<compile_context>
chip_gen: v6e
topology: v6e:2x2x1
jax: 0.10.0
libtpu: 0.0.40
codegen_flags: <defaults>
</compile_context>

<pallas_src>
import jax
import jax.numpy as jnp
from jax.experimental import pallas as pl
from jax.experimental.pallas import tpu as pltpu

LANE = 128
_VMEM = pl.BlockSpec(memory_space=pltpu.MemorySpace.VMEM)
_SMEM = pl.BlockSpec(memory_space=pltpu.MemorySpace.SMEM)


# ----------------------------- Pallas kernels -------------------------------

def _make_flat_kernel(has_res, has_act, has_scale, has_shift, dual_out):
    """matmul + optional (residual, PReLU, scale, shift); optional raw output."""
    def kernel(*refs):
        it = iter(refs)
        a_ref = next(it)
        w_ref = next(it)
        r_ref = next(it) if has_res else None
        sc_ref = next(it) if has_scale else None
        sh_ref = next(it) if has_shift else None
        al_ref = next(it) if has_act else None
        raw_ref = next(it) if dual_out else None
        o_ref = next(it)

        z = jnp.dot(a_ref[...], w_ref[...], preferred_element_type=jnp.float32)
        if dual_out:
            raw_ref[...] = z                     # raw conv output for skip path
        if has_res:
            z = z + r_ref[...]
        if has_act:
            al = al_ref[0]
            z = jnp.where(z > 0, z, al * z)      # shared-parameter PReLU
        if has_scale:
            z = z * sc_ref[...]
        if has_shift:
            z = z + sh_ref[...]
        o_ref[...] = z
    return kernel


def _make_padres_kernel(n, hout, pad_top):
    """convT matmul, rows placed at pad_top inside padded block, + skip,
    then PReLU + BN.  Rows outside the conv range get epilogue(skip) only."""
    def kernel(a_ref, w_ref, r_ref, sc_ref, sh_ref, al_ref, o_ref):
        w = w_ref[...]
        sc = sc_ref[...]
        sh = sh_ref[...]
        al = al_ref[0]

        def epi(v):
            v = jnp.where(v > 0, v, al * v)
            return v * sc + sh

        for b in range(n):                               # n is tiny and static
            r = r_ref[b]                                 # (h_tot, C)
            o_ref[b] = epi(r)                            # padded rows: skip only
            z = jnp.dot(a_ref[b], w, preferred_element_type=jnp.float32)
            o_ref[b, pl.ds(pad_top, hout), :] = epi(z + r[pad_top:pad_top + hout, :])
    return kernel


# ------------------------------ call wrappers --------------------------------

def fused_conv(a, wm, *, res=None, scale=None, shift=None, alpha=None, dual=False):
    m = a.shape[0]
    cp = wm.shape[1]
    inputs = [a, wm]
    specs = [_VMEM, _VMEM]
    if res is not None:
        inputs.append(res); specs.append(_VMEM)
    if scale is not None:
        inputs.append(scale); specs.append(_VMEM)
    if shift is not None:
        inputs.append(shift); specs.append(_VMEM)
    if alpha is not None:
        inputs.append(jnp.reshape(alpha, (1,)).astype(jnp.float32))
        specs.append(_SMEM)
    kernel = _make_flat_kernel(res is not None, alpha is not None,
                               scale is not None, shift is not None, dual)
    if dual:
        out_shape = (jax.ShapeDtypeStruct((m, cp), jnp.float32),
                     jax.ShapeDtypeStruct((m, cp), jnp.float32))
        out_specs = (_VMEM, _VMEM)
    else:
        out_shape = jax.ShapeDtypeStruct((m, cp), jnp.float32)
        out_specs = _VMEM
    return pl.pallas_call(kernel, out_shape=out_shape,
                          in_specs=specs, out_specs=out_specs)(*inputs)


def fused_convT_pad_res(a3, wm, res3, scale, shift, alpha, *, pad_top):
    n, hout, _ = a3.shape
    h_tot = res3.shape[1]
    cp = wm.shape[1]
    kernel = _make_padres_kernel(n, hout, pad_top)
    return pl.pallas_call(
        kernel,
        out_shape=jax.ShapeDtypeStruct((n, h_tot, cp), jnp.float32),
        in_specs=[_VMEM, _VMEM, _VMEM, _VMEM, _VMEM, _SMEM],
        out_specs=_VMEM,
    )(a3, wm, res3, scale, shift, jnp.reshape(alpha, (1,)).astype(jnp.float32))


# ------------------------- im2col glue (XLA, tiny) ----------------------------

def _im2col_conv1(xpad, kh):
    """xpad: (N, Hp, 16) single channel, kernel spans full width."""
    n, hp, w = xpad.shape
    hout = hp - kh + 1
    cols = [xpad[:, dh:dh + hout, :] for dh in range(kh)]
    a = jnp.stack(cols, axis=2).reshape(n * hout, kh * w)
    return a.astype(jnp.bfloat16), hout


def _im2col_conv(x, k, stride, pad):
    """x: (N, H, Cp) channel-padded activation."""
    n, h, c = x.shape
    xp = jnp.pad(x, ((0, 0), (pad, pad), (0, 0)))
    hout = (h + 2 * pad - k) // stride + 1
    cols = [xp[:, dk:dk + (hout - 1) * stride + 1:stride, :] for dk in range(k)]
    a = jnp.stack(cols, axis=2).reshape(n * hout, k * c)
    return a.astype(jnp.bfloat16), hout


def _im2col_convT(x, k, stride, pad):
    """Transposed conv along H as a conv over the zero-upsampled input."""
    n, h, c = x.shape
    hd = (h - 1) * stride + 1
    xd = jnp.zeros((n, hd, c), x.dtype).at[:, ::stride, :].set(x)
    p2 = k - 1 - pad
    xp = jnp.pad(xd, ((0, 0), (p2, p2), (0, 0)))
    hout = hd + 2 * p2 - k + 1
    cols = [xp[:, dk:dk + hout, :] for dk in range(k)]
    a = jnp.stack(cols, axis=2).reshape(n * hout, k * c)
    return a.astype(jnp.bfloat16), hout


# ------------------------------- parameters ----------------------------------

def _prep_conv_w(w):
    """torch Conv1d weight (Cout, Cin, k) -> MXU-ready (k*Cin_pad, Cout_pad) bf16."""
    cout, cin, k = w.shape
    cin_p, cout_p = max(LANE, cin), max(LANE, cout)
    wt = jnp.transpose(w, (2, 1, 0))                              # (k, cin, cout)
    wt = jnp.pad(wt, ((0, 0), (0, cin_p - cin), (0, cout_p - cout)))
    return wt.reshape(k * cin_p, cout_p).astype(jnp.bfloat16)


def _prep_convT_w(w):
    """torch ConvTranspose1d weight (Cin, Cout, k) -> (k*Cin_pad, Cout_pad) bf16."""
    cin, cout, k = w.shape
    cin_p, cout_p = max(LANE, cin), max(LANE, cout)
    wt = jnp.transpose(jnp.flip(w, axis=2), (2, 0, 1))            # (k, cin, cout)
    wt = jnp.pad(wt, ((0, 0), (0, cin_p - cin), (0, cout_p - cout)))
    return wt.reshape(k * cin_p, cout_p).astype(jnp.bfloat16)


def init_params(key):
    keys = iter(jax.random.split(key, 64))

    def w(shape, scale=0.05):
        return scale * jax.random.normal(next(keys), shape, jnp.float32)

    def bn(c, eps=1e-5):   # inference-mode BN folded into (scale, shift), lane-padded
        gamma = 1.0 + 0.1 * jax.random.normal(next(keys), (c,), jnp.float32)
        beta = 0.1 * jax.random.normal(next(keys), (c,), jnp.float32)
        mean = 0.1 * jax.random.normal(next(keys), (c,), jnp.float32)
        var = 1.0 + 0.1 * jnp.abs(jax.random.normal(next(keys), (c,), jnp.float32))
        scale = gamma / jnp.sqrt(var + eps)
        shift = beta - mean * scale
        cp = max(LANE, c)
        scale = jnp.pad(scale, (0, cp - c)).reshape(1, cp)
        shift = jnp.pad(shift, (0, cp - c)).reshape(1, cp)
        return scale, shift

    p = {}
    # conv1: torch (16, 1, 9, 16); kernel spans the full width -> (144, 128)
    w1 = w((16, 1, 9, 16))
    w1m = jnp.transpose(w1[:, 0], (1, 2, 0)).reshape(9 * 16, 16)
    p['w1m'] = jnp.pad(w1m, ((0, 0), (0, LANE - 16))).astype(jnp.bfloat16)
    p['bn1'] = bn(16)
    p['w2m'] = _prep_conv_w(w((32, 16, 3)));     p['bn2'] = bn(32)
    p['w3m'] = _prep_conv_w(w((64, 32, 3)));     p['bn3'] = bn(64)
    p['w4m'] = _prep_conv_w(w((128, 64, 3)));    p['bn4'] = bn(128)
    p['w5m'] = _prep_conv_w(w((256, 128, 3)))
    p['w5_1m'] = _prep_conv_w(w((512, 256, 3))); p['bn5_1'] = bn(512)
    p['w6_1m'] = _prep_convT_w(w((512, 256, 3)))
    p['w6m'] = _prep_convT_w(w((256, 128, 3)));  p['bn6'] = bn(128)
    p['w7m'] = _prep_convT_w(w((128, 64, 3)));   p['bn7'] = bn(64)
    p['w8m'] = _prep_convT_w(w((64, 32, 3)));    p['bn8'] = bn(32)
    p['w9m'] = _prep_convT_w(w((32, 16, 3)));    p['bn9'] = bn(16)
    p['w10m'] = _prep_conv_w(w((1, 16, 3)))
    b10 = 0.05 * jax.random.normal(next(keys), (1,), jnp.float32)
    p['b10'] = jnp.pad(b10, (0, LANE - 1)).reshape(1, LANE)       # conv10 bias
    p['alpha'] = jnp.float32(0.25)                # nn.PReLU() shared parameter
    return p


# --------------------------------- forward -----------------------------------

@jax.jit
def forward(x_nchw, p):
    alpha = p['alpha']
    n = x_nchw.shape[0]
    x = x_nchw[:, 0, :, :].astype(jnp.float32)               # (N, H, 16)
    xp = jnp.pad(x, ((0, 0), (3, 4), (0, 0)))                # ZeroPad2d((0,0,3,4))

    # -------- encoder --------
    a, ho = _im2col_conv1(xp, 9)
    skip9, x1 = fused_conv(a, p['w1m'], scale=p['bn1'][0], shift=p['bn1'][1],
                           alpha=alpha, dual=True)
    skip9 = skip9.reshape(n, ho, LANE)                       # raw conv1 output
    x1 = x1.reshape(n, ho, LANE)

    a, ho = _im2col_conv(x1, 3, 2, 1)
    x2 = fused_conv(a, p['w2m'], scale=p['bn2'][0], shift=p['bn2'][1],
                    alpha=alpha).reshape(n, ho, LANE)

    a, ho = _im2col_conv(x2, 3, 2, 1)
    skip7, x3 = fused_conv(a, p['w3m'], scale=p['bn3'][0], shift=p['bn3'][1],
                           alpha=alpha, dual=True)
    skip7 = skip7.reshape(n, ho, LANE)                       # raw conv3 output
    x3 = x3.reshape(n, ho, LANE)

    a, ho = _im2col_conv(x3, 3, 2, 1)
    x4 = fused_conv(a, p['w4m'], scale=p['bn4'][0], shift=p['bn4'][1],
                    alpha=alpha).reshape(n, ho, LANE)

    a, ho = _im2col_conv(x4, 3, 2, 1)
    skip6_1, x5 = fused_conv(a, p['w5m'], alpha=alpha, dual=True)   # PReLU only
    x5 = x5.reshape(n, ho, 256)                              # skip6_1 kept flat

    a, ho = _im2col_conv(x5, 3, 8, 1)
    x51 = fused_conv(a, p['w5_1m'], scale=p['bn5_1'][0], shift=p['bn5_1'][1],
                     alpha=alpha).reshape(n, ho, 512)

    # -------- decoder --------
    a, ho = _im2col_convT(x51, 3, 8, 1)
    x6_1 = fused_conv(a, p['w6_1m'], res=skip6_1).reshape(n, ho, 256)  # add only

    a, ho = _im2col_convT(x6_1, 3, 2, 1)
    x6 = fused_conv(a, p['w6m'], scale=p['bn6'][0], shift=p['bn6'][1],
                    alpha=alpha).reshape(n, ho, LANE)

    # conv7 -> ZeroPad2d((0,0,2,1)) -> +skip7 -> PReLU -> BN7 (one fused kernel)
    a, ho = _im2col_convT(x6, 3, 2, 1)
    a3 = a.reshape(n, ho, a.shape[1])
    x7 = fused_convT_pad_res(a3, p['w7m'], skip7, p['bn7'][0], p['bn7'][1],
                             alpha, pad_top=2)

    a, ho = _im2col_convT(x7, 3, 2, 1)
    x8 = fused_conv(a, p['w8m'], scale=p['bn8'][0], shift=p['bn8'][1],
                    alpha=alpha).reshape(n, ho, LANE)

    # conv9 -> ZeroPad2d((0,0,1,2)) -> +skip9 -> PReLU -> BN9 (one fused kernel)
    a, ho = _im2col_convT(x8, 3, 2, 1)
    a3 = a.reshape(n, ho, a.shape[1])
    x9 = fused_convT_pad_res(a3, p['w9m'], skip9, p['bn9'][0], p['bn9'][1],
                             alpha, pad_top=1)

    # TODO(synk): BatchNorm uses inference-mode running stats and Dropout2d is
    # eval-mode identity (training-mode batch stats / stochastic dropout not implemented).
    a, ho = _im2col_conv(x9, 3, 1, 1)
    y = fused_conv(a, p['w10m'], shift=p['b10']).reshape(n, ho, LANE)
    y = y[:, :, :1]                                          # true cout = 1
    y = jnp.pad(y, ((0, 0), (0, 1), (0, 0)))                 # ZeroPad2d((0,0,0,1))
    return y[:, None, :, :]                                  # NCHW (N, 1, H, 1)


# ----------------------------------- main -------------------------------------

if __name__ == "__main__":
    key = jax.random.PRNGKey(0)
    kx, kp = jax.random.split(key)
    # H = 17 is the smallest size for which all skip connections align
    # (H-1 = 16 -> 8 -> 4 -> 2 -> 1 down the encoder).
    N, H, W = 2, 17, 16
    x = jax.random.normal(kx, (N, 1, H, W), jnp.float32)
    params = init_params(kp)
    out = forward(x, params)
    out = jax.block_until_ready(out)
    assert out.shape == (N, 1, H, 1), out.shape
    assert bool(jnp.all(jnp.isfinite(out)))
    print("KERNEL_OK")
</pallas_src>

<mosaic_0001>
module attributes {stable_mosaic.version = 11 : i64} {
  func.func @kernel(%arg0: memref<32x144xbf16, #tpu.memory_space<vmem>>, %arg1: memref<144x128xbf16, #tpu.memory_space<vmem>>, %arg2: memref<1x128xf32, #tpu.memory_space<vmem>>, %arg3: memref<1x128xf32, #tpu.memory_space<vmem>>, %arg4: memref<1xf32, #tpu.memory_space<smem>>, %arg5: memref<32x128xf32, #tpu.memory_space<vmem>>, %arg6: memref<32x128xf32, #tpu.memory_space<vmem>>) attributes {dimension_semantics = [], scalar_prefetch = 0 : i64, scratch_operands = 0 : i64, tpu.core_type = #tpu.core_type<tc>} {
    %c0 = arith.constant 0 : index
    %c0_0 = arith.constant 0 : index
    %0 = vector.load %arg0[%c0, %c0_0] : memref<32x144xbf16, #tpu.memory_space<vmem>>, vector<32x144xbf16>
    %c0_1 = arith.constant 0 : index
    %c0_2 = arith.constant 0 : index
    %1 = vector.load %arg1[%c0_1, %c0_2] : memref<144x128xbf16, #tpu.memory_space<vmem>>, vector<144x128xbf16>
    %cst = arith.constant dense<0.000000e+00> : vector<32x128xf32>
    %2 = tpu.matmul %0, %1, %cst {dimension_numbers = #tpu.dot_dimension_numbers<[1], [0], [0], [1], [0, 0, 1, 1], [], []>} : vector<32x144xbf16>, vector<144x128xbf16>, vector<32x128xf32> -> vector<32x128xf32>
    %c0_3 = arith.constant 0 : index
    %c0_4 = arith.constant 0 : index
    %3 = vector.load %arg5[%c0_3, %c0_4] : memref<32x128xf32, #tpu.memory_space<vmem>>, vector<32x128xf32>
    tpu.vector_store %arg5[%c0_3, %c0_4], %2 {strides = array<i32>} : memref<32x128xf32, #tpu.memory_space<vmem>>, vector<32x128xf32>,
    %c0_5 = arith.constant 0 : index
    %4 = memref.load %arg4[%c0_5] : memref<1xf32, #tpu.memory_space<smem>>
    %cst_6 = arith.constant 0.000000e+00 : f32
    %5 = vector.broadcast %cst_6 : f32 to vector<32x128xf32>
    %6 = arith.cmpf ogt, %2, %5 : vector<32x128xf32>
    %7 = vector.broadcast %4 : f32 to vector<32x128xf32>
    %8 = arith.mulf %7, %2 : vector<32x128xf32>
    %9 = arith.select %6, %2, %8 : vector<32x128xi1>, vector<32x128xf32>
    %c0_7 = arith.constant 0 : index
    %c0_8 = arith.constant 0 : index
    %10 = vector.load %arg2[%c0_7, %c0_8] : memref<1x128xf32, #tpu.memory_space<vmem>>, vector<1x128xf32>
    %11 = vector.broadcast %10 : vector<1x128xf32> to vector<32x128xf32>
    %12 = arith.mulf %9, %11 : vector<32x128xf32>
    %c0_9 = arith.constant 0 : index
    %c0_10 = arith.constant 0 : index
    %13 = vector.load %arg3[%c0_9, %c0_10] : memref<1x128xf32, #tpu.memory_space<vmem>>, vector<1x128xf32>
    %14 = vector.broadcast %13 : vector<1x128xf32> to vector<32x128xf32>
    %15 = arith.addf %12, %14 : vector<32x128xf32>
    %c0_11 = arith.constant 0 : index
    %c0_12 = arith.constant 0 : index
    %16 = vector.load %arg6[%c0_11, %c0_12] : memref<32x128xf32, #tpu.memory_space<vmem>>, vector<32x128xf32>
    tpu.vector_store %arg6[%c0_11, %c0_12], %15 {strides = array<i32>} : memref<32x128xf32, #tpu.memory_space<vmem>>, vector<32x128xf32>,
    return
  }
}

module attributes {stable_mosaic.version = 11 : i64} {
  func.func @kernel(%arg0: memref<16x384xbf16, #tpu.memory_space<vmem>>, %arg1: memref<384x128xbf16, #tpu.memory_space<vmem>>, %arg2: memref<1x128xf32, #tpu.memory_space<vmem>>, %arg3: memref<1x128xf32, #tpu.memory_space<vmem>>, %arg4: memref<1xf32, #tpu.memory_space<smem>>, %arg5: memref<16x128xf32, #tpu.memory_space<vmem>>) attributes {dimension_semantics = [], scalar_prefetch = 0 : i64, scratch_operands = 0 : i64, tpu.core_type = #tpu.core_type<tc>} {
    %c0 = arith.constant 0 : index
    %c0_0 = arith.constant 0 : index
    %0 = vector.load %arg0[%c0, %c0_0] : memref<16x384xbf16, #tpu.memory_space<vmem>>, vector<16x384xbf16>
    %c0_1 = arith.constant 0 : index
    %c0_2 = arith.constant 0 : index
    %1 = vector.load %arg1[%c0_1, %c0_2] : memref<384x128xbf16, #tpu.memory_space<vmem>>, vector<384x128xbf16>
    %cst = arith.constant dense<0.000000e+00> : vector<16x128xf32>
    %2 = tpu.matmul %0, %1, %cst {dimension_numbers = #tpu.dot_dimension_numbers<[1], [0], [0], [1], [0, 0, 1, 1], [], []>} : vector<16x384xbf16>, vector<384x128xbf16>, vector<16x128xf32> -> vector<16x128xf32>
    %c0_3 = arith.constant 0 : index
    %3 = memref.load %arg4[%c0_3] : memref<1xf32, #tpu.memory_space<smem>>
    %cst_4 = arith.constant 0.000000e+00 : f32
    %4 = vector.broadcast %cst_4 : f32 to vector<16x128xf32>
    %5 = arith.cmpf ogt, %2, %4 : vector<16x128xf32>
    %6 = vector.broadcast %3 : f32 to vector<16x128xf32>
    %7 = arith.mulf %6, %2 : vector<16x128xf32>
    %8 = arith.select %5, %2, %7 : vector<16x128xi1>, vector<16x128xf32>
    %c0_5 = arith.constant 0 : index
    %c0_6 = arith.constant 0 : index
    %9 = vector.load %arg2[%c0_5, %c0_6] : memref<1x128xf32, #tpu.memory_space<vmem>>, vector<1x128xf32>
    %10 = vector.broadcast %9 : vector<1x128xf32> to vector<16x128xf32>
    %11 = arith.mulf %8, %10 : vector<16x128xf32>
    %c0_7 = arith.constant 0 : index
    %c0_8 = arith.constant 0 : index
    %12 = vector.load %arg3[%c0_7, %c0_8] : memref<1x128xf32, #tpu.memory_space<vmem>>, vector<1x128xf32>
    %13 = vector.broadcast %12 : vector<1x128xf32> to vector<16x128xf32>
    %14 = arith.addf %11, %13 : vector<16x128xf32>
    %c0_9 = arith.constant 0 : index
    %c0_10 = arith.constant 0 : index
    %15 = vector.load %arg5[%c0_9, %c0_10] : memref<16x128xf32, #tpu.memory_space<vmem>>, vector<16x128xf32>
    tpu.vector_store %arg5[%c0_9, %c0_10], %14 {strides = array<i32>} : memref<16x128xf32, #tpu.memory_space<vmem>>, vector<16x128xf32>,
    return
  }
}

module attributes {stable_mosaic.version = 11 : i64} {
  func.func @kernel(%arg0: memref<8x384xbf16, #tpu.memory_space<vmem>>, %arg1: memref<384x128xbf16, #tpu.memory_space<vmem>>, %arg2: memref<1x128xf32, #tpu.memory_space<vmem>>, %arg3: memref<1x128xf32, #tpu.memory_space<vmem>>, %arg4: memref<1xf32, #tpu.memory_space<smem>>, %arg5: memref<8x128xf32, #tpu.memory_space<vmem>>, %arg6: memref<8x128xf32, #tpu.memory_space<vmem>>) attributes {dimension_semantics = [], scalar_prefetch = 0 : i64, scratch_operands = 0 : i64, tpu.core_type = #tpu.core_type<tc>} {
    %c0 = arith.constant 0 : index
    %c0_0 = arith.constant 0 : index
    %0 = vector.load %arg0[%c0, %c0_0] : memref<8x384xbf16, #tpu.memory_space<vmem>>, vector<8x384xbf16>
    %c0_1 = arith.constant 0 : index
    %c0_2 = arith.constant 0 : index
    %1 = vector.load %arg1[%c0_1, %c0_2] : memref<384x128xbf16, #tpu.memory_space<vmem>>, vector<384x128xbf16>
    %cst = arith.constant dense<0.000000e+00> : vector<8x128xf32>
    %2 = tpu.matmul %0, %1, %cst {dimension_numbers = #tpu.dot_dimension_numbers<[1], [0], [0], [1], [0, 0, 1, 1], [], []>} : vector<8x384xbf16>, vector<384x128xbf16>, vector<8x128xf32> -> vector<8x128xf32>
    %c0_3 = arith.constant 0 : index
    %c0_4 = arith.constant 0 : index
    %3 = vector.load %arg5[%c0_3, %c0_4] : memref<8x128xf32, #tpu.memory_space<vmem>>, vector<8x128xf32>
    tpu.vector_store %arg5[%c0_3, %c0_4], %2 {strides = array<i32>} : memref<8x128xf32, #tpu.memory_space<vmem>>, vector<8x128xf32>,
    %c0_5 = arith.constant 0 : index
    %4 = memref.load %arg4[%c0_5] : memref<1xf32, #tpu.memory_space<smem>>
    %cst_6 = arith.constant 0.000000e+00 : f32
    %5 = vector.broadcast %cst_6 : f32 to vector<8x128xf32>
    %6 = arith.cmpf ogt, %2, %5 : vector<8x128xf32>
    %7 = vector.broadcast %4 : f32 to vector<8x128xf32>
    %8 = arith.mulf %7, %2 : vector<8x128xf32>
    %9 = arith.select %6, %2, %8 : vector<8x128xi1>, vector<8x128xf32>
    %c0_7 = arith.constant 0 : index
    %c0_8 = arith.constant 0 : index
    %10 = vector.load %arg2[%c0_7, %c0_8] : memref<1x128xf32, #tpu.memory_space<vmem>>, vector<1x128xf32>
    %11 = vector.broadcast %10 : vector<1x128xf32> to vector<8x128xf32>
    %12 = arith.mulf %9, %11 : vector<8x128xf32>
    %c0_9 = arith.constant 0 : index
    %c0_10 = arith.constant 0 : index
    %13 = vector.load %arg3[%c0_9, %c0_10] : memref<1x128xf32, #tpu.memory_space<vmem>>, vector<1x128xf32>
    %14 = vector.broadcast %13 : vector<1x128xf32> to vector<8x128xf32>
    %15 = arith.addf %12, %14 : vector<8x128xf32>
    %c0_11 = arith.constant 0 : index
    %c0_12 = arith.constant 0 : index
    %16 = vector.load %arg6[%c0_11, %c0_12] : memref<8x128xf32, #tpu.memory_space<vmem>>, vector<8x128xf32>
    tpu.vector_store %arg6[%c0_11, %c0_12], %15 {strides = array<i32>} : memref<8x128xf32, #tpu.memory_space<vmem>>, vector<8x128xf32>,
    return
  }
}

module attributes {stable_mosaic.version = 11 : i64} {
  func.func @kernel(%arg0: memref<4x384xbf16, #tpu.memory_space<vmem>>, %arg1: memref<384x128xbf16, #tpu.memory_space<vmem>>, %arg2: memref<1x128xf32, #tpu.memory_space<vmem>>, %arg3: memref<1x128xf32, #tpu.memory_space<vmem>>, %arg4: memref<1xf32, #tpu.memory_space<smem>>, %arg5: memref<4x128xf32, #tpu.memory_space<vmem>>) attributes {dimension_semantics = [], scalar_prefetch = 0 : i64, scratch_operands = 0 : i64, tpu.core_type = #tpu.core_type<tc>} {
    %c0 = arith.constant 0 : index
    %c0_0 = arith.constant 0 : index
    %0 = vector.load %arg0[%c0, %c0_0] : memref<4x384xbf16, #tpu.memory_space<vmem>>, vector<4x384xbf16>
    %c0_1 = arith.constant 0 : index
    %c0_2 = arith.constant 0 : index
    %1 = vector.load %arg1[%c0_1, %c0_2] : memref<384x128xbf16, #tpu.memory_space<vmem>>, vector<384x128xbf16>
    %cst = arith.constant dense<0.000000e+00> : vector<4x128xf32>
    %2 = tpu.matmul %0, %1, %cst {dimension_numbers = #tpu.dot_dimension_numbers<[1], [0], [0], [1], [0, 0, 1, 1], [], []>} : vector<4x384xbf16>, vector<384x128xbf16>, vector<4x128xf32> -> vector<4x128xf32>
    %c0_3 = arith.constant 0 : index
    %3 = memref.load %arg4[%c0_3] : memref<1xf32, #tpu.memory_space<smem>>
    %cst_4 = arith.constant 0.000000e+00 : f32
    %4 = vector.broadcast %cst_4 : f32 to vector<4x128xf32>
    %5 = arith.cmpf ogt, %2, %4 : vector<4x128xf32>
    %6 = vector.broadcast %3 : f32 to vector<4x128xf32>
    %7 = arith.mulf %6, %2 : vector<4x128xf32>
    %8 = arith.select %5, %2, %7 : vector<4x128xi1>, vector<4x128xf32>
    %c0_5 = arith.constant 0 : index
    %c0_6 = arith.constant 0 : index
    %9 = vector.load %arg2[%c0_5, %c0_6] : memref<1x128xf32, #tpu.memory_space<vmem>>, vector<1x128xf32>
    %10 = vector.broadcast %9 : vector<1x128xf32> to vector<4x128xf32>
    %11 = arith.mulf %8, %10 : vector<4x128xf32>
    %c0_7 = arith.constant 0 : index
    %c0_8 = arith.constant 0 : index
    %12 = vector.load %arg3[%c0_7, %c0_8] : memref<1x128xf32, #tpu.memory_space<vmem>>, vector<1x128xf32>
    %13 = vector.broadcast %12 : vector<1x128xf32> to vector<4x128xf32>
    %14 = arith.addf %11, %13 : vector<4x128xf32>
    %c0_9 = arith.constant 0 : index
    %c0_10 = arith.constant 0 : index
    %15 = vector.load %arg5[%c0_9, %c0_10] : memref<4x128xf32, #tpu.memory_space<vmem>>, vector<4x128xf32>
    tpu.vector_store %arg5[%c0_9, %c0_10], %14 {strides = array<i32>} : memref<4x128xf32, #tpu.memory_space<vmem>>, vector<4x128xf32>,
    return
  }
}

module attributes {stable_mosaic.version = 11 : i64} {
  func.func @kernel(%arg0: memref<2x384xbf16, #tpu.memory_space<vmem>>, %arg1: memref<384x256xbf16, #tpu.memory_space<vmem>>, %arg2: memref<1xf32, #tpu.memory_space<smem>>, %arg3: memref<2x256xf32, #tpu.memory_space<vmem>>, %arg4: memref<2x256xf32, #tpu.memory_space<vmem>>) attributes {dimension_semantics = [], scalar_prefetch = 0 : i64, scratch_operands = 0 : i64, tpu.core_type = #tpu.core_type<tc>} {
    %c0 = arith.constant 0 : index
    %c0_0 = arith.constant 0 : index
    %0 = vector.load %arg0[%c0, %c0_0] : memref<2x384xbf16, #tpu.memory_space<vmem>>, vector<2x384xbf16>
    %c0_1 = arith.constant 0 : index
    %c0_2 = arith.constant 0 : index
    %1 = vector.load %arg1[%c0_1, %c0_2] : memref<384x256xbf16, #tpu.memory_space<vmem>>, vector<384x256xbf16>
    %cst = arith.constant dense<0.000000e+00> : vector<2x256xf32>
    %2 = tpu.matmul %0, %1, %cst {dimension_numbers = #tpu.dot_dimension_numbers<[1], [0], [0], [1], [0, 0, 1, 1], [], []>} : vector<2x384xbf16>, vector<384x256xbf16>, vector<2x256xf32> -> vector<2x256xf32>
    %c0_3 = arith.constant 0 : index
    %c0_4 = arith.constant 0 : index
    %3 = vector.load %arg3[%c0_3, %c0_4] : memref<2x256xf32, #tpu.memory_space<vmem>>, vector<2x256xf32>
    tpu.vector_store %arg3[%c0_3, %c0_4], %2 {strides = array<i32>} : memref<2x256xf32, #tpu.memory_space<vmem>>, vector<2x256xf32>,
    %c0_5 = arith.constant 0 : index
    %4 = memref.load %arg2[%c0_5] : memref<1xf32, #tpu.memory_space<smem>>
    %cst_6 = arith.constant 0.000000e+00 : f32
    %5 = vector.broadcast %cst_6 : f32 to vector<2x256xf32>
    %6 = arith.cmpf ogt, %2, %5 : vector<2x256xf32>
    %7 = vector.broadcast %4 : f32 to vector<2x256xf32>
    %8 = arith.mulf %7, %2 : vector<2x256xf32>
    %9 = arith.select %6, %2, %8 : vector<2x256xi1>, vector<2x256xf32>
    %c0_7 = arith.constant 0 : index
    %c0_8 = arith.constant 0 : index
    %10 = vector.load %arg4[%c0_7, %c0_8] : memref<2x256xf32, #tpu.memory_space<vmem>>, vector<2x256xf32>
    tpu.vector_store %arg4[%c0_7, %c0_8], %9 {strides = array<i32>} : memref<2x256xf32, #tpu.memory_space<vmem>>, vector<2x256xf32>,
    return
  }
}

module attributes {stable_mosaic.version = 11 : i64} {
  func.func @kernel(%arg0: memref<2x768xbf16, #tpu.memory_space<vmem>>, %arg1: memref<768x512xbf16, #tpu.memory_space<vmem>>, %arg2: memref<1x512xf32, #tpu.memory_space<vmem>>, %arg3: memref<1x512xf32, #tpu.memory_space<vmem>>, %arg4: memref<1xf32, #tpu.memory_space<smem>>, %arg5: memref<2x512xf32, #tpu.memory_space<vmem>>) attributes {dimension_semantics = [], scalar_prefetch = 0 : i64, scratch_operands = 0 : i64, tpu.core_type = #tpu.core_type<tc>} {
    %c0 = arith.constant 0 : index
    %c0_0 = arith.constant 0 : index
    %0 = vector.load %arg0[%c0, %c0_0] : memref<2x768xbf16, #tpu.memory_space<vmem>>, vector<2x768xbf16>
    %c0_1 = arith.constant 0 : index
    %c0_2 = arith.constant 0 : index
    %1 = vector.load %arg1[%c0_1, %c0_2] : memref<768x512xbf16, #tpu.memory_space<vmem>>, vector<768x512xbf16>
    %cst = arith.constant dense<0.000000e+00> : vector<2x512xf32>
    %2 = tpu.matmul %0, %1, %cst {dimension_numbers = #tpu.dot_dimension_numbers<[1], [0], [0], [1], [0, 0, 1, 1], [], []>} : vector<2x768xbf16>, vector<768x512xbf16>, vector<2x512xf32> -> vector<2x512xf32>
    %c0_3 = arith.constant 0 : index
    %3 = memref.load %arg4[%c0_3] : memref<1xf32, #tpu.memory_space<smem>>
    %cst_4 = arith.constant 0.000000e+00 : f32
    %4 = vector.broadcast %cst_4 : f32 to vector<2x512xf32>
    %5 = arith.cmpf ogt, %2, %4 : vector<2x512xf32>
    %6 = vector.broadcast %3 : f32 to vector<2x512xf32>
    %7 = arith.mulf %6, %2 : vector<2x512xf32>
    %8 = arith.select %5, %2, %7 : vector<2x512xi1>, vector<2x512xf32>
    %c0_5 = arith.constant 0 : index
    %c0_6 = arith.constant 0 : index
    %9 = vector.load %arg2[%c0_5, %c0_6] : memref<1x512xf32, #tpu.memory_space<vmem>>, vector<1x512xf32>
    %10 = vector.broadcast %9 : vector<1x512xf32> to vector<2x512xf32>
    %11 = arith.mulf %8, %10 : vector<2x512xf32>
    %c0_7 = arith.constant 0 : index
    %c0_8 = arith.constant 0 : index
    %12 = vector.load %arg3[%c0_7, %c0_8] : memref<1x512xf32, #tpu.memory_space<vmem>>, vector<1x512xf32>
    %13 = vector.broadcast %12 : vector<1x512xf32> to vector<2x512xf32>
    %14 = arith.addf %11, %13 : vector<2x512xf32>
    %c0_9 = arith.constant 0 : index
    %c0_10 = arith.constant 0 : index
    %15 = vector.load %arg5[%c0_9, %c0_10] : memref<2x512xf32, #tpu.memory_space<vmem>>, vector<2x512xf32>
    tpu.vector_store %arg5[%c0_9, %c0_10], %14 {strides = array<i32>} : memref<2x512xf32, #tpu.memory_space<vmem>>, vector<2x512xf32>,
    return
  }
}

module attributes {stable_mosaic.version = 11 : i64} {
  func.func @kernel(%arg0: memref<2x1536xbf16, #tpu.memory_space<vmem>>, %arg1: memref<1536x256xbf16, #tpu.memory_space<vmem>>, %arg2: memref<2x256xf32, #tpu.memory_space<vmem>>, %arg3: memref<2x256xf32, #tpu.memory_space<vmem>>) attributes {dimension_semantics = [], scalar_prefetch = 0 : i64, scratch_operands = 0 : i64, tpu.core_type = #tpu.core_type<tc>} {
    %c0 = arith.constant 0 : index
    %c0_0 = arith.constant 0 : index
    %0 = vector.load %arg0[%c0, %c0_0] : memref<2x1536xbf16, #tpu.memory_space<vmem>>, vector<2x1536xbf16>
    %c0_1 = arith.constant 0 : index
    %c0_2 = arith.constant 0 : index
    %1 = vector.load %arg1[%c0_1, %c0_2] : memref<1536x256xbf16, #tpu.memory_space<vmem>>, vector<1536x256xbf16>
    %cst = arith.constant dense<0.000000e+00> : vector<2x256xf32>
    %2 = tpu.matmul %0, %1, %cst {dimension_numbers = #tpu.dot_dimension_numbers<[1], [0], [0], [1], [0, 0, 1, 1], [], []>} : vector<2x1536xbf16>, vector<1536x256xbf16>, vector<2x256xf32> -> vector<2x256xf32>
    %c0_3 = arith.constant 0 : index
    %c0_4 = arith.constant 0 : index
    %3 = vector.load %arg2[%c0_3, %c0_4] : memref<2x256xf32, #tpu.memory_space<vmem>>, vector<2x256xf32>
    %4 = arith.addf %2, %3 : vector<2x256xf32>
    %c0_5 = arith.constant 0 : index
    %c0_6 = arith.constant 0 : index
    %5 = vector.load %arg3[%c0_5, %c0_6] : memref<2x256xf32, #tpu.memory_space<vmem>>, vector<2x256xf32>
    tpu.vector_store %arg3[%c0_5, %c0_6], %4 {strides = array<i32>} : memref<2x256xf32, #tpu.memory_space<vmem>>, vector<2x256xf32>,
    return
  }
}

module attributes {stable_mosaic.version = 11 : i64} {
  func.func @kernel(%arg0: memref<2x768xbf16, #tpu.memory_space<vmem>>, %arg1: memref<768x128xbf16, #tpu.memory_space<vmem>>, %arg2: memref<1x128xf32, #tpu.memory_space<vmem>>, %arg3: memref<1x128xf32, #tpu.memory_space<vmem>>, %arg4: memref<1xf32, #tpu.memory_space<smem>>, %arg5: memref<2x128xf32, #tpu.memory_space<vmem>>) attributes {dimension_semantics = [], scalar_prefetch = 0 : i64, scratch_operands = 0 : i64, tpu.core_type = #tpu.core_type<tc>} {
    %c0 = arith.constant 0 : index
    %c0_0 = arith.constant 0 : index
    %0 = vector.load %arg0[%c0, %c0_0] : memref<2x768xbf16, #tpu.memory_space<vmem>>, vector<2x768xbf16>
    %c0_1 = arith.constant 0 : index
    %c0_2 = arith.constant 0 : index
    %1 = vector.load %arg1[%c0_1, %c0_2] : memref<768x128xbf16, #tpu.memory_space<vmem>>, vector<768x128xbf16>
    %cst = arith.constant dense<0.000000e+00> : vector<2x128xf32>
    %2 = tpu.matmul %0, %1, %cst {dimension_numbers = #tpu.dot_dimension_numbers<[1], [0], [0], [1], [0, 0, 1, 1], [], []>} : vector<2x768xbf16>, vector<768x128xbf16>, vector<2x128xf32> -> vector<2x128xf32>
    %c0_3 = arith.constant 0 : index
    %3 = memref.load %arg4[%c0_3] : memref<1xf32, #tpu.memory_space<smem>>
    %cst_4 = arith.constant 0.000000e+00 : f32
    %4 = vector.broadcast %cst_4 : f32 to vector<2x128xf32>
    %5 = arith.cmpf ogt, %2, %4 : vector<2x128xf32>
    %6 = vector.broadcast %3 : f32 to vector<2x128xf32>
    %7 = arith.mulf %6, %2 : vector<2x128xf32>
    %8 = arith.select %5, %2, %7 : vector<2x128xi1>, vector<2x128xf32>
    %c0_5 = arith.constant 0 : index
    %c0_6 = arith.constant 0 : index
    %9 = vector.load %arg2[%c0_5, %c0_6] : memref<1x128xf32, #tpu.memory_space<vmem>>, vector<1x128xf32>
    %10 = vector.broadcast %9 : vector<1x128xf32> to vector<2x128xf32>
    %11 = arith.mulf %8, %10 : vector<2x128xf32>
    %c0_7 = arith.constant 0 : index
    %c0_8 = arith.constant 0 : index
    %12 = vector.load %arg3[%c0_7, %c0_8] : memref<1x128xf32, #tpu.memory_space<vmem>>, vector<1x128xf32>
    %13 = vector.broadcast %12 : vector<1x128xf32> to vector<2x128xf32>
    %14 = arith.addf %11, %13 : vector<2x128xf32>
    %c0_9 = arith.constant 0 : index
    %c0_10 = arith.constant 0 : index
    %15 = vector.load %arg5[%c0_9, %c0_10] : memref<2x128xf32, #tpu.memory_space<vmem>>, vector<2x128xf32>
    tpu.vector_store %arg5[%c0_9, %c0_10], %14 {strides = array<i32>} : memref<2x128xf32, #tpu.memory_space<vmem>>, vector<2x128xf32>,
    return
  }
}

module attributes {stable_mosaic.version = 11 : i64} {
  func.func @kernel(%arg0: memref<2x1x384xbf16, #tpu.memory_space<vmem>>, %arg1: memref<384x128xbf16, #tpu.memory_space<vmem>>, %arg2: memref<2x4x128xf32, #tpu.memory_space<vmem>>, %arg3: memref<1x128xf32, #tpu.memory_space<vmem>>, %arg4: memref<1x128xf32, #tpu.memory_space<vmem>>, %arg5: memref<1xf32, #tpu.memory_space<smem>>, %arg6: memref<2x4x128xf32, #tpu.memory_space<vmem>>) attributes {dimension_semantics = [], scalar_prefetch = 0 : i64, scratch_operands = 0 : i64, tpu.core_type = #tpu.core_type<tc>} {
    %c0 = arith.constant 0 : index
    %c0_0 = arith.constant 0 : index
    %0 = vector.load %arg1[%c0, %c0_0] : memref<384x128xbf16, #tpu.memory_space<vmem>>, vector<384x128xbf16>
    %c0_1 = arith.constant 0 : index
    %c0_2 = arith.constant 0 : index
    %1 = vector.load %arg3[%c0_1, %c0_2] : memref<1x128xf32, #tpu.memory_space<vmem>>, vector<1x128xf32>
    %c0_3 = arith.constant 0 : index
    %c0_4 = arith.constant 0 : index
    %2 = vector.load %arg4[%c0_3, %c0_4] : memref<1x128xf32, #tpu.memory_space<vmem>>, vector<1x128xf32>
    %c0_5 = arith.constant 0 : index
    %3 = memref.load %arg5[%c0_5] : memref<1xf32, #tpu.memory_space<smem>>
    %c0_6 = arith.constant 0 : index
    %c0_7 = arith.constant 0 : index
    %c0_8 = arith.constant 0 : index
    %4 = vector.load %arg2[%c0_6, %c0_7, %c0_8] : memref<2x4x128xf32, #tpu.memory_space<vmem>>, vector<1x4x128xf32>
    %5 = vector.shape_cast %4 : vector<1x4x128xf32> to vector<4x128xf32>
    %cst = arith.constant 0.000000e+00 : f32
    %6 = vector.broadcast %cst : f32 to vector<4x128xf32>
    %7 = arith.cmpf ogt, %5, %6 : vector<4x128xf32>
    %8 = vector.broadcast %3 : f32 to vector<4x128xf32>
    %9 = arith.mulf %8, %5 : vector<4x128xf32>
    %10 = arith.select %7, %5, %9 : vector<4x128xi1>, vector<4x128xf32>
    %11 = vector.broadcast %1 : vector<1x128xf32> to vector<4x128xf32>
    %12 = arith.mulf %10, %11 : vector<4x128xf32>
    %13 = vector.broadcast %2 : vector<1x128xf32> to vector<4x128xf32>
    %14 = arith.addf %12, %13 : vector<4x128xf32>
    %c0_9 = arith.constant 0 : index
    %c0_10 = arith.constant 0 : index
    %c0_11 = arith.constant 0 : index
    %15 = vector.load %arg6[%c0_9, %c0_10, %c0_11] : memref<2x4x128xf32, #tpu.memory_space<vmem>>, vector<1x4x128xf32>
    %16 = vector.shape_cast %15 : vector<1x4x128xf32> to vector<4x128xf32>
    %17 = vector.shape_cast %14 : vector<4x128xf32> to vector<1x4x128xf32>
    tpu.vector_store %arg6[%c0_9, %c0_10, %c0_11], %17 {strides = array<i32>} : memref<2x4x128xf32, #tpu.memory_space<vmem>>, vector<1x4x128xf32>,
    %c0_12 = arith.constant 0 : index
    %c0_13 = arith.constant 0 : index
    %c0_14 = arith.constant 0 : index
    %18 = vector.load %arg0[%c0_12, %c0_13, %c0_14] : memref<2x1x384xbf16, #tpu.memory_space<vmem>>, vector<1x1x384xbf16>
    %19 = vector.shape_cast %18 : vector<1x1x384xbf16> to vector<1x384xbf16>
    %cst_15 = arith.constant dense<0.000000e+00> : vector<1x128xf32>
    %20 = tpu.matmul %19, %0, %cst_15 {dimension_numbers = #tpu.dot_dimension_numbers<[1], [0], [0], [1], [0, 0, 1, 1], [], []>} : vector<1x384xbf16>, vector<384x128xbf16>, vector<1x128xf32> -> vector<1x128xf32>
    %21 = vector.extract_strided_slice %5 {offsets = [2, 0], sizes = [1, 128], strides = [1, 1]} : vector<4x128xf32> to vector<1x128xf32>
    %22 = arith.addf %20, %21 : vector<1x128xf32>
    %cst_16 = arith.constant 0.000000e+00 : f32
    %23 = vector.broadcast %cst_16 : f32 to vector<1x128xf32>
    %24 = arith.cmpf ogt, %22, %23 : vector<1x128xf32>
    %25 = vector.broadcast %3 : f32 to vector<1x128xf32>
    %26 = arith.mulf %25, %22 : vector<1x128xf32>
    %27 = arith.select %24, %22, %26 : vector<1x128xi1>, vector<1x128xf32>
    %28 = arith.mulf %27, %1 : vector<1x128xf32>
    %29 = arith.addf %28, %2 : vector<1x128xf32>
    %c0_17 = arith.constant 0 : index
    %c2 = arith.constant 2 : index
    %c0_18 = arith.constant 0 : index
    %30 = vector.load %arg6[%c0_17, %c2, %c0_18] : memref<2x4x128xf32, #tpu.memory_space<vmem>>, vector<1x1x128xf32>
    %31 = vector.shape_cast %30 : vector<1x1x128xf32> to vector<1x128xf32>
    %32 = vector.shape_cast %29 : vector<1x128xf32> to vector<1x1x128xf32>
    tpu.vector_store %arg6[%c0_17, %c2, %c0_18], %32 {strides = array<i32>} : memref<2x4x128xf32, #tpu.memory_space<vmem>>, vector<1x1x128xf32>,
    %c1 = arith.constant 1 : index
    %c0_19 = arith.constant 0 : index
    %c0_20 = arith.constant 0 : index
    %33 = vector.load %arg2[%c1, %c0_19, %c0_20] : memref<2x4x128xf32, #tpu.memory_space<vmem>>, vector<1x4x128xf32>
    %34 = vector.shape_cast %33 : vector<1x4x128xf32> to vector<4x128xf32>
    %cst_21 = arith.constant 0.000000e+00 : f32
    %35 = vector.broadcast %cst_21 : f32 to vector<4x128xf32>
    %36 = arith.cmpf ogt, %34, %35 : vector<4x128xf32>
    %37 = vector.broadcast %3 : f32 to vector<4x128xf32>
    %38 = arith.mulf %37, %34 : vector<4x128xf32>
    %39 = arith.select %36, %34, %38 : vector<4x128xi1>, vector<4x128xf32>
    %40 = vector.broadcast %1 : vector<1x128xf32> to vector<4x128xf32>
    %41 = arith.mulf %39, %40 : vector<4x128xf32>
    %42 = vector.broadcast %2 : vector<1x128xf32> to vector<4x128xf32>
    %43 = arith.addf %41, %42 : vector<4x128xf32>
    %c1_22 = arith.constant 1 : index
    %c0_23 = arith.constant 0 : index
    %c0_24 = arith.constant 0 : index
    %44 = vector.load %arg6[%c1_22, %c0_23, %c0_24] : memref<2x4x128xf32, #tpu.memory_space<vmem>>, vector<1x4x128xf32>
    %45 = vector.shape_cast %44 : vector<1x4x128xf32> to vector<4x128xf32>
    %46 = vector.shape_cast %43 : vector<4x128xf32> to vector<1x4x128xf32>
    tpu.vector_store %arg6[%c1_22, %c0_23, %c0_24], %46 {strides = array<i32>} : memref<2x4x128xf32, #tpu.memory_space<vmem>>, vector<1x4x128xf32>,
    %c1_25 = arith.constant 1 : index
    %c0_26 = arith.constant 0 : index
    %c0_27 = arith.constant 0 : index
    %47 = vector.load %arg0[%c1_25, %c0_26, %c0_27] : memref<2x1x384xbf16, #tpu.memory_space<vmem>>, vector<1x1x384xbf16>
    %48 = vector.shape_cast %47 : vector<1x1x384xbf16> to vector<1x384xbf16>
    %cst_28 = arith.constant dense<0.000000e+00> : vector<1x128xf32>
    %49 = tpu.matmul %48, %0, %cst_28 {dimension_numbers = #tpu.dot_dimension_numbers<[1], [0], [0], [1], [0, 0, 1, 1], [], []>} : vector<1x384xbf16>, vector<384x128xbf16>, vector<1x128xf32> -> vector<1x128xf32>
    %50 = vector.extract_strided_slice %34 {offsets = [2, 0], sizes = [1, 128], strides = [1, 1]} : vector<4x128xf32> to vector<1x128xf32>
    %51 = arith.addf %49, %50 : vector<1x128xf32>
    %cst_29 = arith.constant 0.000000e+00 : f32
    %52 = vector.broadcast %cst_29 : f32 to vector<1x128xf32>
    %53 = arith.cmpf ogt, %51, %52 : vector<1x128xf32>
    %54 = vector.broadcast %3 : f32 to vector<1x128xf32>
    %55 = arith.mulf %54, %51 : vector<1x128xf32>
    %56 = arith.select %53, %51, %55 : vector<1x128xi1>, vector<1x128xf32>
    %57 = arith.mulf %56, %1 : vector<1x128xf32>
    %58 = arith.addf %57, %2 : vector<1x128xf32>
    %c1_30 = arith.constant 1 : index
    %c2_31 = arith.constant 2 : index
    %c0_32 = arith.constant 0 : index
    %59 = vector.load %arg6[%c1_30, %c2_31, %c0_32] : memref<2x4x128xf32, #tpu.memory_space<vmem>>, vector<1x1x128xf32>
    %60 = vector.shape_cast %59 : vector<1x1x128xf32> to vector<1x128xf32>
    %61 = vector.shape_cast %58 : vector<1x128xf32> to vector<1x1x128xf32>
    tpu.vector_store %arg6[%c1_30, %c2_31, %c0_32], %61 {strides = array<i32>} : memref<2x4x128xf32, #tpu.memory_space<vmem>>, vector<1x1x128xf32>,
    return
  }
}

module attributes {stable_mosaic.version = 11 : i64} {
  func.func @kernel(%arg0: memref<14x384xbf16, #tpu.memory_space<vmem>>, %arg1: memref<384x128xbf16, #tpu.memory_space<vmem>>, %arg2: memref<1x128xf32, #tpu.memory_space<vmem>>, %arg3: memref<1x128xf32, #tpu.memory_space<vmem>>, %arg4: memref<1xf32, #tpu.memory_space<smem>>, %arg5: memref<14x128xf32, #tpu.memory_space<vmem>>) attributes {dimension_semantics = [], scalar_prefetch = 0 : i64, scratch_operands = 0 : i64, tpu.core_type = #tpu.core_type<tc>} {
    %c0 = arith.constant 0 : index
    %c0_0 = arith.constant 0 : index
    %0 = vector.load %arg0[%c0, %c0_0] : memref<14x384xbf16, #tpu.memory_space<vmem>>, vector<14x384xbf16>
    %c0_1 = arith.constant 0 : index
    %c0_2 = arith.constant 0 : index
    %1 = vector.load %arg1[%c0_1, %c0_2] : memref<384x128xbf16, #tpu.memory_space<vmem>>, vector<384x128xbf16>
    %cst = arith.constant dense<0.000000e+00> : vector<14x128xf32>
    %2 = tpu.matmul %0, %1, %cst {dimension_numbers = #tpu.dot_dimension_numbers<[1], [0], [0], [1], [0, 0, 1, 1], [], []>} : vector<14x384xbf16>, vector<384x128xbf16>, vector<14x128xf32> -> vector<14x128xf32>
    %c0_3 = arith.constant 0 : index
    %3 = memref.load %arg4[%c0_3] : memref<1xf32, #tpu.memory_space<smem>>
    %cst_4 = arith.constant 0.000000e+00 : f32
    %4 = vector.broadcast %cst_4 : f32 to vector<14x128xf32>
    %5 = arith.cmpf ogt, %2, %4 : vector<14x128xf32>
    %6 = vector.broadcast %3 : f32 to vector<14x128xf32>
    %7 = arith.mulf %6, %2 : vector<14x128xf32>
    %8 = arith.select %5, %2, %7 : vector<14x128xi1>, vector<14x128xf32>
    %c0_5 = arith.constant 0 : index
    %c0_6 = arith.constant 0 : index
    %9 = vector.load %arg2[%c0_5, %c0_6] : memref<1x128xf32, #tpu.memory_space<vmem>>, vector<1x128xf32>
    %10 = vector.broadcast %9 : vector<1x128xf32> to vector<14x128xf32>
    %11 = arith.mulf %8, %10 : vector<14x128xf32>
    %c0_7 = arith.constant 0 : index
    %c0_8 = arith.constant 0 : index
    %12 = vector.load %arg3[%c0_7, %c0_8] : memref<1x128xf32, #tpu.memory_space<vmem>>, vector<1x128xf32>
    %13 = vector.broadcast %12 : vector<1x128xf32> to vector<14x128xf32>
    %14 = arith.addf %11, %13 : vector<14x128xf32>
    %c0_9 = arith.constant 0 : index
    %c0_10 = arith.constant 0 : index
    %15 = vector.load %arg5[%c0_9, %c0_10] : memref<14x128xf32, #tpu.memory_space<vmem>>, vector<14x128xf32>
    tpu.vector_store %arg5[%c0_9, %c0_10], %14 {strides = array<i32>} : memref<14x128xf32, #tpu.memory_space<vmem>>, vector<14x128xf32>,
    return
  }
}

module attributes {stable_mosaic.version = 11 : i64} {
  func.func @kernel(%arg0: memref<2x13x384xbf16, #tpu.memory_space<vmem>>, %arg1: memref<384x128xbf16, #tpu.memory_space<vmem>>, %arg2: memref<2x16x128xf32, #tpu.memory_space<vmem>>, %arg3: memref<1x128xf32, #tpu.memory_space<vmem>>, %arg4: memref<1x128xf32, #tpu.memory_space<vmem>>, %arg5: memref<1xf32, #tpu.memory_space<smem>>, %arg6: memref<2x16x128xf32, #tpu.memory_space<vmem>>) attributes {dimension_semantics = [], scalar_prefetch = 0 : i64, scratch_operands = 0 : i64, tpu.core_type = #tpu.core_type<tc>} {
    %c0 = arith.constant 0 : index
    %c0_0 = arith.constant 0 : index
    %0 = vector.load %arg1[%c0, %c0_0] : memref<384x128xbf16, #tpu.memory_space<vmem>>, vector<384x128xbf16>
    %c0_1 = arith.constant 0 : index
    %c0_2 = arith.constant 0 : index
    %1 = vector.load %arg3[%c0_1, %c0_2] : memref<1x128xf32, #tpu.memory_space<vmem>>, vector<1x128xf32>
    %c0_3 = arith.constant 0 : index
    %c0_4 = arith.constant 0 : index
    %2 = vector.load %arg4[%c0_3, %c0_4] : memref<1x128xf32, #tpu.memory_space<vmem>>, vector<1x128xf32>
    %c0_5 = arith.constant 0 : index
    %3 = memref.load %arg5[%c0_5] : memref<1xf32, #tpu.memory_space<smem>>
    %c0_6 = arith.constant 0 : index
    %c0_7 = arith.constant 0 : index
    %c0_8 = arith.constant 0 : index
    %4 = vector.load %arg2[%c0_6, %c0_7, %c0_8] : memref<2x16x128xf32, #tpu.memory_space<vmem>>, vector<1x16x128xf32>
    %5 = vector.shape_cast %4 : vector<1x16x128xf32> to vector<16x128xf32>
    %cst = arith.constant 0.000000e+00 : f32
    %6 = vector.broadcast %cst : f32 to vector<16x128xf32>
    %7 = arith.cmpf ogt, %5, %6 : vector<16x128xf32>
    %8 = vector.broadcast %3 : f32 to vector<16x128xf32>
    %9 = arith.mulf %8, %5 : vector<16x128xf32>
    %10 = arith.select %7, %5, %9 : vector<16x128xi1>, vector<16x128xf32>
    %11 = vector.broadcast %1 : vector<1x128xf32> to vector<16x128xf32>
    %12 = arith.mulf %10, %11 : vector<16x128xf32>
    %13 = vector.broadcast %2 : vector<1x128xf32> to vector<16x128xf32>
    %14 = arith.addf %12, %13 : vector<16x128xf32>
    %c0_9 = arith.constant 0 : index
    %c0_10 = arith.constant 0 : index
    %c0_11 = arith.constant 0 : index
    %15 = vector.load %arg6[%c0_9, %c0_10, %c0_11] : memref<2x16x128xf32, #tpu.memory_space<vmem>>, vector<1x16x128xf32>
    %16 = vector.shape_cast %15 : vector<1x16x128xf32> to vector<16x128xf32>
    %17 = vector.shape_cast %14 : vector<16x128xf32> to vector<1x16x128xf32>
    tpu.vector_store %arg6[%c0_9, %c0_10, %c0_11], %17 {strides = array<i32>} : memref<2x16x128xf32, #tpu.memory_space<vmem>>, vector<1x16x128xf32>,
    %c0_12 = arith.constant 0 : index
    %c0_13 = arith.constant 0 : index
    %c0_14 = arith.constant 0 : index
    %18 = vector.load %arg0[%c0_12, %c0_13, %c0_14] : memref<2x13x384xbf16, #tpu.memory_space<vmem>>, vector<1x13x384xbf16>
    %19 = vector.shape_cast %18 : vector<1x13x384xbf16> to vector<13x384xbf16>
    %cst_15 = arith.constant dense<0.000000e+00> : vector<13x128xf32>
    %20 = tpu.matmul %19, %0, %cst_15 {dimension_numbers = #tpu.dot_dimension_numbers<[1], [0], [0], [1], [0, 0, 1, 1], [], []>} : vector<13x384xbf16>, vector<384x128xbf16>, vector<13x128xf32> -> vector<13x128xf32>
    %21 = vector.extract_strided_slice %5 {offsets = [1, 0], sizes = [13, 128], strides = [1, 1]} : vector<16x128xf32> to vector<13x128xf32>
    %22 = arith.addf %20, %21 : vector<13x128xf32>
    %cst_16 = arith.constant 0.000000e+00 : f32
    %23 = vector.broadcast %cst_16 : f32 to vector<13x128xf32>
    %24 = arith.cmpf ogt, %22, %23 : vector<13x128xf32>
    %25 = vector.broadcast %3 : f32 to vector<13x128xf32>
    %26 = arith.mulf %25, %22 : vector<13x128xf32>
    %27 = arith.select %24, %22, %26 : vector<13x128xi1>, vector<13x128xf32>
    %28 = vector.broadcast %1 : vector<1x128xf32> to vector<13x128xf32>
    %29 = arith.mulf %27, %28 : vector<13x128xf32>
    %30 = vector.broadcast %2 : vector<1x128xf32> to vector<13x128xf32>
    %31 = arith.addf %29, %30 : vector<13x128xf32>
    %c0_17 = arith.constant 0 : index
    %c1 = arith.constant 1 : index
    %c0_18 = arith.constant 0 : index
    %32 = vector.load %arg6[%c0_17, %c1, %c0_18] : memref<2x16x128xf32, #tpu.memory_space<vmem>>, vector<1x13x128xf32>
    %33 = vector.shape_cast %32 : vector<1x13x128xf32> to vector<13x128xf32>
    %34 = vector.shape_cast %31 : vector<13x128xf32> to vector<1x13x128xf32>
    tpu.vector_store %arg6[%c0_17, %c1, %c0_18], %34 {strides = array<i32>} : memref<2x16x128xf32, #tpu.memory_space<vmem>>, vector<1x13x128xf32>,
    %c1_19 = arith.constant 1 : index
    %c0_20 = arith.constant 0 : index
    %c0_21 = arith.constant 0 : index
    %35 = vector.load %arg2[%c1_19, %c0_20, %c0_21] : memref<2x16x128xf32, #tpu.memory_space<vmem>>, vector<1x16x128xf32>
    %36 = vector.shape_cast %35 : vector<1x16x128xf32> to vector<16x128xf32>
    %cst_22 = arith.constant 0.000000e+00 : f32
    %37 = vector.broadcast %cst_22 : f32 to vector<16x128xf32>
    %38 = arith.cmpf ogt, %36, %37 : vector<16x128xf32>
    %39 = vector.broadcast %3 : f32 to vector<16x128xf32>
    %40 = arith.mulf %39, %36 : vector<16x128xf32>
    %41 = arith.select %38, %36, %40 : vector<16x128xi1>, vector<16x128xf32>
    %42 = vector.broadcast %1 : vector<1x128xf32> to vector<16x128xf32>
    %43 = arith.mulf %41, %42 : vector<16x128xf32>
    %44 = vector.broadcast %2 : vector<1x128xf32> to vector<16x128xf32>
    %45 = arith.addf %43, %44 : vector<16x128xf32>
    %c1_23 = arith.constant 1 : index
    %c0_24 = arith.constant 0 : index
    %c0_25 = arith.constant 0 : index
    %46 = vector.load %arg6[%c1_23, %c0_24, %c0_25] : memref<2x16x128xf32, #tpu.memory_space<vmem>>, vector<1x16x128xf32>
    %47 = vector.shape_cast %46 : vector<1x16x128xf32> to vector<16x128xf32>
    %48 = vector.shape_cast %45 : vector<16x128xf32> to vector<1x16x128xf32>
    tpu.vector_store %arg6[%c1_23, %c0_24, %c0_25], %48 {strides = array<i32>} : memref<2x16x128xf32, #tpu.memory_space<vmem>>, vector<1x16x128xf32>,
    %c1_26 = arith.constant 1 : index
    %c0_27 = arith.constant 0 : index
    %c0_28 = arith.constant 0 : index
    %49 = vector.load %arg0[%c1_26, %c0_27, %c0_28] : memref<2x13x384xbf16, #tpu.memory_space<vmem>>, vector<1x13x384xbf16>
    %50 = vector.shape_cast %49 : vector<1x13x384xbf16> to vector<13x384xbf16>
    %cst_29 = arith.constant dense<0.000000e+00> : vector<13x128xf32>
    %51 = tpu.matmul %50, %0, %cst_29 {dimension_numbers = #tpu.dot_dimension_numbers<[1], [0], [0], [1], [0, 0, 1, 1], [], []>} : vector<13x384xbf16>, vector<384x128xbf16>, vector<13x128xf32> -> vector<13x128xf32>
    %52 = vector.extract_strided_slice %36 {offsets = [1, 0], sizes = [13, 128], strides = [1, 1]} : vector<16x128xf32> to vector<13x128xf32>
    %53 = arith.addf %51, %52 : vector<13x128xf32>
    %cst_30 = arith.constant 0.000000e+00 : f32
    %54 = vector.broadcast %cst_30 : f32 to vector<13x128xf32>
    %55 = arith.cmpf ogt, %53, %54 : vector<13x128xf32>
    %56 = vector.broadcast %3 : f32 to vector<13x128xf32>
    %57 = arith.mulf %56, %53 : vector<13x128xf32>
    %58 = arith.select %55, %53, %57 : vector<13x128xi1>, vector<13x128xf32>
    %59 = vector.broadcast %1 : vector<1x128xf32> to vector<13x128xf32>
    %60 = arith.mulf %58, %59 : vector<13x128xf32>
    %61 = vector.broadcast %2 : vector<1x128xf32> to vector<13x128xf32>
    %62 = arith.addf %60, %61 : vector<13x128xf32>
    %c1_31 = arith.constant 1 : index
    %c1_32 = arith.constant 1 : index
    %c0_33 = arith.constant 0 : index
    %63 = vector.load %arg6[%c1_31, %c1_32, %c0_33] : memref<2x16x128xf32, #tpu.memory_space<vmem>>, vector<1x13x128xf32>
    %64 = vector.shape_cast %63 : vector<1x13x128xf32> to vector<13x128xf32>
    %65 = vector.shape_cast %62 : vector<13x128xf32> to vector<1x13x128xf32>
    tpu.vector_store %arg6[%c1_31, %c1_32, %c0_33], %65 {strides = array<i32>} : memref<2x16x128xf32, #tpu.memory_space<vmem>>, vector<1x13x128xf32>,
    return
  }
}

module attributes {stable_mosaic.version = 11 : i64} {
  func.func @kernel(%arg0: memref<32x384xbf16, #tpu.memory_space<vmem>>, %arg1: memref<384x128xbf16, #tpu.memory_space<vmem>>, %arg2: memref<1x128xf32, #tpu.memory_space<vmem>>, %arg3: memref<32x128xf32, #tpu.memory_space<vmem>>) attributes {dimension_semantics = [], scalar_prefetch = 0 : i64, scratch_operands = 0 : i64, tpu.core_type = #tpu.core_type<tc>} {
    %c0 = arith.constant 0 : index
    %c0_0 = arith.constant 0 : index
    %0 = vector.load %arg0[%c0, %c0_0] : memref<32x384xbf16, #tpu.memory_space<vmem>>, vector<32x384xbf16>
    %c0_1 = arith.constant 0 : index
    %c0_2 = arith.constant 0 : index
    %1 = vector.load %arg1[%c0_1, %c0_2] : memref<384x128xbf16, #tpu.memory_space<vmem>>, vector<384x128xbf16>
    %cst = arith.constant dense<0.000000e+00> : vector<32x128xf32>
    %2 = tpu.matmul %0, %1, %cst {dimension_numbers = #tpu.dot_dimension_numbers<[1], [0], [0], [1], [0, 0, 1, 1], [], []>} : vector<32x384xbf16>, vector<384x128xbf16>, vector<32x128xf32> -> vector<32x128xf32>
    %c0_3 = arith.constant 0 : index
    %c0_4 = arith.constant 0 : index
    %3 = vector.load %arg2[%c0_3, %c0_4] : memref<1x128xf32, #tpu.memory_space<vmem>>, vector<1x128xf32>
    %4 = vector.broadcast %3 : vector<1x128xf32> to vector<32x128xf32>
    %5 = arith.addf %2, %4 : vector<32x128xf32>
    %c0_5 = arith.constant 0 : index
    %c0_6 = arith.constant 0 : index
    %6 = vector.load %arg3[%c0_5, %c0_6] : memref<32x128xf32, #tpu.memory_space<vmem>>, vector<32x128xf32>
    tpu.vector_store %arg3[%c0_5, %c0_6], %5 {strides = array<i32>} : memref<32x128xf32, #tpu.memory_space<vmem>>, vector<32x128xf32>,
    return
  }
}

</mosaic_0001>

<llo_original>
// kernel: forward.12
$region0: #{forward.12}
  #allocation0 [shape = 'u32[]', space=smem, size = 0x4, offset = 0x4, fixed_abs, tag = 'smem constant byte address 0x4 - core index']
  #allocation1 [shape = 'u32[144,128]{1,0:T(1,128)}', space=vmem, size = 0x12000, scoped, tag = 'internal scratch']
  #allocation2 [shape = 'f32[1]{0:T(128)S(6)}', space=smem, size = 0x200, scoped, tag = 'scoped memory for forward.12']
  %s0 = inlined_call_operand.vmem [shape: bf16[32,144], index: 0, kind: input, shape index: {}]
  %s1 = inlined_call_operand.hbm [shape: bf16[144,128], index: 1, kind: input, shape index: {}]
  %s2 = inlined_call_operand.vmem [shape: f32[1,128], index: 2, kind: input, shape index: {}]
  %s3 = inlined_call_operand.hbm [shape: f32[1,128], index: 3, kind: input, shape index: {}]
  %s4 = inlined_call_operand.<no memory space> [shape: f32[1], index: 4, kind: input, shape index: {}]
  %s5 = inlined_call_operand.vmem [shape: f32[32,128], index: 5, kind: output, shape index: {0}]
  %s6 = inlined_call_operand.vmem [shape: f32[32,128], index: 6, kind: output, shape index: {1}]
  %7 = xla_tuple %s5, %s6
  %s8 = sld [smem:[#allocation0]]
  $region46: #{forward.12} parent=0
    _
  %s10 = ssub.s32 1, %s8
  %s11 = scalar_select 0, %s10, %s8
  %12 = sst [smem:[#allocation2]] %s4
  $region1: #{forward.12} parent=0
    #allocation3 [shape = 'u8[36864]{0}', space=vmem, size = 0x9000, scoped, tag = 'input window, operand 1, single buffered']
    #allocation4 [shape = 's32[1]{0}', space=sflag, size = 0x4, scoped, tag = 'scoped memory for forward.12']
    #allocation5 [shape = 'u8[512]{0}', space=vmem, size = 0x400, scoped, tag = 'input window, operand 3, single buffered']
    #allocation6 [shape = 's32[1]{0}', space=sflag, size = 0x4, scoped, tag = 'scoped memory for forward.12']
    %13 = vsyncpa [#allocation4], 0
    %14 = vsyncpa [#allocation6], 0
    // Predicated region
    $region2: #{forward.12} parent=1 // pred_check
      _
    $region3: #{forward.12} parent=1 // pred_check_branch
      %16 = sbr.rel (0) target = $region5
    $region4: #{forward.12} parent=1 // pred_region
      _
    $region5: #{forward.12} parent=1 // pred_fallthru
      _
    // Predicated region
    $region6: #{forward.12} parent=1 // pred_check
      _
    $region7: #{forward.12} parent=1 // pred_check_branch
      %18 = sbr.rel (0) target = $region9
    $region8: #{forward.12} parent=1 // pred_region
      %s20 = ssub.s32 1152, 1152
      %21 = vsyncadd [#allocation4], %s20
      %s22 = sshll.u32 [#allocation3], 4
      %s23 = int_to_ptr.vmem [resolvable:$true] %s22
      %28 = dma.hbm_to_vmem [thread:$0]  %s1, 1152, %s23, [#allocation4], 64, 64, 4
    $region9: #{forward.12} parent=1 // pred_fallthru
      _
    // Predicated region
    $region10: #{forward.12} parent=1 // pred_check
      _
    $region11: #{forward.12} parent=1 // pred_check_branch
      %30 = sbr.rel (0) target = $region13
    $region12: #{forward.12} parent=1 // pred_region
      _
    $region13: #{forward.12} parent=1 // pred_fallthru
      _
    // Predicated region
    $region14: #{forward.12} parent=1 // pred_check
      _
    $region15: #{forward.12} parent=1 // pred_check_branch
      %32 = sbr.rel (0) target = $region17
    $region16: #{forward.12} parent=1 // pred_region
      %s34 = ssub.s32 16, 16
      %35 = vsyncadd [#allocation6], %s34
      %s37 = sshll.u32 [#allocation5], 4
      %s38 = int_to_ptr.vmem [resolvable:$true] %s37
      %40 = dma.hbm_to_vmem [thread:$0]  %s3, 16, %s38, [#allocation6]
    $region17: #{forward.12} parent=1 // pred_fallthru
      _
    // Predicated region
    $region18: #{forward.12} parent=1 // pred_check
      _
    $region19: #{forward.12} parent=1 // pred_check_branch
      %42 = sbr.rel (0) target = $region21
    $region20: #{forward.12} parent=1 // pred_region
      _
    $region21: #{forward.12} parent=1 // pred_fallthru
      _
    // Predicated region
    $region22: #{forward.12} parent=1 // pred_check
      _
    $region23: #{forward.12} parent=1 // pred_check_branch
      %44 = sbr.rel (0) target = $region25
    $region24: #{forward.12} parent=1 // pred_region
      %45 = dma.done [#allocation4], 1152
    $region25: #{forward.12} parent=1 // pred_fallthru
      _
    // Predicated region
    $region26: #{forward.12} parent=1 // pred_check
      _
    $region27: #{forward.12} parent=1 // pred_check_branch
      %47 = sbr.rel (0) target = $region29
    $region28: #{forward.12} parent=1 // pred_region
      %48 = dma.done [#allocation6], 16
    $region29: #{forward.12} parent=1 // pred_fallthru
      _
    %v50 = vld [vmem:[%s0] sm:$0xff]
    %v51 = vld [vmem:[%s0 + $0x8] sm:$0xff]
    %v52 = vld [vmem:[%s0 + $0x10] sm:$0xff]
    %v53 = vld [vmem:[%s0 + $0x18] sm:$0xff]
    %v54 = vld [vmem:[#allocation3] sm:$0xf]
    %v55 = vld [vmem:[#allocation3 + $0x4] sm:$0xf]
    %v56 = vld [vmem:[#allocation3 + $0x8] sm:$0xf]
    %v57 = vld [vmem:[#allocation3 + $0xc] sm:$0xf]
    %v58 = vld [vmem:[#allocation3 + $0x10] sm:$0xf]
    %v59 = vld [vmem:[#allocation3 + $0x14] sm:$0xf]
    %v60 = vld [vmem:[#allocation3 + $0x18] sm:$0xf]
    %v61 = vld [vmem:[#allocation3 + $0x1c] sm:$0xf]
    %v62 = vld [vmem:[#allocation3 + $0x20] sm:$0xf]
    %v63 = vld [vmem:[#allocation3 + $0x24] sm:$0xf]
    %v64 = vld [vmem:[#allocation3 + $0x28] sm:$0xf]
    %v65 = vld [vmem:[#allocation3 + $0x2c] sm:$0xf]
    %v66 = vld [vmem:[#allocation3 + $0x30] sm:$0xf]
    %v67 = vld [vmem:[#allocation3 + $0x34] sm:$0xf]
    %v68 = vld [vmem:[#allocation3 + $0x38] sm:$0xf]
    %v69 = vld [vmem:[#allocation3 + $0x3c] sm:$0xf]
    %v70 = vld [vmem:[#allocation3 + $0x40] sm:$0xf]
    %v71 = vld [vmem:[#allocation3 + $0x44] sm:$0xf]
    %v76 = vunpack.c.l.b16 %v50
    %v77 = vunpack.c.h.b16 %v50
    %v78 = vunpack.c.l.b16 %v51
    %v79 = vunpack.c.h.b16 %v51
    %v80 = vunpack.c.l.b16 %v52
    %v81 = vunpack.c.h.b16 %v52
    %v82 = vunpack.c.l.b16 %v53
    %v83 = vunpack.c.h.b16 %v53
    %v84 = vpack.c.b16 %v78, %v76
    %v85 = vpack.c.b16 %v79, %v77
    %v86 = vpack.c.b16 %v82, %v80
    %v87 = vpack.c.b16 %v83, %v81
    %v108 = vunpack.c.l.b16 %v54
    %v109 = vunpack.c.l.b16 %v55
    %v110 = vunpack.c.l.b16 %v56
    %v111 = vunpack.c.l.b16 %v57
    %v112 = vunpack.c.l.b16 %v58
    %v113 = vunpack.c.l.b16 %v59
    %v114 = vunpack.c.l.b16 %v60
    %v115 = vunpack.c.l.b16 %v61
    %v116 = vunpack.c.l.b16 %v62
    %v117 = vunpack.c.l.b16 %v63
    %v118 = vunpack.c.l.b16 %v64
    %v119 = vunpack.c.l.b16 %v65
    %v120 = vunpack.c.l.b16 %v66
    %v121 = vunpack.c.l.b16 %v67
    %v122 = vunpack.c.l.b16 %v68
    %v123 = vunpack.c.l.b16 %v69
    %v124 = vunpack.c.l.b16 %v70
    %v125 = vunpack.c.l.b16 %v71
    %v126 = vpack.c.b16 %v109, %v108
    %v127 = vpack.c.b16 %v111, %v110
    %v128 = vpack.c.b16 %v113, %v112
    %v129 = vpack.c.b16 %v115, %v114
    %v130 = vpack.c.b16 %v117, %v116
    %v131 = vpack.c.b16 %v119, %v118
    %v132 = vpack.c.b16 %v121, %v120
    %v133 = vpack.c.b16 %v123, %v122
    %v134 = vpack.c.b16 %v125, %v124
    %vm144 = vcmask 130048
    %v146 = vsel %vm144, %v85, 0
    %v149 = vsel %vm144, %v87, 0
    %151 = vmatprep.subr.bf16.mxu0 0
    %152 = vmatpush1.bf16.msra.mxu0 %v133
    %153 = vmatprep.subr.bf16.mxu0 0
    %154 = vmatpush1.bf16.msra.mxu0 %v132
    %155 = vmatprep.subr.bf16.mxu0 0
    %156 = vmatpush1.bf16.msra.mxu0 %v131
    %157 = vmatprep.subr.bf16.mxu0 0
    %158 = vmatpush1.bf16.msra.mxu0 %v130
    %159 = vmatprep.subr.bf16.mxu0 0
    %160 = vmatpush1.bf16.msra.mxu0 %v129
    %161 = vmatprep.subr.bf16.mxu0 0
    %162 = vmatpush1.bf16.msra.mxu0 %v128
    %163 = vmatprep.subr.bf16.mxu0 0
    %164 = vmatpush1.bf16.msra.mxu0 %v127
    %165 = vmatprep.subr.bf16.mxu0 0
    %166 = vmatpush1.bf16.msra.mxu0 %v126
    %167 = vmatprep.subr.bf16.mxu0 0
    %168 = vmatpush2.bf16.msra.mxu0 0
    %169 = vmatprep.subr.bf16.mxu0 0
    %170 = vmatpush2.bf16.msra.mxu0 0
    %171 = vmatprep.subr.bf16.mxu0 0
    %172 = vmatpush2.bf16.msra.mxu0 0
    %173 = vmatprep.subr.bf16.mxu0 0
    %174 = vmatpush2.bf16.msra.mxu0 0
    %175 = vmatprep.subr.bf16.mxu0 0
    %176 = vmatpush2.bf16.msra.mxu0 0
    %177 = vmatprep.subr.bf16.mxu0 0
    %178 = vmatpush2.bf16.msra.mxu0 0
    %179 = vmatprep.subr.bf16.mxu0 0
    %180 = vmatpush2.bf16.msra.mxu0 0
    %181 = vmatprep.subr.bf16.mxu0 0
    %182 = vmatpush2.bf16.msra.mxu0 %v134
    %183 = vmatprep.mubr.bf16.mxu0 %v146
    %184 = vmatmul.mubr.bf16.gmra.mxu0 %v84
    %v185 = vpop.f32.mrf.mxu0
    %v186 = vadd.f32 0.0, %v185
    %v187 = vpop.f32.mrf.mxu0
    %v188 = vpop.f32.mrf.mxu0
    %v189 = vadd.f32 0.0, %v188
    %v190 = vpop.f32.mrf.mxu0
    %191 = vmatprep.mubr.bf16.mxu0 %v149
    %192 = vmatmul.mubr.bf16.gmra.mxu0 %v86
    %v193 = vpop.f32.mrf.mxu0
    %v194 = vadd.f32 0.0, %v193
    %v195 = vpop.f32.mrf.mxu0
    %v196 = vpop.f32.mrf.mxu0
    %v197 = vadd.f32 0.0, %v196
    %v198 = vpop.f32.mrf.mxu0
    %199 = vdwg.mxu0
    %200 = vst [vmem:[%s5] sm:$0xff] %v186
    %201 = vst [vmem:[%s5 + $0x8] sm:$0xff] %v189
    %202 = vst [vmem:[%s5 + $0x10] sm:$0xff] %v194
    %203 = vst [vmem:[%s5 + $0x18] sm:$0xff] %v197
    %s204 = sld [smem:[#allocation2]]
    %vm205 = vcmp.gt.f32.partialorder %v186, 0.0
    %vm206 = vcmp.gt.f32.partialorder %v189, 0.0
    %vm207 = vcmp.gt.f32.partialorder %v194, 0.0
    %vm208 = vcmp.gt.f32.partialorder %v197, 0.0
    %v209 = vstv %s204
    %v210 = vmul.f32 %v209, %v186
    %v211 = vmul.f32 %v209, %v189
    %v212 = vmul.f32 %v209, %v194
    %v213 = vmul.f32 %v209, %v197
    %v214 = vsel %vm205, %v186, %v210
    %v215 = vsel %vm206, %v189, %v211
    %v216 = vsel %vm207, %v194, %v212
    %v217 = vsel %vm208, %v197, %v213
    %v218 = vld [vmem:[%s2] sm:$0x1]
    %v220 = vlaneseq
    %v221 = vshrl.u32 %v220, 7
    %v222 = vsub.s32 0, %v221
    %v223 = vrot.slane %v218, %v222
    %v225 = vmul.f32 %v214, %v223
    %v226 = vmul.f32 %v215, %v223
    %v227 = vmul.f32 %v216, %v223
    %v228 = vmul.f32 %v217, %v223
    %v229 = vld [vmem:[#allocation5] sm:$0x1]
    %v231 = vlaneseq
    %v232 = vshrl.u32 %v231, 7
    %v233 = vsub.s32 0, %v232
    %v234 = vrot.slane %v229, %v233
    %v236 = vadd.f32 %v225, %v234
    %v237 = vadd.f32 %v226, %v234
    %v238 = vadd.f32 %v227, %v234
    %v239 = vadd.f32 %v228, %v234
    %240 = vst [vmem:[%s6] sm:$0xff] %v236
    %241 = vst [vmem:[%s6 + $0x8] sm:$0xff] %v237
    %242 = vst [vmem:[%s6 + $0x10] sm:$0xff] %v238
    %243 = vst [vmem:[%s6 + $0x18] sm:$0xff] %v239
    // Predicated region
    $region30: #{forward.12} parent=1 // pred_check
      _
    $region31: #{forward.12} parent=1 // pred_check_branch
      %245 = sbr.rel (0) target = $region33
    $region32: #{forward.12} parent=1 // pred_region
      _
    $region33: #{forward.12} parent=1 // pred_fallthru
      _
    // Predicated region
    $region34: #{forward.12} parent=1 // pred_check
      _
    $region35: #{forward.12} parent=1 // pred_check_branch
      %247 = sbr.rel (0) target = $region37
    $region36: #{forward.12} parent=1 // pred_region
      _
    $region37: #{forward.12} parent=1 // pred_fallthru
      _
    // Predicated region
    $region38: #{forward.12} parent=1 // pred_check
      _
    $region39: #{forward.12} parent=1 // pred_check_branch
      %249 = sbr.rel (0) target = $region41
    $region40: #{forward.12} parent=1 // pred_region
      _
    $region41: #{forward.12} parent=1 // pred_fallthru
      _
    // Predicated region
    $region42: #{forward.12} parent=1 // pred_check
      _
    $region43: #{forward.12} parent=1 // pred_check_branch
      %251 = sbr.rel (0) target = $region45
    $region44: #{forward.12} parent=1 // pred_region
      _
    $region45: #{forward.12} parent=1 // pred_fallthru
      _
    %252 = vsyncpa [#allocation4], 1
    %253 = vsyncpa [#allocation6], 1

// kernel: forward.13
$region0: #{forward.13}
  #allocation0 [shape = 'u32[]', space=smem, size = 0x4, offset = 0x4, fixed_abs, tag = 'smem constant byte address 0x4 - core index']
  #allocation1 [shape = 'u32[144,128]{1,0:T(1,128)}', space=vmem, size = 0x12000, scoped, tag = 'internal scratch']
  #allocation2 [shape = 'f32[1]{0:T(128)S(6)}', space=smem, size = 0x200, scoped, tag = 'scoped memory for forward.13']
  %s0 = inlined_call_operand.vmem [shape: bf16[16,384], index: 0, kind: input, shape index: {}]
  %s1 = inlined_call_operand.vmem [shape: bf16[384,128], index: 1, kind: input, shape index: {}]
  %s2 = inlined_call_operand.hbm [shape: f32[1,128], index: 2, kind: input, shape index: {}]
  %s3 = inlined_call_operand.hbm [shape: f32[1,128], index: 3, kind: input, shape index: {}]
  %s4 = inlined_call_operand.<no memory space> [shape: f32[1], index: 4, kind: input, shape index: {}]
  %s5 = inlined_call_operand.vmem [shape: f32[16,128], index: 5, kind: output, shape index: {}]
  %s6 = sld [smem:[#allocation0]]
  $region38: #{forward.13} parent=0
    _
  %s8 = ssub.s32 1, %s6
  %s9 = scalar_select 0, %s8, %s6
  %10 = sst [smem:[#allocation2]] %s4
  $region1: #{forward.13} parent=0
    #allocation3 [shape = 'u8[512]{0}', space=vmem, size = 0x400, scoped, tag = 'input window, operand 2, single buffered']
    #allocation4 [shape = 's32[1]{0}', space=sflag, size = 0x4, scoped, tag = 'scoped memory for forward.13']
    #allocation5 [shape = 'u8[512]{0}', space=vmem, size = 0x400, scoped, tag = 'input window, operand 3, single buffered']
    #allocation6 [shape = 's32[1]{0}', space=sflag, size = 0x4, scoped, tag = 'scoped memory for forward.13']
    %11 = vsyncpa [#allocation4], 0
    %12 = vsyncpa [#allocation6], 0
    // Predicated region
    $region2: #{forward.13} parent=1 // pred_check
      _
    $region3: #{forward.13} parent=1 // pred_check_branch
      %14 = sbr.rel (0) target = $region5
    $region4: #{forward.13} parent=1 // pred_region
      _
    $region5: #{forward.13} parent=1 // pred_fallthru
      _
    // Predicated region
    $region6: #{forward.13} parent=1 // pred_check
      _
    $region7: #{forward.13} parent=1 // pred_check_branch
      %16 = sbr.rel (0) target = $region9
    $region8: #{forward.13} parent=1 // pred_region
      _
    $region9: #{forward.13} parent=1 // pred_fallthru
      _
    // Predicated region
    $region10: #{forward.13} parent=1 // pred_check
      _
    $region11: #{forward.13} parent=1 // pred_check_branch
      %18 = sbr.rel (0) target = $region13
    $region12: #{forward.13} parent=1 // pred_region
      %s20 = ssub.s32 16, 16
      %21 = vsyncadd [#allocation4], %s20
      %s23 = sshll.u32 [#allocation3], 4
      %s24 = int_to_ptr.vmem [resolvable:$true] %s23
      %26 = dma.hbm_to_vmem [thread:$0]  %s2, 16, %s24, [#allocation4]
    $region13: #{forward.13} parent=1 // pred_fallthru
      _
    // Predicated region
    $region14: #{forward.13} parent=1 // pred_check
      _
    $region15: #{forward.13} parent=1 // pred_check_branch
      %28 = sbr.rel (0) target = $region17
    $region16: #{forward.13} parent=1 // pred_region
      %s30 = ssub.s32 16, 16
      %31 = vsyncadd [#allocation6], %s30
      %s33 = sshll.u32 [#allocation5], 4
      %s34 = int_to_ptr.vmem [resolvable:$true] %s33
      %36 = dma.hbm_to_vmem [thread:$0]  %s3, 16, %s34, [#allocation6]
    $region17: #{forward.13} parent=1 // pred_fallthru
      _
    // Predicated region
    $region18: #{forward.13} parent=1 // pred_check
      _
    $region19: #{forward.13} parent=1 // pred_check_branch
      %38 = sbr.rel (0) target = $region21
    $region20: #{forward.13} parent=1 // pred_region
      _
    $region21: #{forward.13} parent=1 // pred_fallthru
      _
    // Predicated region
    $region22: #{forward.13} parent=1 // pred_check
      _
    $region23: #{forward.13} parent=1 // pred_check_branch
      %40 = sbr.rel (0) target = $region25
    $region24: #{forward.13} parent=1 // pred_region
      %41 = dma.done [#allocation4], 16
    $region25: #{forward.13} parent=1 // pred_fallthru
      _
    // Predicated region
    $region26: #{forward.13} parent=1 // pred_check
      _
    $region27: #{forward.13} parent=1 // pred_check_branch
      %43 = sbr.rel (0) target = $region29
    $region28: #{forward.13} parent=1 // pred_region
      %44 = dma.done [#allocation6], 16
    $region29: #{forward.13} parent=1 // pred_fallthru
      _
    %v46 = vld [vmem:[%s0] sm:$0xff]
    %v47 = vld [vmem:[%s0 + $0x8] sm:$0xf]
    %v48 = vld [vmem:[%s0 + $0xc] sm:$0xff]
    %v49 = vld [vmem:[%s0 + $0x14] sm:$0xf]
    %v50 = vld [vmem:[%s1] sm:$0xf]
    %v51 = vld [vmem:[%s1 + $0x4] sm:$0xf]
    %v52 = vld [vmem:[%s1 + $0x8] sm:$0xf]
    %v53 = vld [vmem:[%s1 + $0xc] sm:$0xf]
    %v54 = vld [vmem:[%s1 + $0x10] sm:$0xf]
    %v55 = vld [vmem:[%s1 + $0x14] sm:$0xf]
    %v56 = vld [vmem:[%s1 + $0x18] sm:$0xf]
    %v57 = vld [vmem:[%s1 + $0x1c] sm:$0xf]
    %v58 = vld [vmem:[%s1 + $0x20] sm:$0xf]
    %v59 = vld [vmem:[%s1 + $0x24] sm:$0xf]
    %v60 = vld [vmem:[%s1 + $0x28] sm:$0xf]
    %v61 = vld [vmem:[%s1 + $0x2c] sm:$0xf]
    %v62 = vld [vmem:[%s1 + $0x30] sm:$0xf]
    %v63 = vld [vmem:[%s1 + $0x34] sm:$0xf]
    %v64 = vld [vmem:[%s1 + $0x38] sm:$0xf]
    %v65 = vld [vmem:[%s1 + $0x3c] sm:$0xf]
    %v66 = vld [vmem:[%s1 + $0x40] sm:$0xf]
    %v67 = vld [vmem:[%s1 + $0x44] sm:$0xf]
    %v68 = vld [vmem:[%s1 + $0x48] sm:$0xf]
    %v69 = vld [vmem:[%s1 + $0x4c] sm:$0xf]
    %v70 = vld [vmem:[%s1 + $0x50] sm:$0xf]
    %v71 = vld [vmem:[%s1 + $0x54] sm:$0xf]
    %v72 = vld [vmem:[%s1 + $0x58] sm:$0xf]
    %v73 = vld [vmem:[%s1 + $0x5c] sm:$0xf]
    %v74 = vld [vmem:[%s1 + $0x60] sm:$0xf]
    %v75 = vld [vmem:[%s1 + $0x64] sm:$0xf]
    %v76 = vld [vmem:[%s1 + $0x68] sm:$0xf]
    %v77 = vld [vmem:[%s1 + $0x6c] sm:$0xf]
    %v78 = vld [vmem:[%s1 + $0x70] sm:$0xf]
    %v79 = vld [vmem:[%s1 + $0x74] sm:$0xf]
    %v80 = vld [vmem:[%s1 + $0x78] sm:$0xf]
    %v81 = vld [vmem:[%s1 + $0x7c] sm:$0xf]
    %v82 = vld [vmem:[%s1 + $0x80] sm:$0xf]
    %v83 = vld [vmem:[%s1 + $0x84] sm:$0xf]
    %v84 = vld [vmem:[%s1 + $0x88] sm:$0xf]
    %v85 = vld [vmem:[%s1 + $0x8c] sm:$0xf]
    %v86 = vld [vmem:[%s1 + $0x90] sm:$0xf]
    %v87 = vld [vmem:[%s1 + $0x94] sm:$0xf]
    %v88 = vld [vmem:[%s1 + $0x98] sm:$0xf]
    %v89 = vld [vmem:[%s1 + $0x9c] sm:$0xf]
    %v90 = vld [vmem:[%s1 + $0xa0] sm:$0xf]
    %v91 = vld [vmem:[%s1 + $0xa4] sm:$0xf]
    %v92 = vld [vmem:[%s1 + $0xa8] sm:$0xf]
    %v93 = vld [vmem:[%s1 + $0xac] sm:$0xf]
    %v94 = vld [vmem:[%s1 + $0xb0] sm:$0xf]
    %v95 = vld [vmem:[%s1 + $0xb4] sm:$0xf]
    %v96 = vld [vmem:[%s1 + $0xb8] sm:$0xf]
    %v97 = vld [vmem:[%s1 + $0xbc] sm:$0xf]
    %v102 = vunpack.c.l.b16 %v46
    %v103 = vunpack.c.h.b16 %v46
    %v104 = vunpack.c.l.b16 %v47
    %v105 = vunpack.c.l.b16 %v48
    %v106 = vunpack.c.h.b16 %v48
    %v107 = vunpack.c.l.b16 %v49
    %v108 = vpack.c.b16 %v105, %v102
    %v109 = vpack.c.b16 %v106, %v103
    %v110 = vpack.c.b16 %v107, %v104
    %v162 = vunpack.c.l.b16 %v50
    %v163 = vunpack.c.l.b16 %v51
    %v164 = vunpack.c.l.b16 %v52
    %v165 = vunpack.c.l.b16 %v53
    %v166 = vunpack.c.l.b16 %v54
    %v167 = vunpack.c.l.b16 %v55
    %v168 = vunpack.c.l.b16 %v56
    %v169 = vunpack.c.l.b16 %v57
    %v170 = vunpack.c.l.b16 %v58
    %v171 = vunpack.c.l.b16 %v59
    %v172 = vunpack.c.l.b16 %v60
    %v173 = vunpack.c.l.b16 %v61
    %v174 = vunpack.c.l.b16 %v62
    %v175 = vunpack.c.l.b16 %v63
    %v176 = vunpack.c.l.b16 %v64
    %v177 = vunpack.c.l.b16 %v65
    %v178 = vunpack.c.l.b16 %v66
    %v179 = vunpack.c.l.b16 %v67
    %v180 = vunpack.c.l.b16 %v68
    %v181 = vunpack.c.l.b16 %v69
    %v182 = vunpack.c.l.b16 %v70
    %v183 = vunpack.c.l.b16 %v71
    %v184 = vunpack.c.l.b16 %v72
    %v185 = vunpack.c.l.b16 %v73
    %v186 = vunpack.c.l.b16 %v74
    %v187 = vunpack.c.l.b16 %v75
    %v188 = vunpack.c.l.b16 %v76
    %v189 = vunpack.c.l.b16 %v77
    %v190 = vunpack.c.l.b16 %v78
    %v191 = vunpack.c.l.b16 %v79
    %v192 = vunpack.c.l.b16 %v80
    %v193 = vunpack.c.l.b16 %v81
    %v194 = vunpack.c.l.b16 %v82
    %v195 = vunpack.c.l.b16 %v83
    %v196 = vunpack.c.l.b16 %v84
    %v197 = vunpack.c.l.b16 %v85
    %v198 = vunpack.c.l.b16 %v86
    %v199 = vunpack.c.l.b16 %v87
    %v200 = vunpack.c.l.b16 %v88
    %v201 = vunpack.c.l.b16 %v89
    %v202 = vunpack.c.l.b16 %v90
    %v203 = vunpack.c.l.b16 %v91
    %v204 = vunpack.c.l.b16 %v92
    %v205 = vunpack.c.l.b16 %v93
    %v206 = vunpack.c.l.b16 %v94
    %v207 = vunpack.c.l.b16 %v95
    %v208 = vunpack.c.l.b16 %v96
    %v209 = vunpack.c.l.b16 %v97
    %v210 = vpack.c.b16 %v163, %v162
    %v211 = vpack.c.b16 %v165, %v164
    %v212 = vpack.c.b16 %v167, %v166
    %v213 = vpack.c.b16 %v169, %v168
    %v214 = vpack.c.b16 %v171, %v170
    %v215 = vpack.c.b16 %v173, %v172
    %v216 = vpack.c.b16 %v175, %v174
    %v217 = vpack.c.b16 %v177, %v176
    %v218 = vpack.c.b16 %v179, %v178
    %v219 = vpack.c.b16 %v181, %v180
    %v220 = vpack.c.b16 %v183, %v182
    %v221 = vpack.c.b16 %v185, %v184
    %v222 = vpack.c.b16 %v187, %v186
    %v223 = vpack.c.b16 %v189, %v188
    %v224 = vpack.c.b16 %v191, %v190
    %v225 = vpack.c.b16 %v193, %v192
    %v226 = vpack.c.b16 %v195, %v194
    %v227 = vpack.c.b16 %v197, %v196
    %v228 = vpack.c.b16 %v199, %v198
    %v229 = vpack.c.b16 %v201, %v200
    %v230 = vpack.c.b16 %v203, %v202
    %v231 = vpack.c.b16 %v205, %v204
    %v232 = vpack.c.b16 %v207, %v206
    %v233 = vpack.c.b16 %v209, %v208
    %258 = vmatprep.subr.bf16.mxu0 0
    %259 = vmatpush1.bf16.msra.mxu0 %v217
    %260 = vmatprep.subr.bf16.mxu0 0
    %261 = vmatpush1.bf16.msra.mxu0 %v216
    %262 = vmatprep.subr.bf16.mxu0 0
    %263 = vmatpush1.bf16.msra.mxu0 %v215
    %264 = vmatprep.subr.bf16.mxu0 0
    %265 = vmatpush1.bf16.msra.mxu0 %v214
    %266 = vmatprep.subr.bf16.mxu0 0
    %267 = vmatpush1.bf16.msra.mxu0 %v213
    %268 = vmatprep.subr.bf16.mxu0 0
    %269 = vmatpush1.bf16.msra.mxu0 %v212
    %270 = vmatprep.subr.bf16.mxu0 0
    %271 = vmatpush1.bf16.msra.mxu0 %v211
    %272 = vmatprep.subr.bf16.mxu0 0
    %273 = vmatpush1.bf16.msra.mxu0 %v210
    %274 = vmatprep.subr.bf16.mxu0 0
    %275 = vmatpush2.bf16.msra.mxu0 %v225
    %276 = vmatprep.subr.bf16.mxu0 0
    %277 = vmatpush2.bf16.msra.mxu0 %v224
    %278 = vmatprep.subr.bf16.mxu0 0
    %279 = vmatpush2.bf16.msra.mxu0 %v223
    %280 = vmatprep.subr.bf16.mxu0 0
    %281 = vmatpush2.bf16.msra.mxu0 %v222
    %282 = vmatprep.subr.bf16.mxu0 0
    %283 = vmatpush2.bf16.msra.mxu0 %v221
    %284 = vmatprep.subr.bf16.mxu0 0
    %285 = vmatpush2.bf16.msra.mxu0 %v220
    %286 = vmatprep.subr.bf16.mxu0 0
    %287 = vmatpush2.bf16.msra.mxu0 %v219
    %288 = vmatprep.subr.bf16.mxu0 0
    %289 = vmatpush2.bf16.msra.mxu0 %v218
    %290 = vmatprep.mubr.bf16.mxu0 %v109
    %291 = vmatmul.mubr.bf16.gmra.mxu0 %v108
    %v292 = vpop.f32.mrf.mxu0
    %v293 = vadd.f32 0.0, %v292
    %v294 = vpop.f32.mrf.mxu0
    %v295 = vpop.f32.mrf.mxu0
    %v296 = vadd.f32 0.0, %v295
    %v297 = vpop.f32.mrf.mxu0
    %298 = vdwg.mxu0
    %299 = vmatprep.subr.bf16.mxu0 0
    %300 = vmatpush1.bf16.msra.mxu0 %v233
    %301 = vmatprep.subr.bf16.mxu0 0
    %302 = vmatpush1.bf16.msra.mxu0 %v232
    %303 = vmatprep.subr.bf16.mxu0 0
    %304 = vmatpush1.bf16.msra.mxu0 %v231
    %305 = vmatprep.subr.bf16.mxu0 0
    %306 = vmatpush1.bf16.msra.mxu0 %v230
    %307 = vmatprep.subr.bf16.mxu0 0
    %308 = vmatpush1.bf16.msra.mxu0 %v229
    %309 = vmatprep.subr.bf16.mxu0 0
    %310 = vmatpush1.bf16.msra.mxu0 %v228
    %311 = vmatprep.subr.bf16.mxu0 0
    %312 = vmatpush1.bf16.msra.mxu0 %v227
    %313 = vmatprep.subr.bf16.mxu0 0
    %314 = vmatpush1.bf16.msra.mxu0 %v226
    %315 = vmatprep.subr.bf16.mxu0 0
    %316 = vmatpush2.bf16.msra.mxu0 0
    %317 = vmatprep.subr.bf16.mxu0 0
    %318 = vmatpush2.bf16.msra.mxu0 0
    %319 = vmatprep.subr.bf16.mxu0 0
    %320 = vmatpush2.bf16.msra.mxu0 0
    %321 = vmatprep.subr.bf16.mxu0 0
    %322 = vmatpush2.bf16.msra.mxu0 0
    %323 = vmatprep.subr.bf16.mxu0 0
    %324 = vmatpush2.bf16.msra.mxu0 0
    %325 = vmatprep.subr.bf16.mxu0 0
    %326 = vmatpush2.bf16.msra.mxu0 0
    %327 = vmatprep.subr.bf16.mxu0 0
    %328 = vmatpush2.bf16.msra.mxu0 0
    %329 = vmatprep.subr.bf16.mxu0 0
    %330 = vmatpush2.bf16.msra.mxu0 0
    %331 = vmatprep.mubr.bf16.mxu0 0
    %332 = vmatmul.mubr.bf16.gmra.mxu0 %v110
    %v333 = vpop.f32.mrf.mxu0
    %v334 = vadd.f32 %v293, %v333
    %v335 = vpop.f32.mrf.mxu0
    %v336 = vpop.f32.mrf.mxu0
    %v337 = vadd.f32 %v296, %v336
    %v338 = vpop.f32.mrf.mxu0
    %339 = vdwg.mxu0
    %s340 = sld [smem:[#allocation2]]
    %vm341 = vcmp.gt.f32.partialorder %v334, 0.0
    %vm342 = vcmp.gt.f32.partialorder %v337, 0.0
    %v343 = vstv %s340
    %v344 = vmul.f32 %v343, %v334
    %v345 = vmul.f32 %v343, %v337
    %v346 = vsel %vm341, %v334, %v344
    %v347 = vsel %vm342, %v337, %v345
    %v348 = vld [vmem:[#allocation3] sm:$0x1]
    %v350 = vlaneseq
    %v351 = vshrl.u32 %v350, 7
    %v352 = vsub.s32 0, %v351
    %v353 = vrot.slane %v348, %v352
    %v355 = vmul.f32 %v346, %v353
    %v356 = vmul.f32 %v347, %v353
    %v357 = vld [vmem:[#allocation5] sm:$0x1]
    %v359 = vlaneseq
    %v360 = vshrl.u32 %v359, 7
    %v361 = vsub.s32 0, %v360
    %v362 = vrot.slane %v357, %v361
    %v364 = vadd.f32 %v355, %v362
    %v365 = vadd.f32 %v356, %v362
    %366 = vst [vmem:[%s5] sm:$0xff] %v364
    %367 = vst [vmem:[%s5 + $0x8] sm:$0xff] %v365
    // Predicated region
    $region30: #{forward.13} parent=1 // pred_check
      _
    $region31: #{forward.13} parent=1 // pred_check_branch
      %369 = sbr.rel (0) target = $region33
    $region32: #{forward.13} parent=1 // pred_region
      _
    $region33: #{forward.13} parent=1 // pred_fallthru
      _
    // Predicated region
    $region34: #{forward.13} parent=1 // pred_check
      _
    $region35: #{forward.13} parent=1 // pred_check_branch
      %371 = sbr.rel (0) target = $region37
    $region36: #{forward.13} parent=1 // pred_region
      _
    $region37: #{forward.13} parent=1 // pred_fallthru
      _
    %372 = vsyncpa [#allocation4], 1
    %373 = vsyncpa [#allocation6], 1

// kernel: forward.14
$region0: #{forward.14}
  #allocation0 [shape = 'u32[]', space=smem, size = 0x4, offset = 0x4, fixed_abs, tag = 'smem constant byte address 0x4 - core index']
  #allocation1 [shape = 'u32[144,128]{1,0:T(1,128)}', space=vmem, size = 0x12000, scoped, tag = 'internal scratch']
  #allocation2 [shape = 'f32[1]{0:T(128)S(6)}', space=smem, size = 0x200, scoped, tag = 'scoped memory for forward.14']
  %s0 = inlined_call_operand.vmem [shape: bf16[8,384], index: 0, kind: input, shape index: {}]
  %s1 = inlined_call_operand.hbm [shape: bf16[384,128], index: 1, kind: input, shape index: {}]
  %s2 = inlined_call_operand.hbm [shape: f32[1,128], index: 2, kind: input, shape index: {}]
  %s3 = inlined_call_operand.hbm [shape: f32[1,128], index: 3, kind: input, shape index: {}]
  %s4 = inlined_call_operand.<no memory space> [shape: f32[1], index: 4, kind: input, shape index: {}]
  %s5 = inlined_call_operand.vmem [shape: f32[8,128], index: 5, kind: output, shape index: {0}]
  %s6 = inlined_call_operand.vmem [shape: f32[8,128], index: 6, kind: output, shape index: {1}]
  %7 = xla_tuple %s5, %s6
  %s8 = sld [smem:[#allocation0]]
  $region50: #{forward.14} parent=0
    _
  %s10 = ssub.s32 1, %s8
  %s11 = scalar_select 0, %s10, %s8
  %12 = sst [smem:[#allocation2]] %s4
  $region1: #{forward.14} parent=0
    #allocation3 [shape = 'u8[98304]{0}', space=vmem, size = 0x18000, scoped, tag = 'input window, operand 1, single buffered']
    #allocation4 [shape = 's32[1]{0}', space=sflag, size = 0x4, scoped, tag = 'scoped memory for forward.14']
    #allocation5 [shape = 'u8[512]{0}', space=vmem, size = 0x400, scoped, tag = 'input window, operand 2, single buffered']
    #allocation6 [shape = 's32[1]{0}', space=sflag, size = 0x4, scoped, tag = 'scoped memory for forward.14']
    #allocation7 [shape = 'u8[512]{0}', space=vmem, size = 0x400, scoped, tag = 'input window, operand 3, single buffered']
    %13 = vsyncpa [#allocation4], 0
    %14 = vsyncpa [#allocation6], 0
    // Predicated region
    $region2: #{forward.14} parent=1 // pred_check
      _
    $region3: #{forward.14} parent=1 // pred_check_branch
      %16 = sbr.rel (0) target = $region5
    $region4: #{forward.14} parent=1 // pred_region
      _
    $region5: #{forward.14} parent=1 // pred_fallthru
      _
    // Predicated region
    $region6: #{forward.14} parent=1 // pred_check
      _
    $region7: #{forward.14} parent=1 // pred_check_branch
      %18 = sbr.rel (0) target = $region9
    $region8: #{forward.14} parent=1 // pred_region
      %s20 = ssub.s32 3072, 3072
      %21 = vsyncadd [#allocation4], %s20
      %s22 = sshll.u32 [#allocation3], 4
      %s23 = int_to_ptr.vmem [resolvable:$true] %s22
      %28 = dma.hbm_to_vmem [thread:$0]  %s1, 3072, %s23, [#allocation4], 64, 64, 4
    $region9: #{forward.14} parent=1 // pred_fallthru
      _
    // Predicated region
    $region10: #{forward.14} parent=1 // pred_check
      _
    $region11: #{forward.14} parent=1 // pred_check_branch
      %30 = sbr.rel (0) target = $region13
    $region12: #{forward.14} parent=1 // pred_region
      %s32 = ssub.s32 16, 16
      %33 = vsyncadd [#allocation6], %s32
      %s35 = sshll.u32 [#allocation5], 4
      %s36 = int_to_ptr.vmem [resolvable:$true] %s35
      %38 = dma.hbm_to_vmem [thread:$0]  %s2, 16, %s36, [#allocation6]
    $region13: #{forward.14} parent=1 // pred_fallthru
      _
    // Predicated region
    $region14: #{forward.14} parent=1 // pred_check
      _
    $region15: #{forward.14} parent=1 // pred_check_branch
      %40 = sbr.rel (0) target = $region17
    $region16: #{forward.14} parent=1 // pred_region
      %s42 = ssub.s32 16, 16
      %43 = vsyncadd [#allocation6], %s42
      %s45 = sshll.u32 [#allocation7], 4
      %s46 = int_to_ptr.vmem [resolvable:$true] %s45
      %48 = dma.hbm_to_vmem [thread:$0]  %s3, 16, %s46, [#allocation6]
    $region17: #{forward.14} parent=1 // pred_fallthru
      _
    // Predicated region
    $region18: #{forward.14} parent=1 // pred_check
      _
    $region19: #{forward.14} parent=1 // pred_check_branch
      %50 = sbr.rel (0) target = $region21
    $region20: #{forward.14} parent=1 // pred_region
      _
    $region21: #{forward.14} parent=1 // pred_fallthru
      _
    // Predicated region
    $region22: #{forward.14} parent=1 // pred_check
      _
    $region23: #{forward.14} parent=1 // pred_check_branch
      %52 = sbr.rel (0) target = $region25
    $region24: #{forward.14} parent=1 // pred_region
      %53 = dma.done [#allocation4], 3072
    $region25: #{forward.14} parent=1 // pred_fallthru
      _
    // Predicated region
    $region26: #{forward.14} parent=1 // pred_check
      _
    $region27: #{forward.14} parent=1 // pred_check_branch
      %55 = sbr.rel (0) target = $region29
    $region28: #{forward.14} parent=1 // pred_region
      %56 = dma.done [#allocation6], 16
    $region29: #{forward.14} parent=1 // pred_fallthru
      _
    // Predicated region
    $region30: #{forward.14} parent=1 // pred_check
      _
    $region31: #{forward.14} parent=1 // pred_check_branch
      %58 = sbr.rel (0) target = $region33
    $region32: #{forward.14} parent=1 // pred_region
      %59 = dma.done [#allocation6], 16
    $region33: #{forward.14} parent=1 // pred_fallthru
      _
    %v61 = vld [vmem:[%s0] sm:$0xff]
    %v62 = vld [vmem:[%s0 + $0x8] sm:$0xf]
    %v63 = vld [vmem:[#allocation3] sm:$0xf]
    %v64 = vld [vmem:[#allocation3 + $0x4] sm:$0xf]
    %v65 = vld [vmem:[#allocation3 + $0x8] sm:$0xf]
    %v66 = vld [vmem:[#allocation3 + $0xc] sm:$0xf]
    %v67 = vld [vmem:[#allocation3 + $0x10] sm:$0xf]
    %v68 = vld [vmem:[#allocation3 + $0x14] sm:$0xf]
    %v69 = vld [vmem:[#allocation3 + $0x18] sm:$0xf]
    %v70 = vld [vmem:[#allocation3 + $0x1c] sm:$0xf]
    %v71 = vld [vmem:[#allocation3 + $0x20] sm:$0xf]
    %v72 = vld [vmem:[#allocation3 + $0x24] sm:$0xf]
    %v73 = vld [vmem:[#allocation3 + $0x28] sm:$0xf]
    %v74 = vld [vmem:[#allocation3 + $0x2c] sm:$0xf]
    %v75 = vld [vmem:[#allocation3 + $0x30] sm:$0xf]
    %v76 = vld [vmem:[#allocation3 + $0x34] sm:$0xf]
    %v77 = vld [vmem:[#allocation3 + $0x38] sm:$0xf]
    %v78 = vld [vmem:[#allocation3 + $0x3c] sm:$0xf]
    %v79 = vld [vmem:[#allocation3 + $0x40] sm:$0xf]
    %v80 = vld [vmem:[#allocation3 + $0x44] sm:$0xf]
    %v81 = vld [vmem:[#allocation3 + $0x48] sm:$0xf]
    %v82 = vld [vmem:[#allocation3 + $0x4c] sm:$0xf]
    %v83 = vld [vmem:[#allocation3 + $0x50] sm:$0xf]
    %v84 = vld [vmem:[#allocation3 + $0x54] sm:$0xf]
    %v85 = vld [vmem:[#allocation3 + $0x58] sm:$0xf]
    %v86 = vld [vmem:[#allocation3 + $0x5c] sm:$0xf]
    %v87 = vld [vmem:[#allocation3 + $0x60] sm:$0xf]
    %v88 = vld [vmem:[#allocation3 + $0x64] sm:$0xf]
    %v89 = vld [vmem:[#allocation3 + $0x68] sm:$0xf]
    %v90 = vld [vmem:[#allocation3 + $0x6c] sm:$0xf]
    %v91 = vld [vmem:[#allocation3 + $0x70] sm:$0xf]
    %v92 = vld [vmem:[#allocation3 + $0x74] sm:$0xf]
    %v93 = vld [vmem:[#allocation3 + $0x78] sm:$0xf]
    %v94 = vld [vmem:[#allocation3 + $0x7c] sm:$0xf]
    %v95 = vld [vmem:[#allocation3 + $0x80] sm:$0xf]
    %v96 = vld [vmem:[#allocation3 + $0x84] sm:$0xf]
    %v97 = vld [vmem:[#allocation3 + $0x88] sm:$0xf]
    %v98 = vld [vmem:[#allocation3 + $0x8c] sm:$0xf]
    %v99 = vld [vmem:[#allocation3 + $0x90] sm:$0xf]
    %v100 = vld [vmem:[#allocation3 + $0x94] sm:$0xf]
    %v101 = vld [vmem:[#allocation3 + $0x98] sm:$0xf]
    %v102 = vld [vmem:[#allocation3 + $0x9c] sm:$0xf]
    %v103 = vld [vmem:[#allocation3 + $0xa0] sm:$0xf]
    %v104 = vld [vmem:[#allocation3 + $0xa4] sm:$0xf]
    %v105 = vld [vmem:[#allocation3 + $0xa8] sm:$0xf]
    %v106 = vld [vmem:[#allocation3 + $0xac] sm:$0xf]
    %v107 = vld [vmem:[#allocation3 + $0xb0] sm:$0xf]
    %v108 = vld [vmem:[#allocation3 + $0xb4] sm:$0xf]
    %v109 = vld [vmem:[#allocation3 + $0xb8] sm:$0xf]
    %v110 = vld [vmem:[#allocation3 + $0xbc] sm:$0xf]
    %v113 = vunpack.c.l.b16 %v61
    %v114 = vunpack.c.h.b16 %v61
    %v115 = vunpack.c.l.b16 %v62
    %v116 = vpack.c.b16 %v113, %v113
    %v117 = vpack.c.b16 %v114, %v114
    %v118 = vpack.c.b16 %v115, %v115
    %v170 = vunpack.c.l.b16 %v63
    %v171 = vunpack.c.l.b16 %v64
    %v172 = vunpack.c.l.b16 %v65
    %v173 = vunpack.c.l.b16 %v66
    %v174 = vunpack.c.l.b16 %v67
    %v175 = vunpack.c.l.b16 %v68
    %v176 = vunpack.c.l.b16 %v69
    %v177 = vunpack.c.l.b16 %v70
    %v178 = vunpack.c.l.b16 %v71
    %v179 = vunpack.c.l.b16 %v72
    %v180 = vunpack.c.l.b16 %v73
    %v181 = vunpack.c.l.b16 %v74
    %v182 = vunpack.c.l.b16 %v75
    %v183 = vunpack.c.l.b16 %v76
    %v184 = vunpack.c.l.b16 %v77
    %v185 = vunpack.c.l.b16 %v78
    %v186 = vunpack.c.l.b16 %v79
    %v187 = vunpack.c.l.b16 %v80
    %v188 = vunpack.c.l.b16 %v81
    %v189 = vunpack.c.l.b16 %v82
    %v190 = vunpack.c.l.b16 %v83
    %v191 = vunpack.c.l.b16 %v84
    %v192 = vunpack.c.l.b16 %v85
    %v193 = vunpack.c.l.b16 %v86
    %v194 = vunpack.c.l.b16 %v87
    %v195 = vunpack.c.l.b16 %v88
    %v196 = vunpack.c.l.b16 %v89
    %v197 = vunpack.c.l.b16 %v90
    %v198 = vunpack.c.l.b16 %v91
    %v199 = vunpack.c.l.b16 %v92
    %v200 = vunpack.c.l.b16 %v93
    %v201 = vunpack.c.l.b16 %v94
    %v202 = vunpack.c.l.b16 %v95
    %v203 = vunpack.c.l.b16 %v96
    %v204 = vunpack.c.l.b16 %v97
    %v205 = vunpack.c.l.b16 %v98
    %v206 = vunpack.c.l.b16 %v99
    %v207 = vunpack.c.l.b16 %v100
    %v208 = vunpack.c.l.b16 %v101
    %v209 = vunpack.c.l.b16 %v102
    %v210 = vunpack.c.l.b16 %v103
    %v211 = vunpack.c.l.b16 %v104
    %v212 = vunpack.c.l.b16 %v105
    %v213 = vunpack.c.l.b16 %v106
    %v214 = vunpack.c.l.b16 %v107
    %v215 = vunpack.c.l.b16 %v108
    %v216 = vunpack.c.l.b16 %v109
    %v217 = vunpack.c.l.b16 %v110
    %v218 = vpack.c.b16 %v171, %v170
    %v219 = vpack.c.b16 %v173, %v172
    %v220 = vpack.c.b16 %v175, %v174
    %v221 = vpack.c.b16 %v177, %v176
    %v222 = vpack.c.b16 %v179, %v178
    %v223 = vpack.c.b16 %v181, %v180
    %v224 = vpack.c.b16 %v183, %v182
    %v225 = vpack.c.b16 %v185, %v184
    %v226 = vpack.c.b16 %v187, %v186
    %v227 = vpack.c.b16 %v189, %v188
    %v228 = vpack.c.b16 %v191, %v190
    %v229 = vpack.c.b16 %v193, %v192
    %v230 = vpack.c.b16 %v195, %v194
    %v231 = vpack.c.b16 %v197, %v196
    %v232 = vpack.c.b16 %v199, %v198
    %v233 = vpack.c.b16 %v201, %v200
    %v234 = vpack.c.b16 %v203, %v202
    %v235 = vpack.c.b16 %v205, %v204
    %v236 = vpack.c.b16 %v207, %v206
    %v237 = vpack.c.b16 %v209, %v208
    %v238 = vpack.c.b16 %v211, %v210
    %v239 = vpack.c.b16 %v213, %v212
    %v240 = vpack.c.b16 %v215, %v214
    %v241 = vpack.c.b16 %v217, %v216
    %266 = vmatprep.subr.bf16.mxu0 0
    %267 = vmatpush1.bf16.msra.mxu0 %v225
    %268 = vmatprep.subr.bf16.mxu0 0
    %269 = vmatpush1.bf16.msra.mxu0 %v224
    %270 = vmatprep.subr.bf16.mxu0 0
    %271 = vmatpush1.bf16.msra.mxu0 %v223
    %272 = vmatprep.subr.bf16.mxu0 0
    %273 = vmatpush1.bf16.msra.mxu0 %v222
    %274 = vmatprep.subr.bf16.mxu0 0
    %275 = vmatpush1.bf16.msra.mxu0 %v221
    %276 = vmatprep.subr.bf16.mxu0 0
    %277 = vmatpush1.bf16.msra.mxu0 %v220
    %278 = vmatprep.subr.bf16.mxu0 0
    %279 = vmatpush1.bf16.msra.mxu0 %v219
    %280 = vmatprep.subr.bf16.mxu0 0
    %281 = vmatpush1.bf16.msra.mxu0 %v218
    %282 = vmatprep.subr.bf16.mxu0 0
    %283 = vmatpush2.bf16.msra.mxu0 %v233
    %284 = vmatprep.subr.bf16.mxu0 0
    %285 = vmatpush2.bf16.msra.mxu0 %v232
    %286 = vmatprep.subr.bf16.mxu0 0
    %287 = vmatpush2.bf16.msra.mxu0 %v231
    %288 = vmatprep.subr.bf16.mxu0 0
    %289 = vmatpush2.bf16.msra.mxu0 %v230
    %290 = vmatprep.subr.bf16.mxu0 0
    %291 = vmatpush2.bf16.msra.mxu0 %v229
    %292 = vmatprep.subr.bf16.mxu0 0
    %293 = vmatpush2.bf16.msra.mxu0 %v228
    %294 = vmatprep.subr.bf16.mxu0 0
    %295 = vmatpush2.bf16.msra.mxu0 %v227
    %296 = vmatprep.subr.bf16.mxu0 0
    %297 = vmatpush2.bf16.msra.mxu0 %v226
    %298 = vmatprep.mubr.bf16.mxu0 %v117
    %299 = vmatmul.mubr.bf16.gmra.mxu0 %v116
    %v300 = vpop.f32.mrf.mxu0
    %v301 = vadd.f32 0.0, %v300
    %v302 = vpop.f32.mrf.mxu0
    %v303 = vpop.f32.mrf.mxu0
    %v304 = vpop.f32.mrf.mxu0
    %305 = vdwg.mxu0
    %306 = vmatprep.subr.bf16.mxu0 0
    %307 = vmatpush1.bf16.msra.mxu0 %v241
    %308 = vmatprep.subr.bf16.mxu0 0
    %309 = vmatpush1.bf16.msra.mxu0 %v240
    %310 = vmatprep.subr.bf16.mxu0 0
    %311 = vmatpush1.bf16.msra.mxu0 %v239
    %312 = vmatprep.subr.bf16.mxu0 0
    %313 = vmatpush1.bf16.msra.mxu0 %v238
    %314 = vmatprep.subr.bf16.mxu0 0
    %315 = vmatpush1.bf16.msra.mxu0 %v237
    %316 = vmatprep.subr.bf16.mxu0 0
    %317 = vmatpush1.bf16.msra.mxu0 %v236
    %318 = vmatprep.subr.bf16.mxu0 0
    %319 = vmatpush1.bf16.msra.mxu0 %v235
    %320 = vmatprep.subr.bf16.mxu0 0
    %321 = vmatpush1.bf16.msra.mxu0 %v234
    %322 = vmatprep.subr.bf16.mxu0 0
    %323 = vmatpush2.bf16.msra.mxu0 0
    %324 = vmatprep.subr.bf16.mxu0 0
    %325 = vmatpush2.bf16.msra.mxu0 0
    %326 = vmatprep.subr.bf16.mxu0 0
    %327 = vmatpush2.bf16.msra.mxu0 0
    %328 = vmatprep.subr.bf16.mxu0 0
    %329 = vmatpush2.bf16.msra.mxu0 0
    %330 = vmatprep.subr.bf16.mxu0 0
    %331 = vmatpush2.bf16.msra.mxu0 0
    %332 = vmatprep.subr.bf16.mxu0 0
    %333 = vmatpush2.bf16.msra.mxu0 0
    %334 = vmatprep.subr.bf16.mxu0 0
    %335 = vmatpush2.bf16.msra.mxu0 0
    %336 = vmatprep.subr.bf16.mxu0 0
    %337 = vmatpush2.bf16.msra.mxu0 0
    %338 = vmatprep.mubr.bf16.mxu0 0
    %339 = vmatmul.mubr.bf16.gmra.mxu0 %v118
    %v340 = vpop.f32.mrf.mxu0
    %v341 = vadd.f32 %v301, %v340
    %v342 = vpop.f32.mrf.mxu0
    %v343 = vpop.f32.mrf.mxu0
    %v344 = vpop.f32.mrf.mxu0
    %345 = vdwg.mxu0
    %346 = vst [vmem:[%s5] sm:$0xff] %v341
    %s347 = sld [smem:[#allocation2]]
    %vm348 = vcmp.gt.f32.partialorder %v341, 0.0
    %v349 = vstv %s347
    %v350 = vmul.f32 %v349, %v341
    %v351 = vsel %vm348, %v341, %v350
    %v352 = vld [vmem:[#allocation5] sm:$0x1]
    %v354 = vlaneseq
    %v355 = vshrl.u32 %v354, 7
    %v356 = vsub.s32 0, %v355
    %v357 = vrot.slane %v352, %v356
    %v359 = vmul.f32 %v351, %v357
    %v360 = vld [vmem:[#allocation7] sm:$0x1]
    %v362 = vlaneseq
    %v363 = vshrl.u32 %v362, 7
    %v364 = vsub.s32 0, %v363
    %v365 = vrot.slane %v360, %v364
    %v367 = vadd.f32 %v359, %v365
    %368 = vst [vmem:[%s6] sm:$0xff] %v367
    // Predicated region
    $region34: #{forward.14} parent=1 // pred_check
      _
    $region35: #{forward.14} parent=1 // pred_check_branch
      %370 = sbr.rel (0) target = $region37
    $region36: #{forward.14} parent=1 // pred_region
      _
    $region37: #{forward.14} parent=1 // pred_fallthru
      _
    // Predicated region
    $region38: #{forward.14} parent=1 // pred_check
      _
    $region39: #{forward.14} parent=1 // pred_check_branch
      %372 = sbr.rel (0) target = $region41
    $region40: #{forward.14} parent=1 // pred_region
      _
    $region41: #{forward.14} parent=1 // pred_fallthru
      _
    // Predicated region
    $region42: #{forward.14} parent=1 // pred_check
      _
    $region43: #{forward.14} parent=1 // pred_check_branch
      %374 = sbr.rel (0) target = $region45
    $region44: #{forward.14} parent=1 // pred_region
      _
    $region45: #{forward.14} parent=1 // pred_fallthru
      _
    // Predicated region
    $region46: #{forward.14} parent=1 // pred_check
      _
    $region47: #{forward.14} parent=1 // pred_check_branch
      %376 = sbr.rel (0) target = $region49
    $region48: #{forward.14} parent=1 // pred_region
      _
    $region49: #{forward.14} parent=1 // pred_fallthru
      _
    %377 = vsyncpa [#allocation4], 1
    %378 = vsyncpa [#allocation6], 1

// kernel: forward.15
$region0: #{forward.15}
  #allocation0 [shape = 'u32[]', space=smem, size = 0x4, offset = 0x4, fixed_abs, tag = 'smem constant byte address 0x4 - core index']
  #allocation1 [shape = 'u32[144,128]{1,0:T(1,128)}', space=vmem, size = 0x12000, scoped, tag = 'internal scratch']
  #allocation2 [shape = 'f32[1]{0:T(128)S(6)}', space=smem, size = 0x200, scoped, tag = 'scoped memory for forward.15']
  %s0 = inlined_call_operand.vmem [shape: bf16[4,384], index: 0, kind: input, shape index: {}]
  %s1 = inlined_call_operand.hbm [shape: bf16[384,128], index: 1, kind: input, shape index: {}]
  %s2 = inlined_call_operand.hbm [shape: f32[1,128], index: 2, kind: input, shape index: {}]
  %s3 = inlined_call_operand.hbm [shape: f32[1,128], index: 3, kind: input, shape index: {}]
  %s4 = inlined_call_operand.<no memory space> [shape: f32[1], index: 4, kind: input, shape index: {}]
  %s5 = inlined_call_operand.vmem [shape: f32[4,128], index: 5, kind: output, shape index: {}]
  %s6 = sld [smem:[#allocation0]]
  $region42: #{forward.15} parent=0
    _
  %s8 = ssub.s32 1, %s6
  %s9 = scalar_select 0, %s8, %s6
  %10 = sst [smem:[#allocation2]] %s4
  $region1: #{forward.15} parent=0
    #allocation3 [shape = 'u8[98304]{0}', space=vmem, size = 0x18000, scoped, tag = 'input window, operand 1, single buffered']
    #allocation4 [shape = 's32[1]{0}', space=sflag, size = 0x4, scoped, tag = 'scoped memory for forward.15']
    #allocation5 [shape = 'u8[512]{0}', space=vmem, size = 0x400, scoped, tag = 'input window, operand 2, single buffered']
    #allocation6 [shape = 's32[1]{0}', space=sflag, size = 0x4, scoped, tag = 'scoped memory for forward.15']
    #allocation7 [shape = 'u8[512]{0}', space=vmem, size = 0x400, scoped, tag = 'input window, operand 3, single buffered']
    %11 = vsyncpa [#allocation4], 0
    %12 = vsyncpa [#allocation6], 0
    // Predicated region
    $region2: #{forward.15} parent=1 // pred_check
      _
    $region3: #{forward.15} parent=1 // pred_check_branch
      %14 = sbr.rel (0) target = $region5
    $region4: #{forward.15} parent=1 // pred_region
      _
    $region5: #{forward.15} parent=1 // pred_fallthru
      _
    // Predicated region
    $region6: #{forward.15} parent=1 // pred_check
      _
    $region7: #{forward.15} parent=1 // pred_check_branch
      %16 = sbr.rel (0) target = $region9
    $region8: #{forward.15} parent=1 // pred_region
      %s18 = ssub.s32 3072, 3072
      %19 = vsyncadd [#allocation4], %s18
      %s20 = sshll.u32 [#allocation3], 4
      %s21 = int_to_ptr.vmem [resolvable:$true] %s20
      %26 = dma.hbm_to_vmem [thread:$0]  %s1, 3072, %s21, [#allocation4], 64, 64, 4
    $region9: #{forward.15} parent=1 // pred_fallthru
      _
    // Predicated region
    $region10: #{forward.15} parent=1 // pred_check
      _
    $region11: #{forward.15} parent=1 // pred_check_branch
      %28 = sbr.rel (0) target = $region13
    $region12: #{forward.15} parent=1 // pred_region
      %s30 = ssub.s32 16, 16
      %31 = vsyncadd [#allocation6], %s30
      %s33 = sshll.u32 [#allocation5], 4
      %s34 = int_to_ptr.vmem [resolvable:$true] %s33
      %36 = dma.hbm_to_vmem [thread:$0]  %s2, 16, %s34, [#allocation6]
    $region13: #{forward.15} parent=1 // pred_fallthru
      _
    // Predicated region
    $region14: #{forward.15} parent=1 // pred_check
      _
    $region15: #{forward.15} parent=1 // pred_check_branch
      %38 = sbr.rel (0) target = $region17
    $region16: #{forward.15} parent=1 // pred_region
      %s40 = ssub.s32 16, 16
      %41 = vsyncadd [#allocation6], %s40
      %s43 = sshll.u32 [#allocation7], 4
      %s44 = int_to_ptr.vmem [resolvable:$true] %s43
      %46 = dma.hbm_to_vmem [thread:$0]  %s3, 16, %s44, [#allocation6]
    $region17: #{forward.15} parent=1 // pred_fallthru
      _
    // Predicated region
    $region18: #{forward.15} parent=1 // pred_check
      _
    $region19: #{forward.15} parent=1 // pred_check_branch
      %48 = sbr.rel (0) target = $region21
    $region20: #{forward.15} parent=1 // pred_region
      _
    $region21: #{forward.15} parent=1 // pred_fallthru
      _
    // Predicated region
    $region22: #{forward.15} parent=1 // pred_check
      _
    $region23: #{forward.15} parent=1 // pred_check_branch
      %50 = sbr.rel (0) target = $region25
    $region24: #{forward.15} parent=1 // pred_region
      %51 = dma.done [#allocation4], 3072
    $region25: #{forward.15} parent=1 // pred_fallthru
      _
    // Predicated region
    $region26: #{forward.15} parent=1 // pred_check
      _
    $region27: #{forward.15} parent=1 // pred_check_branch
      %53 = sbr.rel (0) target = $region29
    $region28: #{forward.15} parent=1 // pred_region
      %54 = dma.done [#allocation6], 16
    $region29: #{forward.15} parent=1 // pred_fallthru
      _
    // Predicated region
    $region30: #{forward.15} parent=1 // pred_check
      _
    $region31: #{forward.15} parent=1 // pred_check_branch
      %56 = sbr.rel (0) target = $region33
    $region32: #{forward.15} parent=1 // pred_region
      %57 = dma.done [#allocation6], 16
    $region33: #{forward.15} parent=1 // pred_fallthru
      _
    %v59 = vld [vmem:[%s0] sm:$0x3f]
    %v60 = vld [vmem:[#allocation3] sm:$0xf]
    %v61 = vld [vmem:[#allocation3 + $0x4] sm:$0xf]
    %v62 = vld [vmem:[#allocation3 + $0x8] sm:$0xf]
    %v63 = vld [vmem:[#allocation3 + $0xc] sm:$0xf]
    %v64 = vld [vmem:[#allocation3 + $0x10] sm:$0xf]
    %v65 = vld [vmem:[#allocation3 + $0x14] sm:$0xf]
    %v66 = vld [vmem:[#allocation3 + $0x18] sm:$0xf]
    %v67 = vld [vmem:[#allocation3 + $0x1c] sm:$0xf]
    %v68 = vld [vmem:[#allocation3 + $0x20] sm:$0xf]
    %v69 = vld [vmem:[#allocation3 + $0x24] sm:$0xf]
    %v70 = vld [vmem:[#allocation3 + $0x28] sm:$0xf]
    %v71 = vld [vmem:[#allocation3 + $0x2c] sm:$0xf]
    %v72 = vld [vmem:[#allocation3 + $0x30] sm:$0xf]
    %v73 = vld [vmem:[#allocation3 + $0x34] sm:$0xf]
    %v74 = vld [vmem:[#allocation3 + $0x38] sm:$0xf]
    %v75 = vld [vmem:[#allocation3 + $0x3c] sm:$0xf]
    %v76 = vld [vmem:[#allocation3 + $0x40] sm:$0xf]
    %v77 = vld [vmem:[#allocation3 + $0x44] sm:$0xf]
    %v78 = vld [vmem:[#allocation3 + $0x48] sm:$0xf]
    %v79 = vld [vmem:[#allocation3 + $0x4c] sm:$0xf]
    %v80 = vld [vmem:[#allocation3 + $0x50] sm:$0xf]
    %v81 = vld [vmem:[#allocation3 + $0x54] sm:$0xf]
    %v82 = vld [vmem:[#allocation3 + $0x58] sm:$0xf]
    %v83 = vld [vmem:[#allocation3 + $0x5c] sm:$0xf]
    %v84 = vld [vmem:[#allocation3 + $0x60] sm:$0xf]
    %v85 = vld [vmem:[#allocation3 + $0x64] sm:$0xf]
    %v86 = vld [vmem:[#allocation3 + $0x68] sm:$0xf]
    %v87 = vld [vmem:[#allocation3 + $0x6c] sm:$0xf]
    %v88 = vld [vmem:[#allocation3 + $0x70] sm:$0xf]
    %v89 = vld [vmem:[#allocation3 + $0x74] sm:$0xf]
    %v90 = vld [vmem:[#allocation3 + $0x78] sm:$0xf]
    %v91 = vld [vmem:[#allocation3 + $0x7c] sm:$0xf]
    %v92 = vld [vmem:[#allocation3 + $0x80] sm:$0xf]
    %v93 = vld [vmem:[#allocation3 + $0x84] sm:$0xf]
    %v94 = vld [vmem:[#allocation3 + $0x88] sm:$0xf]
    %v95 = vld [vmem:[#allocation3 + $0x8c] sm:$0xf]
    %v96 = vld [vmem:[#allocation3 + $0x90] sm:$0xf]
    %v97 = vld [vmem:[#allocation3 + $0x94] sm:$0xf]
    %v98 = vld [vmem:[#allocation3 + $0x98] sm:$0xf]
    %v99 = vld [vmem:[#allocation3 + $0x9c] sm:$0xf]
    %v100 = vld [vmem:[#allocation3 + $0xa0] sm:$0xf]
    %v101 = vld [vmem:[#allocation3 + $0xa4] sm:$0xf]
    %v102 = vld [vmem:[#allocation3 + $0xa8] sm:$0xf]
    %v103 = vld [vmem:[#allocation3 + $0xac] sm:$0xf]
    %v104 = vld [vmem:[#allocation3 + $0xb0] sm:$0xf]
    %v105 = vld [vmem:[#allocation3 + $0xb4] sm:$0xf]
    %v106 = vld [vmem:[#allocation3 + $0xb8] sm:$0xf]
    %v107 = vld [vmem:[#allocation3 + $0xbc] sm:$0xf]
    %v109 = vcombine.high %v59, %v59
    %v111 = vunpack.c.l.s4 1983009808
    %v112 = vunpack.c.0.s8 %v111
    %v113 = vlaneseq
    %v114 = vshrl.u32 %v113, 7
    %v115 = vsub.s32 %v112, %v114
    %v116 = vrot.slane %v59, %v115
    %v118 = vunpack.c.l.s4 1983009808
    %v119 = vunpack.c.0.s8 %v118
    %v120 = vlaneseq
    %v121 = vshrl.u32 %v120, 7
    %v122 = vsub.s32 %v119, %v121
    %v123 = vrot.slane %v109, %v122
    %v124 = vcombine.high %v116, %v116
    %v176 = vunpack.c.l.b16 %v60
    %v177 = vunpack.c.l.b16 %v61
    %v178 = vunpack.c.l.b16 %v62
    %v179 = vunpack.c.l.b16 %v63
    %v180 = vunpack.c.l.b16 %v64
    %v181 = vunpack.c.l.b16 %v65
    %v182 = vunpack.c.l.b16 %v66
    %v183 = vunpack.c.l.b16 %v67
    %v184 = vunpack.c.l.b16 %v68
    %v185 = vunpack.c.l.b16 %v69
    %v186 = vunpack.c.l.b16 %v70
    %v187 = vunpack.c.l.b16 %v71
    %v188 = vunpack.c.l.b16 %v72
    %v189 = vunpack.c.l.b16 %v73
    %v190 = vunpack.c.l.b16 %v74
    %v191 = vunpack.c.l.b16 %v75
    %v192 = vunpack.c.l.b16 %v76
    %v193 = vunpack.c.l.b16 %v77
    %v194 = vunpack.c.l.b16 %v78
    %v195 = vunpack.c.l.b16 %v79
    %v196 = vunpack.c.l.b16 %v80
    %v197 = vunpack.c.l.b16 %v81
    %v198 = vunpack.c.l.b16 %v82
    %v199 = vunpack.c.l.b16 %v83
    %v200 = vunpack.c.l.b16 %v84
    %v201 = vunpack.c.l.b16 %v85
    %v202 = vunpack.c.l.b16 %v86
    %v203 = vunpack.c.l.b16 %v87
    %v204 = vunpack.c.l.b16 %v88
    %v205 = vunpack.c.l.b16 %v89
    %v206 = vunpack.c.l.b16 %v90
    %v207 = vunpack.c.l.b16 %v91
    %v208 = vunpack.c.l.b16 %v92
    %v209 = vunpack.c.l.b16 %v93
    %v210 = vunpack.c.l.b16 %v94
    %v211 = vunpack.c.l.b16 %v95
    %v212 = vunpack.c.l.b16 %v96
    %v213 = vunpack.c.l.b16 %v97
    %v214 = vunpack.c.l.b16 %v98
    %v215 = vunpack.c.l.b16 %v99
    %v216 = vunpack.c.l.b16 %v100
    %v217 = vunpack.c.l.b16 %v101
    %v218 = vunpack.c.l.b16 %v102
    %v219 = vunpack.c.l.b16 %v103
    %v220 = vunpack.c.l.b16 %v104
    %v221 = vunpack.c.l.b16 %v105
    %v222 = vunpack.c.l.b16 %v106
    %v223 = vunpack.c.l.b16 %v107
    %v224 = vpack.c.b16 %v177, %v176
    %v225 = vpack.c.b16 %v179, %v178
    %v226 = vpack.c.b16 %v181, %v180
    %v227 = vpack.c.b16 %v183, %v182
    %v228 = vpack.c.b16 %v185, %v184
    %v229 = vpack.c.b16 %v187, %v186
    %v230 = vpack.c.b16 %v189, %v188
    %v231 = vpack.c.b16 %v191, %v190
    %v232 = vpack.c.b16 %v193, %v192
    %v233 = vpack.c.b16 %v195, %v194
    %v234 = vpack.c.b16 %v197, %v196
    %v235 = vpack.c.b16 %v199, %v198
    %v236 = vpack.c.b16 %v201, %v200
    %v237 = vpack.c.b16 %v203, %v202
    %v238 = vpack.c.b16 %v205, %v204
    %v239 = vpack.c.b16 %v207, %v206
    %v240 = vpack.c.b16 %v209, %v208
    %v241 = vpack.c.b16 %v211, %v210
    %v242 = vpack.c.b16 %v213, %v212
    %v243 = vpack.c.b16 %v215, %v214
    %v244 = vpack.c.b16 %v217, %v216
    %v245 = vpack.c.b16 %v219, %v218
    %v246 = vpack.c.b16 %v221, %v220
    %v247 = vpack.c.b16 %v223, %v222
    %272 = vmatprep.subr.bf16.mxu0 0
    %273 = vmatpush1.bf16.msra.mxu0 %v231
    %274 = vmatprep.subr.bf16.mxu0 0
    %275 = vmatpush1.bf16.msra.mxu0 %v230
    %276 = vmatprep.subr.bf16.mxu0 0
    %277 = vmatpush1.bf16.msra.mxu0 %v229
    %278 = vmatprep.subr.bf16.mxu0 0
    %279 = vmatpush1.bf16.msra.mxu0 %v228
    %280 = vmatprep.subr.bf16.mxu0 0
    %281 = vmatpush1.bf16.msra.mxu0 %v227
    %282 = vmatprep.subr.bf16.mxu0 0
    %283 = vmatpush1.bf16.msra.mxu0 %v226
    %284 = vmatprep.subr.bf16.mxu0 0
    %285 = vmatpush1.bf16.msra.mxu0 %v225
    %286 = vmatprep.subr.bf16.mxu0 0
    %287 = vmatpush1.bf16.msra.mxu0 %v224
    %288 = vmatprep.subr.bf16.mxu0 0
    %289 = vmatpush2.bf16.msra.mxu0 %v239
    %290 = vmatprep.subr.bf16.mxu0 0
    %291 = vmatpush2.bf16.msra.mxu0 %v238
    %292 = vmatprep.subr.bf16.mxu0 0
    %293 = vmatpush2.bf16.msra.mxu0 %v237
    %294 = vmatprep.subr.bf16.mxu0 0
    %295 = vmatpush2.bf16.msra.mxu0 %v236
    %296 = vmatprep.subr.bf16.mxu0 0
    %297 = vmatpush2.bf16.msra.mxu0 %v235
    %298 = vmatprep.subr.bf16.mxu0 0
    %299 = vmatpush2.bf16.msra.mxu0 %v234
    %300 = vmatprep.subr.bf16.mxu0 0
    %301 = vmatpush2.bf16.msra.mxu0 %v233
    %302 = vmatprep.subr.bf16.mxu0 0
    %303 = vmatpush2.bf16.msra.mxu0 %v232
    %304 = vmatprep.mubr.bf16.mxu0 %v124
    %305 = vmatmul.mubr.bf16.gmra.mxu0 %v116
    %v306 = vpop.f32.mrf.mxu0
    %v307 = vadd.f32 0.0, %v306
    %v308 = vpop.f32.mrf.mxu0
    %v309 = vpop.f32.mrf.mxu0
    %v310 = vpop.f32.mrf.mxu0
    %311 = vdwg.mxu0
    %312 = vmatprep.subr.bf16.mxu0 0
    %313 = vmatpush1.bf16.msra.mxu0 %v247
    %314 = vmatprep.subr.bf16.mxu0 0
    %315 = vmatpush1.bf16.msra.mxu0 %v246
    %316 = vmatprep.subr.bf16.mxu0 0
    %317 = vmatpush1.bf16.msra.mxu0 %v245
    %318 = vmatprep.subr.bf16.mxu0 0
    %319 = vmatpush1.bf16.msra.mxu0 %v244
    %320 = vmatprep.subr.bf16.mxu0 0
    %321 = vmatpush1.bf16.msra.mxu0 %v243
    %322 = vmatprep.subr.bf16.mxu0 0
    %323 = vmatpush1.bf16.msra.mxu0 %v242
    %324 = vmatprep.subr.bf16.mxu0 0
    %325 = vmatpush1.bf16.msra.mxu0 %v241
    %326 = vmatprep.subr.bf16.mxu0 0
    %327 = vmatpush1.bf16.msra.mxu0 %v240
    %328 = vmatprep.subr.bf16.mxu0 0
    %329 = vmatpush2.bf16.msra.mxu0 0
    %330 = vmatprep.subr.bf16.mxu0 0
    %331 = vmatpush2.bf16.msra.mxu0 0
    %332 = vmatprep.subr.bf16.mxu0 0
    %333 = vmatpush2.bf16.msra.mxu0 0
    %334 = vmatprep.subr.bf16.mxu0 0
    %335 = vmatpush2.bf16.msra.mxu0 0
    %336 = vmatprep.subr.bf16.mxu0 0
    %337 = vmatpush2.bf16.msra.mxu0 0
    %338 = vmatprep.subr.bf16.mxu0 0
    %339 = vmatpush2.bf16.msra.mxu0 0
    %340 = vmatprep.subr.bf16.mxu0 0
    %341 = vmatpush2.bf16.msra.mxu0 0
    %342 = vmatprep.subr.bf16.mxu0 0
    %343 = vmatpush2.bf16.msra.mxu0 0
    %344 = vmatprep.mubr.bf16.mxu0 0
    %345 = vmatmul.mubr.bf16.gmra.mxu0 %v123
    %v346 = vpop.f32.mrf.mxu0
    %v347 = vadd.f32 %v307, %v346
    %v348 = vpop.f32.mrf.mxu0
    %v349 = vpop.f32.mrf.mxu0
    %v350 = vpop.f32.mrf.mxu0
    %351 = vdwg.mxu0
    %s352 = sld [smem:[#allocation2]]
    %vm353 = vcmp.gt.f32.partialorder %v347, 0.0
    %v354 = vstv %s352
    %v355 = vmul.f32 %v354, %v347
    %v356 = vsel %vm353, %v347, %v355
    %v357 = vld [vmem:[#allocation5] sm:$0x1]
    %v359 = vlaneseq
    %v360 = vshrl.u32 %v359, 7
    %v361 = vsub.s32 0, %v360
    %v362 = vrot.slane %v357, %v361
    %v364 = vmul.f32 %v356, %v362
    %v365 = vld [vmem:[#allocation7] sm:$0x1]
    %v367 = vlaneseq
    %v368 = vshrl.u32 %v367, 7
    %v369 = vsub.s32 0, %v368
    %v370 = vrot.slane %v365, %v369
    %v372 = vadd.f32 %v364, %v370
    %373 = vst [vmem:[%s5] sm:$0xf] %v372
    // Predicated region
    $region34: #{forward.15} parent=1 // pred_check
      _
    $region35: #{forward.15} parent=1 // pred_check_branch
      %375 = sbr.rel (0) target = $region37
    $region36: #{forward.15} parent=1 // pred_region
      _
    $region37: #{forward.15} parent=1 // pred_fallthru
      _
    // Predicated region
    $region38: #{forward.15} parent=1 // pred_check
      _
    $region39: #{forward.15} parent=1 // pred_check_branch
      %377 = sbr.rel (0) target = $region41
    $region40: #{forward.15} parent=1 // pred_region
      _
    $region41: #{forward.15} parent=1 // pred_fallthru
      _
    %378 = vsyncpa [#allocation4], 1
    %379 = vsyncpa [#allocation6], 1

// kernel: forward.16
$region0: #{forward.16}
  #allocation0 [shape = 'u32[]', space=smem, size = 0x4, offset = 0x4, fixed_abs, tag = 'smem constant byte address 0x4 - core index']
  #allocation1 [shape = 'u32[144,128]{1,0:T(1,128)}', space=vmem, size = 0x12000, scoped, tag = 'internal scratch']
  #allocation2 [shape = 'f32[1]{0:T(128)S(6)}', space=smem, size = 0x200, scoped, tag = 'scoped memory for forward.16']
  %s0 = inlined_call_operand.vmem [shape: bf16[2,384], index: 0, kind: input, shape index: {}]
  %s1 = inlined_call_operand.vmem [shape: bf16[384,256], index: 1, kind: input, shape index: {}]
  %s2 = inlined_call_operand.<no memory space> [shape: f32[1], index: 2, kind: input, shape index: {}]
  %s3 = inlined_call_operand.vmem [shape: f32[2,256], index: 3, kind: output, shape index: {0}]
  %s4 = inlined_call_operand.vmem [shape: f32[2,256], index: 4, kind: output, shape index: {1}]
  %5 = xla_tuple %s3, %s4
  %s6 = sld [smem:[#allocation0]]
  $region30: #{forward.16} parent=0
    _
  %s8 = ssub.s32 1, %s6
  %s9 = scalar_select 0, %s8, %s6
  %10 = sst [smem:[#allocation2]] %s2
  // Predicated region
  $region2: #{forward.16} parent=0 // pred_check
    _
  $region3: #{forward.16} parent=0 // pred_check_branch
    %12 = sbr.rel (0) target = $region5
  $region4: #{forward.16} parent=0 // pred_region
    _
  $region5: #{forward.16} parent=0 // pred_fallthru
    _
  // Predicated region
  $region6: #{forward.16} parent=0 // pred_check
    _
  $region7: #{forward.16} parent=0 // pred_check_branch
    %14 = sbr.rel (0) target = $region9
  $region8: #{forward.16} parent=0 // pred_region
    _
  $region9: #{forward.16} parent=0 // pred_fallthru
    _
  // Predicated region
  $region10: #{forward.16} parent=0 // pred_check
    _
  $region11: #{forward.16} parent=0 // pred_check_branch
    %16 = sbr.rel (0) target = $region13
  $region12: #{forward.16} parent=0 // pred_region
    _
  $region13: #{forward.16} parent=0 // pred_fallthru
    _
  %v18 = vld [vmem:[%s0] sm:$0x7]
  %v19 = vld [vmem:[%s1] sm:$0xff]
  %v20 = vld [vmem:[%s1 + $0x8] sm:$0xff]
  %v21 = vld [vmem:[%s1 + $0x10] sm:$0xff]
  %v22 = vld [vmem:[%s1 + $0x18] sm:$0xff]
  %v23 = vld [vmem:[%s1 + $0x20] sm:$0xff]
  %v24 = vld [vmem:[%s1 + $0x28] sm:$0xff]
  %v25 = vld [vmem:[%s1 + $0x30] sm:$0xff]
  %v26 = vld [vmem:[%s1 + $0x38] sm:$0xff]
  %v27 = vld [vmem:[%s1 + $0x40] sm:$0xff]
  %v28 = vld [vmem:[%s1 + $0x48] sm:$0xff]
  %v29 = vld [vmem:[%s1 + $0x50] sm:$0xff]
  %v30 = vld [vmem:[%s1 + $0x58] sm:$0xff]
  %v31 = vld [vmem:[%s1 + $0x60] sm:$0xff]
  %v32 = vld [vmem:[%s1 + $0x68] sm:$0xff]
  %v33 = vld [vmem:[%s1 + $0x70] sm:$0xff]
  %v34 = vld [vmem:[%s1 + $0x78] sm:$0xff]
  %v35 = vld [vmem:[%s1 + $0x80] sm:$0xff]
  %v36 = vld [vmem:[%s1 + $0x88] sm:$0xff]
  %v37 = vld [vmem:[%s1 + $0x90] sm:$0xff]
  %v38 = vld [vmem:[%s1 + $0x98] sm:$0xff]
  %v39 = vld [vmem:[%s1 + $0xa0] sm:$0xff]
  %v40 = vld [vmem:[%s1 + $0xa8] sm:$0xff]
  %v41 = vld [vmem:[%s1 + $0xb0] sm:$0xff]
  %v42 = vld [vmem:[%s1 + $0xb8] sm:$0xff]
  %v43 = vld [vmem:[%s1 + $0xc0] sm:$0xff]
  %v44 = vld [vmem:[%s1 + $0xc8] sm:$0xff]
  %v45 = vld [vmem:[%s1 + $0xd0] sm:$0xff]
  %v46 = vld [vmem:[%s1 + $0xd8] sm:$0xff]
  %v47 = vld [vmem:[%s1 + $0xe0] sm:$0xff]
  %v48 = vld [vmem:[%s1 + $0xe8] sm:$0xff]
  %v49 = vld [vmem:[%s1 + $0xf0] sm:$0xff]
  %v50 = vld [vmem:[%s1 + $0xf8] sm:$0xff]
  %v51 = vld [vmem:[%s1 + $0x100] sm:$0xff]
  %v52 = vld [vmem:[%s1 + $0x108] sm:$0xff]
  %v53 = vld [vmem:[%s1 + $0x110] sm:$0xff]
  %v54 = vld [vmem:[%s1 + $0x118] sm:$0xff]
  %v55 = vld [vmem:[%s1 + $0x120] sm:$0xff]
  %v56 = vld [vmem:[%s1 + $0x128] sm:$0xff]
  %v57 = vld [vmem:[%s1 + $0x130] sm:$0xff]
  %v58 = vld [vmem:[%s1 + $0x138] sm:$0xff]
  %v59 = vld [vmem:[%s1 + $0x140] sm:$0xff]
  %v60 = vld [vmem:[%s1 + $0x148] sm:$0xff]
  %v61 = vld [vmem:[%s1 + $0x150] sm:$0xff]
  %v62 = vld [vmem:[%s1 + $0x158] sm:$0xff]
  %v63 = vld [vmem:[%s1 + $0x160] sm:$0xff]
  %v64 = vld [vmem:[%s1 + $0x168] sm:$0xff]
  %v65 = vld [vmem:[%s1 + $0x170] sm:$0xff]
  %v66 = vld [vmem:[%s1 + $0x178] sm:$0xff]
  %v69 = vunpack.c.l.s4 1966171168
  %v70 = vunpack.c.0.s8 %v69
  %v71 = vlaneseq
  %v72 = vshrl.u32 %v71, 7
  %v73 = vsub.s32 %v70, %v72
  %v74 = vrot.slane %v18, %v73
  %v75 = vcombine.high %v74, %v74
  %v77 = vunpack.c.l.s4 1966171168
  %v78 = vunpack.c.0.s8 %v77
  %v79 = vlaneseq
  %v80 = vshrl.u32 %v79, 7
  %v81 = vsub.s32 %v78, %v80
  %v82 = vrot.slane %v74, %v81
  %v84 = vunpack.c.l.s4 1966171168
  %v85 = vunpack.c.0.s8 %v84
  %v86 = vlaneseq
  %v87 = vshrl.u32 %v86, 7
  %v88 = vsub.s32 %v85, %v87
  %v89 = vrot.slane %v75, %v88
  %v90 = vcombine.high %v82, %v82
  %v142 = vunpack.c.l.b16 %v19
  %v143 = vunpack.c.h.b16 %v19
  %v144 = vunpack.c.l.b16 %v20
  %v145 = vunpack.c.h.b16 %v20
  %v146 = vunpack.c.l.b16 %v21
  %v147 = vunpack.c.h.b16 %v21
  %v148 = vunpack.c.l.b16 %v22
  %v149 = vunpack.c.h.b16 %v22
  %v150 = vunpack.c.l.b16 %v23
  %v151 = vunpack.c.h.b16 %v23
  %v152 = vunpack.c.l.b16 %v24
  %v153 = vunpack.c.h.b16 %v24
  %v154 = vunpack.c.l.b16 %v25
  %v155 = vunpack.c.h.b16 %v25
  %v156 = vunpack.c.l.b16 %v26
  %v157 = vunpack.c.h.b16 %v26
  %v158 = vunpack.c.l.b16 %v27
  %v159 = vunpack.c.h.b16 %v27
  %v160 = vunpack.c.l.b16 %v28
  %v161 = vunpack.c.h.b16 %v28
  %v162 = vunpack.c.l.b16 %v29
  %v163 = vunpack.c.h.b16 %v29
  %v164 = vunpack.c.l.b16 %v30
  %v165 = vunpack.c.h.b16 %v30
  %v166 = vunpack.c.l.b16 %v31
  %v167 = vunpack.c.h.b16 %v31
  %v168 = vunpack.c.l.b16 %v32
  %v169 = vunpack.c.h.b16 %v32
  %v170 = vunpack.c.l.b16 %v33
  %v171 = vunpack.c.h.b16 %v33
  %v172 = vunpack.c.l.b16 %v34
  %v173 = vunpack.c.h.b16 %v34
  %v174 = vunpack.c.l.b16 %v35
  %v175 = vunpack.c.h.b16 %v35
  %v176 = vunpack.c.l.b16 %v36
  %v177 = vunpack.c.h.b16 %v36
  %v178 = vunpack.c.l.b16 %v37
  %v179 = vunpack.c.h.b16 %v37
  %v180 = vunpack.c.l.b16 %v38
  %v181 = vunpack.c.h.b16 %v38
  %v182 = vunpack.c.l.b16 %v39
  %v183 = vunpack.c.h.b16 %v39
  %v184 = vunpack.c.l.b16 %v40
  %v185 = vunpack.c.h.b16 %v40
  %v186 = vunpack.c.l.b16 %v41
  %v187 = vunpack.c.h.b16 %v41
  %v188 = vunpack.c.l.b16 %v42
  %v189 = vunpack.c.h.b16 %v42
  %v190 = vunpack.c.l.b16 %v43
  %v191 = vunpack.c.h.b16 %v43
  %v192 = vunpack.c.l.b16 %v44
  %v193 = vunpack.c.h.b16 %v44
  %v194 = vunpack.c.l.b16 %v45
  %v195 = vunpack.c.h.b16 %v45
  %v196 = vunpack.c.l.b16 %v46
  %v197 = vunpack.c.h.b16 %v46
  %v198 = vunpack.c.l.b16 %v47
  %v199 = vunpack.c.h.b16 %v47
  %v200 = vunpack.c.l.b16 %v48
  %v201 = vunpack.c.h.b16 %v48
  %v202 = vunpack.c.l.b16 %v49
  %v203 = vunpack.c.h.b16 %v49
  %v204 = vunpack.c.l.b16 %v50
  %v205 = vunpack.c.h.b16 %v50
  %v206 = vunpack.c.l.b16 %v51
  %v207 = vunpack.c.h.b16 %v51
  %v208 = vunpack.c.l.b16 %v52
  %v209 = vunpack.c.h.b16 %v52
  %v210 = vunpack.c.l.b16 %v53
  %v211 = vunpack.c.h.b16 %v53
  %v212 = vunpack.c.l.b16 %v54
  %v213 = vunpack.c.h.b16 %v54
  %v214 = vunpack.c.l.b16 %v55
  %v215 = vunpack.c.h.b16 %v55
  %v216 = vunpack.c.l.b16 %v56
  %v217 = vunpack.c.h.b16 %v56
  %v218 = vunpack.c.l.b16 %v57
  %v219 = vunpack.c.h.b16 %v57
  %v220 = vunpack.c.l.b16 %v58
  %v221 = vunpack.c.h.b16 %v58
  %v222 = vunpack.c.l.b16 %v59
  %v223 = vunpack.c.h.b16 %v59
  %v224 = vunpack.c.l.b16 %v60
  %v225 = vunpack.c.h.b16 %v60
  %v226 = vunpack.c.l.b16 %v61
  %v227 = vunpack.c.h.b16 %v61
  %v228 = vunpack.c.l.b16 %v62
  %v229 = vunpack.c.h.b16 %v62
  %v230 = vunpack.c.l.b16 %v63
  %v231 = vunpack.c.h.b16 %v63
  %v232 = vunpack.c.l.b16 %v64
  %v233 = vunpack.c.h.b16 %v64
  %v234 = vunpack.c.l.b16 %v65
  %v235 = vunpack.c.h.b16 %v65
  %v236 = vunpack.c.l.b16 %v66
  %v237 = vunpack.c.h.b16 %v66
  %v238 = vpack.c.b16 %v144, %v142
  %v239 = vpack.c.b16 %v145, %v143
  %v240 = vpack.c.b16 %v148, %v146
  %v241 = vpack.c.b16 %v149, %v147
  %v242 = vpack.c.b16 %v152, %v150
  %v243 = vpack.c.b16 %v153, %v151
  %v244 = vpack.c.b16 %v156, %v154
  %v245 = vpack.c.b16 %v157, %v155
  %v246 = vpack.c.b16 %v160, %v158
  %v247 = vpack.c.b16 %v161, %v159
  %v248 = vpack.c.b16 %v164, %v162
  %v249 = vpack.c.b16 %v165, %v163
  %v250 = vpack.c.b16 %v168, %v166
  %v251 = vpack.c.b16 %v169, %v167
  %v252 = vpack.c.b16 %v172, %v170
  %v253 = vpack.c.b16 %v173, %v171
  %v254 = vpack.c.b16 %v176, %v174
  %v255 = vpack.c.b16 %v177, %v175
  %v256 = vpack.c.b16 %v180, %v178
  %v257 = vpack.c.b16 %v181, %v179
  %v258 = vpack.c.b16 %v184, %v182
  %v259 = vpack.c.b16 %v185, %v183
  %v260 = vpack.c.b16 %v188, %v186
  %v261 = vpack.c.b16 %v189, %v187
  %v262 = vpack.c.b16 %v192, %v190
  %v263 = vpack.c.b16 %v193, %v191
  %v264 = vpack.c.b16 %v196, %v194
  %v265 = vpack.c.b16 %v197, %v195
  %v266 = vpack.c.b16 %v200, %v198
  %v267 = vpack.c.b16 %v201, %v199
  %v268 = vpack.c.b16 %v204, %v202
  %v269 = vpack.c.b16 %v205, %v203
  %v270 = vpack.c.b16 %v208, %v206
  %v271 = vpack.c.b16 %v209, %v207
  %v272 = vpack.c.b16 %v212, %v210
  %v273 = vpack.c.b16 %v213, %v211
  %v274 = vpack.c.b16 %v216, %v214
  %v275 = vpack.c.b16 %v217, %v215
  %v276 = vpack.c.b16 %v220, %v218
  %v277 = vpack.c.b16 %v221, %v219
  %v278 = vpack.c.b16 %v224, %v222
  %v279 = vpack.c.b16 %v225, %v223
  %v280 = vpack.c.b16 %v228, %v226
  %v281 = vpack.c.b16 %v229, %v227
  %v282 = vpack.c.b16 %v232, %v230
  %v283 = vpack.c.b16 %v233, %v231
  %v284 = vpack.c.b16 %v236, %v234
  %v285 = vpack.c.b16 %v237, %v235
  %334 = vmatprep.subr.bf16.mxu0 %v253
  %335 = vmatpush1.bf16.msra.mxu0 %v252
  %336 = vmatprep.subr.bf16.mxu0 %v251
  %337 = vmatpush1.bf16.msra.mxu0 %v250
  %338 = vmatprep.subr.bf16.mxu0 %v249
  %339 = vmatpush1.bf16.msra.mxu0 %v248
  %340 = vmatprep.subr.bf16.mxu0 %v247
  %341 = vmatpush1.bf16.msra.mxu0 %v246
  %342 = vmatprep.subr.bf16.mxu0 %v245
  %343 = vmatpush1.bf16.msra.mxu0 %v244
  %344 = vmatprep.subr.bf16.mxu0 %v243
  %345 = vmatpush1.bf16.msra.mxu0 %v242
  %346 = vmatprep.subr.bf16.mxu0 %v241
  %347 = vmatpush1.bf16.msra.mxu0 %v240
  %348 = vmatprep.subr.bf16.mxu0 %v239
  %349 = vmatpush1.bf16.msra.mxu0 %v238
  %350 = vmatprep.subr.bf16.mxu0 %v269
  %351 = vmatpush2.bf16.msra.mxu0 %v268
  %352 = vmatprep.subr.bf16.mxu0 %v267
  %353 = vmatpush2.bf16.msra.mxu0 %v266
  %354 = vmatprep.subr.bf16.mxu0 %v265
  %355 = vmatpush2.bf16.msra.mxu0 %v264
  %356 = vmatprep.subr.bf16.mxu0 %v263
  %357 = vmatpush2.bf16.msra.mxu0 %v262
  %358 = vmatprep.subr.bf16.mxu0 %v261
  %359 = vmatpush2.bf16.msra.mxu0 %v260
  %360 = vmatprep.subr.bf16.mxu0 %v259
  %361 = vmatpush2.bf16.msra.mxu0 %v258
  %362 = vmatprep.subr.bf16.mxu0 %v257
  %363 = vmatpush2.bf16.msra.mxu0 %v256
  %364 = vmatprep.subr.bf16.mxu0 %v255
  %365 = vmatpush2.bf16.msra.mxu0 %v254
  %366 = vmatprep.mubr.bf16.mxu0 %v89
  %367 = vmatmul.mubr.bf16.gmra.mxu0 %v82
  %v368 = vpop.f32.mrf.mxu0
  %v369 = vadd.f32 0.0, %v368
  %v370 = vpop.f32.mrf.mxu0
  %v371 = vadd.f32 0.0, %v370
  %v372 = vpop.f32.mrf.mxu0
  %v373 = vpop.f32.mrf.mxu0
  %374 = vdwg.mxu0
  %375 = vmatprep.subr.bf16.mxu0 %v285
  %376 = vmatpush1.bf16.msra.mxu0 %v284
  %377 = vmatprep.subr.bf16.mxu0 %v283
  %378 = vmatpush1.bf16.msra.mxu0 %v282
  %379 = vmatprep.subr.bf16.mxu0 %v281
  %380 = vmatpush1.bf16.msra.mxu0 %v280
  %381 = vmatprep.subr.bf16.mxu0 %v279
  %382 = vmatpush1.bf16.msra.mxu0 %v278
  %383 = vmatprep.subr.bf16.mxu0 %v277
  %384 = vmatpush1.bf16.msra.mxu0 %v276
  %385 = vmatprep.subr.bf16.mxu0 %v275
  %386 = vmatpush1.bf16.msra.mxu0 %v274
  %387 = vmatprep.subr.bf16.mxu0 %v273
  %388 = vmatpush1.bf16.msra.mxu0 %v272
  %389 = vmatprep.subr.bf16.mxu0 %v271
  %390 = vmatpush1.bf16.msra.mxu0 %v270
  %391 = vmatprep.subr.bf16.mxu0 0
  %392 = vmatpush2.bf16.msra.mxu0 0
  %393 = vmatprep.subr.bf16.mxu0 0
  %394 = vmatpush2.bf16.msra.mxu0 0
  %395 = vmatprep.subr.bf16.mxu0 0
  %396 = vmatpush2.bf16.msra.mxu0 0
  %397 = vmatprep.subr.bf16.mxu0 0
  %398 = vmatpush2.bf16.msra.mxu0 0
  %399 = vmatprep.subr.bf16.mxu0 0
  %400 = vmatpush2.bf16.msra.mxu0 0
  %401 = vmatprep.subr.bf16.mxu0 0
  %402 = vmatpush2.bf16.msra.mxu0 0
  %403 = vmatprep.subr.bf16.mxu0 0
  %404 = vmatpush2.bf16.msra.mxu0 0
  %405 = vmatprep.subr.bf16.mxu0 0
  %406 = vmatpush2.bf16.msra.mxu0 0
  %407 = vmatprep.mubr.bf16.mxu0 0
  %408 = vmatmul.mubr.bf16.gmra.mxu0 %v90
  %v409 = vpop.f32.mrf.mxu0
  %v410 = vadd.f32 %v369, %v409
  %v411 = vpop.f32.mrf.mxu0
  %v412 = vadd.f32 %v371, %v411
  %v413 = vpop.f32.mrf.mxu0
  %v414 = vpop.f32.mrf.mxu0
  %415 = vdwg.mxu0
  %v418 = vcombine.low %v410, %v412
  %v420 = vunpack.c.l.s4 1983009808
  %v421 = vunpack.c.0.s8 %v420
  %v422 = vlaneseq
  %v423 = vshrl.u32 %v422, 7
  %v424 = vsub.s32 %v421, %v423
  %v425 = vrot.slane %v418, %v424
  %427 = vst [vmem:[%s3] sm:$0xf] %v425
  %s428 = sld [smem:[#allocation2]]
  %vm429 = vcmp.gt.f32.partialorder %v410, 0.0
  %vm430 = vcmp.gt.f32.partialorder %v412, 0.0
  %v431 = vstv %s428
  %v432 = vmul.f32 %v431, %v410
  %v433 = vmul.f32 %v431, %v412
  %v434 = vsel %vm429, %v410, %v432
  %v435 = vsel %vm430, %v412, %v433
  %v438 = vcombine.low %v434, %v435
  %v440 = vunpack.c.l.s4 1983009808
  %v441 = vunpack.c.0.s8 %v440
  %v442 = vlaneseq
  %v443 = vshrl.u32 %v442, 7
  %v444 = vsub.s32 %v441, %v443
  %v445 = vrot.slane %v438, %v444
  %447 = vst [vmem:[%s4] sm:$0xf] %v445
  // Predicated region
  $region14: #{forward.16} parent=0 // pred_check
    _
  $region15: #{forward.16} parent=0 // pred_check_branch
    %449 = sbr.rel (0) target = $region17
  $region16: #{forward.16} parent=0 // pred_region
    _
  $region17: #{forward.16} parent=0 // pred_fallthru
    _
  // Predicated region
  $region18: #{forward.16} parent=0 // pred_check
    _
  $region19: #{forward.16} parent=0 // pred_check_branch
    %451 = sbr.rel (0) target = $region21
  $region20: #{forward.16} parent=0 // pred_region
    _
  $region21: #{forward.16} parent=0 // pred_fallthru
    _
  // Predicated region
  $region22: #{forward.16} parent=0 // pred_check
    _
  $region23: #{forward.16} parent=0 // pred_check_branch
    %453 = sbr.rel (0) target = $region25
  $region24: #{forward.16} parent=0 // pred_region
    _
  $region25: #{forward.16} parent=0 // pred_fallthru
    _
  // Predicated region
  $region26: #{forward.16} parent=0 // pred_check
    _
  $region27: #{forward.16} parent=0 // pred_check_branch
    %455 = sbr.rel (0) target = $region29
  $region28: #{forward.16} parent=0 // pred_region
    _
  $region29: #{forward.16} parent=0 // pred_fallthru
    _

// kernel: forward.19
$region0: #{forward.19}
  #allocation0 [shape = 'u32[]', space=smem, size = 0x4, offset = 0x4, fixed_abs, tag = 'smem constant byte address 0x4 - core index']
  #allocation1 [shape = 'u32[144,128]{1,0:T(1,128)}', space=vmem, size = 0x12000, scoped, tag = 'internal scratch']
  #allocation2 [shape = 'f32[1]{0:T(128)S(6)}', space=smem, size = 0x200, scoped, tag = 'scoped memory for forward.19']
  %s0 = inlined_call_operand.vmem [shape: bf16[2,768], index: 0, kind: input, shape index: {}]
  %s1 = inlined_call_operand.vmem [shape: bf16[768,128], index: 1, kind: input, shape index: {}]
  %s2 = inlined_call_operand.vmem [shape: f32[1,128], index: 2, kind: input, shape index: {}]
  %s3 = inlined_call_operand.vmem [shape: f32[1,128], index: 3, kind: input, shape index: {}]
  %s4 = inlined_call_operand.<no memory space> [shape: f32[1], index: 4, kind: input, shape index: {}]
  %s5 = inlined_call_operand.vmem [shape: f32[2,128], index: 5, kind: output, shape index: {}]
  %s6 = sld [smem:[#allocation0]]
  $region30: #{forward.19} parent=0
    _
  %s8 = ssub.s32 1, %s6
  %s9 = scalar_select 0, %s8, %s6
  %10 = sst [smem:[#allocation2]] %s4
  // Predicated region
  $region2: #{forward.19} parent=0 // pred_check
    _
  $region3: #{forward.19} parent=0 // pred_check_branch
    %12 = sbr.rel (0) target = $region5
  $region4: #{forward.19} parent=0 // pred_region
    _
  $region5: #{forward.19} parent=0 // pred_fallthru
    _
  // Predicated region
  $region6: #{forward.19} parent=0 // pred_check
    _
  $region7: #{forward.19} parent=0 // pred_check_branch
    %14 = sbr.rel (0) target = $region9
  $region8: #{forward.19} parent=0 // pred_region
    _
  $region9: #{forward.19} parent=0 // pred_fallthru
    _
  // Predicated region
  $region10: #{forward.19} parent=0 // pred_check
    _
  $region11: #{forward.19} parent=0 // pred_check_branch
    %16 = sbr.rel (0) target = $region13
  $region12: #{forward.19} parent=0 // pred_region
    _
  $region13: #{forward.19} parent=0 // pred_fallthru
    _
  // Predicated region
  $region14: #{forward.19} parent=0 // pred_check
    _
  $region15: #{forward.19} parent=0 // pred_check_branch
    %18 = sbr.rel (0) target = $region17
  $region16: #{forward.19} parent=0 // pred_region
    _
  $region17: #{forward.19} parent=0 // pred_fallthru
    _
  // Predicated region
  $region18: #{forward.19} parent=0 // pred_check
    _
  $region19: #{forward.19} parent=0 // pred_check_branch
    %20 = sbr.rel (0) target = $region21
  $region20: #{forward.19} parent=0 // pred_region
    _
  $region21: #{forward.19} parent=0 // pred_fallthru
    _
  %v22 = vld [vmem:[%s0] sm:$0x3f]
  %v23 = vld [vmem:[%s1] sm:$0xf]
  %v24 = vld [vmem:[%s1 + $0x4] sm:$0xf]
  %v25 = vld [vmem:[%s1 + $0x8] sm:$0xf]
  %v26 = vld [vmem:[%s1 + $0xc] sm:$0xf]
  %v27 = vld [vmem:[%s1 + $0x10] sm:$0xf]
  %v28 = vld [vmem:[%s1 + $0x14] sm:$0xf]
  %v29 = vld [vmem:[%s1 + $0x18] sm:$0xf]
  %v30 = vld [vmem:[%s1 + $0x1c] sm:$0xf]
  %v31 = vld [vmem:[%s1 + $0x20] sm:$0xf]
  %v32 = vld [vmem:[%s1 + $0x24] sm:$0xf]
  %v33 = vld [vmem:[%s1 + $0x28] sm:$0xf]
  %v34 = vld [vmem:[%s1 + $0x2c] sm:$0xf]
  %v35 = vld [vmem:[%s1 + $0x30] sm:$0xf]
  %v36 = vld [vmem:[%s1 + $0x34] sm:$0xf]
  %v37 = vld [vmem:[%s1 + $0x38] sm:$0xf]
  %v38 = vld [vmem:[%s1 + $0x3c] sm:$0xf]
  %v39 = vld [vmem:[%s1 + $0x40] sm:$0xf]
  %v40 = vld [vmem:[%s1 + $0x44] sm:$0xf]
  %v41 = vld [vmem:[%s1 + $0x48] sm:$0xf]
  %v42 = vld [vmem:[%s1 + $0x4c] sm:$0xf]
  %v43 = vld [vmem:[%s1 + $0x50] sm:$0xf]
  %v44 = vld [vmem:[%s1 + $0x54] sm:$0xf]
  %v45 = vld [vmem:[%s1 + $0x58] sm:$0xf]
  %v46 = vld [vmem:[%s1 + $0x5c] sm:$0xf]
  %v47 = vld [vmem:[%s1 + $0x60] sm:$0xf]
  %v48 = vld [vmem:[%s1 + $0x64] sm:$0xf]
  %v49 = vld [vmem:[%s1 + $0x68] sm:$0xf]
  %v50 = vld [vmem:[%s1 + $0x6c] sm:$0xf]
  %v51 = vld [vmem:[%s1 + $0x70] sm:$0xf]
  %v52 = vld [vmem:[%s1 + $0x74] sm:$0xf]
  %v53 = vld [vmem:[%s1 + $0x78] sm:$0xf]
  %v54 = vld [vmem:[%s1 + $0x7c] sm:$0xf]
  %v55 = vld [vmem:[%s1 + $0x80] sm:$0xf]
  %v56 = vld [vmem:[%s1 + $0x84] sm:$0xf]
  %v57 = vld [vmem:[%s1 + $0x88] sm:$0xf]
  %v58 = vld [vmem:[%s1 + $0x8c] sm:$0xf]
  %v59 = vld [vmem:[%s1 + $0x90] sm:$0xf]
  %v60 = vld [vmem:[%s1 + $0x94] sm:$0xf]
  %v61 = vld [vmem:[%s1 + $0x98] sm:$0xf]
  %v62 = vld [vmem:[%s1 + $0x9c] sm:$0xf]
  %v63 = vld [vmem:[%s1 + $0xa0] sm:$0xf]
  %v64 = vld [vmem:[%s1 + $0xa4] sm:$0xf]
  %v65 = vld [vmem:[%s1 + $0xa8] sm:$0xf]
  %v66 = vld [vmem:[%s1 + $0xac] sm:$0xf]
  %v67 = vld [vmem:[%s1 + $0xb0] sm:$0xf]
  %v68 = vld [vmem:[%s1 + $0xb4] sm:$0xf]
  %v69 = vld [vmem:[%s1 + $0xb8] sm:$0xf]
  %v70 = vld [vmem:[%s1 + $0xbc] sm:$0xf]
  %v71 = vld [vmem:[%s1 + $0xc0] sm:$0xf]
  %v72 = vld [vmem:[%s1 + $0xc4] sm:$0xf]
  %v73 = vld [vmem:[%s1 + $0xc8] sm:$0xf]
  %v74 = vld [vmem:[%s1 + $0xcc] sm:$0xf]
  %v75 = vld [vmem:[%s1 + $0xd0] sm:$0xf]
  %v76 = vld [vmem:[%s1 + $0xd4] sm:$0xf]
  %v77 = vld [vmem:[%s1 + $0xd8] sm:$0xf]
  %v78 = vld [vmem:[%s1 + $0xdc] sm:$0xf]
  %v79 = vld [vmem:[%s1 + $0xe0] sm:$0xf]
  %v80 = vld [vmem:[%s1 + $0xe4] sm:$0xf]
  %v81 = vld [vmem:[%s1 + $0xe8] sm:$0xf]
  %v82 = vld [vmem:[%s1 + $0xec] sm:$0xf]
  %v83 = vld [vmem:[%s1 + $0xf0] sm:$0xf]
  %v84 = vld [vmem:[%s1 + $0xf4] sm:$0xf]
  %v85 = vld [vmem:[%s1 + $0xf8] sm:$0xf]
  %v86 = vld [vmem:[%s1 + $0xfc] sm:$0xf]
  %v87 = vld [vmem:[%s1 + $0x100] sm:$0xf]
  %v88 = vld [vmem:[%s1 + $0x104] sm:$0xf]
  %v89 = vld [vmem:[%s1 + $0x108] sm:$0xf]
  %v90 = vld [vmem:[%s1 + $0x10c] sm:$0xf]
  %v91 = vld [vmem:[%s1 + $0x110] sm:$0xf]
  %v92 = vld [vmem:[%s1 + $0x114] sm:$0xf]
  %v93 = vld [vmem:[%s1 + $0x118] sm:$0xf]
  %v94 = vld [vmem:[%s1 + $0x11c] sm:$0xf]
  %v95 = vld [vmem:[%s1 + $0x120] sm:$0xf]
  %v96 = vld [vmem:[%s1 + $0x124] sm:$0xf]
  %v97 = vld [vmem:[%s1 + $0x128] sm:$0xf]
  %v98 = vld [vmem:[%s1 + $0x12c] sm:$0xf]
  %v99 = vld [vmem:[%s1 + $0x130] sm:$0xf]
  %v100 = vld [vmem:[%s1 + $0x134] sm:$0xf]
  %v101 = vld [vmem:[%s1 + $0x138] sm:$0xf]
  %v102 = vld [vmem:[%s1 + $0x13c] sm:$0xf]
  %v103 = vld [vmem:[%s1 + $0x140] sm:$0xf]
  %v104 = vld [vmem:[%s1 + $0x144] sm:$0xf]
  %v105 = vld [vmem:[%s1 + $0x148] sm:$0xf]
  %v106 = vld [vmem:[%s1 + $0x14c] sm:$0xf]
  %v107 = vld [vmem:[%s1 + $0x150] sm:$0xf]
  %v108 = vld [vmem:[%s1 + $0x154] sm:$0xf]
  %v109 = vld [vmem:[%s1 + $0x158] sm:$0xf]
  %v110 = vld [vmem:[%s1 + $0x15c] sm:$0xf]
  %v111 = vld [vmem:[%s1 + $0x160] sm:$0xf]
  %v112 = vld [vmem:[%s1 + $0x164] sm:$0xf]
  %v113 = vld [vmem:[%s1 + $0x168] sm:$0xf]
  %v114 = vld [vmem:[%s1 + $0x16c] sm:$0xf]
  %v115 = vld [vmem:[%s1 + $0x170] sm:$0xf]
  %v116 = vld [vmem:[%s1 + $0x174] sm:$0xf]
  %v117 = vld [vmem:[%s1 + $0x178] sm:$0xf]
  %v118 = vld [vmem:[%s1 + $0x17c] sm:$0xf]
  %v120 = vcombine.high %v22, %v22
  %v122 = vunpack.c.l.s4 1966171168
  %v123 = vunpack.c.0.s8 %v122
  %v124 = vlaneseq
  %v125 = vshrl.u32 %v124, 7
  %v126 = vsub.s32 %v123, %v125
  %v127 = vrot.slane %v22, %v126
  %v129 = vunpack.c.l.s4 1966171168
  %v130 = vunpack.c.0.s8 %v129
  %v131 = vlaneseq
  %v132 = vshrl.u32 %v131, 7
  %v133 = vsub.s32 %v130, %v132
  %v134 = vrot.slane %v120, %v133
  %v135 = vcombine.high %v127, %v127
  %v136 = vcombine.high %v134, %v134
  %v138 = vunpack.c.l.s4 1966171168
  %v139 = vunpack.c.0.s8 %v138
  %v140 = vlaneseq
  %v141 = vshrl.u32 %v140, 7
  %v142 = vsub.s32 %v139, %v141
  %v143 = vrot.slane %v127, %v142
  %v145 = vunpack.c.l.s4 1966171168
  %v146 = vunpack.c.0.s8 %v145
  %v147 = vlaneseq
  %v148 = vshrl.u32 %v147, 7
  %v149 = vsub.s32 %v146, %v148
  %v150 = vrot.slane %v134, %v149
  %v152 = vunpack.c.l.s4 1966171168
  %v153 = vunpack.c.0.s8 %v152
  %v154 = vlaneseq
  %v155 = vshrl.u32 %v154, 7
  %v156 = vsub.s32 %v153, %v155
  %v157 = vrot.slane %v135, %v156
  %v159 = vunpack.c.l.s4 1966171168
  %v160 = vunpack.c.0.s8 %v159
  %v161 = vlaneseq
  %v162 = vshrl.u32 %v161, 7
  %v163 = vsub.s32 %v160, %v162
  %v164 = vrot.slane %v136, %v163
  %v165 = vcombine.high %v143, %v143
  %v166 = vcombine.high %v157, %v157
  %v269 = vunpack.c.l.b16 %v23
  %v270 = vunpack.c.l.b16 %v24
  %v271 = vunpack.c.l.b16 %v25
  %v272 = vunpack.c.l.b16 %v26
  %v273 = vunpack.c.l.b16 %v27
  %v274 = vunpack.c.l.b16 %v28
  %v275 = vunpack.c.l.b16 %v29
  %v276 = vunpack.c.l.b16 %v30
  %v277 = vunpack.c.l.b16 %v31
  %v278 = vunpack.c.l.b16 %v32
  %v279 = vunpack.c.l.b16 %v33
  %v280 = vunpack.c.l.b16 %v34
  %v281 = vunpack.c.l.b16 %v35
  %v282 = vunpack.c.l.b16 %v36
  %v283 = vunpack.c.l.b16 %v37
  %v284 = vunpack.c.l.b16 %v38
  %v285 = vunpack.c.l.b16 %v39
  %v286 = vunpack.c.l.b16 %v40
  %v287 = vunpack.c.l.b16 %v41
  %v288 = vunpack.c.l.b16 %v42
  %v289 = vunpack.c.l.b16 %v43
  %v290 = vunpack.c.l.b16 %v44
  %v291 = vunpack.c.l.b16 %v45
  %v292 = vunpack.c.l.b16 %v46
  %v293 = vunpack.c.l.b16 %v47
  %v294 = vunpack.c.l.b16 %v48
  %v295 = vunpack.c.l.b16 %v49
  %v296 = vunpack.c.l.b16 %v50
  %v297 = vunpack.c.l.b16 %v51
  %v298 = vunpack.c.l.b16 %v52
  %v299 = vunpack.c.l.b16 %v53
  %v300 = vunpack.c.l.b16 %v54
  %v301 = vunpack.c.l.b16 %v55
  %v302 = vunpack.c.l.b16 %v56
  %v303 = vunpack.c.l.b16 %v57
  %v304 = vunpack.c.l.b16 %v58
  %v305 = vunpack.c.l.b16 %v59
  %v306 = vunpack.c.l.b16 %v60
  %v307 = vunpack.c.l.b16 %v61
  %v308 = vunpack.c.l.b16 %v62
  %v309 = vunpack.c.l.b16 %v63
  %v310 = vunpack.c.l.b16 %v64
  %v311 = vunpack.c.l.b16 %v65
  %v312 = vunpack.c.l.b16 %v66
  %v313 = vunpack.c.l.b16 %v67
  %v314 = vunpack.c.l.b16 %v68
  %v315 = vunpack.c.l.b16 %v69
  %v316 = vunpack.c.l.b16 %v70
  %v317 = vunpack.c.l.b16 %v71
  %v318 = vunpack.c.l.b16 %v72
  %v319 = vunpack.c.l.b16 %v73
  %v320 = vunpack.c.l.b16 %v74
  %v321 = vunpack.c.l.b16 %v75
  %v322 = vunpack.c.l.b16 %v76
  %v323 = vunpack.c.l.b16 %v77
  %v324 = vunpack.c.l.b16 %v78
  %v325 = vunpack.c.l.b16 %v79
  %v326 = vunpack.c.l.b16 %v80
  %v327 = vunpack.c.l.b16 %v81
  %v328 = vunpack.c.l.b16 %v82
  %v329 = vunpack.c.l.b16 %v83
  %v330 = vunpack.c.l.b16 %v84
  %v331 = vunpack.c.l.b16 %v85
  %v332 = vunpack.c.l.b16 %v86
  %v333 = vunpack.c.l.b16 %v87
  %v334 = vunpack.c.l.b16 %v88
  %v335 = vunpack.c.l.b16 %v89
  %v336 = vunpack.c.l.b16 %v90
  %v337 = vunpack.c.l.b16 %v91
  %v338 = vunpack.c.l.b16 %v92
  %v339 = vunpack.c.l.b16 %v93
  %v340 = vunpack.c.l.b16 %v94
  %v341 = vunpack.c.l.b16 %v95
  %v342 = vunpack.c.l.b16 %v96
  %v343 = vunpack.c.l.b16 %v97
  %v344 = vunpack.c.l.b16 %v98
  %v345 = vunpack.c.l.b16 %v99
  %v346 = vunpack.c.l.b16 %v100
  %v347 = vunpack.c.l.b16 %v101
  %v348 = vunpack.c.l.b16 %v102
  %v349 = vunpack.c.l.b16 %v103
  %v350 = vunpack.c.l.b16 %v104
  %v351 = vunpack.c.l.b16 %v105
  %v352 = vunpack.c.l.b16 %v106
  %v353 = vunpack.c.l.b16 %v107
  %v354 = vunpack.c.l.b16 %v108
  %v355 = vunpack.c.l.b16 %v109
  %v356 = vunpack.c.l.b16 %v110
  %v357 = vunpack.c.l.b16 %v111
  %v358 = vunpack.c.l.b16 %v112
  %v359 = vunpack.c.l.b16 %v113
  %v360 = vunpack.c.l.b16 %v114
  %v361 = vunpack.c.l.b16 %v115
  %v362 = vunpack.c.l.b16 %v116
  %v363 = vunpack.c.l.b16 %v117
  %v364 = vunpack.c.l.b16 %v118
  %v365 = vpack.c.b16 %v270, %v269
  %v366 = vpack.c.b16 %v272, %v271
  %v367 = vpack.c.b16 %v274, %v273
  %v368 = vpack.c.b16 %v276, %v275
  %v369 = vpack.c.b16 %v278, %v277
  %v370 = vpack.c.b16 %v280, %v279
  %v371 = vpack.c.b16 %v282, %v281
  %v372 = vpack.c.b16 %v284, %v283
  %v373 = vpack.c.b16 %v286, %v285
  %v374 = vpack.c.b16 %v288, %v287
  %v375 = vpack.c.b16 %v290, %v289
  %v376 = vpack.c.b16 %v292, %v291
  %v377 = vpack.c.b16 %v294, %v293
  %v378 = vpack.c.b16 %v296, %v295
  %v379 = vpack.c.b16 %v298, %v297
  %v380 = vpack.c.b16 %v300, %v299
  %v381 = vpack.c.b16 %v302, %v301
  %v382 = vpack.c.b16 %v304, %v303
  %v383 = vpack.c.b16 %v306, %v305
  %v384 = vpack.c.b16 %v308, %v307
  %v385 = vpack.c.b16 %v310, %v309
  %v386 = vpack.c.b16 %v312, %v311
  %v387 = vpack.c.b16 %v314, %v313
  %v388 = vpack.c.b16 %v316, %v315
  %v389 = vpack.c.b16 %v318, %v317
  %v390 = vpack.c.b16 %v320, %v319
  %v391 = vpack.c.b16 %v322, %v321
  %v392 = vpack.c.b16 %v324, %v323
  %v393 = vpack.c.b16 %v326, %v325
  %v394 = vpack.c.b16 %v328, %v327
  %v395 = vpack.c.b16 %v330, %v329
  %v396 = vpack.c.b16 %v332, %v331
  %v397 = vpack.c.b16 %v334, %v333
  %v398 = vpack.c.b16 %v336, %v335
  %v399 = vpack.c.b16 %v338, %v337
  %v400 = vpack.c.b16 %v340, %v339
  %v401 = vpack.c.b16 %v342, %v341
  %v402 = vpack.c.b16 %v344, %v343
  %v403 = vpack.c.b16 %v346, %v345
  %v404 = vpack.c.b16 %v348, %v347
  %v405 = vpack.c.b16 %v350, %v349
  %v406 = vpack.c.b16 %v352, %v351
  %v407 = vpack.c.b16 %v354, %v353
  %v408 = vpack.c.b16 %v356, %v355
  %v409 = vpack.c.b16 %v358, %v357
  %v410 = vpack.c.b16 %v360, %v359
  %v411 = vpack.c.b16 %v362, %v361
  %v412 = vpack.c.b16 %v364, %v363
  %461 = vmatprep.subr.bf16.mxu0 0
  %462 = vmatpush1.bf16.msra.mxu0 %v372
  %463 = vmatprep.subr.bf16.mxu0 0
  %464 = vmatpush1.bf16.msra.mxu0 %v371
  %465 = vmatprep.subr.bf16.mxu0 0
  %466 = vmatpush1.bf16.msra.mxu0 %v370
  %467 = vmatprep.subr.bf16.mxu0 0
  %468 = vmatpush1.bf16.msra.mxu0 %v369
  %469 = vmatprep.subr.bf16.mxu0 0
  %470 = vmatpush1.bf16.msra.mxu0 %v368
  %471 = vmatprep.subr.bf16.mxu0 0
  %472 = vmatpush1.bf16.msra.mxu0 %v367
  %473 = vmatprep.subr.bf16.mxu0 0
  %474 = vmatpush1.bf16.msra.mxu0 %v366
  %475 = vmatprep.subr.bf16.mxu0 0
  %476 = vmatpush1.bf16.msra.mxu0 %v365
  %477 = vmatprep.subr.bf16.mxu0 0
  %478 = vmatpush2.bf16.msra.mxu0 %v380
  %479 = vmatprep.subr.bf16.mxu0 0
  %480 = vmatpush2.bf16.msra.mxu0 %v379
  %481 = vmatprep.subr.bf16.mxu0 0
  %482 = vmatpush2.bf16.msra.mxu0 %v378
  %483 = vmatprep.subr.bf16.mxu0 0
  %484 = vmatpush2.bf16.msra.mxu0 %v377
  %485 = vmatprep.subr.bf16.mxu0 0
  %486 = vmatpush2.bf16.msra.mxu0 %v376
  %487 = vmatprep.subr.bf16.mxu0 0
  %488 = vmatpush2.bf16.msra.mxu0 %v375
  %489 = vmatprep.subr.bf16.mxu0 0
  %490 = vmatpush2.bf16.msra.mxu0 %v374
  %491 = vmatprep.subr.bf16.mxu0 0
  %492 = vmatpush2.bf16.msra.mxu0 %v373
  %493 = vmatprep.mubr.bf16.mxu0 %v157
  %494 = vmatmul.mubr.bf16.gmra.mxu0 %v143
  %v495 = vpop.f32.mrf.mxu0
  %v496 = vadd.f32 0.0, %v495
  %v497 = vpop.f32.mrf.mxu0
  %v498 = vpop.f32.mrf.mxu0
  %v499 = vpop.f32.mrf.mxu0
  %500 = vdwg.mxu0
  %501 = vmatprep.subr.bf16.mxu0 0
  %502 = vmatpush1.bf16.msra.mxu0 %v388
  %503 = vmatprep.subr.bf16.mxu0 0
  %504 = vmatpush1.bf16.msra.mxu0 %v387
  %505 = vmatprep.subr.bf16.mxu0 0
  %506 = vmatpush1.bf16.msra.mxu0 %v386
  %507 = vmatprep.subr.bf16.mxu0 0
  %508 = vmatpush1.bf16.msra.mxu0 %v385
  %509 = vmatprep.subr.bf16.mxu0 0
  %510 = vmatpush1.bf16.msra.mxu0 %v384
  %511 = vmatprep.subr.bf16.mxu0 0
  %512 = vmatpush1.bf16.msra.mxu0 %v383
  %513 = vmatprep.subr.bf16.mxu0 0
  %514 = vmatpush1.bf16.msra.mxu0 %v382
  %515 = vmatprep.subr.bf16.mxu0 0
  %516 = vmatpush1.bf16.msra.mxu0 %v381
  %517 = vmatprep.subr.bf16.mxu0 0
  %518 = vmatpush2.bf16.msra.mxu0 %v396
  %519 = vmatprep.subr.bf16.mxu0 0
  %520 = vmatpush2.bf16.msra.mxu0 %v395
  %521 = vmatprep.subr.bf16.mxu0 0
  %522 = vmatpush2.bf16.msra.mxu0 %v394
  %523 = vmatprep.subr.bf16.mxu0 0
  %524 = vmatpush2.bf16.msra.mxu0 %v393
  %525 = vmatprep.subr.bf16.mxu0 0
  %526 = vmatpush2.bf16.msra.mxu0 %v392
  %527 = vmatprep.subr.bf16.mxu0 0
  %528 = vmatpush2.bf16.msra.mxu0 %v391
  %529 = vmatprep.subr.bf16.mxu0 0
  %530 = vmatpush2.bf16.msra.mxu0 %v390
  %531 = vmatprep.subr.bf16.mxu0 0
  %532 = vmatpush2.bf16.msra.mxu0 %v389
  %533 = vmatprep.mubr.bf16.mxu0 %v166
  %534 = vmatmul.mubr.bf16.gmra.mxu0 %v165
  %v535 = vpop.f32.mrf.mxu0
  %v536 = vadd.f32 %v496, %v535
  %v537 = vpop.f32.mrf.mxu0
  %v538 = vpop.f32.mrf.mxu0
  %v539 = vpop.f32.mrf.mxu0
  %540 = vdwg.mxu0
  %541 = vmatprep.subr.bf16.mxu0 0
  %542 = vmatpush1.bf16.msra.mxu0 %v404
  %543 = vmatprep.subr.bf16.mxu0 0
  %544 = vmatpush1.bf16.msra.mxu0 %v403
  %545 = vmatprep.subr.bf16.mxu0 0
  %546 = vmatpush1.bf16.msra.mxu0 %v402
  %547 = vmatprep.subr.bf16.mxu0 0
  %548 = vmatpush1.bf16.msra.mxu0 %v401
  %549 = vmatprep.subr.bf16.mxu0 0
  %550 = vmatpush1.bf16.msra.mxu0 %v400
  %551 = vmatprep.subr.bf16.mxu0 0
  %552 = vmatpush1.bf16.msra.mxu0 %v399
  %553 = vmatprep.subr.bf16.mxu0 0
  %554 = vmatpush1.bf16.msra.mxu0 %v398
  %555 = vmatprep.subr.bf16.mxu0 0
  %556 = vmatpush1.bf16.msra.mxu0 %v397
  %557 = vmatprep.subr.bf16.mxu0 0
  %558 = vmatpush2.bf16.msra.mxu0 %v412
  %559 = vmatprep.subr.bf16.mxu0 0
  %560 = vmatpush2.bf16.msra.mxu0 %v411
  %561 = vmatprep.subr.bf16.mxu0 0
  %562 = vmatpush2.bf16.msra.mxu0 %v410
  %563 = vmatprep.subr.bf16.mxu0 0
  %564 = vmatpush2.bf16.msra.mxu0 %v409
  %565 = vmatprep.subr.bf16.mxu0 0
  %566 = vmatpush2.bf16.msra.mxu0 %v408
  %567 = vmatprep.subr.bf16.mxu0 0
  %568 = vmatpush2.bf16.msra.mxu0 %v407
  %569 = vmatprep.subr.bf16.mxu0 0
  %570 = vmatpush2.bf16.msra.mxu0 %v406
  %571 = vmatprep.subr.bf16.mxu0 0
  %572 = vmatpush2.bf16.msra.mxu0 %v405
  %573 = vmatprep.mubr.bf16.mxu0 %v164
  %574 = vmatmul.mubr.bf16.gmra.mxu0 %v150
  %v575 = vpop.f32.mrf.mxu0
  %v576 = vadd.f32 %v536, %v575
  %v577 = vpop.f32.mrf.mxu0
  %v578 = vpop.f32.mrf.mxu0
  %v579 = vpop.f32.mrf.mxu0
  %580 = vdwg.mxu0
  %s581 = sld [smem:[#allocation2]]
  %vm582 = vcmp.gt.f32.partialorder %v576, 0.0
  %v583 = vstv %s581
  %v584 = vmul.f32 %v583, %v576
  %v585 = vsel %vm582, %v576, %v584
  %v586 = vld [vmem:[%s2] sm:$0x1]
  %v588 = vlaneseq
  %v589 = vshrl.u32 %v588, 7
  %v590 = vsub.s32 0, %v589
  %v591 = vrot.slane %v586, %v590
  %v593 = vmul.f32 %v585, %v591
  %v594 = vld [vmem:[%s3] sm:$0x1]
  %v596 = vlaneseq
  %v597 = vshrl.u32 %v596, 7
  %v598 = vsub.s32 0, %v597
  %v599 = vrot.slane %v594, %v598
  %v601 = vadd.f32 %v593, %v599
  %602 = vst [vmem:[%s5] sm:$0x3] %v601
  // Predicated region
  $region22: #{forward.19} parent=0 // pred_check
    _
  $region23: #{forward.19} parent=0 // pred_check_branch
    %604 = sbr.rel (0) target = $region25
  $region24: #{forward.19} parent=0 // pred_region
    _
  $region25: #{forward.19} parent=0 // pred_fallthru
    _
  // Predicated region
  $region26: #{forward.19} parent=0 // pred_check
    _
  $region27: #{forward.19} parent=0 // pred_check_branch
    %606 = sbr.rel (0) target = $region29
  $region28: #{forward.19} parent=0 // pred_region
    _
  $region29: #{forward.19} parent=0 // pred_fallthru
    _

// kernel: forward.18
$region0: #{forward.18}
  #allocation0 [shape = 'u32[]', space=smem, size = 0x4, offset = 0x4, fixed_abs, tag = 'smem constant byte address 0x4 - core index']
  #allocation1 [shape = 'u32[144,128]{1,0:T(1,128)}', space=vmem, size = 0x12000, scoped, tag = 'internal scratch']
  %s0 = inlined_call_operand.vmem [shape: bf16[2,1536], index: 0, kind: input, shape index: {}]
  %s1 = inlined_call_operand.vmem [shape: bf16[1536,256], index: 1, kind: input, shape index: {}]
  %s2 = inlined_call_operand.vmem [shape: f32[2,256], index: 2, kind: input, shape index: {}]
  %s3 = inlined_call_operand.vmem [shape: f32[2,256], index: 3, kind: output, shape index: {}]
  %s4 = sld [smem:[#allocation0]]
  $region22: #{forward.18} parent=0
    _
  %s6 = ssub.s32 1, %s4
  %s7 = scalar_select 0, %s6, %s4
  // Predicated region
  $region2: #{forward.18} parent=0 // pred_check
    _
  $region3: #{forward.18} parent=0 // pred_check_branch
    %9 = sbr.rel (0) target = $region5
  $region4: #{forward.18} parent=0 // pred_region
    _
  $region5: #{forward.18} parent=0 // pred_fallthru
    _
  // Predicated region
  $region6: #{forward.18} parent=0 // pred_check
    _
  $region7: #{forward.18} parent=0 // pred_check_branch
    %11 = sbr.rel (0) target = $region9
  $region8: #{forward.18} parent=0 // pred_region
    _
  $region9: #{forward.18} parent=0 // pred_fallthru
    _
  // Predicated region
  $region10: #{forward.18} parent=0 // pred_check
    _
  $region11: #{forward.18} parent=0 // pred_check_branch
    %13 = sbr.rel (0) target = $region13
  $region12: #{forward.18} parent=0 // pred_region
    _
  $region13: #{forward.18} parent=0 // pred_fallthru
    _
  %v14 = vld [vmem:[%s0] sm:$0xff]
  %v15 = vld [vmem:[%s0 + $0x8] sm:$0xf]
  %v16 = vld [vmem:[%s1] sm:$0xff]
  %v17 = vld [vmem:[%s1 + $0x8] sm:$0xff]
  %v18 = vld [vmem:[%s1 + $0x10] sm:$0xff]
  %v19 = vld [vmem:[%s1 + $0x18] sm:$0xff]
  %v20 = vld [vmem:[%s1 + $0x20] sm:$0xff]
  %v21 = vld [vmem:[%s1 + $0x28] sm:$0xff]
  %v22 = vld [vmem:[%s1 + $0x30] sm:$0xff]
  %v23 = vld [vmem:[%s1 + $0x38] sm:$0xff]
  %v24 = vld [vmem:[%s1 + $0x40] sm:$0xff]
  %v25 = vld [vmem:[%s1 + $0x48] sm:$0xff]
  %v26 = vld [vmem:[%s1 + $0x50] sm:$0xff]
  %v27 = vld [vmem:[%s1 + $0x58] sm:$0xff]
  %v28 = vld [vmem:[%s1 + $0x60] sm:$0xff]
  %v29 = vld [vmem:[%s1 + $0x68] sm:$0xff]
  %v30 = vld [vmem:[%s1 + $0x70] sm:$0xff]
  %v31 = vld [vmem:[%s1 + $0x78] sm:$0xff]
  %v32 = vld [vmem:[%s1 + $0x80] sm:$0xff]
  %v33 = vld [vmem:[%s1 + $0x88] sm:$0xff]
  %v34 = vld [vmem:[%s1 + $0x90] sm:$0xff]
  %v35 = vld [vmem:[%s1 + $0x98] sm:$0xff]
  %v36 = vld [vmem:[%s1 + $0xa0] sm:$0xff]
  %v37 = vld [vmem:[%s1 + $0xa8] sm:$0xff]
  %v38 = vld [vmem:[%s1 + $0xb0] sm:$0xff]
  %v39 = vld [vmem:[%s1 + $0xb8] sm:$0xff]
  %v40 = vld [vmem:[%s1 + $0xc0] sm:$0xff]
  %v41 = vld [vmem:[%s1 + $0xc8] sm:$0xff]
  %v42 = vld [vmem:[%s1 + $0xd0] sm:$0xff]
  %v43 = vld [vmem:[%s1 + $0xd8] sm:$0xff]
  %v44 = vld [vmem:[%s1 + $0xe0] sm:$0xff]
  %v45 = vld [vmem:[%s1 + $0xe8] sm:$0xff]
  %v46 = vld [vmem:[%s1 + $0xf0] sm:$0xff]
  %v47 = vld [vmem:[%s1 + $0xf8] sm:$0xff]
  %v48 = vld [vmem:[%s1 + $0x100] sm:$0xff]
  %v49 = vld [vmem:[%s1 + $0x108] sm:$0xff]
  %v50 = vld [vmem:[%s1 + $0x110] sm:$0xff]
  %v51 = vld [vmem:[%s1 + $0x118] sm:$0xff]
  %v52 = vld [vmem:[%s1 + $0x120] sm:$0xff]
  %v53 = vld [vmem:[%s1 + $0x128] sm:$0xff]
  %v54 = vld [vmem:[%s1 + $0x130] sm:$0xff]
  %v55 = vld [vmem:[%s1 + $0x138] sm:$0xff]
  %v56 = vld [vmem:[%s1 + $0x140] sm:$0xff]
  %v57 = vld [vmem:[%s1 + $0x148] sm:$0xff]
  %v58 = vld [vmem:[%s1 + $0x150] sm:$0xff]
  %v59 = vld [vmem:[%s1 + $0x158] sm:$0xff]
  %v60 = vld [vmem:[%s1 + $0x160] sm:$0xff]
  %v61 = vld [vmem:[%s1 + $0x168] sm:$0xff]
  %v62 = vld [vmem:[%s1 + $0x170] sm:$0xff]
  %v63 = vld [vmem:[%s1 + $0x178] sm:$0xff]
  %v64 = vld [vmem:[%s1 + $0x180] sm:$0xff]
  %v65 = vld [vmem:[%s1 + $0x188] sm:$0xff]
  %v66 = vld [vmem:[%s1 + $0x190] sm:$0xff]
  %v67 = vld [vmem:[%s1 + $0x198] sm:$0xff]
  %v68 = vld [vmem:[%s1 + $0x1a0] sm:$0xff]
  %v69 = vld [vmem:[%s1 + $0x1a8] sm:$0xff]
  %v70 = vld [vmem:[%s1 + $0x1b0] sm:$0xff]
  %v71 = vld [vmem:[%s1 + $0x1b8] sm:$0xff]
  %v72 = vld [vmem:[%s1 + $0x1c0] sm:$0xff]
  %v73 = vld [vmem:[%s1 + $0x1c8] sm:$0xff]
  %v74 = vld [vmem:[%s1 + $0x1d0] sm:$0xff]
  %v75 = vld [vmem:[%s1 + $0x1d8] sm:$0xff]
  %v76 = vld [vmem:[%s1 + $0x1e0] sm:$0xff]
  %v77 = vld [vmem:[%s1 + $0x1e8] sm:$0xff]
  %v78 = vld [vmem:[%s1 + $0x1f0] sm:$0xff]
  %v79 = vld [vmem:[%s1 + $0x1f8] sm:$0xff]
  %v80 = vld [vmem:[%s1 + $0x200] sm:$0xff]
  %v81 = vld [vmem:[%s1 + $0x208] sm:$0xff]
  %v82 = vld [vmem:[%s1 + $0x210] sm:$0xff]
  %v83 = vld [vmem:[%s1 + $0x218] sm:$0xff]
  %v84 = vld [vmem:[%s1 + $0x220] sm:$0xff]
  %v85 = vld [vmem:[%s1 + $0x228] sm:$0xff]
  %v86 = vld [vmem:[%s1 + $0x230] sm:$0xff]
  %v87 = vld [vmem:[%s1 + $0x238] sm:$0xff]
  %v88 = vld [vmem:[%s1 + $0x240] sm:$0xff]
  %v89 = vld [vmem:[%s1 + $0x248] sm:$0xff]
  %v90 = vld [vmem:[%s1 + $0x250] sm:$0xff]
  %v91 = vld [vmem:[%s1 + $0x258] sm:$0xff]
  %v92 = vld [vmem:[%s1 + $0x260] sm:$0xff]
  %v93 = vld [vmem:[%s1 + $0x268] sm:$0xff]
  %v94 = vld [vmem:[%s1 + $0x270] sm:$0xff]
  %v95 = vld [vmem:[%s1 + $0x278] sm:$0xff]
  %v96 = vld [vmem:[%s1 + $0x280] sm:$0xff]
  %v97 = vld [vmem:[%s1 + $0x288] sm:$0xff]
  %v98 = vld [vmem:[%s1 + $0x290] sm:$0xff]
  %v99 = vld [vmem:[%s1 + $0x298] sm:$0xff]
  %v100 = vld [vmem:[%s1 + $0x2a0] sm:$0xff]
  %v101 = vld [vmem:[%s1 + $0x2a8] sm:$0xff]
  %v102 = vld [vmem:[%s1 + $0x2b0] sm:$0xff]
  %v103 = vld [vmem:[%s1 + $0x2b8] sm:$0xff]
  %v104 = vld [vmem:[%s1 + $0x2c0] sm:$0xff]
  %v105 = vld [vmem:[%s1 + $0x2c8] sm:$0xff]
  %v106 = vld [vmem:[%s1 + $0x2d0] sm:$0xff]
  %v107 = vld [vmem:[%s1 + $0x2d8] sm:$0xff]
  %v108 = vld [vmem:[%s1 + $0x2e0] sm:$0xff]
  %v109 = vld [vmem:[%s1 + $0x2e8] sm:$0xff]
  %v110 = vld [vmem:[%s1 + $0x2f0] sm:$0xff]
  %v111 = vld [vmem:[%s1 + $0x2f8] sm:$0xff]
  %v112 = vld [vmem:[%s1 + $0x300] sm:$0xff]
  %v113 = vld [vmem:[%s1 + $0x308] sm:$0xff]
  %v114 = vld [vmem:[%s1 + $0x310] sm:$0xff]
  %v115 = vld [vmem:[%s1 + $0x318] sm:$0xff]
  %v116 = vld [vmem:[%s1 + $0x320] sm:$0xff]
  %v117 = vld [vmem:[%s1 + $0x328] sm:$0xff]
  %v118 = vld [vmem:[%s1 + $0x330] sm:$0xff]
  %v119 = vld [vmem:[%s1 + $0x338] sm:$0xff]
  %v120 = vld [vmem:[%s1 + $0x340] sm:$0xff]
  %v121 = vld [vmem:[%s1 + $0x348] sm:$0xff]
  %v122 = vld [vmem:[%s1 + $0x350] sm:$0xff]
  %v123 = vld [vmem:[%s1 + $0x358] sm:$0xff]
  %v124 = vld [vmem:[%s1 + $0x360] sm:$0xff]
  %v125 = vld [vmem:[%s1 + $0x368] sm:$0xff]
  %v126 = vld [vmem:[%s1 + $0x370] sm:$0xff]
  %v127 = vld [vmem:[%s1 + $0x378] sm:$0xff]
  %v128 = vld [vmem:[%s1 + $0x380] sm:$0xff]
  %v129 = vld [vmem:[%s1 + $0x388] sm:$0xff]
  %v130 = vld [vmem:[%s1 + $0x390] sm:$0xff]
  %v131 = vld [vmem:[%s1 + $0x398] sm:$0xff]
  %v132 = vld [vmem:[%s1 + $0x3a0] sm:$0xff]
  %v133 = vld [vmem:[%s1 + $0x3a8] sm:$0xff]
  %v134 = vld [vmem:[%s1 + $0x3b0] sm:$0xff]
  %v135 = vld [vmem:[%s1 + $0x3b8] sm:$0xff]
  %v136 = vld [vmem:[%s1 + $0x3c0] sm:$0xff]
  %v137 = vld [vmem:[%s1 + $0x3c8] sm:$0xff]
  %v138 = vld [vmem:[%s1 + $0x3d0] sm:$0xff]
  %v139 = vld [vmem:[%s1 + $0x3d8] sm:$0xff]
  %v140 = vld [vmem:[%s1 + $0x3e0] sm:$0xff]
  %v141 = vld [vmem:[%s1 + $0x3e8] sm:$0xff]
  %v142 = vld [vmem:[%s1 + $0x3f0] sm:$0xff]
  %v143 = vld [vmem:[%s1 + $0x3f8] sm:$0xff]
  %v144 = vld [vmem:[%s1 + $0x400] sm:$0xff]
  %v145 = vld [vmem:[%s1 + $0x408] sm:$0xff]
  %v146 = vld [vmem:[%s1 + $0x410] sm:$0xff]
  %v147 = vld [vmem:[%s1 + $0x418] sm:$0xff]
  %v148 = vld [vmem:[%s1 + $0x420] sm:$0xff]
  %v149 = vld [vmem:[%s1 + $0x428] sm:$0xff]
  %v150 = vld [vmem:[%s1 + $0x430] sm:$0xff]
  %v151 = vld [vmem:[%s1 + $0x438] sm:$0xff]
  %v152 = vld [vmem:[%s1 + $0x440] sm:$0xff]
  %v153 = vld [vmem:[%s1 + $0x448] sm:$0xff]
  %v154 = vld [vmem:[%s1 + $0x450] sm:$0xff]
  %v155 = vld [vmem:[%s1 + $0x458] sm:$0xff]
  %v156 = vld [vmem:[%s1 + $0x460] sm:$0xff]
  %v157 = vld [vmem:[%s1 + $0x468] sm:$0xff]
  %v158 = vld [vmem:[%s1 + $0x470] sm:$0xff]
  %v159 = vld [vmem:[%s1 + $0x478] sm:$0xff]
  %v160 = vld [vmem:[%s1 + $0x480] sm:$0xff]
  %v161 = vld [vmem:[%s1 + $0x488] sm:$0xff]
  %v162 = vld [vmem:[%s1 + $0x490] sm:$0xff]
  %v163 = vld [vmem:[%s1 + $0x498] sm:$0xff]
  %v164 = vld [vmem:[%s1 + $0x4a0] sm:$0xff]
  %v165 = vld [vmem:[%s1 + $0x4a8] sm:$0xff]
  %v166 = vld [vmem:[%s1 + $0x4b0] sm:$0xff]
  %v167 = vld [vmem:[%s1 + $0x4b8] sm:$0xff]
  %v168 = vld [vmem:[%s1 + $0x4c0] sm:$0xff]
  %v169 = vld [vmem:[%s1 + $0x4c8] sm:$0xff]
  %v170 = vld [vmem:[%s1 + $0x4d0] sm:$0xff]
  %v171 = vld [vmem:[%s1 + $0x4d8] sm:$0xff]
  %v172 = vld [vmem:[%s1 + $0x4e0] sm:$0xff]
  %v173 = vld [vmem:[%s1 + $0x4e8] sm:$0xff]
  %v174 = vld [vmem:[%s1 + $0x4f0] sm:$0xff]
  %v175 = vld [vmem:[%s1 + $0x4f8] sm:$0xff]
  %v176 = vld [vmem:[%s1 + $0x500] sm:$0xff]
  %v177 = vld [vmem:[%s1 + $0x508] sm:$0xff]
  %v178 = vld [vmem:[%s1 + $0x510] sm:$0xff]
  %v179 = vld [vmem:[%s1 + $0x518] sm:$0xff]
  %v180 = vld [vmem:[%s1 + $0x520] sm:$0xff]
  %v181 = vld [vmem:[%s1 + $0x528] sm:$0xff]
  %v182 = vld [vmem:[%s1 + $0x530] sm:$0xff]
  %v183 = vld [vmem:[%s1 + $0x538] sm:$0xff]
  %v184 = vld [vmem:[%s1 + $0x540] sm:$0xff]
  %v185 = vld [vmem:[%s1 + $0x548] sm:$0xff]
  %v186 = vld [vmem:[%s1 + $0x550] sm:$0xff]
  %v187 = vld [vmem:[%s1 + $0x558] sm:$0xff]
  %v188 = vld [vmem:[%s1 + $0x560] sm:$0xff]
  %v189 = vld [vmem:[%s1 + $0x568] sm:$0xff]
  %v190 = vld [vmem:[%s1 + $0x570] sm:$0xff]
  %v191 = vld [vmem:[%s1 + $0x578] sm:$0xff]
  %v192 = vld [vmem:[%s1 + $0x580] sm:$0xff]
  %v193 = vld [vmem:[%s1 + $0x588] sm:$0xff]
  %v194 = vld [vmem:[%s1 + $0x590] sm:$0xff]
  %v195 = vld [vmem:[%s1 + $0x598] sm:$0xff]
  %v196 = vld [vmem:[%s1 + $0x5a0] sm:$0xff]
  %v197 = vld [vmem:[%s1 + $0x5a8] sm:$0xff]
  %v198 = vld [vmem:[%s1 + $0x5b0] sm:$0xff]
  %v199 = vld [vmem:[%s1 + $0x5b8] sm:$0xff]
  %v200 = vld [vmem:[%s1 + $0x5c0] sm:$0xff]
  %v201 = vld [vmem:[%s1 + $0x5c8] sm:$0xff]
  %v202 = vld [vmem:[%s1 + $0x5d0] sm:$0xff]
  %v203 = vld [vmem:[%s1 + $0x5d8] sm:$0xff]
  %v204 = vld [vmem:[%s1 + $0x5e0] sm:$0xff]
  %v205 = vld [vmem:[%s1 + $0x5e8] sm:$0xff]
  %v206 = vld [vmem:[%s1 + $0x5f0] sm:$0xff]
  %v207 = vld [vmem:[%s1 + $0x5f8] sm:$0xff]
  %v208 = vld [vmem:[%s2] sm:$0xf]
  %v211 = vcombine.high %v14, %v14
  %v213 = vunpack.c.l.s4 1966171168
  %v214 = vunpack.c.0.s8 %v213
  %v215 = vlaneseq
  %v216 = vshrl.u32 %v215, 7
  %v217 = vsub.s32 %v214, %v216
  %v218 = vrot.slane %v14, %v217
  %v220 = vunpack.c.l.s4 1966171168
  %v221 = vunpack.c.0.s8 %v220
  %v222 = vlaneseq
  %v223 = vshrl.u32 %v222, 7
  %v224 = vsub.s32 %v221, %v223
  %v225 = vrot.slane %v211, %v224
  %v226 = vcombine.high %v218, %v218
  %v227 = vcombine.high %v225, %v225
  %v229 = vunpack.c.l.s4 1966171168
  %v230 = vunpack.c.0.s8 %v229
  %v231 = vlaneseq
  %v232 = vshrl.u32 %v231, 7
  %v233 = vsub.s32 %v230, %v232
  %v234 = vrot.slane %v218, %v233
  %v236 = vunpack.c.l.s4 1966171168
  %v237 = vunpack.c.0.s8 %v236
  %v238 = vlaneseq
  %v239 = vshrl.u32 %v238, 7
  %v240 = vsub.s32 %v237, %v239
  %v241 = vrot.slane %v225, %v240
  %v243 = vunpack.c.l.s4 1966171168
  %v244 = vunpack.c.0.s8 %v243
  %v245 = vlaneseq
  %v246 = vshrl.u32 %v245, 7
  %v247 = vsub.s32 %v244, %v246
  %v248 = vrot.slane %v226, %v247
  %v250 = vunpack.c.l.s4 1966171168
  %v251 = vunpack.c.0.s8 %v250
  %v252 = vlaneseq
  %v253 = vshrl.u32 %v252, 7
  %v254 = vsub.s32 %v251, %v253
  %v255 = vrot.slane %v227, %v254
  %v256 = vcombine.high %v234, %v234
  %v257 = vcombine.high %v241, %v241
  %v258 = vcombine.high %v248, %v248
  %v259 = vcombine.high %v255, %v255
  %v261 = vunpack.c.l.s4 1966171168
  %v262 = vunpack.c.0.s8 %v261
  %v263 = vlaneseq
  %v264 = vshrl.u32 %v263, 7
  %v265 = vsub.s32 %v262, %v264
  %v266 = vrot.slane %v15, %v265
  %v267 = vcombine.high %v266, %v266
  %v269 = vunpack.c.l.s4 1966171168
  %v270 = vunpack.c.0.s8 %v269
  %v271 = vlaneseq
  %v272 = vshrl.u32 %v271, 7
  %v273 = vsub.s32 %v270, %v272
  %v274 = vrot.slane %v266, %v273
  %v276 = vunpack.c.l.s4 1966171168
  %v277 = vunpack.c.0.s8 %v276
  %v278 = vlaneseq
  %v279 = vshrl.u32 %v278, 7
  %v280 = vsub.s32 %v277, %v279
  %v281 = vrot.slane %v267, %v280
  %v282 = vcombine.high %v274, %v274
  %v283 = vcombine.high %v281, %v281
  %v488 = vunpack.c.l.b16 %v16
  %v489 = vunpack.c.h.b16 %v16
  %v490 = vunpack.c.l.b16 %v17
  %v491 = vunpack.c.h.b16 %v17
  %v492 = vunpack.c.l.b16 %v18
  %v493 = vunpack.c.h.b16 %v18
  %v494 = vunpack.c.l.b16 %v19
  %v495 = vunpack.c.h.b16 %v19
  %v496 = vunpack.c.l.b16 %v20
  %v497 = vunpack.c.h.b16 %v20
  %v498 = vunpack.c.l.b16 %v21
  %v499 = vunpack.c.h.b16 %v21
  %v500 = vunpack.c.l.b16 %v22
  %v501 = vunpack.c.h.b16 %v22
  %v502 = vunpack.c.l.b16 %v23
  %v503 = vunpack.c.h.b16 %v23
  %v504 = vunpack.c.l.b16 %v24
  %v505 = vunpack.c.h.b16 %v24
  %v506 = vunpack.c.l.b16 %v25
  %v507 = vunpack.c.h.b16 %v25
  %v508 = vunpack.c.l.b16 %v26
  %v509 = vunpack.c.h.b16 %v26
  %v510 = vunpack.c.l.b16 %v27
  %v511 = vunpack.c.h.b16 %v27
  %v512 = vunpack.c.l.b16 %v28
  %v513 = vunpack.c.h.b16 %v28
  %v514 = vunpack.c.l.b16 %v29
  %v515 = vunpack.c.h.b16 %v29
  %v516 = vunpack.c.l.b16 %v30
  %v517 = vunpack.c.h.b16 %v30
  %v518 = vunpack.c.l.b16 %v31
  %v519 = vunpack.c.h.b16 %v31
  %v520 = vunpack.c.l.b16 %v32
  %v521 = vunpack.c.h.b16 %v32
  %v522 = vunpack.c.l.b16 %v33
  %v523 = vunpack.c.h.b16 %v33
  %v524 = vunpack.c.l.b16 %v34
  %v525 = vunpack.c.h.b16 %v34
  %v526 = vunpack.c.l.b16 %v35
  %v527 = vunpack.c.h.b16 %v35
  %v528 = vunpack.c.l.b16 %v36
  %v529 = vunpack.c.h.b16 %v36
  %v530 = vunpack.c.l.b16 %v37
  %v531 = vunpack.c.h.b16 %v37
  %v532 = vunpack.c.l.b16 %v38
  %v533 = vunpack.c.h.b16 %v38
  %v534 = vunpack.c.l.b16 %v39
  %v535 = vunpack.c.h.b16 %v39
  %v536 = vunpack.c.l.b16 %v40
  %v537 = vunpack.c.h.b16 %v40
  %v538 = vunpack.c.l.b16 %v41
  %v539 = vunpack.c.h.b16 %v41
  %v540 = vunpack.c.l.b16 %v42
  %v541 = vunpack.c.h.b16 %v42
  %v542 = vunpack.c.l.b16 %v43
  %v543 = vunpack.c.h.b16 %v43
  %v544 = vunpack.c.l.b16 %v44
  %v545 = vunpack.c.h.b16 %v44
  %v546 = vunpack.c.l.b16 %v45
  %v547 = vunpack.c.h.b16 %v45
  %v548 = vunpack.c.l.b16 %v46
  %v549 = vunpack.c.h.b16 %v46
  %v550 = vunpack.c.l.b16 %v47
  %v551 = vunpack.c.h.b16 %v47
  %v552 = vunpack.c.l.b16 %v48
  %v553 = vunpack.c.h.b16 %v48
  %v554 = vunpack.c.l.b16 %v49
  %v555 = vunpack.c.h.b16 %v49
  %v556 = vunpack.c.l.b16 %v50
  %v557 = vunpack.c.h.b16 %v50
  %v558 = vunpack.c.l.b16 %v51
  %v559 = vunpack.c.h.b16 %v51
  %v560 = vunpack.c.l.b16 %v52
  %v561 = vunpack.c.h.b16 %v52
  %v562 = vunpack.c.l.b16 %v53
  %v563 = vunpack.c.h.b16 %v53
  %v564 = vunpack.c.l.b16 %v54
  %v565 = vunpack.c.h.b16 %v54
  %v566 = vunpack.c.l.b16 %v55
  %v567 = vunpack.c.h.b16 %v55
  %v568 = vunpack.c.l.b16 %v56
  %v569 = vunpack.c.h.b16 %v56
  %v570 = vunpack.c.l.b16 %v57
  %v571 = vunpack.c.h.b16 %v57
  %v572 = vunpack.c.l.b16 %v58
  %v573 = vunpack.c.h.b16 %v58
  %v574 = vunpack.c.l.b16 %v59
  %v575 = vunpack.c.h.b16 %v59
  %v576 = vunpack.c.l.b16 %v60
  %v577 = vunpack.c.h.b16 %v60
  %v578 = vunpack.c.l.b16 %v61
  %v579 = vunpack.c.h.b16 %v61
  %v580 = vunpack.c.l.b16 %v62
  %v581 = vunpack.c.h.b16 %v62
  %v582 = vunpack.c.l.b16 %v63
  %v583 = vunpack.c.h.b16 %v63
  %v584 = vunpack.c.l.b16 %v64
  %v585 = vunpack.c.h.b16 %v64
  %v586 = vunpack.c.l.b16 %v65
  %v587 = vunpack.c.h.b16 %v65
  %v588 = vunpack.c.l.b16 %v66
  %v589 = vunpack.c.h.b16 %v66
  %v590 = vunpack.c.l.b16 %v67
  %v591 = vunpack.c.h.b16 %v67
  %v592 = vunpack.c.l.b16 %v68
  %v593 = vunpack.c.h.b16 %v68
  %v594 = vunpack.c.l.b16 %v69
  %v595 = vunpack.c.h.b16 %v69
  %v596 = vunpack.c.l.b16 %v70
  %v597 = vunpack.c.h.b16 %v70
  %v598 = vunpack.c.l.b16 %v71
  %v599 = vunpack.c.h.b16 %v71
  %v600 = vunpack.c.l.b16 %v72
  %v601 = vunpack.c.h.b16 %v72
  %v602 = vunpack.c.l.b16 %v73
  %v603 = vunpack.c.h.b16 %v73
  %v604 = vunpack.c.l.b16 %v74
  %v605 = vunpack.c.h.b16 %v74
  %v606 = vunpack.c.l.b16 %v75
  %v607 = vunpack.c.h.b16 %v75
  %v608 = vunpack.c.l.b16 %v76
  %v609 = vunpack.c.h.b16 %v76
  %v610 = vunpack.c.l.b16 %v77
  %v611 = vunpack.c.h.b16 %v77
  %v612 = vunpack.c.l.b16 %v78
  %v613 = vunpack.c.h.b16 %v78
  %v614 = vunpack.c.l.b16 %v79
  %v615 = vunpack.c.h.b16 %v79
  %v616 = vunpack.c.l.b16 %v80
  %v617 = vunpack.c.h.b16 %v80
  %v618 = vunpack.c.l.b16 %v81
  %v619 = vunpack.c.h.b16 %v81
  %v620 = vunpack.c.l.b16 %v82
  %v621 = vunpack.c.h.b16 %v82
  %v622 = vunpack.c.l.b16 %v83
  %v623 = vunpack.c.h.b16 %v83
  %v624 = vunpack.c.l.b16 %v84
  %v625 = vunpack.c.h.b16 %v84
  %v626 = vunpack.c.l.b16 %v85
  %v627 = vunpack.c.h.b16 %v85
  %v628 = vunpack.c.l.b16 %v86
  %v629 = vunpack.c.h.b16 %v86
  %v630 = vunpack.c.l.b16 %v87
  %v631 = vunpack.c.h.b16 %v87
  %v632 = vunpack.c.l.b16 %v88
  %v633 = vunpack.c.h.b16 %v88
  %v634 = vunpack.c.l.b16 %v89
  %v635 = vunpack.c.h.b16 %v89
  %v636 = vunpack.c.l.b16 %v90
  %v637 = vunpack.c.h.b16 %v90
  %v638 = vunpack.c.l.b16 %v91
  %v639 = vunpack.c.h.b16 %v91
  %v640 = vunpack.c.l.b16 %v92
  %v641 = vunpack.c.h.b16 %v92
  %v642 = vunpack.c.l.b16 %v93
  %v643 = vunpack.c.h.b16 %v93
  %v644 = vunpack.c.l.b16 %v94
  %v645 = vunpack.c.h.b16 %v94
  %v646 = vunpack.c.l.b16 %v95
  %v647 = vunpack.c.h.b16 %v95
  %v648 = vunpack.c.l.b16 %v96
  %v649 = vunpack.c.h.b16 %v96
  %v650 = vunpack.c.l.b16 %v97
  %v651 = vunpack.c.h.b16 %v97
  %v652 = vunpack.c.l.b16 %v98
  %v653 = vunpack.c.h.b16 %v98
  %v654 = vunpack.c.l.b16 %v99
  %v655 = vunpack.c.h.b16 %v99
  %v656 = vunpack.c.l.b16 %v100
  %v657 = vunpack.c.h.b16 %v100
  %v658 = vunpack.c.l.b16 %v101
  %v659 = vunpack.c.h.b16 %v101
  %v660 = vunpack.c.l.b16 %v102
  %v661 = vunpack.c.h.b16 %v102
  %v662 = vunpack.c.l.b16 %v103
  %v663 = vunpack.c.h.b16 %v103
  %v664 = vunpack.c.l.b16 %v104
  %v665 = vunpack.c.h.b16 %v104
  %v666 = vunpack.c.l.b16 %v105
  %v667 = vunpack.c.h.b16 %v105
  %v668 = vunpack.c.l.b16 %v106
  %v669 = vunpack.c.h.b16 %v106
  %v670 = vunpack.c.l.b16 %v107
  %v671 = vunpack.c.h.b16 %v107
  %v672 = vunpack.c.l.b16 %v108
  %v673 = vunpack.c.h.b16 %v108
  %v674 = vunpack.c.l.b16 %v109
  %v675 = vunpack.c.h.b16 %v109
  %v676 = vunpack.c.l.b16 %v110
  %v677 = vunpack.c.h.b16 %v110
  %v678 = vunpack.c.l.b16 %v111
  %v679 = vunpack.c.h.b16 %v111
  %v680 = vunpack.c.l.b16 %v112
  %v681 = vunpack.c.h.b16 %v112
  %v682 = vunpack.c.l.b16 %v113
  %v683 = vunpack.c.h.b16 %v113
  %v684 = vunpack.c.l.b16 %v114
  %v685 = vunpack.c.h.b16 %v114
  %v686 = vunpack.c.l.b16 %v115
  %v687 = vunpack.c.h.b16 %v115
  %v688 = vunpack.c.l.b16 %v116
  %v689 = vunpack.c.h.b16 %v116
  %v690 = vunpack.c.l.b16 %v117
  %v691 = vunpack.c.h.b16 %v117
  %v692 = vunpack.c.l.b16 %v118
  %v693 = vunpack.c.h.b16 %v118
  %v694 = vunpack.c.l.b16 %v119
  %v695 = vunpack.c.h.b16 %v119
  %v696 = vunpack.c.l.b16 %v120
  %v697 = vunpack.c.h.b16 %v120
  %v698 = vunpack.c.l.b16 %v121
  %v699 = vunpack.c.h.b16 %v121
  %v700 = vunpack.c.l.b16 %v122
  %v701 = vunpack.c.h.b16 %v122
  %v702 = vunpack.c.l.b16 %v123
  %v703 = vunpack.c.h.b16 %v123
  %v704 = vunpack.c.l.b16 %v124
  %v705 = vunpack.c.h.b16 %v124
  %v706 = vunpack.c.l.b16 %v125
  %v707 = vunpack.c.h.b16 %v125
  %v708 = vunpack.c.l.b16 %v126
  %v709 = vunpack.c.h.b16 %v126
  %v710 = vunpack.c.l.b16 %v127
  %v711 = vunpack.c.h.b16 %v127
  %v712 = vunpack.c.l.b16 %v128
  %v713 = vunpack.c.h.b16 %v128
  %v714 = vunpack.c.l.b16 %v129
  %v715 = vunpack.c.h.b16 %v129
  %v716 = vunpack.c.l.b16 %v130
  %v717 = vunpack.c.h.b16 %v130
  %v718 = vunpack.c.l.b16 %v131
  %v719 = vunpack.c.h.b16 %v131
  %v720 = vunpack.c.l.b16 %v132
  %v721 = vunpack.c.h.b16 %v132
  %v722 = vunpack.c.l.b16 %v133
  %v723 = vunpack.c.h.b16 %v133
  %v724 = vunpack.c.l.b16 %v134
  %v725 = vunpack.c.h.b16 %v134
  %v726 = vunpack.c.l.b16 %v135
  %v727 = vunpack.c.h.b16 %v135
  %v728 = vunpack.c.l.b16 %v136
  %v729 = vunpack.c.h.b16 %v136
  %v730 = vunpack.c.l.b16 %v137
  %v731 = vunpack.c.h.b16 %v137
  %v732 = vunpack.c.l.b16 %v138
  %v733 = vunpack.c.h.b16 %v138
  %v734 = vunpack.c.l.b16 %v139
  %v735 = vunpack.c.h.b16 %v139
  %v736 = vunpack.c.l.b16 %v140
  %v737 = vunpack.c.h.b16 %v140
  %v738 = vunpack.c.l.b16 %v141
  %v739 = vunpack.c.h.b16 %v141
  %v740 = vunpack.c.l.b16 %v142
  %v741 = vunpack.c.h.b16 %v142
  %v742 = vunpack.c.l.b16 %v143
  %v743 = vunpack.c.h.b16 %v143
  %v744 = vunpack.c.l.b16 %v144
  %v745 = vunpack.c.h.b16 %v144
  %v746 = vunpack.c.l.b16 %v145
  %v747 = vunpack.c.h.b16 %v145
  %v748 = vunpack.c.l.b16 %v146
  %v749 = vunpack.c.h.b16 %v146
  %v750 = vunpack.c.l.b16 %v147
  %v751 = vunpack.c.h.b16 %v147
  %v752 = vunpack.c.l.b16 %v148
  %v753 = vunpack.c.h.b16 %v148
  %v754 = vunpack.c.l.b16 %v149
  %v755 = vunpack.c.h.b16 %v149
  %v756 = vunpack.c.l.b16 %v150
  %v757 = vunpack.c.h.b16 %v150
  %v758 = vunpack.c.l.b16 %v151
  %v759 = vunpack.c.h.b16 %v151
  %v760 = vunpack.c.l.b16 %v152
  %v761 = vunpack.c.h.b16 %v152
  %v762 = vunpack.c.l.b16 %v153
  %v763 = vunpack.c.h.b16 %v153
  %v764 = vunpack.c.l.b16 %v154
  %v765 = vunpack.c.h.b16 %v154
  %v766 = vunpack.c.l.b16 %v155
  %v767 = vunpack.c.h.b16 %v155
  %v768 = vunpack.c.l.b16 %v156
  %v769 = vunpack.c.h.b16 %v156
  %v770 = vunpack.c.l.b16 %v157
  %v771 = vunpack.c.h.b16 %v157
  %v772 = vunpack.c.l.b16 %v158
  %v773 = vunpack.c.h.b16 %v158
  %v774 = vunpack.c.l.b16 %v159
  %v775 = vunpack.c.h.b16 %v159
  %v776 = vunpack.c.l.b16 %v160
  %v777 = vunpack.c.h.b16 %v160
  %v778 = vunpack.c.l.b16 %v161
  %v779 = vunpack.c.h.b16 %v161
  %v780 = vunpack.c.l.b16 %v162
  %v781 = vunpack.c.h.b16 %v162
  %v782 = vunpack.c.l.b16 %v163
  %v783 = vunpack.c.h.b16 %v163
  %v784 = vunpack.c.l.b16 %v164
  %v785 = vunpack.c.h.b16 %v164
  %v786 = vunpack.c.l.b16 %v165
  %v787 = vunpack.c.h.b16 %v165
  %v788 = vunpack.c.l.b16 %v166
  %v789 = vunpack.c.h.b16 %v166
  %v790 = vunpack.c.l.b16 %v167
  %v791 = vunpack.c.h.b16 %v167
  %v792 = vunpack.c.l.b16 %v168
  %v793 = vunpack.c.h.b16 %v168
  %v794 = vunpack.c.l.b16 %v169
  %v795 = vunpack.c.h.b16 %v169
  %v796 = vunpack.c.l.b16 %v170
  %v797 = vunpack.c.h.b16 %v170
  %v798 = vunpack.c.l.b16 %v171
  %v799 = vunpack.c.h.b16 %v171
  %v800 = vunpack.c.l.b16 %v172
  %v801 = vunpack.c.h.b16 %v172
  %v802 = vunpack.c.l.b16 %v173
  %v803 = vunpack.c.h.b16 %v173
  %v804 = vunpack.c.l.b16 %v174
  %v805 = vunpack.c.h.b16 %v174
  %v806 = vunpack.c.l.b16 %v175
  %v807 = vunpack.c.h.b16 %v175
  %v808 = vunpack.c.l.b16 %v176
  %v809 = vunpack.c.h.b16 %v176
  %v810 = vunpack.c.l.b16 %v177
  %v811 = vunpack.c.h.b16 %v177
  %v812 = vunpack.c.l.b16 %v178
  %v813 = vunpack.c.h.b16 %v178
  %v814 = vunpack.c.l.b16 %v179
  %v815 = vunpack.c.h.b16 %v179
  %v816 = vunpack.c.l.b16 %v180
  %v817 = vunpack.c.h.b16 %v180
  %v818 = vunpack.c.l.b16 %v181
  %v819 = vunpack.c.h.b16 %v181
  %v820 = vunpack.c.l.b16 %v182
  %v821 = vunpack.c.h.b16 %v182
  %v822 = vunpack.c.l.b16 %v183
  %v823 = vunpack.c.h.b16 %v183
  %v824 = vunpack.c.l.b16 %v184
  %v825 = vunpack.c.h.b16 %v184
  %v826 = vunpack.c.l.b16 %v185
  %v827 = vunpack.c.h.b16 %v185
  %v828 = vunpack.c.l.b16 %v186
  %v829 = vunpack.c.h.b16 %v186
  %v830 = vunpack.c.l.b16 %v187
  %v831 = vunpack.c.h.b16 %v187
  %v832 = vunpack.c.l.b16 %v188
  %v833 = vunpack.c.h.b16 %v188
  %v834 = vunpack.c.l.b16 %v189
  %v835 = vunpack.c.h.b16 %v189
  %v836 = vunpack.c.l.b16 %v190
  %v837 = vunpack.c.h.b16 %v190
  %v838 = vunpack.c.l.b16 %v191
  %v839 = vunpack.c.h.b16 %v191
  %v840 = vunpack.c.l.b16 %v192
  %v841 = vunpack.c.h.b16 %v192
  %v842 = vunpack.c.l.b16 %v193
  %v843 = vunpack.c.h.b16 %v193
  %v844 = vunpack.c.l.b16 %v194
  %v845 = vunpack.c.h.b16 %v194
  %v846 = vunpack.c.l.b16 %v195
  %v847 = vunpack.c.h.b16 %v195
  %v848 = vunpack.c.l.b16 %v196
  %v849 = vunpack.c.h.b16 %v196
  %v850 = vunpack.c.l.b16 %v197
  %v851 = vunpack.c.h.b16 %v197
  %v852 = vunpack.c.l.b16 %v198
  %v853 = vunpack.c.h.b16 %v198
  %v854 = vunpack.c.l.b16 %v199
  %v855 = vunpack.c.h.b16 %v199
  %v856 = vunpack.c.l.b16 %v200
  %v857 = vunpack.c.h.b16 %v200
  %v858 = vunpack.c.l.b16 %v201
  %v859 = vunpack.c.h.b16 %v201
  %v860 = vunpack.c.l.b16 %v202
  %v861 = vunpack.c.h.b16 %v202
  %v862 = vunpack.c.l.b16 %v203
  %v863 = vunpack.c.h.b16 %v203
  %v864 = vunpack.c.l.b16 %v204
  %v865 = vunpack.c.h.b16 %v204
  %v866 = vunpack.c.l.b16 %v205
  %v867 = vunpack.c.h.b16 %v205
  %v868 = vunpack.c.l.b16 %v206
  %v869 = vunpack.c.h.b16 %v206
  %v870 = vunpack.c.l.b16 %v207
  %v871 = vunpack.c.h.b16 %v207
  %v872 = vpack.c.b16 %v490, %v488
  %v873 = vpack.c.b16 %v491, %v489
  %v874 = vpack.c.b16 %v494, %v492
  %v875 = vpack.c.b16 %v495, %v493
  %v876 = vpack.c.b16 %v498, %v496
  %v877 = vpack.c.b16 %v499, %v497
  %v878 = vpack.c.b16 %v502, %v500
  %v879 = vpack.c.b16 %v503, %v501
  %v880 = vpack.c.b16 %v506, %v504
  %v881 = vpack.c.b16 %v507, %v505
  %v882 = vpack.c.b16 %v510, %v508
  %v883 = vpack.c.b16 %v511, %v509
  %v884 = vpack.c.b16 %v514, %v512
  %v885 = vpack.c.b16 %v515, %v513
  %v886 = vpack.c.b16 %v518, %v516
  %v887 = vpack.c.b16 %v519, %v517
  %v888 = vpack.c.b16 %v522, %v520
  %v889 = vpack.c.b16 %v523, %v521
  %v890 = vpack.c.b16 %v526, %v524
  %v891 = vpack.c.b16 %v527, %v525
  %v892 = vpack.c.b16 %v530, %v528
  %v893 = vpack.c.b16 %v531, %v529
  %v894 = vpack.c.b16 %v534, %v532
  %v895 = vpack.c.b16 %v535, %v533
  %v896 = vpack.c.b16 %v538, %v536
  %v897 = vpack.c.b16 %v539, %v537
  %v898 = vpack.c.b16 %v542, %v540
  %v899 = vpack.c.b16 %v543, %v541
  %v900 = vpack.c.b16 %v546, %v544
  %v901 = vpack.c.b16 %v547, %v545
  %v902 = vpack.c.b16 %v550, %v548
  %v903 = vpack.c.b16 %v551, %v549
  %v904 = vpack.c.b16 %v554, %v552
  %v905 = vpack.c.b16 %v555, %v553
  %v906 = vpack.c.b16 %v558, %v556
  %v907 = vpack.c.b16 %v559, %v557
  %v908 = vpack.c.b16 %v562, %v560
  %v909 = vpack.c.b16 %v563, %v561
  %v910 = vpack.c.b16 %v566, %v564
  %v911 = vpack.c.b16 %v567, %v565
  %v912 = vpack.c.b16 %v570, %v568
  %v913 = vpack.c.b16 %v571, %v569
  %v914 = vpack.c.b16 %v574, %v572
  %v915 = vpack.c.b16 %v575, %v573
  %v916 = vpack.c.b16 %v578, %v576
  %v917 = vpack.c.b16 %v579, %v577
  %v918 = vpack.c.b16 %v582, %v580
  %v919 = vpack.c.b16 %v583, %v581
  %v920 = vpack.c.b16 %v586, %v584
  %v921 = vpack.c.b16 %v587, %v585
  %v922 = vpack.c.b16 %v590, %v588
  %v923 = vpack.c.b16 %v591, %v589
  %v924 = vpack.c.b16 %v594, %v592
  %v925 = vpack.c.b16 %v595, %v593
  %v926 = vpack.c.b16 %v598, %v596
  %v927 = vpack.c.b16 %v599, %v597
  %v928 = vpack.c.b16 %v602, %v600
  %v929 = vpack.c.b16 %v603, %v601
  %v930 = vpack.c.b16 %v606, %v604
  %v931 = vpack.c.b16 %v607, %v605
  %v932 = vpack.c.b16 %v610, %v608
  %v933 = vpack.c.b16 %v611, %v609
  %v934 = vpack.c.b16 %v614, %v612
  %v935 = vpack.c.b16 %v615, %v613
  %v936 = vpack.c.b16 %v618, %v616
  %v937 = vpack.c.b16 %v619, %v617
  %v938 = vpack.c.b16 %v622, %v620
  %v939 = vpack.c.b16 %v623, %v621
  %v940 = vpack.c.b16 %v626, %v624
  %v941 = vpack.c.b16 %v627, %v625
  %v942 = vpack.c.b16 %v630, %v628
  %v943 = vpack.c.b16 %v631, %v629
  %v944 = vpack.c.b16 %v634, %v632
  %v945 = vpack.c.b16 %v635, %v633
  %v946 = vpack.c.b16 %v638, %v636
  %v947 = vpack.c.b16 %v639, %v637
  %v948 = vpack.c.b16 %v642, %v640
  %v949 = vpack.c.b16 %v643, %v641
  %v950 = vpack.c.b16 %v646, %v644
  %v951 = vpack.c.b16 %v647, %v645
  %v952 = vpack.c.b16 %v650, %v648
  %v953 = vpack.c.b16 %v651, %v649
  %v954 = vpack.c.b16 %v654, %v652
  %v955 = vpack.c.b16 %v655, %v653
  %v956 = vpack.c.b16 %v658, %v656
  %v957 = vpack.c.b16 %v659, %v657
  %v958 = vpack.c.b16 %v662, %v660
  %v959 = vpack.c.b16 %v663, %v661
  %v960 = vpack.c.b16 %v666, %v664
  %v961 = vpack.c.b16 %v667, %v665
  %v962 = vpack.c.b16 %v670, %v668
  %v963 = vpack.c.b16 %v671, %v669
  %v964 = vpack.c.b16 %v674, %v672
  %v965 = vpack.c.b16 %v675, %v673
  %v966 = vpack.c.b16 %v678, %v676
  %v967 = vpack.c.b16 %v679, %v677
  %v968 = vpack.c.b16 %v682, %v680
  %v969 = vpack.c.b16 %v683, %v681
  %v970 = vpack.c.b16 %v686, %v684
  %v971 = vpack.c.b16 %v687, %v685
  %v972 = vpack.c.b16 %v690, %v688
  %v973 = vpack.c.b16 %v691, %v689
  %v974 = vpack.c.b16 %v694, %v692
  %v975 = vpack.c.b16 %v695, %v693
  %v976 = vpack.c.b16 %v698, %v696
  %v977 = vpack.c.b16 %v699, %v697
  %v978 = vpack.c.b16 %v702, %v700
  %v979 = vpack.c.b16 %v703, %v701
  %v980 = vpack.c.b16 %v706, %v704
  %v981 = vpack.c.b16 %v707, %v705
  %v982 = vpack.c.b16 %v710, %v708
  %v983 = vpack.c.b16 %v711, %v709
  %v984 = vpack.c.b16 %v714, %v712
  %v985 = vpack.c.b16 %v715, %v713
  %v986 = vpack.c.b16 %v718, %v716
  %v987 = vpack.c.b16 %v719, %v717
  %v988 = vpack.c.b16 %v722, %v720
  %v989 = vpack.c.b16 %v723, %v721
  %v990 = vpack.c.b16 %v726, %v724
  %v991 = vpack.c.b16 %v727, %v725
  %v992 = vpack.c.b16 %v730, %v728
  %v993 = vpack.c.b16 %v731, %v729
  %v994 = vpack.c.b16 %v734, %v732
  %v995 = vpack.c.b16 %v735, %v733
  %v996 = vpack.c.b16 %v738, %v736
  %v997 = vpack.c.b16 %v739, %v737
  %v998 = vpack.c.b16 %v742, %v740
  %v999 = vpack.c.b16 %v743, %v741
  %v1000 = vpack.c.b16 %v746, %v744
  %v1001 = vpack.c.b16 %v747, %v745
  %v1002 = vpack.c.b16 %v750, %v748
  %v1003 = vpack.c.b16 %v751, %v749
  %v1004 = vpack.c.b16 %v754, %v752
  %v1005 = vpack.c.b16 %v755, %v753
  %v1006 = vpack.c.b16 %v758, %v756
  %v1007 = vpack.c.b16 %v759, %v757
  %v1008 = vpack.c.b16 %v762, %v760
  %v1009 = vpack.c.b16 %v763, %v761
  %v1010 = vpack.c.b16 %v766, %v764
  %v1011 = vpack.c.b16 %v767, %v765
  %v1012 = vpack.c.b16 %v770, %v768
  %v1013 = vpack.c.b16 %v771, %v769
  %v1014 = vpack.c.b16 %v774, %v772
  %v1015 = vpack.c.b16 %v775, %v773
  %v1016 = vpack.c.b16 %v778, %v776
  %v1017 = vpack.c.b16 %v779, %v777
  %v1018 = vpack.c.b16 %v782, %v780
  %v1019 = vpack.c.b16 %v783, %v781
  %v1020 = vpack.c.b16 %v786, %v784
  %v1021 = vpack.c.b16 %v787, %v785
  %v1022 = vpack.c.b16 %v790, %v788
  %v1023 = vpack.c.b16 %v791, %v789
  %v1024 = vpack.c.b16 %v794, %v792
  %v1025 = vpack.c.b16 %v795, %v793
  %v1026 = vpack.c.b16 %v798, %v796
  %v1027 = vpack.c.b16 %v799, %v797
  %v1028 = vpack.c.b16 %v802, %v800
  %v1029 = vpack.c.b16 %v803, %v801
  %v1030 = vpack.c.b16 %v806, %v804
  %v1031 = vpack.c.b16 %v807, %v805
  %v1032 = vpack.c.b16 %v810, %v808
  %v1033 = vpack.c.b16 %v811, %v809
  %v1034 = vpack.c.b16 %v814, %v812
  %v1035 = vpack.c.b16 %v815, %v813
  %v1036 = vpack.c.b16 %v818, %v816
  %v1037 = vpack.c.b16 %v819, %v817
  %v1038 = vpack.c.b16 %v822, %v820
  %v1039 = vpack.c.b16 %v823, %v821
  %v1040 = vpack.c.b16 %v826, %v824
  %v1041 = vpack.c.b16 %v827, %v825
  %v1042 = vpack.c.b16 %v830, %v828
  %v1043 = vpack.c.b16 %v831, %v829
  %v1044 = vpack.c.b16 %v834, %v832
  %v1045 = vpack.c.b16 %v835, %v833
  %v1046 = vpack.c.b16 %v838, %v836
  %v1047 = vpack.c.b16 %v839, %v837
  %v1048 = vpack.c.b16 %v842, %v840
  %v1049 = vpack.c.b16 %v843, %v841
  %v1050 = vpack.c.b16 %v846, %v844
  %v1051 = vpack.c.b16 %v847, %v845
  %v1052 = vpack.c.b16 %v850, %v848
  %v1053 = vpack.c.b16 %v851, %v849
  %v1054 = vpack.c.b16 %v854, %v852
  %v1055 = vpack.c.b16 %v855, %v853
  %v1056 = vpack.c.b16 %v858, %v856
  %v1057 = vpack.c.b16 %v859, %v857
  %v1058 = vpack.c.b16 %v862, %v860
  %v1059 = vpack.c.b16 %v863, %v861
  %v1060 = vpack.c.b16 %v866, %v864
  %v1061 = vpack.c.b16 %v867, %v865
  %v1062 = vpack.c.b16 %v870, %v868
  %v1063 = vpack.c.b16 %v871, %v869
  %v1258 = vunpack.c.l.s4 1983009808
  %v1259 = vunpack.c.0.s8 %v1258
  %v1260 = vlaneseq
  %v1261 = vshrl.u32 %v1260, 7
  %v1262 = vsub.s32 %v1259, %v1261
  %v1263 = vrot.slane %v208, %v1262
  %v1264 = vcombine.high %v1263, %v1263
  %1267 = vmatprep.subr.bf16.mxu0 %v887
  %1268 = vmatpush1.bf16.msra.mxu0 %v886
  %1269 = vmatprep.subr.bf16.mxu0 %v885
  %1270 = vmatpush1.bf16.msra.mxu0 %v884
  %1271 = vmatprep.subr.bf16.mxu0 %v883
  %1272 = vmatpush1.bf16.msra.mxu0 %v882
  %1273 = vmatprep.subr.bf16.mxu0 %v881
  %1274 = vmatpush1.bf16.msra.mxu0 %v880
  %1275 = vmatprep.subr.bf16.mxu0 %v879
  %1276 = vmatpush1.bf16.msra.mxu0 %v878
  %1277 = vmatprep.subr.bf16.mxu0 %v877
  %1278 = vmatpush1.bf16.msra.mxu0 %v876
  %1279 = vmatprep.subr.bf16.mxu0 %v875
  %1280 = vmatpush1.bf16.msra.mxu0 %v874
  %1281 = vmatprep.subr.bf16.mxu0 %v873
  %1282 = vmatpush1.bf16.msra.mxu0 %v872
  %1283 = vmatprep.subr.bf16.mxu0 %v903
  %1284 = vmatpush2.bf16.msra.mxu0 %v902
  %1285 = vmatprep.subr.bf16.mxu0 %v901
  %1286 = vmatpush2.bf16.msra.mxu0 %v900
  %1287 = vmatprep.subr.bf16.mxu0 %v899
  %1288 = vmatpush2.bf16.msra.mxu0 %v898
  %1289 = vmatprep.subr.bf16.mxu0 %v897
  %1290 = vmatpush2.bf16.msra.mxu0 %v896
  %1291 = vmatprep.subr.bf16.mxu0 %v895
  %1292 = vmatpush2.bf16.msra.mxu0 %v894
  %1293 = vmatprep.subr.bf16.mxu0 %v893
  %1294 = vmatpush2.bf16.msra.mxu0 %v892
  %1295 = vmatprep.subr.bf16.mxu0 %v891
  %1296 = vmatpush2.bf16.msra.mxu0 %v890
  %1297 = vmatprep.subr.bf16.mxu0 %v889
  %1298 = vmatpush2.bf16.msra.mxu0 %v888
  %1299 = vmatprep.mubr.bf16.mxu0 %v248
  %1300 = vmatmul.mubr.bf16.gmra.mxu0 %v234
  %v1301 = vpop.f32.mrf.mxu0
  %v1302 = vadd.f32 %v1263, %v1301
  %v1303 = vpop.f32.mrf.mxu0
  %v1304 = vadd.f32 %v1264, %v1303
  %v1305 = vpop.f32.mrf.mxu0
  %v1306 = vpop.f32.mrf.mxu0
  %1307 = vdwg.mxu0
  %1308 = vmatprep.subr.bf16.mxu0 %v919
  %1309 = vmatpush1.bf16.msra.mxu0 %v918
  %1310 = vmatprep.subr.bf16.mxu0 %v917
  %1311 = vmatpush1.bf16.msra.mxu0 %v916
  %1312 = vmatprep.subr.bf16.mxu0 %v915
  %1313 = vmatpush1.bf16.msra.mxu0 %v914
  %1314 = vmatprep.subr.bf16.mxu0 %v913
  %1315 = vmatpush1.bf16.msra.mxu0 %v912
  %1316 = vmatprep.subr.bf16.mxu0 %v911
  %1317 = vmatpush1.bf16.msra.mxu0 %v910
  %1318 = vmatprep.subr.bf16.mxu0 %v909
  %1319 = vmatpush1.bf16.msra.mxu0 %v908
  %1320 = vmatprep.subr.bf16.mxu0 %v907
  %1321 = vmatpush1.bf16.msra.mxu0 %v906
  %1322 = vmatprep.subr.bf16.mxu0 %v905
  %1323 = vmatpush1.bf16.msra.mxu0 %v904
  %1324 = vmatprep.subr.bf16.mxu0 %v935
  %1325 = vmatpush2.bf16.msra.mxu0 %v934
  %1326 = vmatprep.subr.bf16.mxu0 %v933
  %1327 = vmatpush2.bf16.msra.mxu0 %v932
  %1328 = vmatprep.subr.bf16.mxu0 %v931
  %1329 = vmatpush2.bf16.msra.mxu0 %v930
  %1330 = vmatprep.subr.bf16.mxu0 %v929
  %1331 = vmatpush2.bf16.msra.mxu0 %v928
  %1332 = vmatprep.subr.bf16.mxu0 %v927
  %1333 = vmatpush2.bf16.msra.mxu0 %v926
  %1334 = vmatprep.subr.bf16.mxu0 %v925
  %1335 = vmatpush2.bf16.msra.mxu0 %v924
  %1336 = vmatprep.subr.bf16.mxu0 %v923
  %1337 = vmatpush2.bf16.msra.mxu0 %v922
  %1338 = vmatprep.subr.bf16.mxu0 %v921
  %1339 = vmatpush2.bf16.msra.mxu0 %v920
  %1340 = vmatprep.mubr.bf16.mxu0 %v258
  %1341 = vmatmul.mubr.bf16.gmra.mxu0 %v256
  %v1342 = vpop.f32.mrf.mxu0
  %v1343 = vadd.f32 %v1302, %v1342
  %v1344 = vpop.f32.mrf.mxu0
  %v1345 = vadd.f32 %v1304, %v1344
  %v1346 = vpop.f32.mrf.mxu0
  %v1347 = vpop.f32.mrf.mxu0
  %1348 = vdwg.mxu0
  %1349 = vmatprep.subr.bf16.mxu0 %v951
  %1350 = vmatpush1.bf16.msra.mxu0 %v950
  %1351 = vmatprep.subr.bf16.mxu0 %v949
  %1352 = vmatpush1.bf16.msra.mxu0 %v948
  %1353 = vmatprep.subr.bf16.mxu0 %v947
  %1354 = vmatpush1.bf16.msra.mxu0 %v946
  %1355 = vmatprep.subr.bf16.mxu0 %v945
  %1356 = vmatpush1.bf16.msra.mxu0 %v944
  %1357 = vmatprep.subr.bf16.mxu0 %v943
  %1358 = vmatpush1.bf16.msra.mxu0 %v942
  %1359 = vmatprep.subr.bf16.mxu0 %v941
  %1360 = vmatpush1.bf16.msra.mxu0 %v940
  %1361 = vmatprep.subr.bf16.mxu0 %v939
  %1362 = vmatpush1.bf16.msra.mxu0 %v938
  %1363 = vmatprep.subr.bf16.mxu0 %v937
  %1364 = vmatpush1.bf16.msra.mxu0 %v936
  %1365 = vmatprep.subr.bf16.mxu0 %v967
  %1366 = vmatpush2.bf16.msra.mxu0 %v966
  %1367 = vmatprep.subr.bf16.mxu0 %v965
  %1368 = vmatpush2.bf16.msra.mxu0 %v964
  %1369 = vmatprep.subr.bf16.mxu0 %v963
  %1370 = vmatpush2.bf16.msra.mxu0 %v962
  %1371 = vmatprep.subr.bf16.mxu0 %v961
  %1372 = vmatpush2.bf16.msra.mxu0 %v960
  %1373 = vmatprep.subr.bf16.mxu0 %v959
  %1374 = vmatpush2.bf16.msra.mxu0 %v958
  %1375 = vmatprep.subr.bf16.mxu0 %v957
  %1376 = vmatpush2.bf16.msra.mxu0 %v956
  %1377 = vmatprep.subr.bf16.mxu0 %v955
  %1378 = vmatpush2.bf16.msra.mxu0 %v954
  %1379 = vmatprep.subr.bf16.mxu0 %v953
  %1380 = vmatpush2.bf16.msra.mxu0 %v952
  %1381 = vmatprep.mubr.bf16.mxu0 %v255
  %1382 = vmatmul.mubr.bf16.gmra.mxu0 %v241
  %v1383 = vpop.f32.mrf.mxu0
  %v1384 = vadd.f32 %v1343, %v1383
  %v1385 = vpop.f32.mrf.mxu0
  %v1386 = vadd.f32 %v1345, %v1385
  %v1387 = vpop.f32.mrf.mxu0
  %v1388 = vpop.f32.mrf.mxu0
  %1389 = vdwg.mxu0
  %1390 = vmatprep.subr.bf16.mxu0 %v983
  %1391 = vmatpush1.bf16.msra.mxu0 %v982
  %1392 = vmatprep.subr.bf16.mxu0 %v981
  %1393 = vmatpush1.bf16.msra.mxu0 %v980
  %1394 = vmatprep.subr.bf16.mxu0 %v979
  %1395 = vmatpush1.bf16.msra.mxu0 %v978
  %1396 = vmatprep.subr.bf16.mxu0 %v977
  %1397 = vmatpush1.bf16.msra.mxu0 %v976
  %1398 = vmatprep.subr.bf16.mxu0 %v975
  %1399 = vmatpush1.bf16.msra.mxu0 %v974
  %1400 = vmatprep.subr.bf16.mxu0 %v973
  %1401 = vmatpush1.bf16.msra.mxu0 %v972
  %1402 = vmatprep.subr.bf16.mxu0 %v971
  %1403 = vmatpush1.bf16.msra.mxu0 %v970
  %1404 = vmatprep.subr.bf16.mxu0 %v969
  %1405 = vmatpush1.bf16.msra.mxu0 %v968
  %1406 = vmatprep.subr.bf16.mxu0 %v999
  %1407 = vmatpush2.bf16.msra.mxu0 %v998
  %1408 = vmatprep.subr.bf16.mxu0 %v997
  %1409 = vmatpush2.bf16.msra.mxu0 %v996
  %1410 = vmatprep.subr.bf16.mxu0 %v995
  %1411 = vmatpush2.bf16.msra.mxu0 %v994
  %1412 = vmatprep.subr.bf16.mxu0 %v993
  %1413 = vmatpush2.bf16.msra.mxu0 %v992
  %1414 = vmatprep.subr.bf16.mxu0 %v991
  %1415 = vmatpush2.bf16.msra.mxu0 %v990
  %1416 = vmatprep.subr.bf16.mxu0 %v989
  %1417 = vmatpush2.bf16.msra.mxu0 %v988
  %1418 = vmatprep.subr.bf16.mxu0 %v987
  %1419 = vmatpush2.bf16.msra.mxu0 %v986
  %1420 = vmatprep.subr.bf16.mxu0 %v985
  %1421 = vmatpush2.bf16.msra.mxu0 %v984
  %1422 = vmatprep.mubr.bf16.mxu0 %v259
  %1423 = vmatmul.mubr.bf16.gmra.mxu0 %v257
  %v1424 = vpop.f32.mrf.mxu0
  %v1425 = vadd.f32 %v1384, %v1424
  %v1426 = vpop.f32.mrf.mxu0
  %v1427 = vadd.f32 %v1386, %v1426
  %v1428 = vpop.f32.mrf.mxu0
  %v1429 = vpop.f32.mrf.mxu0
  %1430 = vdwg.mxu0
  %1431 = vmatprep.subr.bf16.mxu0 %v1015
  %1432 = vmatpush1.bf16.msra.mxu0 %v1014
  %1433 = vmatprep.subr.bf16.mxu0 %v1013
  %1434 = vmatpush1.bf16.msra.mxu0 %v1012
  %1435 = vmatprep.subr.bf16.mxu0 %v1011
  %1436 = vmatpush1.bf16.msra.mxu0 %v1010
  %1437 = vmatprep.subr.bf16.mxu0 %v1009
  %1438 = vmatpush1.bf16.msra.mxu0 %v1008
  %1439 = vmatprep.subr.bf16.mxu0 %v1007
  %1440 = vmatpush1.bf16.msra.mxu0 %v1006
  %1441 = vmatprep.subr.bf16.mxu0 %v1005
  %1442 = vmatpush1.bf16.msra.mxu0 %v1004
  %1443 = vmatprep.subr.bf16.mxu0 %v1003
  %1444 = vmatpush1.bf16.msra.mxu0 %v1002
  %1445 = vmatprep.subr.bf16.mxu0 %v1001
  %1446 = vmatpush1.bf16.msra.mxu0 %v1000
  %1447 = vmatprep.subr.bf16.mxu0 %v1031
  %1448 = vmatpush2.bf16.msra.mxu0 %v1030
  %1449 = vmatprep.subr.bf16.mxu0 %v1029
  %1450 = vmatpush2.bf16.msra.mxu0 %v1028
  %1451 = vmatprep.subr.bf16.mxu0 %v1027
  %1452 = vmatpush2.bf16.msra.mxu0 %v1026
  %1453 = vmatprep.subr.bf16.mxu0 %v1025
  %1454 = vmatpush2.bf16.msra.mxu0 %v1024
  %1455 = vmatprep.subr.bf16.mxu0 %v1023
  %1456 = vmatpush2.bf16.msra.mxu0 %v1022
  %1457 = vmatprep.subr.bf16.mxu0 %v1021
  %1458 = vmatpush2.bf16.msra.mxu0 %v1020
  %1459 = vmatprep.subr.bf16.mxu0 %v1019
  %1460 = vmatpush2.bf16.msra.mxu0 %v1018
  %1461 = vmatprep.subr.bf16.mxu0 %v1017
  %1462 = vmatpush2.bf16.msra.mxu0 %v1016
  %1463 = vmatprep.mubr.bf16.mxu0 %v281
  %1464 = vmatmul.mubr.bf16.gmra.mxu0 %v274
  %v1465 = vpop.f32.mrf.mxu0
  %v1466 = vadd.f32 %v1425, %v1465
  %v1467 = vpop.f32.mrf.mxu0
  %v1468 = vadd.f32 %v1427, %v1467
  %v1469 = vpop.f32.mrf.mxu0
  %v1470 = vpop.f32.mrf.mxu0
  %1471 = vdwg.mxu0
  %1472 = vmatprep.subr.bf16.mxu0 %v1047
  %1473 = vmatpush1.bf16.msra.mxu0 %v1046
  %1474 = vmatprep.subr.bf16.mxu0 %v1045
  %1475 = vmatpush1.bf16.msra.mxu0 %v1044
  %1476 = vmatprep.subr.bf16.mxu0 %v1043
  %1477 = vmatpush1.bf16.msra.mxu0 %v1042
  %1478 = vmatprep.subr.bf16.mxu0 %v1041
  %1479 = vmatpush1.bf16.msra.mxu0 %v1040
  %1480 = vmatprep.subr.bf16.mxu0 %v1039
  %1481 = vmatpush1.bf16.msra.mxu0 %v1038
  %1482 = vmatprep.subr.bf16.mxu0 %v1037
  %1483 = vmatpush1.bf16.msra.mxu0 %v1036
  %1484 = vmatprep.subr.bf16.mxu0 %v1035
  %1485 = vmatpush1.bf16.msra.mxu0 %v1034
  %1486 = vmatprep.subr.bf16.mxu0 %v1033
  %1487 = vmatpush1.bf16.msra.mxu0 %v1032
  %1488 = vmatprep.subr.bf16.mxu0 %v1063
  %1489 = vmatpush2.bf16.msra.mxu0 %v1062
  %1490 = vmatprep.subr.bf16.mxu0 %v1061
  %1491 = vmatpush2.bf16.msra.mxu0 %v1060
  %1492 = vmatprep.subr.bf16.mxu0 %v1059
  %1493 = vmatpush2.bf16.msra.mxu0 %v1058
  %1494 = vmatprep.subr.bf16.mxu0 %v1057
  %1495 = vmatpush2.bf16.msra.mxu0 %v1056
  %1496 = vmatprep.subr.bf16.mxu0 %v1055
  %1497 = vmatpush2.bf16.msra.mxu0 %v1054
  %1498 = vmatprep.subr.bf16.mxu0 %v1053
  %1499 = vmatpush2.bf16.msra.mxu0 %v1052
  %1500 = vmatprep.subr.bf16.mxu0 %v1051
  %1501 = vmatpush2.bf16.msra.mxu0 %v1050
  %1502 = vmatprep.subr.bf16.mxu0 %v1049
  %1503 = vmatpush2.bf16.msra.mxu0 %v1048
  %1504 = vmatprep.mubr.bf16.mxu0 %v283
  %1505 = vmatmul.mubr.bf16.gmra.mxu0 %v282
  %v1506 = vpop.f32.mrf.mxu0
  %v1507 = vadd.f32 %v1466, %v1506
  %v1508 = vpop.f32.mrf.mxu0
  %v1509 = vadd.f32 %v1468, %v1508
  %v1510 = vpop.f32.mrf.mxu0
  %v1511 = vpop.f32.mrf.mxu0
  %1512 = vdwg.mxu0
  %v1515 = vcombine.low %v1507, %v1509
  %v1517 = vunpack.c.l.s4 1983009808
  %v1518 = vunpack.c.0.s8 %v1517
  %v1519 = vlaneseq
  %v1520 = vshrl.u32 %v1519, 7
  %v1521 = vsub.s32 %v1518, %v1520
  %v1522 = vrot.slane %v1515, %v1521
  %1524 = vst [vmem:[%s3] sm:$0xf] %v1522
  // Predicated region
  $region14: #{forward.18} parent=0 // pred_check
    _
  $region15: #{forward.18} parent=0 // pred_check_branch
    %1526 = sbr.rel (0) target = $region17
  $region16: #{forward.18} parent=0 // pred_region
    _
  $region17: #{forward.18} parent=0 // pred_fallthru
    _
  // Predicated region
  $region18: #{forward.18} parent=0 // pred_check
    _
  $region19: #{forward.18} parent=0 // pred_check_branch
    %1528 = sbr.rel (0) target = $region21
  $region20: #{forward.18} parent=0 // pred_region
    _
  $region21: #{forward.18} parent=0 // pred_fallthru
    _

// kernel: forward.17
$region0: #{forward.17}
  #allocation0 [shape = 'u32[]', space=smem, size = 0x4, offset = 0x4, fixed_abs, tag = 'smem constant byte address 0x4 - core index']
  #allocation1 [shape = 'u32[144,128]{1,0:T(1,128)}', space=vmem, size = 0x12000, scoped, tag = 'internal scratch']
  #allocation2 [shape = 'f32[1]{0:T(128)S(6)}', space=smem, size = 0x200, scoped, tag = 'scoped memory for forward.17']
  %s0 = inlined_call_operand.vmem [shape: bf16[2,768], index: 0, kind: input, shape index: {}]
  %s1 = inlined_call_operand.vmem [shape: bf16[768,512], index: 1, kind: input, shape index: {}]
  %s2 = inlined_call_operand.vmem [shape: f32[1,512], index: 2, kind: input, shape index: {}]
  %s3 = inlined_call_operand.vmem [shape: f32[1,512], index: 3, kind: input, shape index: {}]
  %s4 = inlined_call_operand.<no memory space> [shape: f32[1], index: 4, kind: input, shape index: {}]
  %s5 = inlined_call_operand.vmem [shape: f32[2,512], index: 5, kind: output, shape index: {}]
  %s6 = sld [smem:[#allocation0]]
  $region30: #{forward.17} parent=0
    _
  %s8 = ssub.s32 1, %s6
  %s9 = scalar_select 0, %s8, %s6
  %10 = sst [smem:[#allocation2]] %s4
  // Predicated region
  $region2: #{forward.17} parent=0 // pred_check
    _
  $region3: #{forward.17} parent=0 // pred_check_branch
    %12 = sbr.rel (0) target = $region5
  $region4: #{forward.17} parent=0 // pred_region
    _
  $region5: #{forward.17} parent=0 // pred_fallthru
    _
  // Predicated region
  $region6: #{forward.17} parent=0 // pred_check
    _
  $region7: #{forward.17} parent=0 // pred_check_branch
    %14 = sbr.rel (0) target = $region9
  $region8: #{forward.17} parent=0 // pred_region
    _
  $region9: #{forward.17} parent=0 // pred_fallthru
    _
  // Predicated region
  $region10: #{forward.17} parent=0 // pred_check
    _
  $region11: #{forward.17} parent=0 // pred_check_branch
    %16 = sbr.rel (0) target = $region13
  $region12: #{forward.17} parent=0 // pred_region
    _
  $region13: #{forward.17} parent=0 // pred_fallthru
    _
  // Predicated region
  $region14: #{forward.17} parent=0 // pred_check
    _
  $region15: #{forward.17} parent=0 // pred_check_branch
    %18 = sbr.rel (0) target = $region17
  $region16: #{forward.17} parent=0 // pred_region
    _
  $region17: #{forward.17} parent=0 // pred_fallthru
    _
  // Predicated region
  $region18: #{forward.17} parent=0 // pred_check
    _
  $region19: #{forward.17} parent=0 // pred_check_branch
    %20 = sbr.rel (0) target = $region21
  $region20: #{forward.17} parent=0 // pred_region
    _
  $region21: #{forward.17} parent=0 // pred_fallthru
    _
  %v21 = vld [vmem:[%s0] sm:$0x3f]
  %v22 = vld [vmem:[%s1] sm:$0xff]
  %v23 = vld [vmem:[%s1 + $0x8] sm:$0xff]
  %v24 = vld [vmem:[%s1 + $0x10] sm:$0xff]
  %v25 = vld [vmem:[%s1 + $0x18] sm:$0xff]
  %v26 = vld [vmem:[%s1 + $0x20] sm:$0xff]
  %v27 = vld [vmem:[%s1 + $0x28] sm:$0xff]
  %v28 = vld [vmem:[%s1 + $0x30] sm:$0xff]
  %v29 = vld [vmem:[%s1 + $0x38] sm:$0xff]
  %v30 = vld [vmem:[%s1 + $0x40] sm:$0xff]
  %v31 = vld [vmem:[%s1 + $0x48] sm:$0xff]
  %v32 = vld [vmem:[%s1 + $0x50] sm:$0xff]
  %v33 = vld [vmem:[%s1 + $0x58] sm:$0xff]
  %v34 = vld [vmem:[%s1 + $0x60] sm:$0xff]
  %v35 = vld [vmem:[%s1 + $0x68] sm:$0xff]
  %v36 = vld [vmem:[%s1 + $0x70] sm:$0xff]
  %v37 = vld [vmem:[%s1 + $0x78] sm:$0xff]
  %v38 = vld [vmem:[%s1 + $0x80] sm:$0xff]
  %v39 = vld [vmem:[%s1 + $0x88] sm:$0xff]
  %v40 = vld [vmem:[%s1 + $0x90] sm:$0xff]
  %v41 = vld [vmem:[%s1 + $0x98] sm:$0xff]
  %v42 = vld [vmem:[%s1 + $0xa0] sm:$0xff]
  %v43 = vld [vmem:[%s1 + $0xa8] sm:$0xff]
  %v44 = vld [vmem:[%s1 + $0xb0] sm:$0xff]
  %v45 = vld [vmem:[%s1 + $0xb8] sm:$0xff]
  %v46 = vld [vmem:[%s1 + $0xc0] sm:$0xff]
  %v47 = vld [vmem:[%s1 + $0xc8] sm:$0xff]
  %v48 = vld [vmem:[%s1 + $0xd0] sm:$0xff]
  %v49 = vld [vmem:[%s1 + $0xd8] sm:$0xff]
  %v50 = vld [vmem:[%s1 + $0xe0] sm:$0xff]
  %v51 = vld [vmem:[%s1 + $0xe8] sm:$0xff]
  %v52 = vld [vmem:[%s1 + $0xf0] sm:$0xff]
  %v53 = vld [vmem:[%s1 + $0xf8] sm:$0xff]
  %v54 = vld [vmem:[%s1 + $0x100] sm:$0xff]
  %v55 = vld [vmem:[%s1 + $0x108] sm:$0xff]
  %v56 = vld [vmem:[%s1 + $0x110] sm:$0xff]
  %v57 = vld [vmem:[%s1 + $0x118] sm:$0xff]
  %v58 = vld [vmem:[%s1 + $0x120] sm:$0xff]
  %v59 = vld [vmem:[%s1 + $0x128] sm:$0xff]
  %v60 = vld [vmem:[%s1 + $0x130] sm:$0xff]
  %v61 = vld [vmem:[%s1 + $0x138] sm:$0xff]
  %v62 = vld [vmem:[%s1 + $0x140] sm:$0xff]
  %v63 = vld [vmem:[%s1 + $0x148] sm:$0xff]
  %v64 = vld [vmem:[%s1 + $0x150] sm:$0xff]
  %v65 = vld [vmem:[%s1 + $0x158] sm:$0xff]
  %v66 = vld [vmem:[%s1 + $0x160] sm:$0xff]
  %v67 = vld [vmem:[%s1 + $0x168] sm:$0xff]
  %v68 = vld [vmem:[%s1 + $0x170] sm:$0xff]
  %v69 = vld [vmem:[%s1 + $0x178] sm:$0xff]
  %v70 = vld [vmem:[%s1 + $0x180] sm:$0xff]
  %v71 = vld [vmem:[%s1 + $0x188] sm:$0xff]
  %v72 = vld [vmem:[%s1 + $0x190] sm:$0xff]
  %v73 = vld [vmem:[%s1 + $0x198] sm:$0xff]
  %v74 = vld [vmem:[%s1 + $0x1a0] sm:$0xff]
  %v75 = vld [vmem:[%s1 + $0x1a8] sm:$0xff]
  %v76 = vld [vmem:[%s1 + $0x1b0] sm:$0xff]
  %v77 = vld [vmem:[%s1 + $0x1b8] sm:$0xff]
  %v78 = vld [vmem:[%s1 + $0x1c0] sm:$0xff]
  %v79 = vld [vmem:[%s1 + $0x1c8] sm:$0xff]
  %v80 = vld [vmem:[%s1 + $0x1d0] sm:$0xff]
  %v81 = vld [vmem:[%s1 + $0x1d8] sm:$0xff]
  %v82 = vld [vmem:[%s1 + $0x1e0] sm:$0xff]
  %v83 = vld [vmem:[%s1 + $0x1e8] sm:$0xff]
  %v84 = vld [vmem:[%s1 + $0x1f0] sm:$0xff]
  %v85 = vld [vmem:[%s1 + $0x1f8] sm:$0xff]
  %v86 = vld [vmem:[%s1 + $0x200] sm:$0xff]
  %v87 = vld [vmem:[%s1 + $0x208] sm:$0xff]
  %v88 = vld [vmem:[%s1 + $0x210] sm:$0xff]
  %v89 = vld [vmem:[%s1 + $0x218] sm:$0xff]
  %v90 = vld [vmem:[%s1 + $0x220] sm:$0xff]
  %v91 = vld [vmem:[%s1 + $0x228] sm:$0xff]
  %v92 = vld [vmem:[%s1 + $0x230] sm:$0xff]
  %v93 = vld [vmem:[%s1 + $0x238] sm:$0xff]
  %v94 = vld [vmem:[%s1 + $0x240] sm:$0xff]
  %v95 = vld [vmem:[%s1 + $0x248] sm:$0xff]
  %v96 = vld [vmem:[%s1 + $0x250] sm:$0xff]
  %v97 = vld [vmem:[%s1 + $0x258] sm:$0xff]
  %v98 = vld [vmem:[%s1 + $0x260] sm:$0xff]
  %v99 = vld [vmem:[%s1 + $0x268] sm:$0xff]
  %v100 = vld [vmem:[%s1 + $0x270] sm:$0xff]
  %v101 = vld [vmem:[%s1 + $0x278] sm:$0xff]
  %v102 = vld [vmem:[%s1 + $0x280] sm:$0xff]
  %v103 = vld [vmem:[%s1 + $0x288] sm:$0xff]
  %v104 = vld [vmem:[%s1 + $0x290] sm:$0xff]
  %v105 = vld [vmem:[%s1 + $0x298] sm:$0xff]
  %v106 = vld [vmem:[%s1 + $0x2a0] sm:$0xff]
  %v107 = vld [vmem:[%s1 + $0x2a8] sm:$0xff]
  %v108 = vld [vmem:[%s1 + $0x2b0] sm:$0xff]
  %v109 = vld [vmem:[%s1 + $0x2b8] sm:$0xff]
  %v110 = vld [vmem:[%s1 + $0x2c0] sm:$0xff]
  %v111 = vld [vmem:[%s1 + $0x2c8] sm:$0xff]
  %v112 = vld [vmem:[%s1 + $0x2d0] sm:$0xff]
  %v113 = vld [vmem:[%s1 + $0x2d8] sm:$0xff]
  %v114 = vld [vmem:[%s1 + $0x2e0] sm:$0xff]
  %v115 = vld [vmem:[%s1 + $0x2e8] sm:$0xff]
  %v116 = vld [vmem:[%s1 + $0x2f0] sm:$0xff]
  %v117 = vld [vmem:[%s1 + $0x2f8] sm:$0xff]
  %v118 = vld [vmem:[%s1 + $0x300] sm:$0xff]
  %v119 = vld [vmem:[%s1 + $0x308] sm:$0xff]
  %v120 = vld [vmem:[%s1 + $0x310] sm:$0xff]
  %v121 = vld [vmem:[%s1 + $0x318] sm:$0xff]
  %v122 = vld [vmem:[%s1 + $0x320] sm:$0xff]
  %v123 = vld [vmem:[%s1 + $0x328] sm:$0xff]
  %v124 = vld [vmem:[%s1 + $0x330] sm:$0xff]
  %v125 = vld [vmem:[%s1 + $0x338] sm:$0xff]
  %v126 = vld [vmem:[%s1 + $0x340] sm:$0xff]
  %v127 = vld [vmem:[%s1 + $0x348] sm:$0xff]
  %v128 = vld [vmem:[%s1 + $0x350] sm:$0xff]
  %v129 = vld [vmem:[%s1 + $0x358] sm:$0xff]
  %v130 = vld [vmem:[%s1 + $0x360] sm:$0xff]
  %v131 = vld [vmem:[%s1 + $0x368] sm:$0xff]
  %v132 = vld [vmem:[%s1 + $0x370] sm:$0xff]
  %v133 = vld [vmem:[%s1 + $0x378] sm:$0xff]
  %v134 = vld [vmem:[%s1 + $0x380] sm:$0xff]
  %v135 = vld [vmem:[%s1 + $0x388] sm:$0xff]
  %v136 = vld [vmem:[%s1 + $0x390] sm:$0xff]
  %v137 = vld [vmem:[%s1 + $0x398] sm:$0xff]
  %v138 = vld [vmem:[%s1 + $0x3a0] sm:$0xff]
  %v139 = vld [vmem:[%s1 + $0x3a8] sm:$0xff]
  %v140 = vld [vmem:[%s1 + $0x3b0] sm:$0xff]
  %v141 = vld [vmem:[%s1 + $0x3b8] sm:$0xff]
  %v142 = vld [vmem:[%s1 + $0x3c0] sm:$0xff]
  %v143 = vld [vmem:[%s1 + $0x3c8] sm:$0xff]
  %v144 = vld [vmem:[%s1 + $0x3d0] sm:$0xff]
  %v145 = vld [vmem:[%s1 + $0x3d8] sm:$0xff]
  %v146 = vld [vmem:[%s1 + $0x3e0] sm:$0xff]
  %v147 = vld [vmem:[%s1 + $0x3e8] sm:$0xff]
  %v148 = vld [vmem:[%s1 + $0x3f0] sm:$0xff]
  %v149 = vld [vmem:[%s1 + $0x3f8] sm:$0xff]
  %v150 = vld [vmem:[%s1 + $0x400] sm:$0xff]
  %v151 = vld [vmem:[%s1 + $0x408] sm:$0xff]
  %v152 = vld [vmem:[%s1 + $0x410] sm:$0xff]
  %v153 = vld [vmem:[%s1 + $0x418] sm:$0xff]
  %v154 = vld [vmem:[%s1 + $0x420] sm:$0xff]
  %v155 = vld [vmem:[%s1 + $0x428] sm:$0xff]
  %v156 = vld [vmem:[%s1 + $0x430] sm:$0xff]
  %v157 = vld [vmem:[%s1 + $0x438] sm:$0xff]
  %v158 = vld [vmem:[%s1 + $0x440] sm:$0xff]
  %v159 = vld [vmem:[%s1 + $0x448] sm:$0xff]
  %v160 = vld [vmem:[%s1 + $0x450] sm:$0xff]
  %v161 = vld [vmem:[%s1 + $0x458] sm:$0xff]
  %v162 = vld [vmem:[%s1 + $0x460] sm:$0xff]
  %v163 = vld [vmem:[%s1 + $0x468] sm:$0xff]
  %v164 = vld [vmem:[%s1 + $0x470] sm:$0xff]
  %v165 = vld [vmem:[%s1 + $0x478] sm:$0xff]
  %v166 = vld [vmem:[%s1 + $0x480] sm:$0xff]
  %v167 = vld [vmem:[%s1 + $0x488] sm:$0xff]
  %v168 = vld [vmem:[%s1 + $0x490] sm:$0xff]
  %v169 = vld [vmem:[%s1 + $0x498] sm:$0xff]
  %v170 = vld [vmem:[%s1 + $0x4a0] sm:$0xff]
  %v171 = vld [vmem:[%s1 + $0x4a8] sm:$0xff]
  %v172 = vld [vmem:[%s1 + $0x4b0] sm:$0xff]
  %v173 = vld [vmem:[%s1 + $0x4b8] sm:$0xff]
  %v174 = vld [vmem:[%s1 + $0x4c0] sm:$0xff]
  %v175 = vld [vmem:[%s1 + $0x4c8] sm:$0xff]
  %v176 = vld [vmem:[%s1 + $0x4d0] sm:$0xff]
  %v177 = vld [vmem:[%s1 + $0x4d8] sm:$0xff]
  %v178 = vld [vmem:[%s1 + $0x4e0] sm:$0xff]
  %v179 = vld [vmem:[%s1 + $0x4e8] sm:$0xff]
  %v180 = vld [vmem:[%s1 + $0x4f0] sm:$0xff]
  %v181 = vld [vmem:[%s1 + $0x4f8] sm:$0xff]
  %v182 = vld [vmem:[%s1 + $0x500] sm:$0xff]
  %v183 = vld [vmem:[%s1 + $0x508] sm:$0xff]
  %v184 = vld [vmem:[%s1 + $0x510] sm:$0xff]
  %v185 = vld [vmem:[%s1 + $0x518] sm:$0xff]
  %v186 = vld [vmem:[%s1 + $0x520] sm:$0xff]
  %v187 = vld [vmem:[%s1 + $0x528] sm:$0xff]
  %v188 = vld [vmem:[%s1 + $0x530] sm:$0xff]
  %v189 = vld [vmem:[%s1 + $0x538] sm:$0xff]
  %v190 = vld [vmem:[%s1 + $0x540] sm:$0xff]
  %v191 = vld [vmem:[%s1 + $0x548] sm:$0xff]
  %v192 = vld [vmem:[%s1 + $0x550] sm:$0xff]
  %v193 = vld [vmem:[%s1 + $0x558] sm:$0xff]
  %v194 = vld [vmem:[%s1 + $0x560] sm:$0xff]
  %v195 = vld [vmem:[%s1 + $0x568] sm:$0xff]
  %v196 = vld [vmem:[%s1 + $0x570] sm:$0xff]
  %v197 = vld [vmem:[%s1 + $0x578] sm:$0xff]
  %v198 = vld [vmem:[%s1 + $0x580] sm:$0xff]
  %v199 = vld [vmem:[%s1 + $0x588] sm:$0xff]
  %v200 = vld [vmem:[%s1 + $0x590] sm:$0xff]
  %v201 = vld [vmem:[%s1 + $0x598] sm:$0xff]
  %v202 = vld [vmem:[%s1 + $0x5a0] sm:$0xff]
  %v203 = vld [vmem:[%s1 + $0x5a8] sm:$0xff]
  %v204 = vld [vmem:[%s1 + $0x5b0] sm:$0xff]
  %v205 = vld [vmem:[%s1 + $0x5b8] sm:$0xff]
  %v206 = vld [vmem:[%s1 + $0x5c0] sm:$0xff]
  %v207 = vld [vmem:[%s1 + $0x5c8] sm:$0xff]
  %v208 = vld [vmem:[%s1 + $0x5d0] sm:$0xff]
  %v209 = vld [vmem:[%s1 + $0x5d8] sm:$0xff]
  %v210 = vld [vmem:[%s1 + $0x5e0] sm:$0xff]
  %v211 = vld [vmem:[%s1 + $0x5e8] sm:$0xff]
  %v212 = vld [vmem:[%s1 + $0x5f0] sm:$0xff]
  %v213 = vld [vmem:[%s1 + $0x5f8] sm:$0xff]
  %v215 = vcombine.high %v21, %v21
  %v217 = vunpack.c.l.s4 1966171168
  %v218 = vunpack.c.0.s8 %v217
  %v219 = vlaneseq
  %v220 = vshrl.u32 %v219, 7
  %v221 = vsub.s32 %v218, %v220
  %v222 = vrot.slane %v21, %v221
  %v224 = vunpack.c.l.s4 1966171168
  %v225 = vunpack.c.0.s8 %v224
  %v226 = vlaneseq
  %v227 = vshrl.u32 %v226, 7
  %v228 = vsub.s32 %v225, %v227
  %v229 = vrot.slane %v215, %v228
  %v230 = vcombine.high %v222, %v222
  %v231 = vcombine.high %v229, %v229
  %v233 = vunpack.c.l.s4 1966171168
  %v234 = vunpack.c.0.s8 %v233
  %v235 = vlaneseq
  %v236 = vshrl.u32 %v235, 7
  %v237 = vsub.s32 %v234, %v236
  %v238 = vrot.slane %v222, %v237
  %v240 = vunpack.c.l.s4 1966171168
  %v241 = vunpack.c.0.s8 %v240
  %v242 = vlaneseq
  %v243 = vshrl.u32 %v242, 7
  %v244 = vsub.s32 %v241, %v243
  %v245 = vrot.slane %v229, %v244
  %v247 = vunpack.c.l.s4 1966171168
  %v248 = vunpack.c.0.s8 %v247
  %v249 = vlaneseq
  %v250 = vshrl.u32 %v249, 7
  %v251 = vsub.s32 %v248, %v250
  %v252 = vrot.slane %v230, %v251
  %v254 = vunpack.c.l.s4 1966171168
  %v255 = vunpack.c.0.s8 %v254
  %v256 = vlaneseq
  %v257 = vshrl.u32 %v256, 7
  %v258 = vsub.s32 %v255, %v257
  %v259 = vrot.slane %v231, %v258
  %v260 = vcombine.high %v238, %v238
  %v261 = vcombine.high %v252, %v252
  %v460 = vunpack.c.l.b16 %v22
  %v461 = vunpack.c.h.b16 %v22
  %v462 = vunpack.c.l.b16 %v23
  %v463 = vunpack.c.h.b16 %v23
  %v464 = vunpack.c.l.b16 %v24
  %v465 = vunpack.c.h.b16 %v24
  %v466 = vunpack.c.l.b16 %v25
  %v467 = vunpack.c.h.b16 %v25
  %v468 = vunpack.c.l.b16 %v26
  %v469 = vunpack.c.h.b16 %v26
  %v470 = vunpack.c.l.b16 %v27
  %v471 = vunpack.c.h.b16 %v27
  %v472 = vunpack.c.l.b16 %v28
  %v473 = vunpack.c.h.b16 %v28
  %v474 = vunpack.c.l.b16 %v29
  %v475 = vunpack.c.h.b16 %v29
  %v476 = vunpack.c.l.b16 %v30
  %v477 = vunpack.c.h.b16 %v30
  %v478 = vunpack.c.l.b16 %v31
  %v479 = vunpack.c.h.b16 %v31
  %v480 = vunpack.c.l.b16 %v32
  %v481 = vunpack.c.h.b16 %v32
  %v482 = vunpack.c.l.b16 %v33
  %v483 = vunpack.c.h.b16 %v33
  %v484 = vunpack.c.l.b16 %v34
  %v485 = vunpack.c.h.b16 %v34
  %v486 = vunpack.c.l.b16 %v35
  %v487 = vunpack.c.h.b16 %v35
  %v488 = vunpack.c.l.b16 %v36
  %v489 = vunpack.c.h.b16 %v36
  %v490 = vunpack.c.l.b16 %v37
  %v491 = vunpack.c.h.b16 %v37
  %v492 = vunpack.c.l.b16 %v38
  %v493 = vunpack.c.h.b16 %v38
  %v494 = vunpack.c.l.b16 %v39
  %v495 = vunpack.c.h.b16 %v39
  %v496 = vunpack.c.l.b16 %v40
  %v497 = vunpack.c.h.b16 %v40
  %v498 = vunpack.c.l.b16 %v41
  %v499 = vunpack.c.h.b16 %v41
  %v500 = vunpack.c.l.b16 %v42
  %v501 = vunpack.c.h.b16 %v42
  %v502 = vunpack.c.l.b16 %v43
  %v503 = vunpack.c.h.b16 %v43
  %v504 = vunpack.c.l.b16 %v44
  %v505 = vunpack.c.h.b16 %v44
  %v506 = vunpack.c.l.b16 %v45
  %v507 = vunpack.c.h.b16 %v45
  %v508 = vunpack.c.l.b16 %v46
  %v509 = vunpack.c.h.b16 %v46
  %v510 = vunpack.c.l.b16 %v47
  %v511 = vunpack.c.h.b16 %v47
  %v512 = vunpack.c.l.b16 %v48
  %v513 = vunpack.c.h.b16 %v48
  %v514 = vunpack.c.l.b16 %v49
  %v515 = vunpack.c.h.b16 %v49
  %v516 = vunpack.c.l.b16 %v50
  %v517 = vunpack.c.h.b16 %v50
  %v518 = vunpack.c.l.b16 %v51
  %v519 = vunpack.c.h.b16 %v51
  %v520 = vunpack.c.l.b16 %v52
  %v521 = vunpack.c.h.b16 %v52
  %v522 = vunpack.c.l.b16 %v53
  %v523 = vunpack.c.h.b16 %v53
  %v524 = vunpack.c.l.b16 %v54
  %v525 = vunpack.c.h.b16 %v54
  %v526 = vunpack.c.l.b16 %v55
  %v527 = vunpack.c.h.b16 %v55
  %v528 = vunpack.c.l.b16 %v56
  %v529 = vunpack.c.h.b16 %v56
  %v530 = vunpack.c.l.b16 %v57
  %v531 = vunpack.c.h.b16 %v57
  %v532 = vunpack.c.l.b16 %v58
  %v533 = vunpack.c.h.b16 %v58
  %v534 = vunpack.c.l.b16 %v59
  %v535 = vunpack.c.h.b16 %v59
  %v536 = vunpack.c.l.b16 %v60
  %v537 = vunpack.c.h.b16 %v60
  %v538 = vunpack.c.l.b16 %v61
  %v539 = vunpack.c.h.b16 %v61
  %v540 = vunpack.c.l.b16 %v62
  %v541 = vunpack.c.h.b16 %v62
  %v542 = vunpack.c.l.b16 %v63
  %v543 = vunpack.c.h.b16 %v63
  %v544 = vunpack.c.l.b16 %v64
  %v545 = vunpack.c.h.b16 %v64
  %v546 = vunpack.c.l.b16 %v65
  %v547 = vunpack.c.h.b16 %v65
  %v548 = vunpack.c.l.b16 %v66
  %v549 = vunpack.c.h.b16 %v66
  %v550 = vunpack.c.l.b16 %v67
  %v551 = vunpack.c.h.b16 %v67
  %v552 = vunpack.c.l.b16 %v68
  %v553 = vunpack.c.h.b16 %v68
  %v554 = vunpack.c.l.b16 %v69
  %v555 = vunpack.c.h.b16 %v69
  %v556 = vunpack.c.l.b16 %v70
  %v557 = vunpack.c.h.b16 %v70
  %v558 = vunpack.c.l.b16 %v71
  %v559 = vunpack.c.h.b16 %v71
  %v560 = vunpack.c.l.b16 %v72
  %v561 = vunpack.c.h.b16 %v72
  %v562 = vunpack.c.l.b16 %v73
  %v563 = vunpack.c.h.b16 %v73
  %v564 = vunpack.c.l.b16 %v74
  %v565 = vunpack.c.h.b16 %v74
  %v566 = vunpack.c.l.b16 %v75
  %v567 = vunpack.c.h.b16 %v75
  %v568 = vunpack.c.l.b16 %v76
  %v569 = vunpack.c.h.b16 %v76
  %v570 = vunpack.c.l.b16 %v77
  %v571 = vunpack.c.h.b16 %v77
  %v572 = vunpack.c.l.b16 %v78
  %v573 = vunpack.c.h.b16 %v78
  %v574 = vunpack.c.l.b16 %v79
  %v575 = vunpack.c.h.b16 %v79
  %v576 = vunpack.c.l.b16 %v80
  %v577 = vunpack.c.h.b16 %v80
  %v578 = vunpack.c.l.b16 %v81
  %v579 = vunpack.c.h.b16 %v81
  %v580 = vunpack.c.l.b16 %v82
  %v581 = vunpack.c.h.b16 %v82
  %v582 = vunpack.c.l.b16 %v83
  %v583 = vunpack.c.h.b16 %v83
  %v584 = vunpack.c.l.b16 %v84
  %v585 = vunpack.c.h.b16 %v84
  %v586 = vunpack.c.l.b16 %v85
  %v587 = vunpack.c.h.b16 %v85
  %v588 = vunpack.c.l.b16 %v86
  %v589 = vunpack.c.h.b16 %v86
  %v590 = vunpack.c.l.b16 %v87
  %v591 = vunpack.c.h.b16 %v87
  %v592 = vunpack.c.l.b16 %v88
  %v593 = vunpack.c.h.b16 %v88
  %v594 = vunpack.c.l.b16 %v89
  %v595 = vunpack.c.h.b16 %v89
  %v596 = vunpack.c.l.b16 %v90
  %v597 = vunpack.c.h.b16 %v90
  %v598 = vunpack.c.l.b16 %v91
  %v599 = vunpack.c.h.b16 %v91
  %v600 = vunpack.c.l.b16 %v92
  %v601 = vunpack.c.h.b16 %v92
  %v602 = vunpack.c.l.b16 %v93
  %v603 = vunpack.c.h.b16 %v93
  %v604 = vunpack.c.l.b16 %v94
  %v605 = vunpack.c.h.b16 %v94
  %v606 = vunpack.c.l.b16 %v95
  %v607 = vunpack.c.h.b16 %v95
  %v608 = vunpack.c.l.b16 %v96
  %v609 = vunpack.c.h.b16 %v96
  %v610 = vunpack.c.l.b16 %v97
  %v611 = vunpack.c.h.b16 %v97
  %v612 = vunpack.c.l.b16 %v98
  %v613 = vunpack.c.h.b16 %v98
  %v614 = vunpack.c.l.b16 %v99
  %v615 = vunpack.c.h.b16 %v99
  %v616 = vunpack.c.l.b16 %v100
  %v617 = vunpack.c.h.b16 %v100
  %v618 = vunpack.c.l.b16 %v101
  %v619 = vunpack.c.h.b16 %v101
  %v620 = vunpack.c.l.b16 %v102
  %v621 = vunpack.c.h.b16 %v102
  %v622 = vunpack.c.l.b16 %v103
  %v623 = vunpack.c.h.b16 %v103
  %v624 = vunpack.c.l.b16 %v104
  %v625 = vunpack.c.h.b16 %v104
  %v626 = vunpack.c.l.b16 %v105
  %v627 = vunpack.c.h.b16 %v105
  %v628 = vunpack.c.l.b16 %v106
  %v629 = vunpack.c.h.b16 %v106
  %v630 = vunpack.c.l.b16 %v107
  %v631 = vunpack.c.h.b16 %v107
  %v632 = vunpack.c.l.b16 %v108
  %v633 = vunpack.c.h.b16 %v108
  %v634 = vunpack.c.l.b16 %v109
  %v635 = vunpack.c.h.b16 %v109
  %v636 = vunpack.c.l.b16 %v110
  %v637 = vunpack.c.h.b16 %v110
  %v638 = vunpack.c.l.b16 %v111
  %v639 = vunpack.c.h.b16 %v111
  %v640 = vunpack.c.l.b16 %v112
  %v641 = vunpack.c.h.b16 %v112
  %v642 = vunpack.c.l.b16 %v113
  %v643 = vunpack.c.h.b16 %v113
  %v644 = vunpack.c.l.b16 %v114
  %v645 = vunpack.c.h.b16 %v114
  %v646 = vunpack.c.l.b16 %v115
  %v647 = vunpack.c.h.b16 %v115
  %v648 = vunpack.c.l.b16 %v116
  %v649 = vunpack.c.h.b16 %v116
  %v650 = vunpack.c.l.b16 %v117
  %v651 = vunpack.c.h.b16 %v117
  %v652 = vunpack.c.l.b16 %v118
  %v653 = vunpack.c.h.b16 %v118
  %v654 = vunpack.c.l.b16 %v119
  %v655 = vunpack.c.h.b16 %v119
  %v656 = vunpack.c.l.b16 %v120
  %v657 = vunpack.c.h.b16 %v120
  %v658 = vunpack.c.l.b16 %v121
  %v659 = vunpack.c.h.b16 %v121
  %v660 = vunpack.c.l.b16 %v122
  %v661 = vunpack.c.h.b16 %v122
  %v662 = vunpack.c.l.b16 %v123
  %v663 = vunpack.c.h.b16 %v123
  %v664 = vunpack.c.l.b16 %v124
  %v665 = vunpack.c.h.b16 %v124
  %v666 = vunpack.c.l.b16 %v125
  %v667 = vunpack.c.h.b16 %v125
  %v668 = vunpack.c.l.b16 %v126
  %v669 = vunpack.c.h.b16 %v126
  %v670 = vunpack.c.l.b16 %v127
  %v671 = vunpack.c.h.b16 %v127
  %v672 = vunpack.c.l.b16 %v128
  %v673 = vunpack.c.h.b16 %v128
  %v674 = vunpack.c.l.b16 %v129
  %v675 = vunpack.c.h.b16 %v129
  %v676 = vunpack.c.l.b16 %v130
  %v677 = vunpack.c.h.b16 %v130
  %v678 = vunpack.c.l.b16 %v131
  %v679 = vunpack.c.h.b16 %v131
  %v680 = vunpack.c.l.b16 %v132
  %v681 = vunpack.c.h.b16 %v132
  %v682 = vunpack.c.l.b16 %v133
  %v683 = vunpack.c.h.b16 %v133
  %v684 = vunpack.c.l.b16 %v134
  %v685 = vunpack.c.h.b16 %v134
  %v686 = vunpack.c.l.b16 %v135
  %v687 = vunpack.c.h.b16 %v135
  %v688 = vunpack.c.l.b16 %v136
  %v689 = vunpack.c.h.b16 %v136
  %v690 = vunpack.c.l.b16 %v137
  %v691 = vunpack.c.h.b16 %v137
  %v692 = vunpack.c.l.b16 %v138
  %v693 = vunpack.c.h.b16 %v138
  %v694 = vunpack.c.l.b16 %v139
  %v695 = vunpack.c.h.b16 %v139
  %v696 = vunpack.c.l.b16 %v140
  %v697 = vunpack.c.h.b16 %v140
  %v698 = vunpack.c.l.b16 %v141
  %v699 = vunpack.c.h.b16 %v141
  %v700 = vunpack.c.l.b16 %v142
  %v701 = vunpack.c.h.b16 %v142
  %v702 = vunpack.c.l.b16 %v143
  %v703 = vunpack.c.h.b16 %v143
  %v704 = vunpack.c.l.b16 %v144
  %v705 = vunpack.c.h.b16 %v144
  %v706 = vunpack.c.l.b16 %v145
  %v707 = vunpack.c.h.b16 %v145
  %v708 = vunpack.c.l.b16 %v146
  %v709 = vunpack.c.h.b16 %v146
  %v710 = vunpack.c.l.b16 %v147
  %v711 = vunpack.c.h.b16 %v147
  %v712 = vunpack.c.l.b16 %v148
  %v713 = vunpack.c.h.b16 %v148
  %v714 = vunpack.c.l.b16 %v149
  %v715 = vunpack.c.h.b16 %v149
  %v716 = vunpack.c.l.b16 %v150
  %v717 = vunpack.c.h.b16 %v150
  %v718 = vunpack.c.l.b16 %v151
  %v719 = vunpack.c.h.b16 %v151
  %v720 = vunpack.c.l.b16 %v152
  %v721 = vunpack.c.h.b16 %v152
  %v722 = vunpack.c.l.b16 %v153
  %v723 = vunpack.c.h.b16 %v153
  %v724 = vunpack.c.l.b16 %v154
  %v725 = vunpack.c.h.b16 %v154
  %v726 = vunpack.c.l.b16 %v155
  %v727 = vunpack.c.h.b16 %v155
  %v728 = vunpack.c.l.b16 %v156
  %v729 = vunpack.c.h.b16 %v156
  %v730 = vunpack.c.l.b16 %v157
  %v731 = vunpack.c.h.b16 %v157
  %v732 = vunpack.c.l.b16 %v158
  %v733 = vunpack.c.h.b16 %v158
  %v734 = vunpack.c.l.b16 %v159
  %v735 = vunpack.c.h.b16 %v159
  %v736 = vunpack.c.l.b16 %v160
  %v737 = vunpack.c.h.b16 %v160
  %v738 = vunpack.c.l.b16 %v161
  %v739 = vunpack.c.h.b16 %v161
  %v740 = vunpack.c.l.b16 %v162
  %v741 = vunpack.c.h.b16 %v162
  %v742 = vunpack.c.l.b16 %v163
  %v743 = vunpack.c.h.b16 %v163
  %v744 = vunpack.c.l.b16 %v164
  %v745 = vunpack.c.h.b16 %v164
  %v746 = vunpack.c.l.b16 %v165
  %v747 = vunpack.c.h.b16 %v165
  %v748 = vunpack.c.l.b16 %v166
  %v749 = vunpack.c.h.b16 %v166
  %v750 = vunpack.c.l.b16 %v167
  %v751 = vunpack.c.h.b16 %v167
  %v752 = vunpack.c.l.b16 %v168
  %v753 = vunpack.c.h.b16 %v168
  %v754 = vunpack.c.l.b16 %v169
  %v755 = vunpack.c.h.b16 %v169
  %v756 = vunpack.c.l.b16 %v170
  %v757 = vunpack.c.h.b16 %v170
  %v758 = vunpack.c.l.b16 %v171
  %v759 = vunpack.c.h.b16 %v171
  %v760 = vunpack.c.l.b16 %v172
  %v761 = vunpack.c.h.b16 %v172
  %v762 = vunpack.c.l.b16 %v173
  %v763 = vunpack.c.h.b16 %v173
  %v764 = vunpack.c.l.b16 %v174
  %v765 = vunpack.c.h.b16 %v174
  %v766 = vunpack.c.l.b16 %v175
  %v767 = vunpack.c.h.b16 %v175
  %v768 = vunpack.c.l.b16 %v176
  %v769 = vunpack.c.h.b16 %v176
  %v770 = vunpack.c.l.b16 %v177
  %v771 = vunpack.c.h.b16 %v177
  %v772 = vunpack.c.l.b16 %v178
  %v773 = vunpack.c.h.b16 %v178
  %v774 = vunpack.c.l.b16 %v179
  %v775 = vunpack.c.h.b16 %v179
  %v776 = vunpack.c.l.b16 %v180
  %v777 = vunpack.c.h.b16 %v180
  %v778 = vunpack.c.l.b16 %v181
  %v779 = vunpack.c.h.b16 %v181
  %v780 = vunpack.c.l.b16 %v182
  %v781 = vunpack.c.h.b16 %v182
  %v782 = vunpack.c.l.b16 %v183
  %v783 = vunpack.c.h.b16 %v183
  %v784 = vunpack.c.l.b16 %v184
  %v785 = vunpack.c.h.b16 %v184
  %v786 = vunpack.c.l.b16 %v185
  %v787 = vunpack.c.h.b16 %v185
  %v788 = vunpack.c.l.b16 %v186
  %v789 = vunpack.c.h.b16 %v186
  %v790 = vunpack.c.l.b16 %v187
  %v791 = vunpack.c.h.b16 %v187
  %v792 = vunpack.c.l.b16 %v188
  %v793 = vunpack.c.h.b16 %v188
  %v794 = vunpack.c.l.b16 %v189
  %v795 = vunpack.c.h.b16 %v189
  %v796 = vunpack.c.l.b16 %v190
  %v797 = vunpack.c.h.b16 %v190
  %v798 = vunpack.c.l.b16 %v191
  %v799 = vunpack.c.h.b16 %v191
  %v800 = vunpack.c.l.b16 %v192
  %v801 = vunpack.c.h.b16 %v192
  %v802 = vunpack.c.l.b16 %v193
  %v803 = vunpack.c.h.b16 %v193
  %v804 = vunpack.c.l.b16 %v194
  %v805 = vunpack.c.h.b16 %v194
  %v806 = vunpack.c.l.b16 %v195
  %v807 = vunpack.c.h.b16 %v195
  %v808 = vunpack.c.l.b16 %v196
  %v809 = vunpack.c.h.b16 %v196
  %v810 = vunpack.c.l.b16 %v197
  %v811 = vunpack.c.h.b16 %v197
  %v812 = vunpack.c.l.b16 %v198
  %v813 = vunpack.c.h.b16 %v198
  %v814 = vunpack.c.l.b16 %v199
  %v815 = vunpack.c.h.b16 %v199
  %v816 = vunpack.c.l.b16 %v200
  %v817 = vunpack.c.h.b16 %v200
  %v818 = vunpack.c.l.b16 %v201
  %v819 = vunpack.c.h.b16 %v201
  %v820 = vunpack.c.l.b16 %v202
  %v821 = vunpack.c.h.b16 %v202
  %v822 = vunpack.c.l.b16 %v203
  %v823 = vunpack.c.h.b16 %v203
  %v824 = vunpack.c.l.b16 %v204
  %v825 = vunpack.c.h.b16 %v204
  %v826 = vunpack.c.l.b16 %v205
  %v827 = vunpack.c.h.b16 %v205
  %v828 = vunpack.c.l.b16 %v206
  %v829 = vunpack.c.h.b16 %v206
  %v830 = vunpack.c.l.b16 %v207
  %v831 = vunpack.c.h.b16 %v207
  %v832 = vunpack.c.l.b16 %v208
  %v833 = vunpack.c.h.b16 %v208
  %v834 = vunpack.c.l.b16 %v209
  %v835 = vunpack.c.h.b16 %v209
  %v836 = vunpack.c.l.b16 %v210
  %v837 = vunpack.c.h.b16 %v210
  %v838 = vunpack.c.l.b16 %v211
  %v839 = vunpack.c.h.b16 %v211
  %v840 = vunpack.c.l.b16 %v212
  %v841 = vunpack.c.h.b16 %v212
  %v842 = vunpack.c.l.b16 %v213
  %v843 = vunpack.c.h.b16 %v213
  %v844 = vpack.c.b16 %v464, %v460
  %v845 = vpack.c.b16 %v465, %v461
  %v846 = vpack.c.b16 %v466, %v462
  %v847 = vpack.c.b16 %v467, %v463
  %v848 = vpack.c.b16 %v472, %v468
  %v849 = vpack.c.b16 %v473, %v469
  %v850 = vpack.c.b16 %v474, %v470
  %v851 = vpack.c.b16 %v475, %v471
  %v852 = vpack.c.b16 %v480, %v476
  %v853 = vpack.c.b16 %v481, %v477
  %v854 = vpack.c.b16 %v482, %v478
  %v855 = vpack.c.b16 %v483, %v479
  %v856 = vpack.c.b16 %v488, %v484
  %v857 = vpack.c.b16 %v489, %v485
  %v858 = vpack.c.b16 %v490, %v486
  %v859 = vpack.c.b16 %v491, %v487
  %v860 = vpack.c.b16 %v496, %v492
  %v861 = vpack.c.b16 %v497, %v493
  %v862 = vpack.c.b16 %v498, %v494
  %v863 = vpack.c.b16 %v499, %v495
  %v864 = vpack.c.b16 %v504, %v500
  %v865 = vpack.c.b16 %v505, %v501
  %v866 = vpack.c.b16 %v506, %v502
  %v867 = vpack.c.b16 %v507, %v503
  %v868 = vpack.c.b16 %v512, %v508
  %v869 = vpack.c.b16 %v513, %v509
  %v870 = vpack.c.b16 %v514, %v510
  %v871 = vpack.c.b16 %v515, %v511
  %v872 = vpack.c.b16 %v520, %v516
  %v873 = vpack.c.b16 %v521, %v517
  %v874 = vpack.c.b16 %v522, %v518
  %v875 = vpack.c.b16 %v523, %v519
  %v876 = vpack.c.b16 %v528, %v524
  %v877 = vpack.c.b16 %v529, %v525
  %v878 = vpack.c.b16 %v530, %v526
  %v879 = vpack.c.b16 %v531, %v527
  %v880 = vpack.c.b16 %v536, %v532
  %v881 = vpack.c.b16 %v537, %v533
  %v882 = vpack.c.b16 %v538, %v534
  %v883 = vpack.c.b16 %v539, %v535
  %v884 = vpack.c.b16 %v544, %v540
  %v885 = vpack.c.b16 %v545, %v541
  %v886 = vpack.c.b16 %v546, %v542
  %v887 = vpack.c.b16 %v547, %v543
  %v888 = vpack.c.b16 %v552, %v548
  %v889 = vpack.c.b16 %v553, %v549
  %v890 = vpack.c.b16 %v554, %v550
  %v891 = vpack.c.b16 %v555, %v551
  %v892 = vpack.c.b16 %v560, %v556
  %v893 = vpack.c.b16 %v561, %v557
  %v894 = vpack.c.b16 %v562, %v558
  %v895 = vpack.c.b16 %v563, %v559
  %v896 = vpack.c.b16 %v568, %v564
  %v897 = vpack.c.b16 %v569, %v565
  %v898 = vpack.c.b16 %v570, %v566
  %v899 = vpack.c.b16 %v571, %v567
  %v900 = vpack.c.b16 %v576, %v572
  %v901 = vpack.c.b16 %v577, %v573
  %v902 = vpack.c.b16 %v578, %v574
  %v903 = vpack.c.b16 %v579, %v575
  %v904 = vpack.c.b16 %v584, %v580
  %v905 = vpack.c.b16 %v585, %v581
  %v906 = vpack.c.b16 %v586, %v582
  %v907 = vpack.c.b16 %v587, %v583
  %v908 = vpack.c.b16 %v592, %v588
  %v909 = vpack.c.b16 %v593, %v589
  %v910 = vpack.c.b16 %v594, %v590
  %v911 = vpack.c.b16 %v595, %v591
  %v912 = vpack.c.b16 %v600, %v596
  %v913 = vpack.c.b16 %v601, %v597
  %v914 = vpack.c.b16 %v602, %v598
  %v915 = vpack.c.b16 %v603, %v599
  %v916 = vpack.c.b16 %v608, %v604
  %v917 = vpack.c.b16 %v609, %v605
  %v918 = vpack.c.b16 %v610, %v606
  %v919 = vpack.c.b16 %v611, %v607
  %v920 = vpack.c.b16 %v616, %v612
  %v921 = vpack.c.b16 %v617, %v613
  %v922 = vpack.c.b16 %v618, %v614
  %v923 = vpack.c.b16 %v619, %v615
  %v924 = vpack.c.b16 %v624, %v620
  %v925 = vpack.c.b16 %v625, %v621
  %v926 = vpack.c.b16 %v626, %v622
  %v927 = vpack.c.b16 %v627, %v623
  %v928 = vpack.c.b16 %v632, %v628
  %v929 = vpack.c.b16 %v633, %v629
  %v930 = vpack.c.b16 %v634, %v630
  %v931 = vpack.c.b16 %v635, %v631
  %v932 = vpack.c.b16 %v640, %v636
  %v933 = vpack.c.b16 %v641, %v637
  %v934 = vpack.c.b16 %v642, %v638
  %v935 = vpack.c.b16 %v643, %v639
  %v936 = vpack.c.b16 %v648, %v644
  %v937 = vpack.c.b16 %v649, %v645
  %v938 = vpack.c.b16 %v650, %v646
  %v939 = vpack.c.b16 %v651, %v647
  %v940 = vpack.c.b16 %v656, %v652
  %v941 = vpack.c.b16 %v657, %v653
  %v942 = vpack.c.b16 %v658, %v654
  %v943 = vpack.c.b16 %v659, %v655
  %v944 = vpack.c.b16 %v664, %v660
  %v945 = vpack.c.b16 %v665, %v661
  %v946 = vpack.c.b16 %v666, %v662
  %v947 = vpack.c.b16 %v667, %v663
  %v948 = vpack.c.b16 %v672, %v668
  %v949 = vpack.c.b16 %v673, %v669
  %v950 = vpack.c.b16 %v674, %v670
  %v951 = vpack.c.b16 %v675, %v671
  %v952 = vpack.c.b16 %v680, %v676
  %v953 = vpack.c.b16 %v681, %v677
  %v954 = vpack.c.b16 %v682, %v678
  %v955 = vpack.c.b16 %v683, %v679
  %v956 = vpack.c.b16 %v688, %v684
  %v957 = vpack.c.b16 %v689, %v685
  %v958 = vpack.c.b16 %v690, %v686
  %v959 = vpack.c.b16 %v691, %v687
  %v960 = vpack.c.b16 %v696, %v692
  %v961 = vpack.c.b16 %v697, %v693
  %v962 = vpack.c.b16 %v698, %v694
  %v963 = vpack.c.b16 %v699, %v695
  %v964 = vpack.c.b16 %v704, %v700
  %v965 = vpack.c.b16 %v705, %v701
  %v966 = vpack.c.b16 %v706, %v702
  %v967 = vpack.c.b16 %v707, %v703
  %v968 = vpack.c.b16 %v712, %v708
  %v969 = vpack.c.b16 %v713, %v709
  %v970 = vpack.c.b16 %v714, %v710
  %v971 = vpack.c.b16 %v715, %v711
  %v972 = vpack.c.b16 %v720, %v716
  %v973 = vpack.c.b16 %v721, %v717
  %v974 = vpack.c.b16 %v722, %v718
  %v975 = vpack.c.b16 %v723, %v719
  %v976 = vpack.c.b16 %v728, %v724
  %v977 = vpack.c.b16 %v729, %v725
  %v978 = vpack.c.b16 %v730, %v726
  %v979 = vpack.c.b16 %v731, %v727
  %v980 = vpack.c.b16 %v736, %v732
  %v981 = vpack.c.b16 %v737, %v733
  %v982 = vpack.c.b16 %v738, %v734
  %v983 = vpack.c.b16 %v739, %v735
  %v984 = vpack.c.b16 %v744, %v740
  %v985 = vpack.c.b16 %v745, %v741
  %v986 = vpack.c.b16 %v746, %v742
  %v987 = vpack.c.b16 %v747, %v743
  %v988 = vpack.c.b16 %v752, %v748
  %v989 = vpack.c.b16 %v753, %v749
  %v990 = vpack.c.b16 %v754, %v750
  %v991 = vpack.c.b16 %v755, %v751
  %v992 = vpack.c.b16 %v760, %v756
  %v993 = vpack.c.b16 %v761, %v757
  %v994 = vpack.c.b16 %v762, %v758
  %v995 = vpack.c.b16 %v763, %v759
  %v996 = vpack.c.b16 %v768, %v764
  %v997 = vpack.c.b16 %v769, %v765
  %v998 = vpack.c.b16 %v770, %v766
  %v999 = vpack.c.b16 %v771, %v767
  %v1000 = vpack.c.b16 %v776, %v772
  %v1001 = vpack.c.b16 %v777, %v773
  %v1002 = vpack.c.b16 %v778, %v774
  %v1003 = vpack.c.b16 %v779, %v775
  %v1004 = vpack.c.b16 %v784, %v780
  %v1005 = vpack.c.b16 %v785, %v781
  %v1006 = vpack.c.b16 %v786, %v782
  %v1007 = vpack.c.b16 %v787, %v783
  %v1008 = vpack.c.b16 %v792, %v788
  %v1009 = vpack.c.b16 %v793, %v789
  %v1010 = vpack.c.b16 %v794, %v790
  %v1011 = vpack.c.b16 %v795, %v791
  %v1012 = vpack.c.b16 %v800, %v796
  %v1013 = vpack.c.b16 %v801, %v797
  %v1014 = vpack.c.b16 %v802, %v798
  %v1015 = vpack.c.b16 %v803, %v799
  %v1016 = vpack.c.b16 %v808, %v804
  %v1017 = vpack.c.b16 %v809, %v805
  %v1018 = vpack.c.b16 %v810, %v806
  %v1019 = vpack.c.b16 %v811, %v807
  %v1020 = vpack.c.b16 %v816, %v812
  %v1021 = vpack.c.b16 %v817, %v813
  %v1022 = vpack.c.b16 %v818, %v814
  %v1023 = vpack.c.b16 %v819, %v815
  %v1024 = vpack.c.b16 %v824, %v820
  %v1025 = vpack.c.b16 %v825, %v821
  %v1026 = vpack.c.b16 %v826, %v822
  %v1027 = vpack.c.b16 %v827, %v823
  %v1028 = vpack.c.b16 %v832, %v828
  %v1029 = vpack.c.b16 %v833, %v829
  %v1030 = vpack.c.b16 %v834, %v830
  %v1031 = vpack.c.b16 %v835, %v831
  %v1032 = vpack.c.b16 %v840, %v836
  %v1033 = vpack.c.b16 %v841, %v837
  %v1034 = vpack.c.b16 %v842, %v838
  %v1035 = vpack.c.b16 %v843, %v839
  %1228 = vmatprep.subr.bf16.mxu0 %v873
  %1229 = vmatpush1.bf16.msra.mxu0 %v872
  %1230 = vmatprep.subr.bf16.mxu0 %v869
  %1231 = vmatpush1.bf16.msra.mxu0 %v868
  %1232 = vmatprep.subr.bf16.mxu0 %v865
  %1233 = vmatpush1.bf16.msra.mxu0 %v864
  %1234 = vmatprep.subr.bf16.mxu0 %v861
  %1235 = vmatpush1.bf16.msra.mxu0 %v860
  %1236 = vmatprep.subr.bf16.mxu0 %v857
  %1237 = vmatpush1.bf16.msra.mxu0 %v856
  %1238 = vmatprep.subr.bf16.mxu0 %v853
  %1239 = vmatpush1.bf16.msra.mxu0 %v852
  %1240 = vmatprep.subr.bf16.mxu0 %v849
  %1241 = vmatpush1.bf16.msra.mxu0 %v848
  %1242 = vmatprep.subr.bf16.mxu0 %v845
  %1243 = vmatpush1.bf16.msra.mxu0 %v844
  %1244 = vmatprep.subr.bf16.mxu0 %v905
  %1245 = vmatpush2.bf16.msra.mxu0 %v904
  %1246 = vmatprep.subr.bf16.mxu0 %v901
  %1247 = vmatpush2.bf16.msra.mxu0 %v900
  %1248 = vmatprep.subr.bf16.mxu0 %v897
  %1249 = vmatpush2.bf16.msra.mxu0 %v896
  %1250 = vmatprep.subr.bf16.mxu0 %v893
  %1251 = vmatpush2.bf16.msra.mxu0 %v892
  %1252 = vmatprep.subr.bf16.mxu0 %v889
  %1253 = vmatpush2.bf16.msra.mxu0 %v888
  %1254 = vmatprep.subr.bf16.mxu0 %v885
  %1255 = vmatpush2.bf16.msra.mxu0 %v884
  %1256 = vmatprep.subr.bf16.mxu0 %v881
  %1257 = vmatpush2.bf16.msra.mxu0 %v880
  %1258 = vmatprep.subr.bf16.mxu0 %v877
  %1259 = vmatpush2.bf16.msra.mxu0 %v876
  %1260 = vmatprep.mubr.bf16.mxu0 %v252
  %1261 = vmatmul.mubr.bf16.gmra.mxu0 %v238
  %v1262 = vpop.f32.mrf.mxu0
  %v1263 = vadd.f32 0.0, %v1262
  %v1264 = vpop.f32.mrf.mxu0
  %v1265 = vadd.f32 0.0, %v1264
  %v1266 = vpop.f32.mrf.mxu0
  %v1267 = vpop.f32.mrf.mxu0
  %1268 = vdwg.mxu0
  %1269 = vmatprep.subr.bf16.mxu0 %v937
  %1270 = vmatpush1.bf16.msra.mxu0 %v936
  %1271 = vmatprep.subr.bf16.mxu0 %v933
  %1272 = vmatpush1.bf16.msra.mxu0 %v932
  %1273 = vmatprep.subr.bf16.mxu0 %v929
  %1274 = vmatpush1.bf16.msra.mxu0 %v928
  %1275 = vmatprep.subr.bf16.mxu0 %v925
  %1276 = vmatpush1.bf16.msra.mxu0 %v924
  %1277 = vmatprep.subr.bf16.mxu0 %v921
  %1278 = vmatpush1.bf16.msra.mxu0 %v920
  %1279 = vmatprep.subr.bf16.mxu0 %v917
  %1280 = vmatpush1.bf16.msra.mxu0 %v916
  %1281 = vmatprep.subr.bf16.mxu0 %v913
  %1282 = vmatpush1.bf16.msra.mxu0 %v912
  %1283 = vmatprep.subr.bf16.mxu0 %v909
  %1284 = vmatpush1.bf16.msra.mxu0 %v908
  %1285 = vmatprep.subr.bf16.mxu0 %v969
  %1286 = vmatpush2.bf16.msra.mxu0 %v968
  %1287 = vmatprep.subr.bf16.mxu0 %v965
  %1288 = vmatpush2.bf16.msra.mxu0 %v964
  %1289 = vmatprep.subr.bf16.mxu0 %v961
  %1290 = vmatpush2.bf16.msra.mxu0 %v960
  %1291 = vmatprep.subr.bf16.mxu0 %v957
  %1292 = vmatpush2.bf16.msra.mxu0 %v956
  %1293 = vmatprep.subr.bf16.mxu0 %v953
  %1294 = vmatpush2.bf16.msra.mxu0 %v952
  %1295 = vmatprep.subr.bf16.mxu0 %v949
  %1296 = vmatpush2.bf16.msra.mxu0 %v948
  %1297 = vmatprep.subr.bf16.mxu0 %v945
  %1298 = vmatpush2.bf16.msra.mxu0 %v944
  %1299 = vmatprep.subr.bf16.mxu0 %v941
  %1300 = vmatpush2.bf16.msra.mxu0 %v940
  %1301 = vmatprep.mubr.bf16.mxu0 %v261
  %1302 = vmatmul.mubr.bf16.gmra.mxu0 %v260
  %v1303 = vpop.f32.mrf.mxu0
  %v1304 = vadd.f32 %v1263, %v1303
  %v1305 = vpop.f32.mrf.mxu0
  %v1306 = vadd.f32 %v1265, %v1305
  %v1307 = vpop.f32.mrf.mxu0
  %v1308 = vpop.f32.mrf.mxu0
  %1309 = vdwg.mxu0
  %1310 = vmatprep.subr.bf16.mxu0 %v1001
  %1311 = vmatpush1.bf16.msra.mxu0 %v1000
  %1312 = vmatprep.subr.bf16.mxu0 %v997
  %1313 = vmatpush1.bf16.msra.mxu0 %v996
  %1314 = vmatprep.subr.bf16.mxu0 %v993
  %1315 = vmatpush1.bf16.msra.mxu0 %v992
  %1316 = vmatprep.subr.bf16.mxu0 %v989
  %1317 = vmatpush1.bf16.msra.mxu0 %v988
  %1318 = vmatprep.subr.bf16.mxu0 %v985
  %1319 = vmatpush1.bf16.msra.mxu0 %v984
  %1320 = vmatprep.subr.bf16.mxu0 %v981
  %1321 = vmatpush1.bf16.msra.mxu0 %v980
  %1322 = vmatprep.subr.bf16.mxu0 %v977
  %1323 = vmatpush1.bf16.msra.mxu0 %v976
  %1324 = vmatprep.subr.bf16.mxu0 %v973
  %1325 = vmatpush1.bf16.msra.mxu0 %v972
  %1326 = vmatprep.subr.bf16.mxu0 %v1033
  %1327 = vmatpush2.bf16.msra.mxu0 %v1032
  %1328 = vmatprep.subr.bf16.mxu0 %v1029
  %1329 = vmatpush2.bf16.msra.mxu0 %v1028
  %1330 = vmatprep.subr.bf16.mxu0 %v1025
  %1331 = vmatpush2.bf16.msra.mxu0 %v1024
  %1332 = vmatprep.subr.bf16.mxu0 %v1021
  %1333 = vmatpush2.bf16.msra.mxu0 %v1020
  %1334 = vmatprep.subr.bf16.mxu0 %v1017
  %1335 = vmatpush2.bf16.msra.mxu0 %v1016
  %1336 = vmatprep.subr.bf16.mxu0 %v1013
  %1337 = vmatpush2.bf16.msra.mxu0 %v1012
  %1338 = vmatprep.subr.bf16.mxu0 %v1009
  %1339 = vmatpush2.bf16.msra.mxu0 %v1008
  %1340 = vmatprep.subr.bf16.mxu0 %v1005
  %1341 = vmatpush2.bf16.msra.mxu0 %v1004
  %1342 = vmatprep.mubr.bf16.mxu0 %v259
  %1343 = vmatmul.mubr.bf16.gmra.mxu0 %v245
  %v1344 = vpop.f32.mrf.mxu0
  %v1345 = vadd.f32 %v1304, %v1344
  %v1346 = vpop.f32.mrf.mxu0
  %v1347 = vadd.f32 %v1306, %v1346
  %v1348 = vpop.f32.mrf.mxu0
  %v1349 = vpop.f32.mrf.mxu0
  %1350 = vdwg.mxu0
  %1351 = vmatprep.subr.bf16.mxu0 %v875
  %1352 = vmatpush1.bf16.msra.mxu0 %v874
  %1353 = vmatprep.subr.bf16.mxu0 %v871
  %1354 = vmatpush1.bf16.msra.mxu0 %v870
  %1355 = vmatprep.subr.bf16.mxu0 %v867
  %1356 = vmatpush1.bf16.msra.mxu0 %v866
  %1357 = vmatprep.subr.bf16.mxu0 %v863
  %1358 = vmatpush1.bf16.msra.mxu0 %v862
  %1359 = vmatprep.subr.bf16.mxu0 %v859
  %1360 = vmatpush1.bf16.msra.mxu0 %v858
  %1361 = vmatprep.subr.bf16.mxu0 %v855
  %1362 = vmatpush1.bf16.msra.mxu0 %v854
  %1363 = vmatprep.subr.bf16.mxu0 %v851
  %1364 = vmatpush1.bf16.msra.mxu0 %v850
  %1365 = vmatprep.subr.bf16.mxu0 %v847
  %1366 = vmatpush1.bf16.msra.mxu0 %v846
  %1367 = vmatprep.subr.bf16.mxu0 %v907
  %1368 = vmatpush2.bf16.msra.mxu0 %v906
  %1369 = vmatprep.subr.bf16.mxu0 %v903
  %1370 = vmatpush2.bf16.msra.mxu0 %v902
  %1371 = vmatprep.subr.bf16.mxu0 %v899
  %1372 = vmatpush2.bf16.msra.mxu0 %v898
  %1373 = vmatprep.subr.bf16.mxu0 %v895
  %1374 = vmatpush2.bf16.msra.mxu0 %v894
  %1375 = vmatprep.subr.bf16.mxu0 %v891
  %1376 = vmatpush2.bf16.msra.mxu0 %v890
  %1377 = vmatprep.subr.bf16.mxu0 %v887
  %1378 = vmatpush2.bf16.msra.mxu0 %v886
  %1379 = vmatprep.subr.bf16.mxu0 %v883
  %1380 = vmatpush2.bf16.msra.mxu0 %v882
  %1381 = vmatprep.subr.bf16.mxu0 %v879
  %1382 = vmatpush2.bf16.msra.mxu0 %v878
  %1383 = vmatprep.mubr.bf16.mxu0 %v252
  %1384 = vmatmul.mubr.bf16.gmra.mxu0 %v238
  %v1385 = vpop.f32.mrf.mxu0
  %v1386 = vadd.f32 0.0, %v1385
  %v1387 = vpop.f32.mrf.mxu0
  %v1388 = vadd.f32 0.0, %v1387
  %v1389 = vpop.f32.mrf.mxu0
  %v1390 = vpop.f32.mrf.mxu0
  %1391 = vdwg.mxu0
  %1392 = vmatprep.subr.bf16.mxu0 %v939
  %1393 = vmatpush1.bf16.msra.mxu0 %v938
  %1394 = vmatprep.subr.bf16.mxu0 %v935
  %1395 = vmatpush1.bf16.msra.mxu0 %v934
  %1396 = vmatprep.subr.bf16.mxu0 %v931
  %1397 = vmatpush1.bf16.msra.mxu0 %v930
  %1398 = vmatprep.subr.bf16.mxu0 %v927
  %1399 = vmatpush1.bf16.msra.mxu0 %v926
  %1400 = vmatprep.subr.bf16.mxu0 %v923
  %1401 = vmatpush1.bf16.msra.mxu0 %v922
  %1402 = vmatprep.subr.bf16.mxu0 %v919
  %1403 = vmatpush1.bf16.msra.mxu0 %v918
  %1404 = vmatprep.subr.bf16.mxu0 %v915
  %1405 = vmatpush1.bf16.msra.mxu0 %v914
  %1406 = vmatprep.subr.bf16.mxu0 %v911
  %1407 = vmatpush1.bf16.msra.mxu0 %v910
  %1408 = vmatprep.subr.bf16.mxu0 %v971
  %1409 = vmatpush2.bf16.msra.mxu0 %v970
  %1410 = vmatprep.subr.bf16.mxu0 %v967
  %1411 = vmatpush2.bf16.msra.mxu0 %v966
  %1412 = vmatprep.subr.bf16.mxu0 %v963
  %1413 = vmatpush2.bf16.msra.mxu0 %v962
  %1414 = vmatprep.subr.bf16.mxu0 %v959
  %1415 = vmatpush2.bf16.msra.mxu0 %v958
  %1416 = vmatprep.subr.bf16.mxu0 %v955
  %1417 = vmatpush2.bf16.msra.mxu0 %v954
  %1418 = vmatprep.subr.bf16.mxu0 %v951
  %1419 = vmatpush2.bf16.msra.mxu0 %v950
  %1420 = vmatprep.subr.bf16.mxu0 %v947
  %1421 = vmatpush2.bf16.msra.mxu0 %v946
  %1422 = vmatprep.subr.bf16.mxu0 %v943
  %1423 = vmatpush2.bf16.msra.mxu0 %v942
  %1424 = vmatprep.mubr.bf16.mxu0 %v261
  %1425 = vmatmul.mubr.bf16.gmra.mxu0 %v260
  %v1426 = vpop.f32.mrf.mxu0
  %v1427 = vadd.f32 %v1386, %v1426
  %v1428 = vpop.f32.mrf.mxu0
  %v1429 = vadd.f32 %v1388, %v1428
  %v1430 = vpop.f32.mrf.mxu0
  %v1431 = vpop.f32.mrf.mxu0
  %1432 = vdwg.mxu0
  %1433 = vmatprep.subr.bf16.mxu0 %v1003
  %1434 = vmatpush1.bf16.msra.mxu0 %v1002
  %1435 = vmatprep.subr.bf16.mxu0 %v999
  %1436 = vmatpush1.bf16.msra.mxu0 %v998
  %1437 = vmatprep.subr.bf16.mxu0 %v995
  %1438 = vmatpush1.bf16.msra.mxu0 %v994
  %1439 = vmatprep.subr.bf16.mxu0 %v991
  %1440 = vmatpush1.bf16.msra.mxu0 %v990
  %1441 = vmatprep.subr.bf16.mxu0 %v987
  %1442 = vmatpush1.bf16.msra.mxu0 %v986
  %1443 = vmatprep.subr.bf16.mxu0 %v983
  %1444 = vmatpush1.bf16.msra.mxu0 %v982
  %1445 = vmatprep.subr.bf16.mxu0 %v979
  %1446 = vmatpush1.bf16.msra.mxu0 %v978
  %1447 = vmatprep.subr.bf16.mxu0 %v975
  %1448 = vmatpush1.bf16.msra.mxu0 %v974
  %1449 = vmatprep.subr.bf16.mxu0 %v1035
  %1450 = vmatpush2.bf16.msra.mxu0 %v1034
  %1451 = vmatprep.subr.bf16.mxu0 %v1031
  %1452 = vmatpush2.bf16.msra.mxu0 %v1030
  %1453 = vmatprep.subr.bf16.mxu0 %v1027
  %1454 = vmatpush2.bf16.msra.mxu0 %v1026
  %1455 = vmatprep.subr.bf16.mxu0 %v1023
  %1456 = vmatpush2.bf16.msra.mxu0 %v1022
  %1457 = vmatprep.subr.bf16.mxu0 %v1019
  %1458 = vmatpush2.bf16.msra.mxu0 %v1018
  %1459 = vmatprep.subr.bf16.mxu0 %v1015
  %1460 = vmatpush2.bf16.msra.mxu0 %v1014
  %1461 = vmatprep.subr.bf16.mxu0 %v1011
  %1462 = vmatpush2.bf16.msra.mxu0 %v1010
  %1463 = vmatprep.subr.bf16.mxu0 %v1007
  %1464 = vmatpush2.bf16.msra.mxu0 %v1006
  %1465 = vmatprep.mubr.bf16.mxu0 %v259
  %1466 = vmatmul.mubr.bf16.gmra.mxu0 %v245
  %v1467 = vpop.f32.mrf.mxu0
  %v1468 = vadd.f32 %v1427, %v1467
  %v1469 = vpop.f32.mrf.mxu0
  %v1470 = vadd.f32 %v1429, %v1469
  %v1471 = vpop.f32.mrf.mxu0
  %v1472 = vpop.f32.mrf.mxu0
  %1473 = vdwg.mxu0
  %s1474 = sld [smem:[#allocation2]]
  %vm1475 = vcmp.gt.f32.partialorder %v1345, 0.0
  %vm1476 = vcmp.gt.f32.partialorder %v1347, 0.0
  %vm1477 = vcmp.gt.f32.partialorder %v1468, 0.0
  %vm1478 = vcmp.gt.f32.partialorder %v1470, 0.0
  %v1479 = vstv %s1474
  %v1480 = vmul.f32 %v1479, %v1345
  %v1481 = vmul.f32 %v1479, %v1347
  %v1482 = vmul.f32 %v1479, %v1468
  %v1483 = vmul.f32 %v1479, %v1470
  %v1484 = vsel %vm1475, %v1345, %v1480
  %v1485 = vsel %vm1476, %v1347, %v1481
  %v1486 = vsel %vm1477, %v1468, %v1482
  %v1487 = vsel %vm1478, %v1470, %v1483
  %v1488 = vld [vmem:[%s2] sm:$0xf]
  %v1490 = vlaneseq
  %v1491 = vshrl.u32 %v1490, 7
  %v1492 = vsub.s32 0, %v1491
  %v1493 = vrot.slane %v1488, %v1492
  %v1494 = vlaneseq
  %v1495 = vshrl.u32 %v1494, 7
  %v1496 = vsub.s32 1, %v1495
  %v1497 = vrot.slane %v1488, %v1496
  %v1498 = vlaneseq
  %v1499 = vshrl.u32 %v1498, 7
  %v1500 = vsub.s32 2, %v1499
  %v1501 = vrot.slane %v1488, %v1500
  %v1502 = vlaneseq
  %v1503 = vshrl.u32 %v1502, 7
  %v1504 = vsub.s32 3, %v1503
  %v1505 = vrot.slane %v1488, %v1504
  %v1510 = vmul.f32 %v1484, %v1493
  %v1511 = vmul.f32 %v1485, %v1497
  %v1512 = vmul.f32 %v1486, %v1501
  %v1513 = vmul.f32 %v1487, %v1505
  %v1514 = vld [vmem:[%s3] sm:$0xf]
  %v1516 = vlaneseq
  %v1517 = vshrl.u32 %v1516, 7
  %v1518 = vsub.s32 0, %v1517
  %v1519 = vrot.slane %v1514, %v1518
  %v1520 = vlaneseq
  %v1521 = vshrl.u32 %v1520, 7
  %v1522 = vsub.s32 1, %v1521
  %v1523 = vrot.slane %v1514, %v1522
  %v1524 = vlaneseq
  %v1525 = vshrl.u32 %v1524, 7
  %v1526 = vsub.s32 2, %v1525
  %v1527 = vrot.slane %v1514, %v1526
  %v1528 = vlaneseq
  %v1529 = vshrl.u32 %v1528, 7
  %v1530 = vsub.s32 3, %v1529
  %v1531 = vrot.slane %v1514, %v1530
  %v1536 = vadd.f32 %v1510, %v1519
  %v1537 = vadd.f32 %v1511, %v1523
  %v1538 = vadd.f32 %v1512, %v1527
  %v1539 = vadd.f32 %v1513, %v1531
  %v1544 = vcombine.low %v1536, %v1537
  %v1545 = vcombine.low %v1538, %v1539
  %v1547 = vunpack.c.l.s4 1983009808
  %v1548 = vunpack.c.0.s8 %v1547
  %v1549 = vlaneseq
  %v1550 = vshrl.u32 %v1549, 7
  %v1551 = vsub.s32 %v1548, %v1550
  %v1552 = vrot.slane %v1544, %v1551
  %v1554 = vunpack.c.l.s4 1983009808
  %v1555 = vunpack.c.0.s8 %v1554
  %v1556 = vlaneseq
  %v1557 = vshrl.u32 %v1556, 7
  %v1558 = vsub.s32 %v1555, %v1557
  %v1559 = vrot.slane %v1545, %v1558
  %v1560 = vcombine.low %v1552, %v1559
  %1562 = vst [vmem:[%s5] sm:$0xff] %v1560
  // Predicated region
  $region22: #{forward.17} parent=0 // pred_check
    _
  $region23: #{forward.17} parent=0 // pred_check_branch
    %1564 = sbr.rel (0) target = $region25
  $region24: #{forward.17} parent=0 // pred_region
    _
  $region25: #{forward.17} parent=0 // pred_fallthru
    _
  // Predicated region
  $region26: #{forward.17} parent=0 // pred_check
    _
  $region27: #{forward.17} parent=0 // pred_check_branch
    %1566 = sbr.rel (0) target = $region29
  $region28: #{forward.17} parent=0 // pred_region
    _
  $region29: #{forward.17} parent=0 // pred_fallthru
    _

// kernel: forward.20
$region0: #{forward.20}
  #allocation0 [shape = 'u32[]', space=smem, size = 0x4, offset = 0x4, fixed_abs, tag = 'smem constant byte address 0x4 - core index']
  #allocation1 [shape = 'u32[144,128]{1,0:T(1,128)}', space=vmem, size = 0x12000, scoped, tag = 'internal scratch']
  #allocation2 [shape = 'f32[1]{0:T(128)S(6)}', space=smem, size = 0x200, scoped, tag = 'scoped memory for forward.20']
  %s0 = inlined_call_operand.vmem [shape: bf16[2,1,384], index: 0, kind: input, shape index: {}]
  %s1 = inlined_call_operand.vmem [shape: bf16[384,128], index: 1, kind: input, shape index: {}]
  %s2 = inlined_call_operand.vmem [shape: f32[2,4,128], index: 2, kind: input, shape index: {}]
  %s3 = inlined_call_operand.vmem [shape: f32[1,128], index: 3, kind: input, shape index: {}]
  %s4 = inlined_call_operand.vmem [shape: f32[1,128], index: 4, kind: input, shape index: {}]
  %s5 = inlined_call_operand.<no memory space> [shape: f32[1], index: 5, kind: input, shape index: {}]
  %s6 = inlined_call_operand.vmem [shape: f32[2,4,128], index: 6, kind: output, shape index: {}]
  %s7 = sld [smem:[#allocation0]]
  $region34: #{forward.20} parent=0
    _
  %s9 = ssub.s32 1, %s7
  %s10 = scalar_select 0, %s9, %s7
  %11 = sst [smem:[#allocation2]] %s5
  // Predicated region
  $region2: #{forward.20} parent=0 // pred_check
    _
  $region3: #{forward.20} parent=0 // pred_check_branch
    %13 = sbr.rel (0) target = $region5
  $region4: #{forward.20} parent=0 // pred_region
    _
  $region5: #{forward.20} parent=0 // pred_fallthru
    _
  // Predicated region
  $region6: #{forward.20} parent=0 // pred_check
    _
  $region7: #{forward.20} parent=0 // pred_check_branch
    %15 = sbr.rel (0) target = $region9
  $region8: #{forward.20} parent=0 // pred_region
    _
  $region9: #{forward.20} parent=0 // pred_fallthru
    _
  // Predicated region
  $region10: #{forward.20} parent=0 // pred_check
    _
  $region11: #{forward.20} parent=0 // pred_check_branch
    %17 = sbr.rel (0) target = $region13
  $region12: #{forward.20} parent=0 // pred_region
    _
  $region13: #{forward.20} parent=0 // pred_fallthru
    _
  // Predicated region
  $region14: #{forward.20} parent=0 // pred_check
    _
  $region15: #{forward.20} parent=0 // pred_check_branch
    %19 = sbr.rel (0) target = $region17
  $region16: #{forward.20} parent=0 // pred_region
    _
  $region17: #{forward.20} parent=0 // pred_fallthru
    _
  // Predicated region
  $region18: #{forward.20} parent=0 // pred_check
    _
  $region19: #{forward.20} parent=0 // pred_check_branch
    %21 = sbr.rel (0) target = $region21
  $region20: #{forward.20} parent=0 // pred_region
    _
  $region21: #{forward.20} parent=0 // pred_fallthru
    _
  // Predicated region
  $region22: #{forward.20} parent=0 // pred_check
    _
  $region23: #{forward.20} parent=0 // pred_check_branch
    %23 = sbr.rel (0) target = $region25
  $region24: #{forward.20} parent=0 // pred_region
    _
  $region25: #{forward.20} parent=0 // pred_fallthru
    _
  %v25 = vld [vmem:[%s1] sm:$0xf]
  %v26 = vld [vmem:[%s1 + $0x4] sm:$0xf]
  %v27 = vld [vmem:[%s1 + $0x8] sm:$0xf]
  %v28 = vld [vmem:[%s1 + $0xc] sm:$0xf]
  %v29 = vld [vmem:[%s1 + $0x10] sm:$0xf]
  %v30 = vld [vmem:[%s1 + $0x14] sm:$0xf]
  %v31 = vld [vmem:[%s1 + $0x18] sm:$0xf]
  %v32 = vld [vmem:[%s1 + $0x1c] sm:$0xf]
  %v33 = vld [vmem:[%s1 + $0x20] sm:$0xf]
  %v34 = vld [vmem:[%s1 + $0x24] sm:$0xf]
  %v35 = vld [vmem:[%s1 + $0x28] sm:$0xf]
  %v36 = vld [vmem:[%s1 + $0x2c] sm:$0xf]
  %v37 = vld [vmem:[%s1 + $0x30] sm:$0xf]
  %v38 = vld [vmem:[%s1 + $0x34] sm:$0xf]
  %v39 = vld [vmem:[%s1 + $0x38] sm:$0xf]
  %v40 = vld [vmem:[%s1 + $0x3c] sm:$0xf]
  %v41 = vld [vmem:[%s1 + $0x40] sm:$0xf]
  %v42 = vld [vmem:[%s1 + $0x44] sm:$0xf]
  %v43 = vld [vmem:[%s1 + $0x48] sm:$0xf]
  %v44 = vld [vmem:[%s1 + $0x4c] sm:$0xf]
  %v45 = vld [vmem:[%s1 + $0x50] sm:$0xf]
  %v46 = vld [vmem:[%s1 + $0x54] sm:$0xf]
  %v47 = vld [vmem:[%s1 + $0x58] sm:$0xf]
  %v48 = vld [vmem:[%s1 + $0x5c] sm:$0xf]
  %v49 = vld [vmem:[%s1 + $0x60] sm:$0xf]
  %v50 = vld [vmem:[%s1 + $0x64] sm:$0xf]
  %v51 = vld [vmem:[%s1 + $0x68] sm:$0xf]
  %v52 = vld [vmem:[%s1 + $0x6c] sm:$0xf]
  %v53 = vld [vmem:[%s1 + $0x70] sm:$0xf]
  %v54 = vld [vmem:[%s1 + $0x74] sm:$0xf]
  %v55 = vld [vmem:[%s1 + $0x78] sm:$0xf]
  %v56 = vld [vmem:[%s1 + $0x7c] sm:$0xf]
  %v57 = vld [vmem:[%s1 + $0x80] sm:$0xf]
  %v58 = vld [vmem:[%s1 + $0x84] sm:$0xf]
  %v59 = vld [vmem:[%s1 + $0x88] sm:$0xf]
  %v60 = vld [vmem:[%s1 + $0x8c] sm:$0xf]
  %v61 = vld [vmem:[%s1 + $0x90] sm:$0xf]
  %v62 = vld [vmem:[%s1 + $0x94] sm:$0xf]
  %v63 = vld [vmem:[%s1 + $0x98] sm:$0xf]
  %v64 = vld [vmem:[%s1 + $0x9c] sm:$0xf]
  %v65 = vld [vmem:[%s1 + $0xa0] sm:$0xf]
  %v66 = vld [vmem:[%s1 + $0xa4] sm:$0xf]
  %v67 = vld [vmem:[%s1 + $0xa8] sm:$0xf]
  %v68 = vld [vmem:[%s1 + $0xac] sm:$0xf]
  %v69 = vld [vmem:[%s1 + $0xb0] sm:$0xf]
  %v70 = vld [vmem:[%s1 + $0xb4] sm:$0xf]
  %v71 = vld [vmem:[%s1 + $0xb8] sm:$0xf]
  %v72 = vld [vmem:[%s1 + $0xbc] sm:$0xf]
  %v73 = vld [vmem:[%s3] sm:$0x1]
  %v74 = vld [vmem:[%s4] sm:$0x1]
  %s75 = sld [smem:[#allocation2]]
  %v76 = vld [vmem:[%s2] sm:$0xf]
  %vm77 = vcmp.gt.f32.partialorder %v76, 0.0
  %v78 = vstv %s75
  %v79 = vmul.f32 %v78, %v76
  %v80 = vsel %vm77, %v76, %v79
  %v82 = vlaneseq
  %v83 = vshrl.u32 %v82, 7
  %v84 = vsub.s32 0, %v83
  %v85 = vrot.slane %v73, %v84
  %v87 = vmul.f32 %v80, %v85
  %v89 = vlaneseq
  %v90 = vshrl.u32 %v89, 7
  %v91 = vsub.s32 0, %v90
  %v92 = vrot.slane %v74, %v91
  %v94 = vadd.f32 %v87, %v92
  %95 = vst [vmem:[%s6] sm:$0xf] %v94
  %v96 = vld [vmem:[%s0] sm:$0x7]
  %v99 = vunpack.c.l.s4 1966171168
  %v100 = vunpack.c.0.s8 %v99
  %v101 = vlaneseq
  %v102 = vshrl.u32 %v101, 7
  %v103 = vsub.s32 %v100, %v102
  %v104 = vrot.slane %v96, %v103
  %v105 = vcombine.high %v104, %v104
  %v107 = vunpack.c.l.s4 1966171168
  %v108 = vunpack.c.0.s8 %v107
  %v109 = vlaneseq
  %v110 = vshrl.u32 %v109, 7
  %v111 = vsub.s32 %v108, %v110
  %v112 = vrot.slane %v104, %v111
  %v114 = vunpack.c.l.s4 1966171168
  %v115 = vunpack.c.0.s8 %v114
  %v116 = vlaneseq
  %v117 = vshrl.u32 %v116, 7
  %v118 = vsub.s32 %v115, %v117
  %v119 = vrot.slane %v105, %v118
  %v120 = vcombine.high %v112, %v112
  %v172 = vunpack.c.l.b16 %v25
  %v173 = vunpack.c.l.b16 %v26
  %v174 = vunpack.c.l.b16 %v27
  %v175 = vunpack.c.l.b16 %v28
  %v176 = vunpack.c.l.b16 %v29
  %v177 = vunpack.c.l.b16 %v30
  %v178 = vunpack.c.l.b16 %v31
  %v179 = vunpack.c.l.b16 %v32
  %v180 = vunpack.c.l.b16 %v33
  %v181 = vunpack.c.l.b16 %v34
  %v182 = vunpack.c.l.b16 %v35
  %v183 = vunpack.c.l.b16 %v36
  %v184 = vunpack.c.l.b16 %v37
  %v185 = vunpack.c.l.b16 %v38
  %v186 = vunpack.c.l.b16 %v39
  %v187 = vunpack.c.l.b16 %v40
  %v188 = vunpack.c.l.b16 %v41
  %v189 = vunpack.c.l.b16 %v42
  %v190 = vunpack.c.l.b16 %v43
  %v191 = vunpack.c.l.b16 %v44
  %v192 = vunpack.c.l.b16 %v45
  %v193 = vunpack.c.l.b16 %v46
  %v194 = vunpack.c.l.b16 %v47
  %v195 = vunpack.c.l.b16 %v48
  %v196 = vunpack.c.l.b16 %v49
  %v197 = vunpack.c.l.b16 %v50
  %v198 = vunpack.c.l.b16 %v51
  %v199 = vunpack.c.l.b16 %v52
  %v200 = vunpack.c.l.b16 %v53
  %v201 = vunpack.c.l.b16 %v54
  %v202 = vunpack.c.l.b16 %v55
  %v203 = vunpack.c.l.b16 %v56
  %v204 = vunpack.c.l.b16 %v57
  %v205 = vunpack.c.l.b16 %v58
  %v206 = vunpack.c.l.b16 %v59
  %v207 = vunpack.c.l.b16 %v60
  %v208 = vunpack.c.l.b16 %v61
  %v209 = vunpack.c.l.b16 %v62
  %v210 = vunpack.c.l.b16 %v63
  %v211 = vunpack.c.l.b16 %v64
  %v212 = vunpack.c.l.b16 %v65
  %v213 = vunpack.c.l.b16 %v66
  %v214 = vunpack.c.l.b16 %v67
  %v215 = vunpack.c.l.b16 %v68
  %v216 = vunpack.c.l.b16 %v69
  %v217 = vunpack.c.l.b16 %v70
  %v218 = vunpack.c.l.b16 %v71
  %v219 = vunpack.c.l.b16 %v72
  %v220 = vpack.c.b16 %v173, %v172
  %v221 = vpack.c.b16 %v175, %v174
  %v222 = vpack.c.b16 %v177, %v176
  %v223 = vpack.c.b16 %v179, %v178
  %v224 = vpack.c.b16 %v181, %v180
  %v225 = vpack.c.b16 %v183, %v182
  %v226 = vpack.c.b16 %v185, %v184
  %v227 = vpack.c.b16 %v187, %v186
  %v228 = vpack.c.b16 %v189, %v188
  %v229 = vpack.c.b16 %v191, %v190
  %v230 = vpack.c.b16 %v193, %v192
  %v231 = vpack.c.b16 %v195, %v194
  %v232 = vpack.c.b16 %v197, %v196
  %v233 = vpack.c.b16 %v199, %v198
  %v234 = vpack.c.b16 %v201, %v200
  %v235 = vpack.c.b16 %v203, %v202
  %v236 = vpack.c.b16 %v205, %v204
  %v237 = vpack.c.b16 %v207, %v206
  %v238 = vpack.c.b16 %v209, %v208
  %v239 = vpack.c.b16 %v211, %v210
  %v240 = vpack.c.b16 %v213, %v212
  %v241 = vpack.c.b16 %v215, %v214
  %v242 = vpack.c.b16 %v217, %v216
  %v243 = vpack.c.b16 %v219, %v218
  %v269 = vrot.slane %v76, 2
  %271 = vmatprep.subr.bf16.mxu0 0
  %272 = vmatpush1.bf16.msra.mxu0 %v227
  %273 = vmatprep.subr.bf16.mxu0 0
  %274 = vmatpush1.bf16.msra.mxu0 %v226
  %275 = vmatprep.subr.bf16.mxu0 0
  %276 = vmatpush1.bf16.msra.mxu0 %v225
  %277 = vmatprep.subr.bf16.mxu0 0
  %278 = vmatpush1.bf16.msra.mxu0 %v224
  %279 = vmatprep.subr.bf16.mxu0 0
  %280 = vmatpush1.bf16.msra.mxu0 %v223
  %281 = vmatprep.subr.bf16.mxu0 0
  %282 = vmatpush1.bf16.msra.mxu0 %v222
  %283 = vmatprep.subr.bf16.mxu0 0
  %284 = vmatpush1.bf16.msra.mxu0 %v221
  %285 = vmatprep.subr.bf16.mxu0 0
  %286 = vmatpush1.bf16.msra.mxu0 %v220
  %287 = vmatprep.subr.bf16.mxu0 0
  %288 = vmatpush2.bf16.msra.mxu0 %v235
  %289 = vmatprep.subr.bf16.mxu0 0
  %290 = vmatpush2.bf16.msra.mxu0 %v234
  %291 = vmatprep.subr.bf16.mxu0 0
  %292 = vmatpush2.bf16.msra.mxu0 %v233
  %293 = vmatprep.subr.bf16.mxu0 0
  %294 = vmatpush2.bf16.msra.mxu0 %v232
  %295 = vmatprep.subr.bf16.mxu0 0
  %296 = vmatpush2.bf16.msra.mxu0 %v231
  %297 = vmatprep.subr.bf16.mxu0 0
  %298 = vmatpush2.bf16.msra.mxu0 %v230
  %299 = vmatprep.subr.bf16.mxu0 0
  %300 = vmatpush2.bf16.msra.mxu0 %v229
  %301 = vmatprep.subr.bf16.mxu0 0
  %302 = vmatpush2.bf16.msra.mxu0 %v228
  %303 = vmatprep.mubr.bf16.mxu0 %v119
  %304 = vmatmul.mubr.bf16.gmra.mxu0 %v112
  %v305 = vpop.f32.mrf.mxu0
  %v306 = vadd.f32 %v269, %v305
  %v307 = vpop.f32.mrf.mxu0
  %v308 = vpop.f32.mrf.mxu0
  %v309 = vpop.f32.mrf.mxu0
  %310 = vdwg.mxu0
  %311 = vmatprep.subr.bf16.mxu0 0
  %312 = vmatpush1.bf16.msra.mxu0 %v243
  %313 = vmatprep.subr.bf16.mxu0 0
  %314 = vmatpush1.bf16.msra.mxu0 %v242
  %315 = vmatprep.subr.bf16.mxu0 0
  %316 = vmatpush1.bf16.msra.mxu0 %v241
  %317 = vmatprep.subr.bf16.mxu0 0
  %318 = vmatpush1.bf16.msra.mxu0 %v240
  %319 = vmatprep.subr.bf16.mxu0 0
  %320 = vmatpush1.bf16.msra.mxu0 %v239
  %321 = vmatprep.subr.bf16.mxu0 0
  %322 = vmatpush1.bf16.msra.mxu0 %v238
  %323 = vmatprep.subr.bf16.mxu0 0
  %324 = vmatpush1.bf16.msra.mxu0 %v237
  %325 = vmatprep.subr.bf16.mxu0 0
  %326 = vmatpush1.bf16.msra.mxu0 %v236
  %327 = vmatprep.subr.bf16.mxu0 0
  %328 = vmatpush2.bf16.msra.mxu0 0
  %329 = vmatprep.subr.bf16.mxu0 0
  %330 = vmatpush2.bf16.msra.mxu0 0
  %331 = vmatprep.subr.bf16.mxu0 0
  %332 = vmatpush2.bf16.msra.mxu0 0
  %333 = vmatprep.subr.bf16.mxu0 0
  %334 = vmatpush2.bf16.msra.mxu0 0
  %335 = vmatprep.subr.bf16.mxu0 0
  %336 = vmatpush2.bf16.msra.mxu0 0
  %337 = vmatprep.subr.bf16.mxu0 0
  %338 = vmatpush2.bf16.msra.mxu0 0
  %339 = vmatprep.subr.bf16.mxu0 0
  %340 = vmatpush2.bf16.msra.mxu0 0
  %341 = vmatprep.subr.bf16.mxu0 0
  %342 = vmatpush2.bf16.msra.mxu0 0
  %343 = vmatprep.mubr.bf16.mxu0 0
  %344 = vmatmul.mubr.bf16.gmra.mxu0 %v120
  %v345 = vpop.f32.mrf.mxu0
  %v346 = vadd.f32 %v306, %v345
  %v347 = vpop.f32.mrf.mxu0
  %v348 = vpop.f32.mrf.mxu0
  %v349 = vpop.f32.mrf.mxu0
  %350 = vdwg.mxu0
  %vm351 = vcmp.gt.f32.partialorder %v346, 0.0
  %v352 = vmul.f32 %v78, %v346
  %v353 = vsel %vm351, %v346, %v352
  %v354 = vmul.f32 %v353, %v73
  %v355 = vadd.f32 %v354, %v74
  %356 = vst [vmem:[%s6 + $0x2] sm:$0x1] %v355
  %s357 = scalar_lea.vmem %s2, 4
  %v358 = vld [vmem:[%s357] sm:$0xf]
  %vm359 = vcmp.gt.f32.partialorder %v358, 0.0
  %v360 = vmul.f32 %v78, %v358
  %v361 = vsel %vm359, %v358, %v360
  %v362 = vmul.f32 %v361, %v85
  %v363 = vadd.f32 %v362, %v92
  %s364 = scalar_lea.vmem %s6, 4
  %365 = vst [vmem:[%s364] sm:$0xf] %v363
  %s366 = scalar_lea.vmem %s0, 3
  %v367 = vld [vmem:[%s366] sm:$0x7]
  %v370 = vunpack.c.l.s4 1966171168
  %v371 = vunpack.c.0.s8 %v370
  %v372 = vlaneseq
  %v373 = vshrl.u32 %v372, 7
  %v374 = vsub.s32 %v371, %v373
  %v375 = vrot.slane %v367, %v374
  %v376 = vcombine.high %v375, %v375
  %v378 = vunpack.c.l.s4 1966171168
  %v379 = vunpack.c.0.s8 %v378
  %v380 = vlaneseq
  %v381 = vshrl.u32 %v380, 7
  %v382 = vsub.s32 %v379, %v381
  %v383 = vrot.slane %v375, %v382
  %v385 = vunpack.c.l.s4 1966171168
  %v386 = vunpack.c.0.s8 %v385
  %v387 = vlaneseq
  %v388 = vshrl.u32 %v387, 7
  %v389 = vsub.s32 %v386, %v388
  %v390 = vrot.slane %v376, %v389
  %v391 = vcombine.high %v383, %v383
  %v396 = vrot.slane %v358, 2
  %398 = vmatprep.subr.bf16.mxu0 0
  %399 = vmatpush1.bf16.msra.mxu0 %v227
  %400 = vmatprep.subr.bf16.mxu0 0
  %401 = vmatpush1.bf16.msra.mxu0 %v226
  %402 = vmatprep.subr.bf16.mxu0 0
  %403 = vmatpush1.bf16.msra.mxu0 %v225
  %404 = vmatprep.subr.bf16.mxu0 0
  %405 = vmatpush1.bf16.msra.mxu0 %v224
  %406 = vmatprep.subr.bf16.mxu0 0
  %407 = vmatpush1.bf16.msra.mxu0 %v223
  %408 = vmatprep.subr.bf16.mxu0 0
  %409 = vmatpush1.bf16.msra.mxu0 %v222
  %410 = vmatprep.subr.bf16.mxu0 0
  %411 = vmatpush1.bf16.msra.mxu0 %v221
  %412 = vmatprep.subr.bf16.mxu0 0
  %413 = vmatpush1.bf16.msra.mxu0 %v220
  %414 = vmatprep.subr.bf16.mxu0 0
  %415 = vmatpush2.bf16.msra.mxu0 %v235
  %416 = vmatprep.subr.bf16.mxu0 0
  %417 = vmatpush2.bf16.msra.mxu0 %v234
  %418 = vmatprep.subr.bf16.mxu0 0
  %419 = vmatpush2.bf16.msra.mxu0 %v233
  %420 = vmatprep.subr.bf16.mxu0 0
  %421 = vmatpush2.bf16.msra.mxu0 %v232
  %422 = vmatprep.subr.bf16.mxu0 0
  %423 = vmatpush2.bf16.msra.mxu0 %v231
  %424 = vmatprep.subr.bf16.mxu0 0
  %425 = vmatpush2.bf16.msra.mxu0 %v230
  %426 = vmatprep.subr.bf16.mxu0 0
  %427 = vmatpush2.bf16.msra.mxu0 %v229
  %428 = vmatprep.subr.bf16.mxu0 0
  %429 = vmatpush2.bf16.msra.mxu0 %v228
  %430 = vmatprep.mubr.bf16.mxu0 %v390
  %431 = vmatmul.mubr.bf16.gmra.mxu0 %v383
  %v432 = vpop.f32.mrf.mxu0
  %v433 = vadd.f32 %v396, %v432
  %v434 = vpop.f32.mrf.mxu0
  %v435 = vpop.f32.mrf.mxu0
  %v436 = vpop.f32.mrf.mxu0
  %437 = vdwg.mxu0
  %438 = vmatprep.subr.bf16.mxu0 0
  %439 = vmatpush1.bf16.msra.mxu0 %v243
  %440 = vmatprep.subr.bf16.mxu0 0
  %441 = vmatpush1.bf16.msra.mxu0 %v242
  %442 = vmatprep.subr.bf16.mxu0 0
  %443 = vmatpush1.bf16.msra.mxu0 %v241
  %444 = vmatprep.subr.bf16.mxu0 0
  %445 = vmatpush1.bf16.msra.mxu0 %v240
  %446 = vmatprep.subr.bf16.mxu0 0
  %447 = vmatpush1.bf16.msra.mxu0 %v239
  %448 = vmatprep.subr.bf16.mxu0 0
  %449 = vmatpush1.bf16.msra.mxu0 %v238
  %450 = vmatprep.subr.bf16.mxu0 0
  %451 = vmatpush1.bf16.msra.mxu0 %v237
  %452 = vmatprep.subr.bf16.mxu0 0
  %453 = vmatpush1.bf16.msra.mxu0 %v236
  %454 = vmatprep.subr.bf16.mxu0 0
  %455 = vmatpush2.bf16.msra.mxu0 0
  %456 = vmatprep.subr.bf16.mxu0 0
  %457 = vmatpush2.bf16.msra.mxu0 0
  %458 = vmatprep.subr.bf16.mxu0 0
  %459 = vmatpush2.bf16.msra.mxu0 0
  %460 = vmatprep.subr.bf16.mxu0 0
  %461 = vmatpush2.bf16.msra.mxu0 0
  %462 = vmatprep.subr.bf16.mxu0 0
  %463 = vmatpush2.bf16.msra.mxu0 0
  %464 = vmatprep.subr.bf16.mxu0 0
  %465 = vmatpush2.bf16.msra.mxu0 0
  %466 = vmatprep.subr.bf16.mxu0 0
  %467 = vmatpush2.bf16.msra.mxu0 0
  %468 = vmatprep.subr.bf16.mxu0 0
  %469 = vmatpush2.bf16.msra.mxu0 0
  %470 = vmatprep.mubr.bf16.mxu0 0
  %471 = vmatmul.mubr.bf16.gmra.mxu0 %v391
  %v472 = vpop.f32.mrf.mxu0
  %v473 = vadd.f32 %v433, %v472
  %v474 = vpop.f32.mrf.mxu0
  %v475 = vpop.f32.mrf.mxu0
  %v476 = vpop.f32.mrf.mxu0
  %477 = vdwg.mxu0
  %vm478 = vcmp.gt.f32.partialorder %v473, 0.0
  %v479 = vmul.f32 %v78, %v473
  %v480 = vsel %vm478, %v473, %v479
  %v481 = vmul.f32 %v480, %v73
  %v482 = vadd.f32 %v481, %v74
  %483 = vst [vmem:[%s364 + $0x2] sm:$0x1] %v482
  // Predicated region
  $region26: #{forward.20} parent=0 // pred_check
    _
  $region27: #{forward.20} parent=0 // pred_check_branch
    %485 = sbr.rel (0) target = $region29
  $region28: #{forward.20} parent=0 // pred_region
    _
  $region29: #{forward.20} parent=0 // pred_fallthru
    _
  // Predicated region
  $region30: #{forward.20} parent=0 // pred_check
    _
  $region31: #{forward.20} parent=0 // pred_check_branch
    %487 = sbr.rel (0) target = $region33
  $region32: #{forward.20} parent=0 // pred_region
    _
  $region33: #{forward.20} parent=0 // pred_fallthru
    _

// kernel: forward.21
$region0: #{forward.21}
  #allocation0 [shape = 'u32[]', space=smem, size = 0x4, offset = 0x4, fixed_abs, tag = 'smem constant byte address 0x4 - core index']
  #allocation1 [shape = 'u32[144,128]{1,0:T(1,128)}', space=vmem, size = 0x12000, scoped, tag = 'internal scratch']
  #allocation2 [shape = 'f32[1]{0:T(128)S(6)}', space=smem, size = 0x200, scoped, tag = 'scoped memory for forward.21']
  %s0 = inlined_call_operand.vmem [shape: bf16[14,384], index: 0, kind: input, shape index: {}]
  %s1 = inlined_call_operand.vmem [shape: bf16[384,128], index: 1, kind: input, shape index: {}]
  %s2 = inlined_call_operand.vmem [shape: f32[1,128], index: 2, kind: input, shape index: {}]
  %s3 = inlined_call_operand.vmem [shape: f32[1,128], index: 3, kind: input, shape index: {}]
  %s4 = inlined_call_operand.<no memory space> [shape: f32[1], index: 4, kind: input, shape index: {}]
  %s5 = inlined_call_operand.vmem [shape: f32[14,128], index: 5, kind: output, shape index: {}]
  %s6 = sld [smem:[#allocation0]]
  $region30: #{forward.21} parent=0
    _
  %s8 = ssub.s32 1, %s6
  %s9 = scalar_select 0, %s8, %s6
  %10 = sst [smem:[#allocation2]] %s4
  // Predicated region
  $region2: #{forward.21} parent=0 // pred_check
    _
  $region3: #{forward.21} parent=0 // pred_check_branch
    %12 = sbr.rel (0) target = $region5
  $region4: #{forward.21} parent=0 // pred_region
    _
  $region5: #{forward.21} parent=0 // pred_fallthru
    _
  // Predicated region
  $region6: #{forward.21} parent=0 // pred_check
    _
  $region7: #{forward.21} parent=0 // pred_check_branch
    %14 = sbr.rel (0) target = $region9
  $region8: #{forward.21} parent=0 // pred_region
    _
  $region9: #{forward.21} parent=0 // pred_fallthru
    _
  // Predicated region
  $region10: #{forward.21} parent=0 // pred_check
    _
  $region11: #{forward.21} parent=0 // pred_check_branch
    %16 = sbr.rel (0) target = $region13
  $region12: #{forward.21} parent=0 // pred_region
    _
  $region13: #{forward.21} parent=0 // pred_fallthru
    _
  // Predicated region
  $region14: #{forward.21} parent=0 // pred_check
    _
  $region15: #{forward.21} parent=0 // pred_check_branch
    %18 = sbr.rel (0) target = $region17
  $region16: #{forward.21} parent=0 // pred_region
    _
  $region17: #{forward.21} parent=0 // pred_fallthru
    _
  // Predicated region
  $region18: #{forward.21} parent=0 // pred_check
    _
  $region19: #{forward.21} parent=0 // pred_check_branch
    %20 = sbr.rel (0) target = $region21
  $region20: #{forward.21} parent=0 // pred_region
    _
  $region21: #{forward.21} parent=0 // pred_fallthru
    _
  %v22 = vld [vmem:[%s0] sm:$0xff]
  %v23 = vld [vmem:[%s0 + $0x8] sm:$0xf]
  %v24 = vld [vmem:[%s0 + $0xc] sm:$0x77]
  %v25 = vld [vmem:[%s0 + $0x14] sm:$0x7]
  %v26 = vld [vmem:[%s1] sm:$0xf]
  %v27 = vld [vmem:[%s1 + $0x4] sm:$0xf]
  %v28 = vld [vmem:[%s1 + $0x8] sm:$0xf]
  %v29 = vld [vmem:[%s1 + $0xc] sm:$0xf]
  %v30 = vld [vmem:[%s1 + $0x10] sm:$0xf]
  %v31 = vld [vmem:[%s1 + $0x14] sm:$0xf]
  %v32 = vld [vmem:[%s1 + $0x18] sm:$0xf]
  %v33 = vld [vmem:[%s1 + $0x1c] sm:$0xf]
  %v34 = vld [vmem:[%s1 + $0x20] sm:$0xf]
  %v35 = vld [vmem:[%s1 + $0x24] sm:$0xf]
  %v36 = vld [vmem:[%s1 + $0x28] sm:$0xf]
  %v37 = vld [vmem:[%s1 + $0x2c] sm:$0xf]
  %v38 = vld [vmem:[%s1 + $0x30] sm:$0xf]
  %v39 = vld [vmem:[%s1 + $0x34] sm:$0xf]
  %v40 = vld [vmem:[%s1 + $0x38] sm:$0xf]
  %v41 = vld [vmem:[%s1 + $0x3c] sm:$0xf]
  %v42 = vld [vmem:[%s1 + $0x40] sm:$0xf]
  %v43 = vld [vmem:[%s1 + $0x44] sm:$0xf]
  %v44 = vld [vmem:[%s1 + $0x48] sm:$0xf]
  %v45 = vld [vmem:[%s1 + $0x4c] sm:$0xf]
  %v46 = vld [vmem:[%s1 + $0x50] sm:$0xf]
  %v47 = vld [vmem:[%s1 + $0x54] sm:$0xf]
  %v48 = vld [vmem:[%s1 + $0x58] sm:$0xf]
  %v49 = vld [vmem:[%s1 + $0x5c] sm:$0xf]
  %v50 = vld [vmem:[%s1 + $0x60] sm:$0xf]
  %v51 = vld [vmem:[%s1 + $0x64] sm:$0xf]
  %v52 = vld [vmem:[%s1 + $0x68] sm:$0xf]
  %v53 = vld [vmem:[%s1 + $0x6c] sm:$0xf]
  %v54 = vld [vmem:[%s1 + $0x70] sm:$0xf]
  %v55 = vld [vmem:[%s1 + $0x74] sm:$0xf]
  %v56 = vld [vmem:[%s1 + $0x78] sm:$0xf]
  %v57 = vld [vmem:[%s1 + $0x7c] sm:$0xf]
  %v58 = vld [vmem:[%s1 + $0x80] sm:$0xf]
  %v59 = vld [vmem:[%s1 + $0x84] sm:$0xf]
  %v60 = vld [vmem:[%s1 + $0x88] sm:$0xf]
  %v61 = vld [vmem:[%s1 + $0x8c] sm:$0xf]
  %v62 = vld [vmem:[%s1 + $0x90] sm:$0xf]
  %v63 = vld [vmem:[%s1 + $0x94] sm:$0xf]
  %v64 = vld [vmem:[%s1 + $0x98] sm:$0xf]
  %v65 = vld [vmem:[%s1 + $0x9c] sm:$0xf]
  %v66 = vld [vmem:[%s1 + $0xa0] sm:$0xf]
  %v67 = vld [vmem:[%s1 + $0xa4] sm:$0xf]
  %v68 = vld [vmem:[%s1 + $0xa8] sm:$0xf]
  %v69 = vld [vmem:[%s1 + $0xac] sm:$0xf]
  %v70 = vld [vmem:[%s1 + $0xb0] sm:$0xf]
  %v71 = vld [vmem:[%s1 + $0xb4] sm:$0xf]
  %v72 = vld [vmem:[%s1 + $0xb8] sm:$0xf]
  %v73 = vld [vmem:[%s1 + $0xbc] sm:$0xf]
  %v78 = vunpack.c.l.b16 %v22
  %v79 = vunpack.c.h.b16 %v22
  %v80 = vunpack.c.l.b16 %v23
  %v81 = vunpack.c.l.b16 %v24
  %v82 = vunpack.c.h.b16 %v24
  %v83 = vunpack.c.l.b16 %v25
  %v84 = vpack.c.b16 %v81, %v78
  %v85 = vpack.c.b16 %v82, %v79
  %v86 = vpack.c.b16 %v83, %v80
  %v138 = vunpack.c.l.b16 %v26
  %v139 = vunpack.c.l.b16 %v27
  %v140 = vunpack.c.l.b16 %v28
  %v141 = vunpack.c.l.b16 %v29
  %v142 = vunpack.c.l.b16 %v30
  %v143 = vunpack.c.l.b16 %v31
  %v144 = vunpack.c.l.b16 %v32
  %v145 = vunpack.c.l.b16 %v33
  %v146 = vunpack.c.l.b16 %v34
  %v147 = vunpack.c.l.b16 %v35
  %v148 = vunpack.c.l.b16 %v36
  %v149 = vunpack.c.l.b16 %v37
  %v150 = vunpack.c.l.b16 %v38
  %v151 = vunpack.c.l.b16 %v39
  %v152 = vunpack.c.l.b16 %v40
  %v153 = vunpack.c.l.b16 %v41
  %v154 = vunpack.c.l.b16 %v42
  %v155 = vunpack.c.l.b16 %v43
  %v156 = vunpack.c.l.b16 %v44
  %v157 = vunpack.c.l.b16 %v45
  %v158 = vunpack.c.l.b16 %v46
  %v159 = vunpack.c.l.b16 %v47
  %v160 = vunpack.c.l.b16 %v48
  %v161 = vunpack.c.l.b16 %v49
  %v162 = vunpack.c.l.b16 %v50
  %v163 = vunpack.c.l.b16 %v51
  %v164 = vunpack.c.l.b16 %v52
  %v165 = vunpack.c.l.b16 %v53
  %v166 = vunpack.c.l.b16 %v54
  %v167 = vunpack.c.l.b16 %v55
  %v168 = vunpack.c.l.b16 %v56
  %v169 = vunpack.c.l.b16 %v57
  %v170 = vunpack.c.l.b16 %v58
  %v171 = vunpack.c.l.b16 %v59
  %v172 = vunpack.c.l.b16 %v60
  %v173 = vunpack.c.l.b16 %v61
  %v174 = vunpack.c.l.b16 %v62
  %v175 = vunpack.c.l.b16 %v63
  %v176 = vunpack.c.l.b16 %v64
  %v177 = vunpack.c.l.b16 %v65
  %v178 = vunpack.c.l.b16 %v66
  %v179 = vunpack.c.l.b16 %v67
  %v180 = vunpack.c.l.b16 %v68
  %v181 = vunpack.c.l.b16 %v69
  %v182 = vunpack.c.l.b16 %v70
  %v183 = vunpack.c.l.b16 %v71
  %v184 = vunpack.c.l.b16 %v72
  %v185 = vunpack.c.l.b16 %v73
  %v186 = vpack.c.b16 %v139, %v138
  %v187 = vpack.c.b16 %v141, %v140
  %v188 = vpack.c.b16 %v143, %v142
  %v189 = vpack.c.b16 %v145, %v144
  %v190 = vpack.c.b16 %v147, %v146
  %v191 = vpack.c.b16 %v149, %v148
  %v192 = vpack.c.b16 %v151, %v150
  %v193 = vpack.c.b16 %v153, %v152
  %v194 = vpack.c.b16 %v155, %v154
  %v195 = vpack.c.b16 %v157, %v156
  %v196 = vpack.c.b16 %v159, %v158
  %v197 = vpack.c.b16 %v161, %v160
  %v198 = vpack.c.b16 %v163, %v162
  %v199 = vpack.c.b16 %v165, %v164
  %v200 = vpack.c.b16 %v167, %v166
  %v201 = vpack.c.b16 %v169, %v168
  %v202 = vpack.c.b16 %v171, %v170
  %v203 = vpack.c.b16 %v173, %v172
  %v204 = vpack.c.b16 %v175, %v174
  %v205 = vpack.c.b16 %v177, %v176
  %v206 = vpack.c.b16 %v179, %v178
  %v207 = vpack.c.b16 %v181, %v180
  %v208 = vpack.c.b16 %v183, %v182
  %v209 = vpack.c.b16 %v185, %v184
  %234 = vmatprep.subr.bf16.mxu0 0
  %235 = vmatpush1.bf16.msra.mxu0 %v193
  %236 = vmatprep.subr.bf16.mxu0 0
  %237 = vmatpush1.bf16.msra.mxu0 %v192
  %238 = vmatprep.subr.bf16.mxu0 0
  %239 = vmatpush1.bf16.msra.mxu0 %v191
  %240 = vmatprep.subr.bf16.mxu0 0
  %241 = vmatpush1.bf16.msra.mxu0 %v190
  %242 = vmatprep.subr.bf16.mxu0 0
  %243 = vmatpush1.bf16.msra.mxu0 %v189
  %244 = vmatprep.subr.bf16.mxu0 0
  %245 = vmatpush1.bf16.msra.mxu0 %v188
  %246 = vmatprep.subr.bf16.mxu0 0
  %247 = vmatpush1.bf16.msra.mxu0 %v187
  %248 = vmatprep.subr.bf16.mxu0 0
  %249 = vmatpush1.bf16.msra.mxu0 %v186
  %250 = vmatprep.subr.bf16.mxu0 0
  %251 = vmatpush2.bf16.msra.mxu0 %v201
  %252 = vmatprep.subr.bf16.mxu0 0
  %253 = vmatpush2.bf16.msra.mxu0 %v200
  %254 = vmatprep.subr.bf16.mxu0 0
  %255 = vmatpush2.bf16.msra.mxu0 %v199
  %256 = vmatprep.subr.bf16.mxu0 0
  %257 = vmatpush2.bf16.msra.mxu0 %v198
  %258 = vmatprep.subr.bf16.mxu0 0
  %259 = vmatpush2.bf16.msra.mxu0 %v197
  %260 = vmatprep.subr.bf16.mxu0 0
  %261 = vmatpush2.bf16.msra.mxu0 %v196
  %262 = vmatprep.subr.bf16.mxu0 0
  %263 = vmatpush2.bf16.msra.mxu0 %v195
  %264 = vmatprep.subr.bf16.mxu0 0
  %265 = vmatpush2.bf16.msra.mxu0 %v194
  %266 = vmatprep.mubr.bf16.mxu0 %v85
  %267 = vmatmul.mubr.bf16.gmra.mxu0 %v84
  %v268 = vpop.f32.mrf.mxu0
  %v269 = vadd.f32 0.0, %v268
  %v270 = vpop.f32.mrf.mxu0
  %v271 = vpop.f32.mrf.mxu0
  %v272 = vadd.f32 0.0, %v271
  %v273 = vpop.f32.mrf.mxu0
  %274 = vdwg.mxu0
  %275 = vmatprep.subr.bf16.mxu0 0
  %276 = vmatpush1.bf16.msra.mxu0 %v209
  %277 = vmatprep.subr.bf16.mxu0 0
  %278 = vmatpush1.bf16.msra.mxu0 %v208
  %279 = vmatprep.subr.bf16.mxu0 0
  %280 = vmatpush1.bf16.msra.mxu0 %v207
  %281 = vmatprep.subr.bf16.mxu0 0
  %282 = vmatpush1.bf16.msra.mxu0 %v206
  %283 = vmatprep.subr.bf16.mxu0 0
  %284 = vmatpush1.bf16.msra.mxu0 %v205
  %285 = vmatprep.subr.bf16.mxu0 0
  %286 = vmatpush1.bf16.msra.mxu0 %v204
  %287 = vmatprep.subr.bf16.mxu0 0
  %288 = vmatpush1.bf16.msra.mxu0 %v203
  %289 = vmatprep.subr.bf16.mxu0 0
  %290 = vmatpush1.bf16.msra.mxu0 %v202
  %291 = vmatprep.subr.bf16.mxu0 0
  %292 = vmatpush2.bf16.msra.mxu0 0
  %293 = vmatprep.subr.bf16.mxu0 0
  %294 = vmatpush2.bf16.msra.mxu0 0
  %295 = vmatprep.subr.bf16.mxu0 0
  %296 = vmatpush2.bf16.msra.mxu0 0
  %297 = vmatprep.subr.bf16.mxu0 0
  %298 = vmatpush2.bf16.msra.mxu0 0
  %299 = vmatprep.subr.bf16.mxu0 0
  %300 = vmatpush2.bf16.msra.mxu0 0
  %301 = vmatprep.subr.bf16.mxu0 0
  %302 = vmatpush2.bf16.msra.mxu0 0
  %303 = vmatprep.subr.bf16.mxu0 0
  %304 = vmatpush2.bf16.msra.mxu0 0
  %305 = vmatprep.subr.bf16.mxu0 0
  %306 = vmatpush2.bf16.msra.mxu0 0
  %307 = vmatprep.mubr.bf16.mxu0 0
  %308 = vmatmul.mubr.bf16.gmra.mxu0 %v86
  %v309 = vpop.f32.mrf.mxu0
  %v310 = vadd.f32 %v269, %v309
  %v311 = vpop.f32.mrf.mxu0
  %v312 = vpop.f32.mrf.mxu0
  %v313 = vadd.f32 %v272, %v312
  %v314 = vpop.f32.mrf.mxu0
  %315 = vdwg.mxu0
  %s316 = sld [smem:[#allocation2]]
  %vm317 = vcmp.gt.f32.partialorder %v310, 0.0
  %vm318 = vcmp.gt.f32.partialorder %v313, 0.0
  %v319 = vstv %s316
  %v320 = vmul.f32 %v319, %v310
  %v321 = vmul.f32 %v319, %v313
  %v322 = vsel %vm317, %v310, %v320
  %v323 = vsel %vm318, %v313, %v321
  %v324 = vld [vmem:[%s2] sm:$0x1]
  %v326 = vlaneseq
  %v327 = vshrl.u32 %v326, 7
  %v328 = vsub.s32 0, %v327
  %v329 = vrot.slane %v324, %v328
  %v331 = vmul.f32 %v322, %v329
  %v332 = vmul.f32 %v323, %v329
  %v333 = vld [vmem:[%s3] sm:$0x1]
  %v335 = vlaneseq
  %v336 = vshrl.u32 %v335, 7
  %v337 = vsub.s32 0, %v336
  %v338 = vrot.slane %v333, %v337
  %v340 = vadd.f32 %v331, %v338
  %v341 = vadd.f32 %v332, %v338
  %342 = vst [vmem:[%s5] sm:$0xff] %v340
  %343 = vst [vmem:[%s5 + $0x8] sm:$0x3f] %v341
  // Predicated region
  $region22: #{forward.21} parent=0 // pred_check
    _
  $region23: #{forward.21} parent=0 // pred_check_branch
    %345 = sbr.rel (0) target = $region25
  $region24: #{forward.21} parent=0 // pred_region
    _
  $region25: #{forward.21} parent=0 // pred_fallthru
    _
  // Predicated region
  $region26: #{forward.21} parent=0 // pred_check
    _
  $region27: #{forward.21} parent=0 // pred_check_branch
    %347 = sbr.rel (0) target = $region29
  $region28: #{forward.21} parent=0 // pred_region
    _
  $region29: #{forward.21} parent=0 // pred_fallthru
    _

// kernel: forward.23
$region0: #{forward.23}
  #allocation0 [shape = 'u32[]', space=smem, size = 0x4, offset = 0x4, fixed_abs, tag = 'smem constant byte address 0x4 - core index']
  #allocation1 [shape = 'u32[144,128]{1,0:T(1,128)}', space=vmem, size = 0x12000, scoped, tag = 'internal scratch']
  %s0 = inlined_call_operand.vmem [shape: bf16[32,384], index: 0, kind: input, shape index: {}]
  %s1 = inlined_call_operand.vmem [shape: bf16[384,128], index: 1, kind: input, shape index: {}]
  %s2 = inlined_call_operand.vmem [shape: f32[1,128], index: 2, kind: input, shape index: {}]
  %s3 = inlined_call_operand.vmem [shape: f32[32,128], index: 3, kind: output, shape index: {}]
  %s4 = sld [smem:[#allocation0]]
  $region22: #{forward.23} parent=0
    _
  %s6 = ssub.s32 1, %s4
  %s7 = scalar_select 0, %s6, %s4
  // Predicated region
  $region2: #{forward.23} parent=0 // pred_check
    _
  $region3: #{forward.23} parent=0 // pred_check_branch
    %9 = sbr.rel (0) target = $region5
  $region4: #{forward.23} parent=0 // pred_region
    _
  $region5: #{forward.23} parent=0 // pred_fallthru
    _
  // Predicated region
  $region6: #{forward.23} parent=0 // pred_check
    _
  $region7: #{forward.23} parent=0 // pred_check_branch
    %11 = sbr.rel (0) target = $region9
  $region8: #{forward.23} parent=0 // pred_region
    _
  $region9: #{forward.23} parent=0 // pred_fallthru
    _
  // Predicated region
  $region10: #{forward.23} parent=0 // pred_check
    _
  $region11: #{forward.23} parent=0 // pred_check_branch
    %13 = sbr.rel (0) target = $region13
  $region12: #{forward.23} parent=0 // pred_region
    _
  $region13: #{forward.23} parent=0 // pred_fallthru
    _
  %v15 = vld [vmem:[%s0] sm:$0xff]
  %v16 = vld [vmem:[%s0 + $0x8] sm:$0xf]
  %v17 = vld [vmem:[%s0 + $0xc] sm:$0xff]
  %v18 = vld [vmem:[%s0 + $0x14] sm:$0xf]
  %v19 = vld [vmem:[%s0 + $0x18] sm:$0xff]
  %v20 = vld [vmem:[%s0 + $0x20] sm:$0xf]
  %v21 = vld [vmem:[%s0 + $0x24] sm:$0xff]
  %v22 = vld [vmem:[%s0 + $0x2c] sm:$0xf]
  %v23 = vld [vmem:[%s1] sm:$0xf]
  %v24 = vld [vmem:[%s1 + $0x4] sm:$0xf]
  %v25 = vld [vmem:[%s1 + $0x8] sm:$0xf]
  %v26 = vld [vmem:[%s1 + $0xc] sm:$0xf]
  %v27 = vld [vmem:[%s1 + $0x10] sm:$0xf]
  %v28 = vld [vmem:[%s1 + $0x14] sm:$0xf]
  %v29 = vld [vmem:[%s1 + $0x18] sm:$0xf]
  %v30 = vld [vmem:[%s1 + $0x1c] sm:$0xf]
  %v31 = vld [vmem:[%s1 + $0x20] sm:$0xf]
  %v32 = vld [vmem:[%s1 + $0x24] sm:$0xf]
  %v33 = vld [vmem:[%s1 + $0x28] sm:$0xf]
  %v34 = vld [vmem:[%s1 + $0x2c] sm:$0xf]
  %v35 = vld [vmem:[%s1 + $0x30] sm:$0xf]
  %v36 = vld [vmem:[%s1 + $0x34] sm:$0xf]
  %v37 = vld [vmem:[%s1 + $0x38] sm:$0xf]
  %v38 = vld [vmem:[%s1 + $0x3c] sm:$0xf]
  %v39 = vld [vmem:[%s1 + $0x40] sm:$0xf]
  %v40 = vld [vmem:[%s1 + $0x44] sm:$0xf]
  %v41 = vld [vmem:[%s1 + $0x48] sm:$0xf]
  %v42 = vld [vmem:[%s1 + $0x4c] sm:$0xf]
  %v43 = vld [vmem:[%s1 + $0x50] sm:$0xf]
  %v44 = vld [vmem:[%s1 + $0x54] sm:$0xf]
  %v45 = vld [vmem:[%s1 + $0x58] sm:$0xf]
  %v46 = vld [vmem:[%s1 + $0x5c] sm:$0xf]
  %v47 = vld [vmem:[%s1 + $0x60] sm:$0xf]
  %v48 = vld [vmem:[%s1 + $0x64] sm:$0xf]
  %v49 = vld [vmem:[%s1 + $0x68] sm:$0xf]
  %v50 = vld [vmem:[%s1 + $0x6c] sm:$0xf]
  %v51 = vld [vmem:[%s1 + $0x70] sm:$0xf]
  %v52 = vld [vmem:[%s1 + $0x74] sm:$0xf]
  %v53 = vld [vmem:[%s1 + $0x78] sm:$0xf]
  %v54 = vld [vmem:[%s1 + $0x7c] sm:$0xf]
  %v55 = vld [vmem:[%s1 + $0x80] sm:$0xf]
  %v56 = vld [vmem:[%s1 + $0x84] sm:$0xf]
  %v57 = vld [vmem:[%s1 + $0x88] sm:$0xf]
  %v58 = vld [vmem:[%s1 + $0x8c] sm:$0xf]
  %v59 = vld [vmem:[%s1 + $0x90] sm:$0xf]
  %v60 = vld [vmem:[%s1 + $0x94] sm:$0xf]
  %v61 = vld [vmem:[%s1 + $0x98] sm:$0xf]
  %v62 = vld [vmem:[%s1 + $0x9c] sm:$0xf]
  %v63 = vld [vmem:[%s1 + $0xa0] sm:$0xf]
  %v64 = vld [vmem:[%s1 + $0xa4] sm:$0xf]
  %v65 = vld [vmem:[%s1 + $0xa8] sm:$0xf]
  %v66 = vld [vmem:[%s1 + $0xac] sm:$0xf]
  %v67 = vld [vmem:[%s1 + $0xb0] sm:$0xf]
  %v68 = vld [vmem:[%s1 + $0xb4] sm:$0xf]
  %v69 = vld [vmem:[%s1 + $0xb8] sm:$0xf]
  %v70 = vld [vmem:[%s1 + $0xbc] sm:$0xf]
  %v71 = vld [vmem:[%s2] sm:$0x1]
  %v73 = vlaneseq
  %v74 = vshrl.u32 %v73, 7
  %v75 = vsub.s32 0, %v74
  %v76 = vrot.slane %v71, %v75
  %v86 = vunpack.c.l.b16 %v15
  %v87 = vunpack.c.h.b16 %v15
  %v88 = vunpack.c.l.b16 %v16
  %v89 = vunpack.c.l.b16 %v17
  %v90 = vunpack.c.h.b16 %v17
  %v91 = vunpack.c.l.b16 %v18
  %v92 = vunpack.c.l.b16 %v19
  %v93 = vunpack.c.h.b16 %v19
  %v94 = vunpack.c.l.b16 %v20
  %v95 = vunpack.c.l.b16 %v21
  %v96 = vunpack.c.h.b16 %v21
  %v97 = vunpack.c.l.b16 %v22
  %v98 = vpack.c.b16 %v89, %v86
  %v99 = vpack.c.b16 %v90, %v87
  %v100 = vpack.c.b16 %v91, %v88
  %v101 = vpack.c.b16 %v95, %v92
  %v102 = vpack.c.b16 %v96, %v93
  %v103 = vpack.c.b16 %v97, %v94
  %v158 = vunpack.c.l.b16 %v23
  %v159 = vunpack.c.l.b16 %v24
  %v160 = vunpack.c.l.b16 %v25
  %v161 = vunpack.c.l.b16 %v26
  %v162 = vunpack.c.l.b16 %v27
  %v163 = vunpack.c.l.b16 %v28
  %v164 = vunpack.c.l.b16 %v29
  %v165 = vunpack.c.l.b16 %v30
  %v166 = vunpack.c.l.b16 %v31
  %v167 = vunpack.c.l.b16 %v32
  %v168 = vunpack.c.l.b16 %v33
  %v169 = vunpack.c.l.b16 %v34
  %v170 = vunpack.c.l.b16 %v35
  %v171 = vunpack.c.l.b16 %v36
  %v172 = vunpack.c.l.b16 %v37
  %v173 = vunpack.c.l.b16 %v38
  %v174 = vunpack.c.l.b16 %v39
  %v175 = vunpack.c.l.b16 %v40
  %v176 = vunpack.c.l.b16 %v41
  %v177 = vunpack.c.l.b16 %v42
  %v178 = vunpack.c.l.b16 %v43
  %v179 = vunpack.c.l.b16 %v44
  %v180 = vunpack.c.l.b16 %v45
  %v181 = vunpack.c.l.b16 %v46
  %v182 = vunpack.c.l.b16 %v47
  %v183 = vunpack.c.l.b16 %v48
  %v184 = vunpack.c.l.b16 %v49
  %v185 = vunpack.c.l.b16 %v50
  %v186 = vunpack.c.l.b16 %v51
  %v187 = vunpack.c.l.b16 %v52
  %v188 = vunpack.c.l.b16 %v53
  %v189 = vunpack.c.l.b16 %v54
  %v190 = vunpack.c.l.b16 %v55
  %v191 = vunpack.c.l.b16 %v56
  %v192 = vunpack.c.l.b16 %v57
  %v193 = vunpack.c.l.b16 %v58
  %v194 = vunpack.c.l.b16 %v59
  %v195 = vunpack.c.l.b16 %v60
  %v196 = vunpack.c.l.b16 %v61
  %v197 = vunpack.c.l.b16 %v62
  %v198 = vunpack.c.l.b16 %v63
  %v199 = vunpack.c.l.b16 %v64
  %v200 = vunpack.c.l.b16 %v65
  %v201 = vunpack.c.l.b16 %v66
  %v202 = vunpack.c.l.b16 %v67
  %v203 = vunpack.c.l.b16 %v68
  %v204 = vunpack.c.l.b16 %v69
  %v205 = vunpack.c.l.b16 %v70
  %v206 = vpack.c.b16 %v159, %v158
  %v207 = vpack.c.b16 %v161, %v160
  %v208 = vpack.c.b16 %v163, %v162
  %v209 = vpack.c.b16 %v165, %v164
  %v210 = vpack.c.b16 %v167, %v166
  %v211 = vpack.c.b16 %v169, %v168
  %v212 = vpack.c.b16 %v171, %v170
  %v213 = vpack.c.b16 %v173, %v172
  %v214 = vpack.c.b16 %v175, %v174
  %v215 = vpack.c.b16 %v177, %v176
  %v216 = vpack.c.b16 %v179, %v178
  %v217 = vpack.c.b16 %v181, %v180
  %v218 = vpack.c.b16 %v183, %v182
  %v219 = vpack.c.b16 %v185, %v184
  %v220 = vpack.c.b16 %v187, %v186
  %v221 = vpack.c.b16 %v189, %v188
  %v222 = vpack.c.b16 %v191, %v190
  %v223 = vpack.c.b16 %v193, %v192
  %v224 = vpack.c.b16 %v195, %v194
  %v225 = vpack.c.b16 %v197, %v196
  %v226 = vpack.c.b16 %v199, %v198
  %v227 = vpack.c.b16 %v201, %v200
  %v228 = vpack.c.b16 %v203, %v202
  %v229 = vpack.c.b16 %v205, %v204
  %254 = vmatprep.subr.bf16.mxu0 0
  %255 = vmatpush1.bf16.msra.mxu0 %v213
  %256 = vmatprep.subr.bf16.mxu0 0
  %257 = vmatpush1.bf16.msra.mxu0 %v212
  %258 = vmatprep.subr.bf16.mxu0 0
  %259 = vmatpush1.bf16.msra.mxu0 %v211
  %260 = vmatprep.subr.bf16.mxu0 0
  %261 = vmatpush1.bf16.msra.mxu0 %v210
  %262 = vmatprep.subr.bf16.mxu0 0
  %263 = vmatpush1.bf16.msra.mxu0 %v209
  %264 = vmatprep.subr.bf16.mxu0 0
  %265 = vmatpush1.bf16.msra.mxu0 %v208
  %266 = vmatprep.subr.bf16.mxu0 0
  %267 = vmatpush1.bf16.msra.mxu0 %v207
  %268 = vmatprep.subr.bf16.mxu0 0
  %269 = vmatpush1.bf16.msra.mxu0 %v206
  %270 = vmatprep.subr.bf16.mxu0 0
  %271 = vmatpush2.bf16.msra.mxu0 %v221
  %272 = vmatprep.subr.bf16.mxu0 0
  %273 = vmatpush2.bf16.msra.mxu0 %v220
  %274 = vmatprep.subr.bf16.mxu0 0
  %275 = vmatpush2.bf16.msra.mxu0 %v219
  %276 = vmatprep.subr.bf16.mxu0 0
  %277 = vmatpush2.bf16.msra.mxu0 %v218
  %278 = vmatprep.subr.bf16.mxu0 0
  %279 = vmatpush2.bf16.msra.mxu0 %v217
  %280 = vmatprep.subr.bf16.mxu0 0
  %281 = vmatpush2.bf16.msra.mxu0 %v216
  %282 = vmatprep.subr.bf16.mxu0 0
  %283 = vmatpush2.bf16.msra.mxu0 %v215
  %284 = vmatprep.subr.bf16.mxu0 0
  %285 = vmatpush2.bf16.msra.mxu0 %v214
  %286 = vmatprep.mubr.bf16.mxu0 %v99
  %287 = vmatmul.mubr.bf16.gmra.mxu0 %v98
  %v288 = vpop.f32.mrf.mxu0
  %v289 = vadd.f32 %v76, %v288
  %v290 = vpop.f32.mrf.mxu0
  %v291 = vpop.f32.mrf.mxu0
  %v292 = vadd.f32 %v76, %v291
  %v293 = vpop.f32.mrf.mxu0
  %294 = vmatprep.mubr.bf16.mxu0 %v102
  %295 = vmatmul.mubr.bf16.gmra.mxu0 %v101
  %v296 = vpop.f32.mrf.mxu0
  %v297 = vadd.f32 %v76, %v296
  %v298 = vpop.f32.mrf.mxu0
  %v299 = vpop.f32.mrf.mxu0
  %v300 = vadd.f32 %v76, %v299
  %v301 = vpop.f32.mrf.mxu0
  %302 = vdwg.mxu0
  %303 = vmatprep.subr.bf16.mxu0 0
  %304 = vmatpush1.bf16.msra.mxu0 %v229
  %305 = vmatprep.subr.bf16.mxu0 0
  %306 = vmatpush1.bf16.msra.mxu0 %v228
  %307 = vmatprep.subr.bf16.mxu0 0
  %308 = vmatpush1.bf16.msra.mxu0 %v227
  %309 = vmatprep.subr.bf16.mxu0 0
  %310 = vmatpush1.bf16.msra.mxu0 %v226
  %311 = vmatprep.subr.bf16.mxu0 0
  %312 = vmatpush1.bf16.msra.mxu0 %v225
  %313 = vmatprep.subr.bf16.mxu0 0
  %314 = vmatpush1.bf16.msra.mxu0 %v224
  %315 = vmatprep.subr.bf16.mxu0 0
  %316 = vmatpush1.bf16.msra.mxu0 %v223
  %317 = vmatprep.subr.bf16.mxu0 0
  %318 = vmatpush1.bf16.msra.mxu0 %v222
  %319 = vmatprep.subr.bf16.mxu0 0
  %320 = vmatpush2.bf16.msra.mxu0 0
  %321 = vmatprep.subr.bf16.mxu0 0
  %322 = vmatpush2.bf16.msra.mxu0 0
  %323 = vmatprep.subr.bf16.mxu0 0
  %324 = vmatpush2.bf16.msra.mxu0 0
  %325 = vmatprep.subr.bf16.mxu0 0
  %326 = vmatpush2.bf16.msra.mxu0 0
  %327 = vmatprep.subr.bf16.mxu0 0
  %328 = vmatpush2.bf16.msra.mxu0 0
  %329 = vmatprep.subr.bf16.mxu0 0
  %330 = vmatpush2.bf16.msra.mxu0 0
  %331 = vmatprep.subr.bf16.mxu0 0
  %332 = vmatpush2.bf16.msra.mxu0 0
  %333 = vmatprep.subr.bf16.mxu0 0
  %334 = vmatpush2.bf16.msra.mxu0 0
  %335 = vmatprep.mubr.bf16.mxu0 0
  %336 = vmatmul.mubr.bf16.gmra.mxu0 %v100
  %v337 = vpop.f32.mrf.mxu0
  %v338 = vadd.f32 %v289, %v337
  %v339 = vpop.f32.mrf.mxu0
  %v340 = vpop.f32.mrf.mxu0
  %v341 = vadd.f32 %v292, %v340
  %v342 = vpop.f32.mrf.mxu0
  %343 = vmatprep.mubr.bf16.mxu0 0
  %344 = vmatmul.mubr.bf16.gmra.mxu0 %v103
  %v345 = vpop.f32.mrf.mxu0
  %v346 = vadd.f32 %v297, %v345
  %v347 = vpop.f32.mrf.mxu0
  %v348 = vpop.f32.mrf.mxu0
  %v349 = vadd.f32 %v300, %v348
  %v350 = vpop.f32.mrf.mxu0
  %351 = vdwg.mxu0
  %352 = vst [vmem:[%s3] sm:$0xff] %v338
  %353 = vst [vmem:[%s3 + $0x8] sm:$0xff] %v341
  %354 = vst [vmem:[%s3 + $0x10] sm:$0xff] %v346
  %355 = vst [vmem:[%s3 + $0x18] sm:$0xff] %v349
  // Predicated region
  $region14: #{forward.23} parent=0 // pred_check
    _
  $region15: #{forward.23} parent=0 // pred_check_branch
    %357 = sbr.rel (0) target = $region17
  $region16: #{forward.23} parent=0 // pred_region
    _
  $region17: #{forward.23} parent=0 // pred_fallthru
    _
  // Predicated region
  $region18: #{forward.23} parent=0 // pred_check
    _
  $region19: #{forward.23} parent=0 // pred_check_branch
    %359 = sbr.rel (0) target = $region21
  $region20: #{forward.23} parent=0 // pred_region
    _
  $region21: #{forward.23} parent=0 // pred_fallthru
    _

// kernel: forward.22
$region0: #{forward.22}
  #allocation0 [shape = 'u32[]', space=smem, size = 0x4, offset = 0x4, fixed_abs, tag = 'smem constant byte address 0x4 - core index']
  #allocation1 [shape = 'u32[144,128]{1,0:T(1,128)}', space=vmem, size = 0x12000, scoped, tag = 'internal scratch']
  #allocation2 [shape = 'f32[1]{0:T(128)S(6)}', space=smem, size = 0x200, scoped, tag = 'scoped memory for forward.22']
  %s0 = inlined_call_operand.vmem [shape: bf16[2,13,384], index: 0, kind: input, shape index: {}]
  %s1 = inlined_call_operand.vmem [shape: bf16[384,128], index: 1, kind: input, shape index: {}]
  %s2 = inlined_call_operand.vmem [shape: f32[2,16,128], index: 2, kind: input, shape index: {}]
  %s3 = inlined_call_operand.vmem [shape: f32[1,128], index: 3, kind: input, shape index: {}]
  %s4 = inlined_call_operand.vmem [shape: f32[1,128], index: 4, kind: input, shape index: {}]
  %s5 = inlined_call_operand.<no memory space> [shape: f32[1], index: 5, kind: input, shape index: {}]
  %s6 = inlined_call_operand.vmem [shape: f32[2,16,128], index: 6, kind: output, shape index: {}]
  %s7 = sld [smem:[#allocation0]]
  $region34: #{forward.22} parent=0
    _
  %s9 = ssub.s32 1, %s7
  %s10 = scalar_select 0, %s9, %s7
  %11 = sst [smem:[#allocation2]] %s5
  // Predicated region
  $region2: #{forward.22} parent=0 // pred_check
    _
  $region3: #{forward.22} parent=0 // pred_check_branch
    %13 = sbr.rel (0) target = $region5
  $region4: #{forward.22} parent=0 // pred_region
    _
  $region5: #{forward.22} parent=0 // pred_fallthru
    _
  // Predicated region
  $region6: #{forward.22} parent=0 // pred_check
    _
  $region7: #{forward.22} parent=0 // pred_check_branch
    %15 = sbr.rel (0) target = $region9
  $region8: #{forward.22} parent=0 // pred_region
    _
  $region9: #{forward.22} parent=0 // pred_fallthru
    _
  // Predicated region
  $region10: #{forward.22} parent=0 // pred_check
    _
  $region11: #{forward.22} parent=0 // pred_check_branch
    %17 = sbr.rel (0) target = $region13
  $region12: #{forward.22} parent=0 // pred_region
    _
  $region13: #{forward.22} parent=0 // pred_fallthru
    _
  // Predicated region
  $region14: #{forward.22} parent=0 // pred_check
    _
  $region15: #{forward.22} parent=0 // pred_check_branch
    %19 = sbr.rel (0) target = $region17
  $region16: #{forward.22} parent=0 // pred_region
    _
  $region17: #{forward.22} parent=0 // pred_fallthru
    _
  // Predicated region
  $region18: #{forward.22} parent=0 // pred_check
    _
  $region19: #{forward.22} parent=0 // pred_check_branch
    %21 = sbr.rel (0) target = $region21
  $region20: #{forward.22} parent=0 // pred_region
    _
  $region21: #{forward.22} parent=0 // pred_fallthru
    _
  // Predicated region
  $region22: #{forward.22} parent=0 // pred_check
    _
  $region23: #{forward.22} parent=0 // pred_check_branch
    %23 = sbr.rel (0) target = $region25
  $region24: #{forward.22} parent=0 // pred_region
    _
  $region25: #{forward.22} parent=0 // pred_fallthru
    _
  %v25 = vld [vmem:[%s1] sm:$0xf]
  %v26 = vld [vmem:[%s1 + $0x4] sm:$0xf]
  %v27 = vld [vmem:[%s1 + $0x8] sm:$0xf]
  %v28 = vld [vmem:[%s1 + $0xc] sm:$0xf]
  %v29 = vld [vmem:[%s1 + $0x10] sm:$0xf]
  %v30 = vld [vmem:[%s1 + $0x14] sm:$0xf]
  %v31 = vld [vmem:[%s1 + $0x18] sm:$0xf]
  %v32 = vld [vmem:[%s1 + $0x1c] sm:$0xf]
  %v33 = vld [vmem:[%s1 + $0x20] sm:$0xf]
  %v34 = vld [vmem:[%s1 + $0x24] sm:$0xf]
  %v35 = vld [vmem:[%s1 + $0x28] sm:$0xf]
  %v36 = vld [vmem:[%s1 + $0x2c] sm:$0xf]
  %v37 = vld [vmem:[%s1 + $0x30] sm:$0xf]
  %v38 = vld [vmem:[%s1 + $0x34] sm:$0xf]
  %v39 = vld [vmem:[%s1 + $0x38] sm:$0xf]
  %v40 = vld [vmem:[%s1 + $0x3c] sm:$0xf]
  %v41 = vld [vmem:[%s1 + $0x40] sm:$0xf]
  %v42 = vld [vmem:[%s1 + $0x44] sm:$0xf]
  %v43 = vld [vmem:[%s1 + $0x48] sm:$0xf]
  %v44 = vld [vmem:[%s1 + $0x4c] sm:$0xf]
  %v45 = vld [vmem:[%s1 + $0x50] sm:$0xf]
  %v46 = vld [vmem:[%s1 + $0x54] sm:$0xf]
  %v47 = vld [vmem:[%s1 + $0x58] sm:$0xf]
  %v48 = vld [vmem:[%s1 + $0x5c] sm:$0xf]
  %v49 = vld [vmem:[%s1 + $0x60] sm:$0xf]
  %v50 = vld [vmem:[%s1 + $0x64] sm:$0xf]
  %v51 = vld [vmem:[%s1 + $0x68] sm:$0xf]
  %v52 = vld [vmem:[%s1 + $0x6c] sm:$0xf]
  %v53 = vld [vmem:[%s1 + $0x70] sm:$0xf]
  %v54 = vld [vmem:[%s1 + $0x74] sm:$0xf]
  %v55 = vld [vmem:[%s1 + $0x78] sm:$0xf]
  %v56 = vld [vmem:[%s1 + $0x7c] sm:$0xf]
  %v57 = vld [vmem:[%s1 + $0x80] sm:$0xf]
  %v58 = vld [vmem:[%s1 + $0x84] sm:$0xf]
  %v59 = vld [vmem:[%s1 + $0x88] sm:$0xf]
  %v60 = vld [vmem:[%s1 + $0x8c] sm:$0xf]
  %v61 = vld [vmem:[%s1 + $0x90] sm:$0xf]
  %v62 = vld [vmem:[%s1 + $0x94] sm:$0xf]
  %v63 = vld [vmem:[%s1 + $0x98] sm:$0xf]
  %v64 = vld [vmem:[%s1 + $0x9c] sm:$0xf]
  %v65 = vld [vmem:[%s1 + $0xa0] sm:$0xf]
  %v66 = vld [vmem:[%s1 + $0xa4] sm:$0xf]
  %v67 = vld [vmem:[%s1 + $0xa8] sm:$0xf]
  %v68 = vld [vmem:[%s1 + $0xac] sm:$0xf]
  %v69 = vld [vmem:[%s1 + $0xb0] sm:$0xf]
  %v70 = vld [vmem:[%s1 + $0xb4] sm:$0xf]
  %v71 = vld [vmem:[%s1 + $0xb8] sm:$0xf]
  %v72 = vld [vmem:[%s1 + $0xbc] sm:$0xf]
  %v73 = vld [vmem:[%s3] sm:$0x1]
  %v74 = vld [vmem:[%s4] sm:$0x1]
  %s75 = sld [smem:[#allocation2]]
  %v76 = vld [vmem:[%s2] sm:$0xff]
  %v77 = vld [vmem:[%s2 + $0x8] sm:$0xff]
  %vm78 = vcmp.gt.f32.partialorder %v76, 0.0
  %vm79 = vcmp.gt.f32.partialorder %v77, 0.0
  %v80 = vstv %s75
  %v81 = vmul.f32 %v80, %v76
  %v82 = vmul.f32 %v80, %v77
  %v83 = vsel %vm78, %v76, %v81
  %v84 = vsel %vm79, %v77, %v82
  %v86 = vlaneseq
  %v87 = vshrl.u32 %v86, 7
  %v88 = vsub.s32 0, %v87
  %v89 = vrot.slane %v73, %v88
  %v91 = vmul.f32 %v83, %v89
  %v92 = vmul.f32 %v84, %v89
  %v94 = vlaneseq
  %v95 = vshrl.u32 %v94, 7
  %v96 = vsub.s32 0, %v95
  %v97 = vrot.slane %v74, %v96
  %v99 = vadd.f32 %v91, %v97
  %v100 = vadd.f32 %v92, %v97
  %101 = vst [vmem:[%s6] sm:$0xff] %v99
  %102 = vst [vmem:[%s6 + $0x8] sm:$0xff] %v100
  %v103 = vld [vmem:[%s0] sm:$0xff]
  %v104 = vld [vmem:[%s0 + $0x8] sm:$0xf]
  %v105 = vld [vmem:[%s0 + $0xc] sm:$0x77]
  %v106 = vld [vmem:[%s0 + $0x14] sm:$0x7]
  %v111 = vunpack.c.l.b16 %v103
  %v112 = vunpack.c.h.b16 %v103
  %v113 = vunpack.c.l.b16 %v104
  %v114 = vunpack.c.l.b16 %v105
  %v115 = vunpack.c.h.b16 %v105
  %v116 = vunpack.c.l.b16 %v106
  %v117 = vpack.c.b16 %v114, %v111
  %v118 = vpack.c.b16 %v115, %v112
  %v119 = vpack.c.b16 %v116, %v113
  %v171 = vunpack.c.l.b16 %v25
  %v172 = vunpack.c.l.b16 %v26
  %v173 = vunpack.c.l.b16 %v27
  %v174 = vunpack.c.l.b16 %v28
  %v175 = vunpack.c.l.b16 %v29
  %v176 = vunpack.c.l.b16 %v30
  %v177 = vunpack.c.l.b16 %v31
  %v178 = vunpack.c.l.b16 %v32
  %v179 = vunpack.c.l.b16 %v33
  %v180 = vunpack.c.l.b16 %v34
  %v181 = vunpack.c.l.b16 %v35
  %v182 = vunpack.c.l.b16 %v36
  %v183 = vunpack.c.l.b16 %v37
  %v184 = vunpack.c.l.b16 %v38
  %v185 = vunpack.c.l.b16 %v39
  %v186 = vunpack.c.l.b16 %v40
  %v187 = vunpack.c.l.b16 %v41
  %v188 = vunpack.c.l.b16 %v42
  %v189 = vunpack.c.l.b16 %v43
  %v190 = vunpack.c.l.b16 %v44
  %v191 = vunpack.c.l.b16 %v45
  %v192 = vunpack.c.l.b16 %v46
  %v193 = vunpack.c.l.b16 %v47
  %v194 = vunpack.c.l.b16 %v48
  %v195 = vunpack.c.l.b16 %v49
  %v196 = vunpack.c.l.b16 %v50
  %v197 = vunpack.c.l.b16 %v51
  %v198 = vunpack.c.l.b16 %v52
  %v199 = vunpack.c.l.b16 %v53
  %v200 = vunpack.c.l.b16 %v54
  %v201 = vunpack.c.l.b16 %v55
  %v202 = vunpack.c.l.b16 %v56
  %v203 = vunpack.c.l.b16 %v57
  %v204 = vunpack.c.l.b16 %v58
  %v205 = vunpack.c.l.b16 %v59
  %v206 = vunpack.c.l.b16 %v60
  %v207 = vunpack.c.l.b16 %v61
  %v208 = vunpack.c.l.b16 %v62
  %v209 = vunpack.c.l.b16 %v63
  %v210 = vunpack.c.l.b16 %v64
  %v211 = vunpack.c.l.b16 %v65
  %v212 = vunpack.c.l.b16 %v66
  %v213 = vunpack.c.l.b16 %v67
  %v214 = vunpack.c.l.b16 %v68
  %v215 = vunpack.c.l.b16 %v69
  %v216 = vunpack.c.l.b16 %v70
  %v217 = vunpack.c.l.b16 %v71
  %v218 = vunpack.c.l.b16 %v72
  %v219 = vpack.c.b16 %v172, %v171
  %v220 = vpack.c.b16 %v174, %v173
  %v221 = vpack.c.b16 %v176, %v175
  %v222 = vpack.c.b16 %v178, %v177
  %v223 = vpack.c.b16 %v180, %v179
  %v224 = vpack.c.b16 %v182, %v181
  %v225 = vpack.c.b16 %v184, %v183
  %v226 = vpack.c.b16 %v186, %v185
  %v227 = vpack.c.b16 %v188, %v187
  %v228 = vpack.c.b16 %v190, %v189
  %v229 = vpack.c.b16 %v192, %v191
  %v230 = vpack.c.b16 %v194, %v193
  %v231 = vpack.c.b16 %v196, %v195
  %v232 = vpack.c.b16 %v198, %v197
  %v233 = vpack.c.b16 %v200, %v199
  %v234 = vpack.c.b16 %v202, %v201
  %v235 = vpack.c.b16 %v204, %v203
  %v236 = vpack.c.b16 %v206, %v205
  %v237 = vpack.c.b16 %v208, %v207
  %v238 = vpack.c.b16 %v210, %v209
  %v239 = vpack.c.b16 %v212, %v211
  %v240 = vpack.c.b16 %v214, %v213
  %v241 = vpack.c.b16 %v216, %v215
  %v242 = vpack.c.b16 %v218, %v217
  %vm269 = vcmask 1046528
  %v270 = vrot.slane %v76, 1
  %v271 = vrot.slane %v77, 1
  %v272 = vsel %vm269, %v270, %v271
  %275 = vmatprep.subr.bf16.mxu0 0
  %276 = vmatpush1.bf16.msra.mxu0 %v226
  %277 = vmatprep.subr.bf16.mxu0 0
  %278 = vmatpush1.bf16.msra.mxu0 %v225
  %279 = vmatprep.subr.bf16.mxu0 0
  %280 = vmatpush1.bf16.msra.mxu0 %v224
  %281 = vmatprep.subr.bf16.mxu0 0
  %282 = vmatpush1.bf16.msra.mxu0 %v223
  %283 = vmatprep.subr.bf16.mxu0 0
  %284 = vmatpush1.bf16.msra.mxu0 %v222
  %285 = vmatprep.subr.bf16.mxu0 0
  %286 = vmatpush1.bf16.msra.mxu0 %v221
  %287 = vmatprep.subr.bf16.mxu0 0
  %288 = vmatpush1.bf16.msra.mxu0 %v220
  %289 = vmatprep.subr.bf16.mxu0 0
  %290 = vmatpush1.bf16.msra.mxu0 %v219
  %291 = vmatprep.subr.bf16.mxu0 0
  %292 = vmatpush2.bf16.msra.mxu0 %v234
  %293 = vmatprep.subr.bf16.mxu0 0
  %294 = vmatpush2.bf16.msra.mxu0 %v233
  %295 = vmatprep.subr.bf16.mxu0 0
  %296 = vmatpush2.bf16.msra.mxu0 %v232
  %297 = vmatprep.subr.bf16.mxu0 0
  %298 = vmatpush2.bf16.msra.mxu0 %v231
  %299 = vmatprep.subr.bf16.mxu0 0
  %300 = vmatpush2.bf16.msra.mxu0 %v230
  %301 = vmatprep.subr.bf16.mxu0 0
  %302 = vmatpush2.bf16.msra.mxu0 %v229
  %303 = vmatprep.subr.bf16.mxu0 0
  %304 = vmatpush2.bf16.msra.mxu0 %v228
  %305 = vmatprep.subr.bf16.mxu0 0
  %306 = vmatpush2.bf16.msra.mxu0 %v227
  %307 = vmatprep.mubr.bf16.mxu0 %v118
  %308 = vmatmul.mubr.bf16.gmra.mxu0 %v117
  %v309 = vpop.f32.mrf.mxu0
  %v310 = vadd.f32 %v272, %v309
  %v311 = vpop.f32.mrf.mxu0
  %v312 = vpop.f32.mrf.mxu0
  %v313 = vadd.f32 %v271, %v312
  %v314 = vpop.f32.mrf.mxu0
  %315 = vdwg.mxu0
  %316 = vmatprep.subr.bf16.mxu0 0
  %317 = vmatpush1.bf16.msra.mxu0 %v242
  %318 = vmatprep.subr.bf16.mxu0 0
  %319 = vmatpush1.bf16.msra.mxu0 %v241
  %320 = vmatprep.subr.bf16.mxu0 0
  %321 = vmatpush1.bf16.msra.mxu0 %v240
  %322 = vmatprep.subr.bf16.mxu0 0
  %323 = vmatpush1.bf16.msra.mxu0 %v239
  %324 = vmatprep.subr.bf16.mxu0 0
  %325 = vmatpush1.bf16.msra.mxu0 %v238
  %326 = vmatprep.subr.bf16.mxu0 0
  %327 = vmatpush1.bf16.msra.mxu0 %v237
  %328 = vmatprep.subr.bf16.mxu0 0
  %329 = vmatpush1.bf16.msra.mxu0 %v236
  %330 = vmatprep.subr.bf16.mxu0 0
  %331 = vmatpush1.bf16.msra.mxu0 %v235
  %332 = vmatprep.subr.bf16.mxu0 0
  %333 = vmatpush2.bf16.msra.mxu0 0
  %334 = vmatprep.subr.bf16.mxu0 0
  %335 = vmatpush2.bf16.msra.mxu0 0
  %336 = vmatprep.subr.bf16.mxu0 0
  %337 = vmatpush2.bf16.msra.mxu0 0
  %338 = vmatprep.subr.bf16.mxu0 0
  %339 = vmatpush2.bf16.msra.mxu0 0
  %340 = vmatprep.subr.bf16.mxu0 0
  %341 = vmatpush2.bf16.msra.mxu0 0
  %342 = vmatprep.subr.bf16.mxu0 0
  %343 = vmatpush2.bf16.msra.mxu0 0
  %344 = vmatprep.subr.bf16.mxu0 0
  %345 = vmatpush2.bf16.msra.mxu0 0
  %346 = vmatprep.subr.bf16.mxu0 0
  %347 = vmatpush2.bf16.msra.mxu0 0
  %348 = vmatprep.mubr.bf16.mxu0 0
  %349 = vmatmul.mubr.bf16.gmra.mxu0 %v119
  %v350 = vpop.f32.mrf.mxu0
  %v351 = vadd.f32 %v310, %v350
  %v352 = vpop.f32.mrf.mxu0
  %v353 = vpop.f32.mrf.mxu0
  %v354 = vadd.f32 %v313, %v353
  %v355 = vpop.f32.mrf.mxu0
  %356 = vdwg.mxu0
  %vm357 = vcmp.gt.f32.partialorder %v351, 0.0
  %vm358 = vcmp.gt.f32.partialorder %v354, 0.0
  %v359 = vmul.f32 %v80, %v351
  %v360 = vmul.f32 %v80, %v354
  %v361 = vsel %vm357, %v351, %v359
  %v362 = vsel %vm358, %v354, %v360
  %v363 = vmul.f32 %v361, %v89
  %v364 = vmul.f32 %v362, %v89
  %v365 = vadd.f32 %v363, %v97
  %v366 = vadd.f32 %v364, %v97
  %367 = vst [vmem:[%s6 + $0x1] sm:$0xff] %v365
  %368 = vst [vmem:[%s6 + $0x9] sm:$0x1f] %v366
  %s369 = scalar_lea.vmem %s2, 16
  %v370 = vld [vmem:[%s369] sm:$0xff]
  %v371 = vld [vmem:[%s369 + $0x8] sm:$0xff]
  %vm372 = vcmp.gt.f32.partialorder %v370, 0.0
  %vm373 = vcmp.gt.f32.partialorder %v371, 0.0
  %v374 = vmul.f32 %v80, %v370
  %v375 = vmul.f32 %v80, %v371
  %v376 = vsel %vm372, %v370, %v374
  %v377 = vsel %vm373, %v371, %v375
  %v378 = vmul.f32 %v376, %v89
  %v379 = vmul.f32 %v377, %v89
  %v380 = vadd.f32 %v378, %v97
  %v381 = vadd.f32 %v379, %v97
  %s382 = scalar_lea.vmem %s6, 16
  %383 = vst [vmem:[%s382] sm:$0xff] %v380
  %384 = vst [vmem:[%s382 + $0x8] sm:$0xff] %v381
  %s385 = scalar_lea.vmem %s0, 24
  %v386 = vld [vmem:[%s385] sm:$0xff]
  %v387 = vld [vmem:[%s385 + $0x8] sm:$0xf]
  %v388 = vld [vmem:[%s385 + $0xc] sm:$0x77]
  %v389 = vld [vmem:[%s385 + $0x14] sm:$0x7]
  %v394 = vunpack.c.l.b16 %v386
  %v395 = vunpack.c.h.b16 %v386
  %v396 = vunpack.c.l.b16 %v387
  %v397 = vunpack.c.l.b16 %v388
  %v398 = vunpack.c.h.b16 %v388
  %v399 = vunpack.c.l.b16 %v389
  %v400 = vpack.c.b16 %v397, %v394
  %v401 = vpack.c.b16 %v398, %v395
  %v402 = vpack.c.b16 %v399, %v396
  %v408 = vrot.slane %v370, 1
  %v409 = vrot.slane %v371, 1
  %v410 = vsel %vm269, %v408, %v409
  %413 = vmatprep.subr.bf16.mxu0 0
  %414 = vmatpush1.bf16.msra.mxu0 %v226
  %415 = vmatprep.subr.bf16.mxu0 0
  %416 = vmatpush1.bf16.msra.mxu0 %v225
  %417 = vmatprep.subr.bf16.mxu0 0
  %418 = vmatpush1.bf16.msra.mxu0 %v224
  %419 = vmatprep.subr.bf16.mxu0 0
  %420 = vmatpush1.bf16.msra.mxu0 %v223
  %421 = vmatprep.subr.bf16.mxu0 0
  %422 = vmatpush1.bf16.msra.mxu0 %v222
  %423 = vmatprep.subr.bf16.mxu0 0
  %424 = vmatpush1.bf16.msra.mxu0 %v221
  %425 = vmatprep.subr.bf16.mxu0 0
  %426 = vmatpush1.bf16.msra.mxu0 %v220
  %427 = vmatprep.subr.bf16.mxu0 0
  %428 = vmatpush1.bf16.msra.mxu0 %v219
  %429 = vmatprep.subr.bf16.mxu0 0
  %430 = vmatpush2.bf16.msra.mxu0 %v234
  %431 = vmatprep.subr.bf16.mxu0 0
  %432 = vmatpush2.bf16.msra.mxu0 %v233
  %433 = vmatprep.subr.bf16.mxu0 0
  %434 = vmatpush2.bf16.msra.mxu0 %v232
  %435 = vmatprep.subr.bf16.mxu0 0
  %436 = vmatpush2.bf16.msra.mxu0 %v231
  %437 = vmatprep.subr.bf16.mxu0 0
  %438 = vmatpush2.bf16.msra.mxu0 %v230
  %439 = vmatprep.subr.bf16.mxu0 0
  %440 = vmatpush2.bf16.msra.mxu0 %v229
  %441 = vmatprep.subr.bf16.mxu0 0
  %442 = vmatpush2.bf16.msra.mxu0 %v228
  %443 = vmatprep.subr.bf16.mxu0 0
  %444 = vmatpush2.bf16.msra.mxu0 %v227
  %445 = vmatprep.mubr.bf16.mxu0 %v401
  %446 = vmatmul.mubr.bf16.gmra.mxu0 %v400
  %v447 = vpop.f32.mrf.mxu0
  %v448 = vadd.f32 %v410, %v447
  %v449 = vpop.f32.mrf.mxu0
  %v450 = vpop.f32.mrf.mxu0
  %v451 = vadd.f32 %v409, %v450
  %v452 = vpop.f32.mrf.mxu0
  %453 = vdwg.mxu0
  %454 = vmatprep.subr.bf16.mxu0 0
  %455 = vmatpush1.bf16.msra.mxu0 %v242
  %456 = vmatprep.subr.bf16.mxu0 0
  %457 = vmatpush1.bf16.msra.mxu0 %v241
  %458 = vmatprep.subr.bf16.mxu0 0
  %459 = vmatpush1.bf16.msra.mxu0 %v240
  %460 = vmatprep.subr.bf16.mxu0 0
  %461 = vmatpush1.bf16.msra.mxu0 %v239
  %462 = vmatprep.subr.bf16.mxu0 0
  %463 = vmatpush1.bf16.msra.mxu0 %v238
  %464 = vmatprep.subr.bf16.mxu0 0
  %465 = vmatpush1.bf16.msra.mxu0 %v237
  %466 = vmatprep.subr.bf16.mxu0 0
  %467 = vmatpush1.bf16.msra.mxu0 %v236
  %468 = vmatprep.subr.bf16.mxu0 0
  %469 = vmatpush1.bf16.msra.mxu0 %v235
  %470 = vmatprep.subr.bf16.mxu0 0
  %471 = vmatpush2.bf16.msra.mxu0 0
  %472 = vmatprep.subr.bf16.mxu0 0
  %473 = vmatpush2.bf16.msra.mxu0 0
  %474 = vmatprep.subr.bf16.mxu0 0
  %475 = vmatpush2.bf16.msra.mxu0 0
  %476 = vmatprep.subr.bf16.mxu0 0
  %477 = vmatpush2.bf16.msra.mxu0 0
  %478 = vmatprep.subr.bf16.mxu0 0
  %479 = vmatpush2.bf16.msra.mxu0 0
  %480 = vmatprep.subr.bf16.mxu0 0
  %481 = vmatpush2.bf16.msra.mxu0 0
  %482 = vmatprep.subr.bf16.mxu0 0
  %483 = vmatpush2.bf16.msra.mxu0 0
  %484 = vmatprep.subr.bf16.mxu0 0
  %485 = vmatpush2.bf16.msra.mxu0 0
  %486 = vmatprep.mubr.bf16.mxu0 0
  %487 = vmatmul.mubr.bf16.gmra.mxu0 %v402
  %v488 = vpop.f32.mrf.mxu0
  %v489 = vadd.f32 %v448, %v488
  %v490 = vpop.f32.mrf.mxu0
  %v491 = vpop.f32.mrf.mxu0
  %v492 = vadd.f32 %v451, %v491
  %v493 = vpop.f32.mrf.mxu0
  %494 = vdwg.mxu0
  %vm495 = vcmp.gt.f32.partialorder %v489, 0.0
  %vm496 = vcmp.gt.f32.partialorder %v492, 0.0
  %v497 = vmul.f32 %v80, %v489
  %v498 = vmul.f32 %v80, %v492
  %v499 = vsel %vm495, %v489, %v497
  %v500 = vsel %vm496, %v492, %v498
  %v501 = vmul.f32 %v499, %v89
  %v502 = vmul.f32 %v500, %v89
  %v503 = vadd.f32 %v501, %v97
  %v504 = vadd.f32 %v502, %v97
  %505 = vst [vmem:[%s382 + $0x1] sm:$0xff] %v503
  %506 = vst [vmem:[%s382 + $0x9] sm:$0x1f] %v504
  // Predicated region
  $region26: #{forward.22} parent=0 // pred_check
    _
  $region27: #{forward.22} parent=0 // pred_check_branch
    %508 = sbr.rel (0) target = $region29
  $region28: #{forward.22} parent=0 // pred_region
    _
  $region29: #{forward.22} parent=0 // pred_fallthru
    _
  // Predicated region
  $region30: #{forward.22} parent=0 // pred_check
    _
  $region31: #{forward.22} parent=0 // pred_check_branch
    %510 = sbr.rel (0) target = $region33
  $region32: #{forward.22} parent=0 // pred_region
    _
  $region33: #{forward.22} parent=0 // pred_fallthru
    _

</llo_original>
